<compile_context>
chip_gen: v6e
topology: v6e:2x2x1
jax: 0.10.0
libtpu: 0.0.40
codegen_flags: <defaults>
</compile_context>

<pallas_src>
import functools

import jax
import jax.numpy as jnp
from jax import lax
from jax.experimental import pallas as pl
from jax.experimental.pallas import tpu as pltpu


# ----------------------------------------------------------------------------
# Fused kernel: stem -> gate -> decoder stack -> fc -> log_softmax
# ----------------------------------------------------------------------------
def _fused_model_kernel(patches_ref, stem_w_ref, stem_b_ref,
                        gate_w_ref, gate_b_ref,
                        qkv_w_ref, qkv_b_ref, aow_ref, aob_ref, ca_ref,
                        lng_ref, lnb_ref,
                        f1w_ref, f1b_ref, f2w_ref, f2b_ref,
                        fcw_ref, fcb_ref, o_ref, *, nhead):
    blk_b, S, HoK = patches_ref.shape
    M = blk_b * S                                   # matmul row dimension
    Dcnn, D = gate_w_ref.shape
    dh = D // nhead
    L = qkv_w_ref.shape[0]
    Cpad = fcw_ref.shape[1]
    bf16 = jnp.bfloat16

    def ln(z, idx):                                 # LayerNorm, eps=1e-5, f32
        mu = jnp.mean(z, axis=-1, keepdims=True)
        zc = z - mu
        var = jnp.mean(zc * zc, axis=-1, keepdims=True)
        return zc * lax.rsqrt(var + 1e-5) * lng_ref[idx] + lnb_ref[idx]

    # ---- stem: block-diagonal conv over the Ho rows of BLK_B*S positions ----
    xp = patches_ref[...].reshape(M, HoK).astype(bf16)
    feat = jnp.dot(xp, stem_w_ref[...], preferred_element_type=jnp.float32)
    feat = jnp.maximum(feat + stem_b_ref[...], 0.0)            # (M, Dcnn) f32

    # ---- gate + relu ----
    h = jnp.dot(feat.astype(bf16), gate_w_ref[...],
                preferred_element_type=jnp.float32) + gate_b_ref[...]
    h = jnp.maximum(h, 0.0)                                     # (M, D) f32

    # ---- decoder layers (static unroll; weights are VMEM-resident) ----
    for l in range(L):
        # self-attention: one packed QKV matmul (scale pre-folded into Q cols)
        qkv = jnp.dot(h.astype(bf16), qkv_w_ref[l],
                      preferred_element_type=jnp.float32) + qkv_b_ref[l]
        qkv3 = qkv.reshape(blk_b, S, 3 * D)         # leading-dim split (cheap)
        wo = aow_ref[l]                             # (D, D) bf16
        sa = jnp.zeros((M, D), jnp.float32)
        for hh in range(nhead):
            qh = qkv3[:, :, hh * dh:(hh + 1) * dh].astype(bf16)
            kh = qkv3[:, :, D + hh * dh:D + (hh + 1) * dh].astype(bf16)
            vh = qkv3[:, :, 2 * D + hh * dh:2 * D + (hh + 1) * dh].astype(bf16)
            s = jnp.einsum('bqd,bkd->bqk', qh, kh,
                           preferred_element_type=jnp.float32)  # (blk, S, S)
            s = s - jnp.max(s, axis=-1, keepdims=True)
            p = jnp.exp(s)
            p = p * pl.reciprocal(jnp.sum(p, axis=-1, keepdims=True), approx=True)
            oh = jnp.einsum('bqk,bkd->bqd', p.astype(bf16), vh,
                            preferred_element_type=jnp.float32)  # (blk, S, dh)
            # accumulate through the matching (sublane-aligned) row slice of Wo
            # instead of concatenating heads (no lane concat / relayout).
            sa = sa + jnp.dot(oh.reshape(M, dh).astype(bf16),
                              wo[hh * dh:(hh + 1) * dh, :],
                              preferred_element_type=jnp.float32)
        sa = sa + aob_ref[l]
        h = ln(h + sa, 3 * l + 0)

        # cross-attention vs. zero memory == constant row (precomputed at init)
        h = ln(h + ca_ref[l], 3 * l + 1)

        # feed-forward
        f1 = jnp.dot(h.astype(bf16), f1w_ref[l],
                     preferred_element_type=jnp.float32) + f1b_ref[l]
        f1 = jnp.maximum(f1, 0.0)                   # (M, ffn) f32
        f2 = jnp.dot(f1.astype(bf16), f2w_ref[l],
                     preferred_element_type=jnp.float32) + f2b_ref[l]
        h = ln(h + f2, 3 * l + 2)

    # ---- classifier (lane-dense Cpad columns) + log_softmax ----
    logits = jnp.dot(h.astype(bf16), fcw_ref[...],
                     preferred_element_type=jnp.float32) + fcb_ref[...]
    m = jnp.max(logits, axis=-1, keepdims=True)
    s = logits - m
    lse = jnp.log(jnp.sum(jnp.exp(s), axis=-1, keepdims=True))
    o_ref[...] = (s - lse).reshape(blk_b, S, Cpad)


def _pick_block_batch(B, S, target_rows=256):
    """Largest divisor of B with BLK_B*S <= target_rows (MXU row fill), while
    keeping at least 2 grid steps so the 'parallel' batch axis can still split
    across v7x's two TensorCores."""
    best = 1
    for d in range(1, B + 1):
        if B % d:
            continue
        if d * S <= target_rows and (B // d >= 2 or B == 1):
            best = d
    return best


def fused_ocr_model(patches, p, *, nhead):
    """patches: (B, S, Ho*Cin*9) im2col rows -> (B, S, Cpad) log-probs."""
    B, S, HoK = patches.shape
    Dcnn, D = p['gate_w'].shape
    L = p['qkv_w'].shape[0]
    ffn = p['ff1_w'].shape[2]
    Cpad = p['fc_w'].shape[1]
    blk_b = _pick_block_batch(B, S)
    grid = (B // blk_b,)

    # Constant-index full-array specs: weights stay VMEM-resident across steps.
    # (At production sizes on v7x, add pipeline_mode=pl.Buffered(1) here and/or
    #  stream per-layer weights -- see TODO at the top of the file.)
    def const_spec(arr):
        return pl.BlockSpec(arr.shape, lambda b, _nd=arr.ndim: (0,) * _nd)

    weights = (p['stem_w'], p['stem_b'], p['gate_w'], p['gate_b'],
               p['qkv_w'], p['qkv_b'], p['attn_out_w'], p['attn_out_b'],
               p['ca_const'], p['ln_g'], p['ln_b'],
               p['ff1_w'], p['ff1_b'], p['ff2_w'], p['ff2_b'],
               p['fc_w'], p['fc_b'])
    in_specs = ([pl.BlockSpec((blk_b, S, HoK), lambda b: (b, 0, 0))]
                + [const_spec(w) for w in weights])

    # Advisory cost estimate (FFN matmuls dominate flops, weights dominate bytes).
    m_rows = B * S
    flops = (2 * m_rows * (HoK * Dcnn + Dcnn * D + D * Cpad)
             + 2 * m_rows * L * (3 * D * D + 2 * S * D + D * D + 2 * D * ffn))
    transcendentals = m_rows * (L * nhead * S + Cpad) + 3 * L * m_rows
    bytes_accessed = (int(patches.size) * 4 + B * S * Cpad * 4
                      + sum(int(w.size) * w.dtype.itemsize for w in weights))

    return pl.pallas_call(
        functools.partial(_fused_model_kernel, nhead=nhead),
        out_shape=jax.ShapeDtypeStruct((B, S, Cpad), jnp.float32),
        grid=grid,
        in_specs=in_specs,
        out_specs=pl.BlockSpec((blk_b, S, Cpad), lambda b: (b, 0, 0)),
        compiler_params=pltpu.CompilerParams(
            dimension_semantics=("parallel",),
            vmem_limit_bytes=32 * 1024 * 1024),
        cost_estimate=pl.CostEstimate(flops=flops,
                                      transcendentals=transcendentals,
                                      bytes_accessed=bytes_accessed),
    )(patches, *weights)


# ----------------------------------------------------------------------------
# Glue (trace-time im2col / parameter packing) in plain JAX
# ----------------------------------------------------------------------------
def im2col(x, kh=3, kw=3, stride=2, pad=1):
    """NCHW -> (B*Wo*Ho, C*kh*kw) patches; rows ordered (b, wo, ho), feature
    columns ordered (c, ky, kx).  With this ordering the fused kernel's
    block-diagonal stem emits features directly in (seq=Wo, feat=Ho*Cout)
    layout; the reference's (c*Ho + ho) order is recovered by a one-time gate
    weight row permutation at init."""
    B, C, H, W = x.shape
    xp = jnp.pad(x, ((0, 0), (0, 0), (pad, pad), (pad, pad)))
    Ho = (H + 2 * pad - kh) // stride + 1
    Wo = (W + 2 * pad - kw) // stride + 1
    cols = []
    for dy in range(kh):
        for dx in range(kw):
            cols.append(xp[:, :, dy:dy + stride * (Ho - 1) + 1:stride,
                               dx:dx + stride * (Wo - 1) + 1:stride])
    patches = jnp.stack(cols, axis=0).reshape(kh, kw, B, C, Ho, Wo)
    patches = patches.transpose(2, 5, 4, 3, 0, 1)    # (B, Wo, Ho, C, kh, kw)
    return patches.reshape(B * Wo * Ho, C * kh * kw), Ho, Wo


def _uniform(key, shape, limit):
    return jax.random.uniform(key, shape, jnp.float32, -limit, limit)


def init_params(key, cin, cout, Ho, d_model, nhead, num_layers, ffn, num_classes):
    """PyTorch-style params pre-packed into (in, out) layouts; matmul weights in
    bf16, everything else f32.  Nothing is transposed/sliced inside the forward."""
    keys = iter(jax.random.split(key, 128))
    Dcnn = cout * Ho
    K = cin * 9
    dh = d_model // nhead
    bf16 = jnp.bfloat16
    p = {}

    # stand-in backbone conv (kaiming-normal fan_in); replicated along a block
    # diagonal over the Ho output rows so the fused stem is one matmul.
    conv_w = jax.random.normal(next(keys), (cout, cin, 3, 3), jnp.float32) \
        * jnp.sqrt(2.0 / (cin * 9))
    conv_w_t = conv_w.reshape(cout, -1).T                         # (K, Cout)
    p['stem_w'] = jnp.kron(jnp.eye(Ho, dtype=jnp.float32), conv_w_t).astype(bf16)
    p['stem_b'] = jnp.zeros((1, Dcnn), jnp.float32)

    # gate: kaiming_normal_(fan_out, relu), bias 0.01.  Rows permuted so the
    # stem's (ho*Cout + c) feature order matches the reference (c*Ho + ho).
    gate_w = jax.random.normal(next(keys), (d_model, Dcnn), jnp.float32) \
        * jnp.sqrt(2.0 / d_model)
    gate_wt = gate_w.T                                            # rows = c*Ho + ho
    new_idx = jnp.arange(Dcnn)
    old_idx = (new_idx % cout) * Ho + (new_idx // cout)           # new = ho*Cout + c
    p['gate_w'] = gate_wt[old_idx, :].astype(bf16)                # (Dcnn, D)
    p['gate_b'] = jnp.full((1, d_model), 0.01, jnp.float32)

    # softmax scale folded into the Q rows of the packed in-proj weight/bias
    scale = 1.0 / (dh ** 0.5)
    q_scale = jnp.concatenate([jnp.full((d_model,), scale, jnp.float32),
                               jnp.ones((2 * d_model,), jnp.float32)])

    qkv_w, qkv_b, aow, aob, ca_c = [], [], [], [], []
    lng, lnb, f1w, f1b, f2w, f2b = [], [], [], [], [], []
    for _ in range(num_layers):
        lim_in = (6.0 / (3 * d_model + d_model)) ** 0.5
        lim_o = (6.0 / (2 * d_model)) ** 0.5
        # self-attention: packed QKV (D, 3D) with scale folded, (D, D) out-proj
        sa_in_w = _uniform(next(keys), (3 * d_model, d_model), lim_in) * q_scale[:, None]
        sa_in_b = jnp.zeros((3 * d_model,), jnp.float32) * q_scale
        sa_out_w = _uniform(next(keys), (d_model, d_model), lim_o)
        sa_out_b = jnp.zeros((d_model,), jnp.float32)
        qkv_w.append(sa_in_w.T.astype(bf16))
        qkv_b.append(sa_in_b.reshape(1, 3 * d_model))
        aow.append(sa_out_w.T.astype(bf16))
        aob.append(sa_out_b.reshape(1, d_model))
        # cross-attention vs zero memory collapses to constant row bv @ Wo^T + bo
        ca_in_b = jnp.zeros((3 * d_model,), jnp.float32)
        _ = _uniform(next(keys), (3 * d_model, d_model), lim_in)   # ca_in_w unused
        ca_out_w = _uniform(next(keys), (d_model, d_model), lim_o)
        ca_out_b = jnp.zeros((d_model,), jnp.float32)
        bv = ca_in_b[2 * d_model:]
        ca_c.append(bv[None, :] @ ca_out_w.T + ca_out_b[None, :])
        # feed-forward
        lim1 = (6.0 / (d_model + ffn)) ** 0.5
        ff1 = _uniform(next(keys), (ffn, d_model), lim1)
        ff2 = _uniform(next(keys), (d_model, ffn), lim1)
        f1w.append(ff1.T.astype(bf16)); f1b.append(jnp.zeros((1, ffn), jnp.float32))
        f2w.append(ff2.T.astype(bf16)); f2b.append(jnp.zeros((1, d_model), jnp.float32))
        # layernorms (ln1, ln2, ln3)
        for _j in range(3):
            lng.append(jnp.ones((1, d_model), jnp.float32))
            lnb.append(jnp.zeros((1, d_model), jnp.float32))

    p['qkv_w'] = jnp.stack(qkv_w)          # (L, D, 3D)   bf16
    p['qkv_b'] = jnp.stack(qkv_b)          # (L, 1, 3D)   f32
    p['attn_out_w'] = jnp.stack(aow)       # (L, D, D)    bf16
    p['attn_out_b'] = jnp.stack(aob)       # (L, 1, D)    f32
    p['ca_const'] = jnp.stack(ca_c)        # (L, 1, D)    f32
    p['ln_g'] = jnp.stack(lng)             # (3L, 1, D)   f32
    p['ln_b'] = jnp.stack(lnb)             # (3L, 1, D)   f32
    p['ff1_w'] = jnp.stack(f1w)            # (L, D, ffn)  bf16
    p['ff1_b'] = jnp.stack(f1b)            # (L, 1, ffn)  f32
    p['ff2_w'] = jnp.stack(f2w)            # (L, ffn, D)  bf16
    p['ff2_b'] = jnp.stack(f2b)            # (L, 1, D)    f32

    # fc: xavier_uniform, bias 0.01, padded to Cpad=128 lanes; padded biases are
    # -1e30 so exp() underflows to exactly 0 and log_softmax is unchanged.
    Cpad = max(128, ((num_classes + 127) // 128) * 128)
    lim = (6.0 / (num_classes + d_model)) ** 0.5
    fc_w = _uniform(next(keys), (num_classes, d_model), lim).T     # (D, C)
    p['fc_w'] = jnp.zeros((d_model, Cpad), jnp.float32) \
        .at[:, :num_classes].set(fc_w).astype(bf16)                # (D, Cpad)
    p['fc_b'] = jnp.full((1, Cpad), -1e30, jnp.float32) \
        .at[:, :num_classes].set(0.01)
    return p


def transformer_ocr_forward(params, x, *, nhead, num_classes):
    B = x.shape[0]
    patches, Ho, Wo = im2col(x)                       # (B*Wo*Ho, Cin*9)
    K = patches.shape[1]
    patches = patches.reshape(B, Wo, Ho * K)          # free reshape (rows (b,wo,ho))
    logp = fused_ocr_model(patches, params, nhead=nhead)   # (B, S, Cpad) log-probs
    # drop the lane-padding classes and present (S, B, C) like the reference
    return logp[:, :, :num_classes].transpose(1, 0, 2)


# ----------------------------------------------------------------------------
if __name__ == "__main__":
    key = jax.random.PRNGKey(0)
    kx, kp = jax.random.split(key)

    # small, self-consistent config
    B, Cin, H, W = 2, 4, 16, 16
    Cout = 8                       # stand-in backbone channels
    Ho, Wo = H // 2, W // 2        # stride-2 stem -> S = Wo = 8
    d_model, nhead, num_layers = 32, 4, 2
    ffn = 2048                     # TransformerDecoderLayer default dim_feedforward
    num_classes = 16

    x = jax.random.normal(kx, (B, Cin, H, W), jnp.float32)
    params = init_params(kp, Cin, Cout, Ho, d_model, nhead, num_layers, ffn,
                         num_classes)

    fwd = jax.jit(functools.partial(transformer_ocr_forward, nhead=nhead,
                                    num_classes=num_classes))
    out = fwd(params, x)
    jax.block_until_ready(out)

    assert out.shape == (Wo, B, num_classes), out.shape
    # log_softmax rows should exponentiate-sum to ~1
    assert jnp.allclose(jnp.sum(jnp.exp(out), axis=-1), 1.0, atol=1e-3)
    print("KERNEL_OK")
</pallas_src>

<mosaic_0001>
module attributes {stable_mosaic.version = 11 : i64} {
  func.func @_fused_model_kernel(%arg0: i32, %arg1: memref<1x8x288xf32, #tpu.memory_space<vmem>>, %arg2: memref<288x64xbf16, #tpu.memory_space<vmem>>, %arg3: memref<1x64xf32, #tpu.memory_space<vmem>>, %arg4: memref<64x32xbf16, #tpu.memory_space<vmem>>, %arg5: memref<1x32xf32, #tpu.memory_space<vmem>>, %arg6: memref<2x32x96xbf16, #tpu.memory_space<vmem>>, %arg7: memref<2x1x96xf32, #tpu.memory_space<vmem>>, %arg8: memref<2x32x32xbf16, #tpu.memory_space<vmem>>, %arg9: memref<2x1x32xf32, #tpu.memory_space<vmem>>, %arg10: memref<2x1x32xf32, #tpu.memory_space<vmem>>, %arg11: memref<6x1x32xf32, #tpu.memory_space<vmem>>, %arg12: memref<6x1x32xf32, #tpu.memory_space<vmem>>, %arg13: memref<2x32x2048xbf16, #tpu.memory_space<vmem>>, %arg14: memref<2x1x2048xf32, #tpu.memory_space<vmem>>, %arg15: memref<2x2048x32xbf16, #tpu.memory_space<vmem>>, %arg16: memref<2x1x32xf32, #tpu.memory_space<vmem>>, %arg17: memref<32x128xbf16, #tpu.memory_space<vmem>>, %arg18: memref<1x128xf32, #tpu.memory_space<vmem>>, %arg19: memref<1x8x128xf32, #tpu.memory_space<vmem>>) attributes {dimension_semantics = [#tpu.dimension_semantics<parallel>], iteration_bounds = array<i64: 2>, scalar_prefetch = 0 : i64, scratch_operands = 0 : i64, tpu.core_type = #tpu.core_type<tc>, window_params = [{transform_indices = @transform_0, window_bounds = array<i64: 1, 8, 288>}, {pipeline_mode = #tpu.pipeline_mode<synchronous>, transform_indices = @transform_1, window_bounds = array<i64: 288, 64>}, {pipeline_mode = #tpu.pipeline_mode<synchronous>, transform_indices = @transform_2, window_bounds = array<i64: 1, 64>}, {pipeline_mode = #tpu.pipeline_mode<synchronous>, transform_indices = @transform_3, window_bounds = array<i64: 64, 32>}, {pipeline_mode = #tpu.pipeline_mode<synchronous>, transform_indices = @transform_4, window_bounds = array<i64: 1, 32>}, {pipeline_mode = #tpu.pipeline_mode<synchronous>, transform_indices = @transform_5, window_bounds = array<i64: 2, 32, 96>}, {pipeline_mode = #tpu.pipeline_mode<synchronous>, transform_indices = @transform_6, window_bounds = array<i64: 2, 1, 96>}, {pipeline_mode = #tpu.pipeline_mode<synchronous>, transform_indices = @transform_7, window_bounds = array<i64: 2, 32, 32>}, {pipeline_mode = #tpu.pipeline_mode<synchronous>, transform_indices = @transform_8, window_bounds = array<i64: 2, 1, 32>}, {pipeline_mode = #tpu.pipeline_mode<synchronous>, transform_indices = @transform_9, window_bounds = array<i64: 2, 1, 32>}, {pipeline_mode = #tpu.pipeline_mode<synchronous>, transform_indices = @transform_10, window_bounds = array<i64: 6, 1, 32>}, {pipeline_mode = #tpu.pipeline_mode<synchronous>, transform_indices = @transform_11, window_bounds = array<i64: 6, 1, 32>}, {pipeline_mode = #tpu.pipeline_mode<synchronous>, transform_indices = @transform_12, window_bounds = array<i64: 2, 32, 2048>}, {pipeline_mode = #tpu.pipeline_mode<synchronous>, transform_indices = @transform_13, window_bounds = array<i64: 2, 1, 2048>}, {pipeline_mode = #tpu.pipeline_mode<synchronous>, transform_indices = @transform_14, window_bounds = array<i64: 2, 2048, 32>}, {pipeline_mode = #tpu.pipeline_mode<synchronous>, transform_indices = @transform_15, window_bounds = array<i64: 2, 1, 32>}, {pipeline_mode = #tpu.pipeline_mode<synchronous>, transform_indices = @transform_16, window_bounds = array<i64: 32, 128>}, {pipeline_mode = #tpu.pipeline_mode<synchronous>, transform_indices = @transform_17, window_bounds = array<i64: 1, 128>}, {transform_indices = @transform_18, window_bounds = array<i64: 1, 8, 128>}]} {
    %c0 = arith.constant 0 : index
    %c0_0 = arith.constant 0 : index
    %c0_1 = arith.constant 0 : index
    %0 = vector.load %arg1[%c0, %c0_0, %c0_1] : memref<1x8x288xf32, #tpu.memory_space<vmem>>, vector<1x8x288xf32>
    %1 = vector.shape_cast %0 : vector<1x8x288xf32> to vector<8x288xf32>
    %2 = arith.truncf %1 : vector<8x288xf32> to vector<8x288xbf16>
    %c0_2 = arith.constant 0 : index
    %c0_3 = arith.constant 0 : index
    %3 = vector.load %arg2[%c0_2, %c0_3] : memref<288x64xbf16, #tpu.memory_space<vmem>>, vector<288x64xbf16>
    %cst = arith.constant dense<0.000000e+00> : vector<8x64xf32>
    %4 = tpu.matmul %2, %3, %cst {dimension_numbers = #tpu.dot_dimension_numbers<[1], [0], [0], [1], [0, 0, 1, 1], [], []>} : vector<8x288xbf16>, vector<288x64xbf16>, vector<8x64xf32> -> vector<8x64xf32>
    %c0_4 = arith.constant 0 : index
    %c0_5 = arith.constant 0 : index
    %5 = vector.load %arg3[%c0_4, %c0_5] : memref<1x64xf32, #tpu.memory_space<vmem>>, vector<1x64xf32>
    %6 = vector.broadcast %5 : vector<1x64xf32> to vector<8x64xf32>
    %7 = arith.addf %4, %6 : vector<8x64xf32>
    %cst_6 = arith.constant 0.000000e+00 : f32
    %8 = vector.broadcast %cst_6 : f32 to vector<8x64xf32>
    %9 = arith.maximumf %7, %8 : vector<8x64xf32>
    %10 = arith.truncf %9 : vector<8x64xf32> to vector<8x64xbf16>
    %c0_7 = arith.constant 0 : index
    %c0_8 = arith.constant 0 : index
    %11 = vector.load %arg4[%c0_7, %c0_8] : memref<64x32xbf16, #tpu.memory_space<vmem>>, vector<64x32xbf16>
    %cst_9 = arith.constant dense<0.000000e+00> : vector<8x32xf32>
    %12 = tpu.matmul %10, %11, %cst_9 {dimension_numbers = #tpu.dot_dimension_numbers<[1], [0], [0], [1], [0, 0, 1, 1], [], []>} : vector<8x64xbf16>, vector<64x32xbf16>, vector<8x32xf32> -> vector<8x32xf32>
    %c0_10 = arith.constant 0 : index
    %c0_11 = arith.constant 0 : index
    %13 = vector.load %arg5[%c0_10, %c0_11] : memref<1x32xf32, #tpu.memory_space<vmem>>, vector<1x32xf32>
    %14 = vector.broadcast %13 : vector<1x32xf32> to vector<8x32xf32>
    %15 = arith.addf %12, %14 : vector<8x32xf32>
    %cst_12 = arith.constant 0.000000e+00 : f32
    %16 = vector.broadcast %cst_12 : f32 to vector<8x32xf32>
    %17 = arith.maximumf %15, %16 : vector<8x32xf32>
    %18 = arith.truncf %17 : vector<8x32xf32> to vector<8x32xbf16>
    %c0_13 = arith.constant 0 : index
    %c0_14 = arith.constant 0 : index
    %c0_15 = arith.constant 0 : index
    %19 = vector.load %arg6[%c0_13, %c0_14, %c0_15] : memref<2x32x96xbf16, #tpu.memory_space<vmem>>, vector<1x32x96xbf16>
    %20 = vector.shape_cast %19 : vector<1x32x96xbf16> to vector<32x96xbf16>
    %cst_16 = arith.constant dense<0.000000e+00> : vector<8x96xf32>
    %21 = tpu.matmul %18, %20, %cst_16 {dimension_numbers = #tpu.dot_dimension_numbers<[1], [0], [0], [1], [0, 0, 1, 1], [], []>} : vector<8x32xbf16>, vector<32x96xbf16>, vector<8x96xf32> -> vector<8x96xf32>
    %c0_17 = arith.constant 0 : index
    %c0_18 = arith.constant 0 : index
    %c0_19 = arith.constant 0 : index
    %22 = vector.load %arg7[%c0_17, %c0_18, %c0_19] : memref<2x1x96xf32, #tpu.memory_space<vmem>>, vector<1x1x96xf32>
    %23 = vector.shape_cast %22 : vector<1x1x96xf32> to vector<1x96xf32>
    %24 = vector.broadcast %23 : vector<1x96xf32> to vector<8x96xf32>
    %25 = arith.addf %21, %24 : vector<8x96xf32>
    %26 = vector.shape_cast %25 : vector<8x96xf32> to vector<1x8x96xf32>
    %c0_20 = arith.constant 0 : index
    %c0_21 = arith.constant 0 : index
    %c0_22 = arith.constant 0 : index
    %27 = vector.load %arg8[%c0_20, %c0_21, %c0_22] : memref<2x32x32xbf16, #tpu.memory_space<vmem>>, vector<1x32x32xbf16>
    %28 = vector.shape_cast %27 : vector<1x32x32xbf16> to vector<32x32xbf16>
    %cst_23 = arith.constant 0.000000e+00 : f32
    %29 = vector.broadcast %cst_23 : f32 to vector<8x32xf32>
    %30 = vector.extract_strided_slice %26 {offsets = [0, 0, 0], sizes = [1, 8, 8], strides = [1, 1, 1]} : vector<1x8x96xf32> to vector<1x8x8xf32>
    %31 = arith.truncf %30 : vector<1x8x8xf32> to vector<1x8x8xbf16>
    %32 = vector.extract_strided_slice %26 {offsets = [0, 0, 32], sizes = [1, 8, 8], strides = [1, 1, 1]} : vector<1x8x96xf32> to vector<1x8x8xf32>
    %33 = arith.truncf %32 : vector<1x8x8xf32> to vector<1x8x8xbf16>
    %34 = vector.extract_strided_slice %26 {offsets = [0, 0, 64], sizes = [1, 8, 8], strides = [1, 1, 1]} : vector<1x8x96xf32> to vector<1x8x8xf32>
    %35 = arith.truncf %34 : vector<1x8x8xf32> to vector<1x8x8xbf16>
    "tpu.trace_start"() <{level = 10 : i32, message = "bqd,bkd->bqk"}> : () -> ()
    %cst_24 = arith.constant dense<0.000000e+00> : vector<1x8x8xf32>
    %36 = tpu.matmul %31, %33, %cst_24 {dimension_numbers = #tpu.dot_dimension_numbers<[2], [2], [1], [1], [0, 0, 0, 1, 1, 1], [0], [0]>} : vector<1x8x8xbf16>, vector<1x8x8xbf16>, vector<1x8x8xf32> -> vector<1x8x8xf32>
    "tpu.trace_stop"() : () -> ()
    %cst_25 = arith.constant dense<0xFF800000> : vector<1x8xf32>
    %37 = vector.multi_reduction <maximumf>, %36, %cst_25 [2] : vector<1x8x8xf32> to vector<1x8xf32>
    %38 = vector.shape_cast %37 : vector<1x8xf32> to vector<1x8x1xf32>
    %39 = vector.broadcast %38 : vector<1x8x1xf32> to vector<1x8x8xf32>
    %40 = arith.subf %36, %39 : vector<1x8x8xf32>
    %41 = math.exp %40 : vector<1x8x8xf32>
    %cst_26 = arith.constant dense<0.000000e+00> : vector<1x8xf32>
    %42 = vector.multi_reduction <add>, %41, %cst_26 [2] : vector<1x8x8xf32> to vector<1x8xf32>
    %43 = vector.shape_cast %42 : vector<1x8xf32> to vector<1x8x1xf32>
    %44 = tpu.reciprocal %43 {approx = true} : vector<1x8x1xf32> -> vector<1x8x1xf32>
    %45 = vector.broadcast %44 : vector<1x8x1xf32> to vector<1x8x8xf32>
    %46 = arith.mulf %41, %45 : vector<1x8x8xf32>
    %47 = arith.truncf %46 : vector<1x8x8xf32> to vector<1x8x8xbf16>
    "tpu.trace_start"() <{level = 10 : i32, message = "bqk,bkd->bqd"}> : () -> ()
    %cst_27 = arith.constant dense<0.000000e+00> : vector<1x8x8xf32>
    %48 = tpu.matmul %47, %35, %cst_27 {dimension_numbers = #tpu.dot_dimension_numbers<[2], [1], [1], [2], [0, 0, 0, 1, 1, 2], [0], [0]>} : vector<1x8x8xbf16>, vector<1x8x8xbf16>, vector<1x8x8xf32> -> vector<1x8x8xf32>
    "tpu.trace_stop"() : () -> ()
    %49 = vector.shape_cast %48 : vector<1x8x8xf32> to vector<8x8xf32>
    %50 = arith.truncf %49 : vector<8x8xf32> to vector<8x8xbf16>
    %51 = vector.extract_strided_slice %28 {offsets = [0, 0], sizes = [8, 32], strides = [1, 1]} : vector<32x32xbf16> to vector<8x32xbf16>
    %cst_28 = arith.constant dense<0.000000e+00> : vector<8x32xf32>
    %52 = tpu.matmul %50, %51, %cst_28 {dimension_numbers = #tpu.dot_dimension_numbers<[1], [0], [0], [1], [0, 0, 1, 1], [], []>} : vector<8x8xbf16>, vector<8x32xbf16>, vector<8x32xf32> -> vector<8x32xf32>
    %53 = arith.addf %29, %52 : vector<8x32xf32>
    %54 = vector.extract_strided_slice %26 {offsets = [0, 0, 8], sizes = [1, 8, 8], strides = [1, 1, 1]} : vector<1x8x96xf32> to vector<1x8x8xf32>
    %55 = arith.truncf %54 : vector<1x8x8xf32> to vector<1x8x8xbf16>
    %56 = vector.extract_strided_slice %26 {offsets = [0, 0, 40], sizes = [1, 8, 8], strides = [1, 1, 1]} : vector<1x8x96xf32> to vector<1x8x8xf32>
    %57 = arith.truncf %56 : vector<1x8x8xf32> to vector<1x8x8xbf16>
    %58 = vector.extract_strided_slice %26 {offsets = [0, 0, 72], sizes = [1, 8, 8], strides = [1, 1, 1]} : vector<1x8x96xf32> to vector<1x8x8xf32>
    %59 = arith.truncf %58 : vector<1x8x8xf32> to vector<1x8x8xbf16>
    "tpu.trace_start"() <{level = 10 : i32, message = "bqd,bkd->bqk"}> : () -> ()
    %cst_29 = arith.constant dense<0.000000e+00> : vector<1x8x8xf32>
    %60 = tpu.matmul %55, %57, %cst_29 {dimension_numbers = #tpu.dot_dimension_numbers<[2], [2], [1], [1], [0, 0, 0, 1, 1, 1], [0], [0]>} : vector<1x8x8xbf16>, vector<1x8x8xbf16>, vector<1x8x8xf32> -> vector<1x8x8xf32>
    "tpu.trace_stop"() : () -> ()
    %cst_30 = arith.constant dense<0xFF800000> : vector<1x8xf32>
    %61 = vector.multi_reduction <maximumf>, %60, %cst_30 [2] : vector<1x8x8xf32> to vector<1x8xf32>
    %62 = vector.shape_cast %61 : vector<1x8xf32> to vector<1x8x1xf32>
    %63 = vector.broadcast %62 : vector<1x8x1xf32> to vector<1x8x8xf32>
    %64 = arith.subf %60, %63 : vector<1x8x8xf32>
    %65 = math.exp %64 : vector<1x8x8xf32>
    %cst_31 = arith.constant dense<0.000000e+00> : vector<1x8xf32>
    %66 = vector.multi_reduction <add>, %65, %cst_31 [2] : vector<1x8x8xf32> to vector<1x8xf32>
    %67 = vector.shape_cast %66 : vector<1x8xf32> to vector<1x8x1xf32>
    %68 = tpu.reciprocal %67 {approx = true} : vector<1x8x1xf32> -> vector<1x8x1xf32>
    %69 = vector.broadcast %68 : vector<1x8x1xf32> to vector<1x8x8xf32>
    %70 = arith.mulf %65, %69 : vector<1x8x8xf32>
    %71 = arith.truncf %70 : vector<1x8x8xf32> to vector<1x8x8xbf16>
    "tpu.trace_start"() <{level = 10 : i32, message = "bqk,bkd->bqd"}> : () -> ()
    %cst_32 = arith.constant dense<0.000000e+00> : vector<1x8x8xf32>
    %72 = tpu.matmul %71, %59, %cst_32 {dimension_numbers = #tpu.dot_dimension_numbers<[2], [1], [1], [2], [0, 0, 0, 1, 1, 2], [0], [0]>} : vector<1x8x8xbf16>, vector<1x8x8xbf16>, vector<1x8x8xf32> -> vector<1x8x8xf32>
    "tpu.trace_stop"() : () -> ()
    %73 = vector.shape_cast %72 : vector<1x8x8xf32> to vector<8x8xf32>
    %74 = arith.truncf %73 : vector<8x8xf32> to vector<8x8xbf16>
    %75 = vector.extract_strided_slice %28 {offsets = [8, 0], sizes = [8, 32], strides = [1, 1]} : vector<32x32xbf16> to vector<8x32xbf16>
    %cst_33 = arith.constant dense<0.000000e+00> : vector<8x32xf32>
    %76 = tpu.matmul %74, %75, %cst_33 {dimension_numbers = #tpu.dot_dimension_numbers<[1], [0], [0], [1], [0, 0, 1, 1], [], []>} : vector<8x8xbf16>, vector<8x32xbf16>, vector<8x32xf32> -> vector<8x32xf32>
    %77 = arith.addf %53, %76 : vector<8x32xf32>
    %78 = vector.extract_strided_slice %26 {offsets = [0, 0, 16], sizes = [1, 8, 8], strides = [1, 1, 1]} : vector<1x8x96xf32> to vector<1x8x8xf32>
    %79 = arith.truncf %78 : vector<1x8x8xf32> to vector<1x8x8xbf16>
    %80 = vector.extract_strided_slice %26 {offsets = [0, 0, 48], sizes = [1, 8, 8], strides = [1, 1, 1]} : vector<1x8x96xf32> to vector<1x8x8xf32>
    %81 = arith.truncf %80 : vector<1x8x8xf32> to vector<1x8x8xbf16>
    %82 = vector.extract_strided_slice %26 {offsets = [0, 0, 80], sizes = [1, 8, 8], strides = [1, 1, 1]} : vector<1x8x96xf32> to vector<1x8x8xf32>
    %83 = arith.truncf %82 : vector<1x8x8xf32> to vector<1x8x8xbf16>
    "tpu.trace_start"() <{level = 10 : i32, message = "bqd,bkd->bqk"}> : () -> ()
    %cst_34 = arith.constant dense<0.000000e+00> : vector<1x8x8xf32>
    %84 = tpu.matmul %79, %81, %cst_34 {dimension_numbers = #tpu.dot_dimension_numbers<[2], [2], [1], [1], [0, 0, 0, 1, 1, 1], [0], [0]>} : vector<1x8x8xbf16>, vector<1x8x8xbf16>, vector<1x8x8xf32> -> vector<1x8x8xf32>
    "tpu.trace_stop"() : () -> ()
    %cst_35 = arith.constant dense<0xFF800000> : vector<1x8xf32>
    %85 = vector.multi_reduction <maximumf>, %84, %cst_35 [2] : vector<1x8x8xf32> to vector<1x8xf32>
    %86 = vector.shape_cast %85 : vector<1x8xf32> to vector<1x8x1xf32>
    %87 = vector.broadcast %86 : vector<1x8x1xf32> to vector<1x8x8xf32>
    %88 = arith.subf %84, %87 : vector<1x8x8xf32>
    %89 = math.exp %88 : vector<1x8x8xf32>
    %cst_36 = arith.constant dense<0.000000e+00> : vector<1x8xf32>
    %90 = vector.multi_reduction <add>, %89, %cst_36 [2] : vector<1x8x8xf32> to vector<1x8xf32>
    %91 = vector.shape_cast %90 : vector<1x8xf32> to vector<1x8x1xf32>
    %92 = tpu.reciprocal %91 {approx = true} : vector<1x8x1xf32> -> vector<1x8x1xf32>
    %93 = vector.broadcast %92 : vector<1x8x1xf32> to vector<1x8x8xf32>
    %94 = arith.mulf %89, %93 : vector<1x8x8xf32>
    %95 = arith.truncf %94 : vector<1x8x8xf32> to vector<1x8x8xbf16>
    "tpu.trace_start"() <{level = 10 : i32, message = "bqk,bkd->bqd"}> : () -> ()
    %cst_37 = arith.constant dense<0.000000e+00> : vector<1x8x8xf32>
    %96 = tpu.matmul %95, %83, %cst_37 {dimension_numbers = #tpu.dot_dimension_numbers<[2], [1], [1], [2], [0, 0, 0, 1, 1, 2], [0], [0]>} : vector<1x8x8xbf16>, vector<1x8x8xbf16>, vector<1x8x8xf32> -> vector<1x8x8xf32>
    "tpu.trace_stop"() : () -> ()
    %97 = vector.shape_cast %96 : vector<1x8x8xf32> to vector<8x8xf32>
    %98 = arith.truncf %97 : vector<8x8xf32> to vector<8x8xbf16>
    %99 = vector.extract_strided_slice %28 {offsets = [16, 0], sizes = [8, 32], strides = [1, 1]} : vector<32x32xbf16> to vector<8x32xbf16>
    %cst_38 = arith.constant dense<0.000000e+00> : vector<8x32xf32>
    %100 = tpu.matmul %98, %99, %cst_38 {dimension_numbers = #tpu.dot_dimension_numbers<[1], [0], [0], [1], [0, 0, 1, 1], [], []>} : vector<8x8xbf16>, vector<8x32xbf16>, vector<8x32xf32> -> vector<8x32xf32>
    %101 = arith.addf %77, %100 : vector<8x32xf32>
    %102 = vector.extract_strided_slice %26 {offsets = [0, 0, 24], sizes = [1, 8, 8], strides = [1, 1, 1]} : vector<1x8x96xf32> to vector<1x8x8xf32>
    %103 = arith.truncf %102 : vector<1x8x8xf32> to vector<1x8x8xbf16>
    %104 = vector.extract_strided_slice %26 {offsets = [0, 0, 56], sizes = [1, 8, 8], strides = [1, 1, 1]} : vector<1x8x96xf32> to vector<1x8x8xf32>
    %105 = arith.truncf %104 : vector<1x8x8xf32> to vector<1x8x8xbf16>
    %106 = vector.extract_strided_slice %26 {offsets = [0, 0, 88], sizes = [1, 8, 8], strides = [1, 1, 1]} : vector<1x8x96xf32> to vector<1x8x8xf32>
    %107 = arith.truncf %106 : vector<1x8x8xf32> to vector<1x8x8xbf16>
    "tpu.trace_start"() <{level = 10 : i32, message = "bqd,bkd->bqk"}> : () -> ()
    %cst_39 = arith.constant dense<0.000000e+00> : vector<1x8x8xf32>
    %108 = tpu.matmul %103, %105, %cst_39 {dimension_numbers = #tpu.dot_dimension_numbers<[2], [2], [1], [1], [0, 0, 0, 1, 1, 1], [0], [0]>} : vector<1x8x8xbf16>, vector<1x8x8xbf16>, vector<1x8x8xf32> -> vector<1x8x8xf32>
    "tpu.trace_stop"() : () -> ()
    %cst_40 = arith.constant dense<0xFF800000> : vector<1x8xf32>
    %109 = vector.multi_reduction <maximumf>, %108, %cst_40 [2] : vector<1x8x8xf32> to vector<1x8xf32>
    %110 = vector.shape_cast %109 : vector<1x8xf32> to vector<1x8x1xf32>
    %111 = vector.broadcast %110 : vector<1x8x1xf32> to vector<1x8x8xf32>
    %112 = arith.subf %108, %111 : vector<1x8x8xf32>
    %113 = math.exp %112 : vector<1x8x8xf32>
    %cst_41 = arith.constant dense<0.000000e+00> : vector<1x8xf32>
    %114 = vector.multi_reduction <add>, %113, %cst_41 [2] : vector<1x8x8xf32> to vector<1x8xf32>
    %115 = vector.shape_cast %114 : vector<1x8xf32> to vector<1x8x1xf32>
    %116 = tpu.reciprocal %115 {approx = true} : vector<1x8x1xf32> -> vector<1x8x1xf32>
    %117 = vector.broadcast %116 : vector<1x8x1xf32> to vector<1x8x8xf32>
    %118 = arith.mulf %113, %117 : vector<1x8x8xf32>
    %119 = arith.truncf %118 : vector<1x8x8xf32> to vector<1x8x8xbf16>
    "tpu.trace_start"() <{level = 10 : i32, message = "bqk,bkd->bqd"}> : () -> ()
    %cst_42 = arith.constant dense<0.000000e+00> : vector<1x8x8xf32>
    %120 = tpu.matmul %119, %107, %cst_42 {dimension_numbers = #tpu.dot_dimension_numbers<[2], [1], [1], [2], [0, 0, 0, 1, 1, 2], [0], [0]>} : vector<1x8x8xbf16>, vector<1x8x8xbf16>, vector<1x8x8xf32> -> vector<1x8x8xf32>
    "tpu.trace_stop"() : () -> ()
    %121 = vector.shape_cast %120 : vector<1x8x8xf32> to vector<8x8xf32>
    %122 = arith.truncf %121 : vector<8x8xf32> to vector<8x8xbf16>
    %123 = vector.extract_strided_slice %28 {offsets = [24, 0], sizes = [8, 32], strides = [1, 1]} : vector<32x32xbf16> to vector<8x32xbf16>
    %cst_43 = arith.constant dense<0.000000e+00> : vector<8x32xf32>
    %124 = tpu.matmul %122, %123, %cst_43 {dimension_numbers = #tpu.dot_dimension_numbers<[1], [0], [0], [1], [0, 0, 1, 1], [], []>} : vector<8x8xbf16>, vector<8x32xbf16>, vector<8x32xf32> -> vector<8x32xf32>
    %125 = arith.addf %101, %124 : vector<8x32xf32>
    %c0_44 = arith.constant 0 : index
    %c0_45 = arith.constant 0 : index
    %c0_46 = arith.constant 0 : index
    %126 = vector.load %arg9[%c0_44, %c0_45, %c0_46] : memref<2x1x32xf32, #tpu.memory_space<vmem>>, vector<1x1x32xf32>
    %127 = vector.shape_cast %126 : vector<1x1x32xf32> to vector<1x32xf32>
    %128 = vector.broadcast %127 : vector<1x32xf32> to vector<8x32xf32>
    %129 = arith.addf %125, %128 : vector<8x32xf32>
    %130 = arith.addf %17, %129 : vector<8x32xf32>
    %cst_47 = arith.constant dense<0.000000e+00> : vector<8xf32>
    %131 = vector.multi_reduction <add>, %130, %cst_47 [1] : vector<8x32xf32> to vector<8xf32>
    %132 = vector.shape_cast %131 : vector<8xf32> to vector<8x1xf32>
    %cst_48 = arith.constant 3.200000e+01 : f32
    %133 = vector.broadcast %cst_48 : f32 to vector<8x1xf32>
    %134 = arith.divf %132, %133 : vector<8x1xf32>
    %135 = vector.broadcast %134 : vector<8x1xf32> to vector<8x32xf32>
    %136 = arith.subf %130, %135 : vector<8x32xf32>
    %137 = arith.mulf %136, %136 : vector<8x32xf32>
    %cst_49 = arith.constant dense<0.000000e+00> : vector<8xf32>
    %138 = vector.multi_reduction <add>, %137, %cst_49 [1] : vector<8x32xf32> to vector<8xf32>
    %139 = vector.shape_cast %138 : vector<8xf32> to vector<8x1xf32>
    %cst_50 = arith.constant 3.200000e+01 : f32
    %140 = vector.broadcast %cst_50 : f32 to vector<8x1xf32>
    %141 = arith.divf %139, %140 : vector<8x1xf32>
    %cst_51 = arith.constant 9.99999974E-6 : f32
    %142 = vector.broadcast %cst_51 : f32 to vector<8x1xf32>
    %143 = arith.addf %141, %142 : vector<8x1xf32>
    %144 = math.rsqrt %143 : vector<8x1xf32>
    %145 = vector.broadcast %144 : vector<8x1xf32> to vector<8x32xf32>
    %146 = arith.mulf %136, %145 : vector<8x32xf32>
    %c0_52 = arith.constant 0 : index
    %c0_53 = arith.constant 0 : index
    %c0_54 = arith.constant 0 : index
    %147 = vector.load %arg11[%c0_52, %c0_53, %c0_54] : memref<6x1x32xf32, #tpu.memory_space<vmem>>, vector<1x1x32xf32>
    %148 = vector.shape_cast %147 : vector<1x1x32xf32> to vector<1x32xf32>
    %149 = vector.broadcast %148 : vector<1x32xf32> to vector<8x32xf32>
    %150 = arith.mulf %146, %149 : vector<8x32xf32>
    %c0_55 = arith.constant 0 : index
    %c0_56 = arith.constant 0 : index
    %c0_57 = arith.constant 0 : index
    %151 = vector.load %arg12[%c0_55, %c0_56, %c0_57] : memref<6x1x32xf32, #tpu.memory_space<vmem>>, vector<1x1x32xf32>
    %152 = vector.shape_cast %151 : vector<1x1x32xf32> to vector<1x32xf32>
    %153 = vector.broadcast %152 : vector<1x32xf32> to vector<8x32xf32>
    %154 = arith.addf %150, %153 : vector<8x32xf32>
    %c0_58 = arith.constant 0 : index
    %c0_59 = arith.constant 0 : index
    %c0_60 = arith.constant 0 : index
    %155 = vector.load %arg10[%c0_58, %c0_59, %c0_60] : memref<2x1x32xf32, #tpu.memory_space<vmem>>, vector<1x1x32xf32>
    %156 = vector.shape_cast %155 : vector<1x1x32xf32> to vector<1x32xf32>
    %157 = vector.broadcast %156 : vector<1x32xf32> to vector<8x32xf32>
    %158 = arith.addf %154, %157 : vector<8x32xf32>
    %cst_61 = arith.constant dense<0.000000e+00> : vector<8xf32>
    %159 = vector.multi_reduction <add>, %158, %cst_61 [1] : vector<8x32xf32> to vector<8xf32>
    %160 = vector.shape_cast %159 : vector<8xf32> to vector<8x1xf32>
    %cst_62 = arith.constant 3.200000e+01 : f32
    %161 = vector.broadcast %cst_62 : f32 to vector<8x1xf32>
    %162 = arith.divf %160, %161 : vector<8x1xf32>
    %163 = vector.broadcast %162 : vector<8x1xf32> to vector<8x32xf32>
    %164 = arith.subf %158, %163 : vector<8x32xf32>
    %165 = arith.mulf %164, %164 : vector<8x32xf32>
    %cst_63 = arith.constant dense<0.000000e+00> : vector<8xf32>
    %166 = vector.multi_reduction <add>, %165, %cst_63 [1] : vector<8x32xf32> to vector<8xf32>
    %167 = vector.shape_cast %166 : vector<8xf32> to vector<8x1xf32>
    %cst_64 = arith.constant 3.200000e+01 : f32
    %168 = vector.broadcast %cst_64 : f32 to vector<8x1xf32>
    %169 = arith.divf %167, %168 : vector<8x1xf32>
    %cst_65 = arith.constant 9.99999974E-6 : f32
    %170 = vector.broadcast %cst_65 : f32 to vector<8x1xf32>
    %171 = arith.addf %169, %170 : vector<8x1xf32>
    %172 = math.rsqrt %171 : vector<8x1xf32>
    %173 = vector.broadcast %172 : vector<8x1xf32> to vector<8x32xf32>
    %174 = arith.mulf %164, %173 : vector<8x32xf32>
    %c1 = arith.constant 1 : index
    %c0_66 = arith.constant 0 : index
    %c0_67 = arith.constant 0 : index
    %175 = vector.load %arg11[%c1, %c0_66, %c0_67] : memref<6x1x32xf32, #tpu.memory_space<vmem>>, vector<1x1x32xf32>
    %176 = vector.shape_cast %175 : vector<1x1x32xf32> to vector<1x32xf32>
    %177 = vector.broadcast %176 : vector<1x32xf32> to vector<8x32xf32>
    %178 = arith.mulf %174, %177 : vector<8x32xf32>
    %c1_68 = arith.constant 1 : index
    %c0_69 = arith.constant 0 : index
    %c0_70 = arith.constant 0 : index
    %179 = vector.load %arg12[%c1_68, %c0_69, %c0_70] : memref<6x1x32xf32, #tpu.memory_space<vmem>>, vector<1x1x32xf32>
    %180 = vector.shape_cast %179 : vector<1x1x32xf32> to vector<1x32xf32>
    %181 = vector.broadcast %180 : vector<1x32xf32> to vector<8x32xf32>
    %182 = arith.addf %178, %181 : vector<8x32xf32>
    %183 = arith.truncf %182 : vector<8x32xf32> to vector<8x32xbf16>
    %c0_71 = arith.constant 0 : index
    %c0_72 = arith.constant 0 : index
    %c0_73 = arith.constant 0 : index
    %184 = vector.load %arg13[%c0_71, %c0_72, %c0_73] : memref<2x32x2048xbf16, #tpu.memory_space<vmem>>, vector<1x32x2048xbf16>
    %185 = vector.shape_cast %184 : vector<1x32x2048xbf16> to vector<32x2048xbf16>
    %cst_74 = arith.constant dense<0.000000e+00> : vector<8x2048xf32>
    %186 = tpu.matmul %183, %185, %cst_74 {dimension_numbers = #tpu.dot_dimension_numbers<[1], [0], [0], [1], [0, 0, 1, 1], [], []>} : vector<8x32xbf16>, vector<32x2048xbf16>, vector<8x2048xf32> -> vector<8x2048xf32>
    %c0_75 = arith.constant 0 : index
    %c0_76 = arith.constant 0 : index
    %c0_77 = arith.constant 0 : index
    %187 = vector.load %arg14[%c0_75, %c0_76, %c0_77] : memref<2x1x2048xf32, #tpu.memory_space<vmem>>, vector<1x1x2048xf32>
    %188 = vector.shape_cast %187 : vector<1x1x2048xf32> to vector<1x2048xf32>
    %189 = vector.broadcast %188 : vector<1x2048xf32> to vector<8x2048xf32>
    %190 = arith.addf %186, %189 : vector<8x2048xf32>
    %cst_78 = arith.constant 0.000000e+00 : f32
    %191 = vector.broadcast %cst_78 : f32 to vector<8x2048xf32>
    %192 = arith.maximumf %190, %191 : vector<8x2048xf32>
    %193 = arith.truncf %192 : vector<8x2048xf32> to vector<8x2048xbf16>
    %c0_79 = arith.constant 0 : index
    %c0_80 = arith.constant 0 : index
    %c0_81 = arith.constant 0 : index
    %194 = vector.load %arg15[%c0_79, %c0_80, %c0_81] : memref<2x2048x32xbf16, #tpu.memory_space<vmem>>, vector<1x2048x32xbf16>
    %195 = vector.shape_cast %194 : vector<1x2048x32xbf16> to vector<2048x32xbf16>
    %cst_82 = arith.constant dense<0.000000e+00> : vector<8x32xf32>
    %196 = tpu.matmul %193, %195, %cst_82 {dimension_numbers = #tpu.dot_dimension_numbers<[1], [0], [0], [1], [0, 0, 1, 1], [], []>} : vector<8x2048xbf16>, vector<2048x32xbf16>, vector<8x32xf32> -> vector<8x32xf32>
    %c0_83 = arith.constant 0 : index
    %c0_84 = arith.constant 0 : index
    %c0_85 = arith.constant 0 : index
    %197 = vector.load %arg16[%c0_83, %c0_84, %c0_85] : memref<2x1x32xf32, #tpu.memory_space<vmem>>, vector<1x1x32xf32>
    %198 = vector.shape_cast %197 : vector<1x1x32xf32> to vector<1x32xf32>
    %199 = vector.broadcast %198 : vector<1x32xf32> to vector<8x32xf32>
    %200 = arith.addf %196, %199 : vector<8x32xf32>
    %201 = arith.addf %182, %200 : vector<8x32xf32>
    %cst_86 = arith.constant dense<0.000000e+00> : vector<8xf32>
    %202 = vector.multi_reduction <add>, %201, %cst_86 [1] : vector<8x32xf32> to vector<8xf32>
    %203 = vector.shape_cast %202 : vector<8xf32> to vector<8x1xf32>
    %cst_87 = arith.constant 3.200000e+01 : f32
    %204 = vector.broadcast %cst_87 : f32 to vector<8x1xf32>
    %205 = arith.divf %203, %204 : vector<8x1xf32>
    %206 = vector.broadcast %205 : vector<8x1xf32> to vector<8x32xf32>
    %207 = arith.subf %201, %206 : vector<8x32xf32>
    %208 = arith.mulf %207, %207 : vector<8x32xf32>
    %cst_88 = arith.constant dense<0.000000e+00> : vector<8xf32>
    %209 = vector.multi_reduction <add>, %208, %cst_88 [1] : vector<8x32xf32> to vector<8xf32>
    %210 = vector.shape_cast %209 : vector<8xf32> to vector<8x1xf32>
    %cst_89 = arith.constant 3.200000e+01 : f32
    %211 = vector.broadcast %cst_89 : f32 to vector<8x1xf32>
    %212 = arith.divf %210, %211 : vector<8x1xf32>
    %cst_90 = arith.constant 9.99999974E-6 : f32
    %213 = vector.broadcast %cst_90 : f32 to vector<8x1xf32>
    %214 = arith.addf %212, %213 : vector<8x1xf32>
    %215 = math.rsqrt %214 : vector<8x1xf32>
    %216 = vector.broadcast %215 : vector<8x1xf32> to vector<8x32xf32>
    %217 = arith.mulf %207, %216 : vector<8x32xf32>
    %c2 = arith.constant 2 : index
    %c0_91 = arith.constant 0 : index
    %c0_92 = arith.constant 0 : index
    %218 = vector.load %arg11[%c2, %c0_91, %c0_92] : memref<6x1x32xf32, #tpu.memory_space<vmem>>, vector<1x1x32xf32>
    %219 = vector.shape_cast %218 : vector<1x1x32xf32> to vector<1x32xf32>
    %220 = vector.broadcast %219 : vector<1x32xf32> to vector<8x32xf32>
    %221 = arith.mulf %217, %220 : vector<8x32xf32>
    %c2_93 = arith.constant 2 : index
    %c0_94 = arith.constant 0 : index
    %c0_95 = arith.constant 0 : index
    %222 = vector.load %arg12[%c2_93, %c0_94, %c0_95] : memref<6x1x32xf32, #tpu.memory_space<vmem>>, vector<1x1x32xf32>
    %223 = vector.shape_cast %222 : vector<1x1x32xf32> to vector<1x32xf32>
    %224 = vector.broadcast %223 : vector<1x32xf32> to vector<8x32xf32>
    %225 = arith.addf %221, %224 : vector<8x32xf32>
    %226 = arith.truncf %225 : vector<8x32xf32> to vector<8x32xbf16>
    %c1_96 = arith.constant 1 : index
    %c0_97 = arith.constant 0 : index
    %c0_98 = arith.constant 0 : index
    %227 = vector.load %arg6[%c1_96, %c0_97, %c0_98] : memref<2x32x96xbf16, #tpu.memory_space<vmem>>, vector<1x32x96xbf16>
    %228 = vector.shape_cast %227 : vector<1x32x96xbf16> to vector<32x96xbf16>
    %cst_99 = arith.constant dense<0.000000e+00> : vector<8x96xf32>
    %229 = tpu.matmul %226, %228, %cst_99 {dimension_numbers = #tpu.dot_dimension_numbers<[1], [0], [0], [1], [0, 0, 1, 1], [], []>} : vector<8x32xbf16>, vector<32x96xbf16>, vector<8x96xf32> -> vector<8x96xf32>
    %c1_100 = arith.constant 1 : index
    %c0_101 = arith.constant 0 : index
    %c0_102 = arith.constant 0 : index
    %230 = vector.load %arg7[%c1_100, %c0_101, %c0_102] : memref<2x1x96xf32, #tpu.memory_space<vmem>>, vector<1x1x96xf32>
    %231 = vector.shape_cast %230 : vector<1x1x96xf32> to vector<1x96xf32>
    %232 = vector.broadcast %231 : vector<1x96xf32> to vector<8x96xf32>
    %233 = arith.addf %229, %232 : vector<8x96xf32>
    %234 = vector.shape_cast %233 : vector<8x96xf32> to vector<1x8x96xf32>
    %c1_103 = arith.constant 1 : index
    %c0_104 = arith.constant 0 : index
    %c0_105 = arith.constant 0 : index
    %235 = vector.load %arg8[%c1_103, %c0_104, %c0_105] : memref<2x32x32xbf16, #tpu.memory_space<vmem>>, vector<1x32x32xbf16>
    %236 = vector.shape_cast %235 : vector<1x32x32xbf16> to vector<32x32xbf16>
    %cst_106 = arith.constant 0.000000e+00 : f32
    %237 = vector.broadcast %cst_106 : f32 to vector<8x32xf32>
    %238 = vector.extract_strided_slice %234 {offsets = [0, 0, 0], sizes = [1, 8, 8], strides = [1, 1, 1]} : vector<1x8x96xf32> to vector<1x8x8xf32>
    %239 = arith.truncf %238 : vector<1x8x8xf32> to vector<1x8x8xbf16>
    %240 = vector.extract_strided_slice %234 {offsets = [0, 0, 32], sizes = [1, 8, 8], strides = [1, 1, 1]} : vector<1x8x96xf32> to vector<1x8x8xf32>
    %241 = arith.truncf %240 : vector<1x8x8xf32> to vector<1x8x8xbf16>
    %242 = vector.extract_strided_slice %234 {offsets = [0, 0, 64], sizes = [1, 8, 8], strides = [1, 1, 1]} : vector<1x8x96xf32> to vector<1x8x8xf32>
    %243 = arith.truncf %242 : vector<1x8x8xf32> to vector<1x8x8xbf16>
    "tpu.trace_start"() <{level = 10 : i32, message = "bqd,bkd->bqk"}> : () -> ()
    %cst_107 = arith.constant dense<0.000000e+00> : vector<1x8x8xf32>
    %244 = tpu.matmul %239, %241, %cst_107 {dimension_numbers = #tpu.dot_dimension_numbers<[2], [2], [1], [1], [0, 0, 0, 1, 1, 1], [0], [0]>} : vector<1x8x8xbf16>, vector<1x8x8xbf16>, vector<1x8x8xf32> -> vector<1x8x8xf32>
    "tpu.trace_stop"() : () -> ()
    %cst_108 = arith.constant dense<0xFF800000> : vector<1x8xf32>
    %245 = vector.multi_reduction <maximumf>, %244, %cst_108 [2] : vector<1x8x8xf32> to vector<1x8xf32>
    %246 = vector.shape_cast %245 : vector<1x8xf32> to vector<1x8x1xf32>
    %247 = vector.broadcast %246 : vector<1x8x1xf32> to vector<1x8x8xf32>
    %248 = arith.subf %244, %247 : vector<1x8x8xf32>
    %249 = math.exp %248 : vector<1x8x8xf32>
    %cst_109 = arith.constant dense<0.000000e+00> : vector<1x8xf32>
    %250 = vector.multi_reduction <add>, %249, %cst_109 [2] : vector<1x8x8xf32> to vector<1x8xf32>
    %251 = vector.shape_cast %250 : vector<1x8xf32> to vector<1x8x1xf32>
    %252 = tpu.reciprocal %251 {approx = true} : vector<1x8x1xf32> -> vector<1x8x1xf32>
    %253 = vector.broadcast %252 : vector<1x8x1xf32> to vector<1x8x8xf32>
    %254 = arith.mulf %249, %253 : vector<1x8x8xf32>
    %255 = arith.truncf %254 : vector<1x8x8xf32> to vector<1x8x8xbf16>
    "tpu.trace_start"() <{level = 10 : i32, message = "bqk,bkd->bqd"}> : () -> ()
    %cst_110 = arith.constant dense<0.000000e+00> : vector<1x8x8xf32>
    %256 = tpu.matmul %255, %243, %cst_110 {dimension_numbers = #tpu.dot_dimension_numbers<[2], [1], [1], [2], [0, 0, 0, 1, 1, 2], [0], [0]>} : vector<1x8x8xbf16>, vector<1x8x8xbf16>, vector<1x8x8xf32> -> vector<1x8x8xf32>
    "tpu.trace_stop"() : () -> ()
    %257 = vector.shape_cast %256 : vector<1x8x8xf32> to vector<8x8xf32>
    %258 = arith.truncf %257 : vector<8x8xf32> to vector<8x8xbf16>
    %259 = vector.extract_strided_slice %236 {offsets = [0, 0], sizes = [8, 32], strides = [1, 1]} : vector<32x32xbf16> to vector<8x32xbf16>
    %cst_111 = arith.constant dense<0.000000e+00> : vector<8x32xf32>
    %260 = tpu.matmul %258, %259, %cst_111 {dimension_numbers = #tpu.dot_dimension_numbers<[1], [0], [0], [1], [0, 0, 1, 1], [], []>} : vector<8x8xbf16>, vector<8x32xbf16>, vector<8x32xf32> -> vector<8x32xf32>
    %261 = arith.addf %237, %260 : vector<8x32xf32>
    %262 = vector.extract_strided_slice %234 {offsets = [0, 0, 8], sizes = [1, 8, 8], strides = [1, 1, 1]} : vector<1x8x96xf32> to vector<1x8x8xf32>
    %263 = arith.truncf %262 : vector<1x8x8xf32> to vector<1x8x8xbf16>
    %264 = vector.extract_strided_slice %234 {offsets = [0, 0, 40], sizes = [1, 8, 8], strides = [1, 1, 1]} : vector<1x8x96xf32> to vector<1x8x8xf32>
    %265 = arith.truncf %264 : vector<1x8x8xf32> to vector<1x8x8xbf16>
    %266 = vector.extract_strided_slice %234 {offsets = [0, 0, 72], sizes = [1, 8, 8], strides = [1, 1, 1]} : vector<1x8x96xf32> to vector<1x8x8xf32>
    %267 = arith.truncf %266 : vector<1x8x8xf32> to vector<1x8x8xbf16>
    "tpu.trace_start"() <{level = 10 : i32, message = "bqd,bkd->bqk"}> : () -> ()
    %cst_112 = arith.constant dense<0.000000e+00> : vector<1x8x8xf32>
    %268 = tpu.matmul %263, %265, %cst_112 {dimension_numbers = #tpu.dot_dimension_numbers<[2], [2], [1], [1], [0, 0, 0, 1, 1, 1], [0], [0]>} : vector<1x8x8xbf16>, vector<1x8x8xbf16>, vector<1x8x8xf32> -> vector<1x8x8xf32>
    "tpu.trace_stop"() : () -> ()
    %cst_113 = arith.constant dense<0xFF800000> : vector<1x8xf32>
    %269 = vector.multi_reduction <maximumf>, %268, %cst_113 [2] : vector<1x8x8xf32> to vector<1x8xf32>
    %270 = vector.shape_cast %269 : vector<1x8xf32> to vector<1x8x1xf32>
    %271 = vector.broadcast %270 : vector<1x8x1xf32> to vector<1x8x8xf32>
    %272 = arith.subf %268, %271 : vector<1x8x8xf32>
    %273 = math.exp %272 : vector<1x8x8xf32>
    %cst_114 = arith.constant dense<0.000000e+00> : vector<1x8xf32>
    %274 = vector.multi_reduction <add>, %273, %cst_114 [2] : vector<1x8x8xf32> to vector<1x8xf32>
    %275 = vector.shape_cast %274 : vector<1x8xf32> to vector<1x8x1xf32>
    %276 = tpu.reciprocal %275 {approx = true} : vector<1x8x1xf32> -> vector<1x8x1xf32>
    %277 = vector.broadcast %276 : vector<1x8x1xf32> to vector<1x8x8xf32>
    %278 = arith.mulf %273, %277 : vector<1x8x8xf32>
    %279 = arith.truncf %278 : vector<1x8x8xf32> to vector<1x8x8xbf16>
    "tpu.trace_start"() <{level = 10 : i32, message = "bqk,bkd->bqd"}> : () -> ()
    %cst_115 = arith.constant dense<0.000000e+00> : vector<1x8x8xf32>
    %280 = tpu.matmul %279, %267, %cst_115 {dimension_numbers = #tpu.dot_dimension_numbers<[2], [1], [1], [2], [0, 0, 0, 1, 1, 2], [0], [0]>} : vector<1x8x8xbf16>, vector<1x8x8xbf16>, vector<1x8x8xf32> -> vector<1x8x8xf32>
    "tpu.trace_stop"() : () -> ()
    %281 = vector.shape_cast %280 : vector<1x8x8xf32> to vector<8x8xf32>
    %282 = arith.truncf %281 : vector<8x8xf32> to vector<8x8xbf16>
    %283 = vector.extract_strided_slice %236 {offsets = [8, 0], sizes = [8, 32], strides = [1, 1]} : vector<32x32xbf16> to vector<8x32xbf16>
    %cst_116 = arith.constant dense<0.000000e+00> : vector<8x32xf32>
    %284 = tpu.matmul %282, %283, %cst_116 {dimension_numbers = #tpu.dot_dimension_numbers<[1], [0], [0], [1], [0, 0, 1, 1], [], []>} : vector<8x8xbf16>, vector<8x32xbf16>, vector<8x32xf32> -> vector<8x32xf32>
    %285 = arith.addf %261, %284 : vector<8x32xf32>
    %286 = vector.extract_strided_slice %234 {offsets = [0, 0, 16], sizes = [1, 8, 8], strides = [1, 1, 1]} : vector<1x8x96xf32> to vector<1x8x8xf32>
    %287 = arith.truncf %286 : vector<1x8x8xf32> to vector<1x8x8xbf16>
    %288 = vector.extract_strided_slice %234 {offsets = [0, 0, 48], sizes = [1, 8, 8], strides = [1, 1, 1]} : vector<1x8x96xf32> to vector<1x8x8xf32>
    %289 = arith.truncf %288 : vector<1x8x8xf32> to vector<1x8x8xbf16>
    %290 = vector.extract_strided_slice %234 {offsets = [0, 0, 80], sizes = [1, 8, 8], strides = [1, 1, 1]} : vector<1x8x96xf32> to vector<1x8x8xf32>
    %291 = arith.truncf %290 : vector<1x8x8xf32> to vector<1x8x8xbf16>
    "tpu.trace_start"() <{level = 10 : i32, message = "bqd,bkd->bqk"}> : () -> ()
    %cst_117 = arith.constant dense<0.000000e+00> : vector<1x8x8xf32>
    %292 = tpu.matmul %287, %289, %cst_117 {dimension_numbers = #tpu.dot_dimension_numbers<[2], [2], [1], [1], [0, 0, 0, 1, 1, 1], [0], [0]>} : vector<1x8x8xbf16>, vector<1x8x8xbf16>, vector<1x8x8xf32> -> vector<1x8x8xf32>
    "tpu.trace_stop"() : () -> ()
    %cst_118 = arith.constant dense<0xFF800000> : vector<1x8xf32>
    %293 = vector.multi_reduction <maximumf>, %292, %cst_118 [2] : vector<1x8x8xf32> to vector<1x8xf32>
    %294 = vector.shape_cast %293 : vector<1x8xf32> to vector<1x8x1xf32>
    %295 = vector.broadcast %294 : vector<1x8x1xf32> to vector<1x8x8xf32>
    %296 = arith.subf %292, %295 : vector<1x8x8xf32>
    %297 = math.exp %296 : vector<1x8x8xf32>
    %cst_119 = arith.constant dense<0.000000e+00> : vector<1x8xf32>
    %298 = vector.multi_reduction <add>, %297, %cst_119 [2] : vector<1x8x8xf32> to vector<1x8xf32>
    %299 = vector.shape_cast %298 : vector<1x8xf32> to vector<1x8x1xf32>
    %300 = tpu.reciprocal %299 {approx = true} : vector<1x8x1xf32> -> vector<1x8x1xf32>
    %301 = vector.broadcast %300 : vector<1x8x1xf32> to vector<1x8x8xf32>
    %302 = arith.mulf %297, %301 : vector<1x8x8xf32>
    %303 = arith.truncf %302 : vector<1x8x8xf32> to vector<1x8x8xbf16>
    "tpu.trace_start"() <{level = 10 : i32, message = "bqk,bkd->bqd"}> : () -> ()
    %cst_120 = arith.constant dense<0.000000e+00> : vector<1x8x8xf32>
    %304 = tpu.matmul %303, %291, %cst_120 {dimension_numbers = #tpu.dot_dimension_numbers<[2], [1], [1], [2], [0, 0, 0, 1, 1, 2], [0], [0]>} : vector<1x8x8xbf16>, vector<1x8x8xbf16>, vector<1x8x8xf32> -> vector<1x8x8xf32>
    "tpu.trace_stop"() : () -> ()
    %305 = vector.shape_cast %304 : vector<1x8x8xf32> to vector<8x8xf32>
    %306 = arith.truncf %305 : vector<8x8xf32> to vector<8x8xbf16>
    %307 = vector.extract_strided_slice %236 {offsets = [16, 0], sizes = [8, 32], strides = [1, 1]} : vector<32x32xbf16> to vector<8x32xbf16>
    %cst_121 = arith.constant dense<0.000000e+00> : vector<8x32xf32>
    %308 = tpu.matmul %306, %307, %cst_121 {dimension_numbers = #tpu.dot_dimension_numbers<[1], [0], [0], [1], [0, 0, 1, 1], [], []>} : vector<8x8xbf16>, vector<8x32xbf16>, vector<8x32xf32> -> vector<8x32xf32>
    %309 = arith.addf %285, %308 : vector<8x32xf32>
    %310 = vector.extract_strided_slice %234 {offsets = [0, 0, 24], sizes = [1, 8, 8], strides = [1, 1, 1]} : vector<1x8x96xf32> to vector<1x8x8xf32>
    %311 = arith.truncf %310 : vector<1x8x8xf32> to vector<1x8x8xbf16>
    %312 = vector.extract_strided_slice %234 {offsets = [0, 0, 56], sizes = [1, 8, 8], strides = [1, 1, 1]} : vector<1x8x96xf32> to vector<1x8x8xf32>
    %313 = arith.truncf %312 : vector<1x8x8xf32> to vector<1x8x8xbf16>
    %314 = vector.extract_strided_slice %234 {offsets = [0, 0, 88], sizes = [1, 8, 8], strides = [1, 1, 1]} : vector<1x8x96xf32> to vector<1x8x8xf32>
    %315 = arith.truncf %314 : vector<1x8x8xf32> to vector<1x8x8xbf16>
    "tpu.trace_start"() <{level = 10 : i32, message = "bqd,bkd->bqk"}> : () -> ()
    %cst_122 = arith.constant dense<0.000000e+00> : vector<1x8x8xf32>
    %316 = tpu.matmul %311, %313, %cst_122 {dimension_numbers = #tpu.dot_dimension_numbers<[2], [2], [1], [1], [0, 0, 0, 1, 1, 1], [0], [0]>} : vector<1x8x8xbf16>, vector<1x8x8xbf16>, vector<1x8x8xf32> -> vector<1x8x8xf32>
    "tpu.trace_stop"() : () -> ()
    %cst_123 = arith.constant dense<0xFF800000> : vector<1x8xf32>
    %317 = vector.multi_reduction <maximumf>, %316, %cst_123 [2] : vector<1x8x8xf32> to vector<1x8xf32>
    %318 = vector.shape_cast %317 : vector<1x8xf32> to vector<1x8x1xf32>
    %319 = vector.broadcast %318 : vector<1x8x1xf32> to vector<1x8x8xf32>
    %320 = arith.subf %316, %319 : vector<1x8x8xf32>
    %321 = math.exp %320 : vector<1x8x8xf32>
    %cst_124 = arith.constant dense<0.000000e+00> : vector<1x8xf32>
    %322 = vector.multi_reduction <add>, %321, %cst_124 [2] : vector<1x8x8xf32> to vector<1x8xf32>
    %323 = vector.shape_cast %322 : vector<1x8xf32> to vector<1x8x1xf32>
    %324 = tpu.reciprocal %323 {approx = true} : vector<1x8x1xf32> -> vector<1x8x1xf32>
    %325 = vector.broadcast %324 : vector<1x8x1xf32> to vector<1x8x8xf32>
    %326 = arith.mulf %321, %325 : vector<1x8x8xf32>
    %327 = arith.truncf %326 : vector<1x8x8xf32> to vector<1x8x8xbf16>
    "tpu.trace_start"() <{level = 10 : i32, message = "bqk,bkd->bqd"}> : () -> ()
    %cst_125 = arith.constant dense<0.000000e+00> : vector<1x8x8xf32>
    %328 = tpu.matmul %327, %315, %cst_125 {dimension_numbers = #tpu.dot_dimension_numbers<[2], [1], [1], [2], [0, 0, 0, 1, 1, 2], [0], [0]>} : vector<1x8x8xbf16>, vector<1x8x8xbf16>, vector<1x8x8xf32> -> vector<1x8x8xf32>
    "tpu.trace_stop"() : () -> ()
    %329 = vector.shape_cast %328 : vector<1x8x8xf32> to vector<8x8xf32>
    %330 = arith.truncf %329 : vector<8x8xf32> to vector<8x8xbf16>
    %331 = vector.extract_strided_slice %236 {offsets = [24, 0], sizes = [8, 32], strides = [1, 1]} : vector<32x32xbf16> to vector<8x32xbf16>
    %cst_126 = arith.constant dense<0.000000e+00> : vector<8x32xf32>
    %332 = tpu.matmul %330, %331, %cst_126 {dimension_numbers = #tpu.dot_dimension_numbers<[1], [0], [0], [1], [0, 0, 1, 1], [], []>} : vector<8x8xbf16>, vector<8x32xbf16>, vector<8x32xf32> -> vector<8x32xf32>
    %333 = arith.addf %309, %332 : vector<8x32xf32>
    %c1_127 = arith.constant 1 : index
    %c0_128 = arith.constant 0 : index
    %c0_129 = arith.constant 0 : index
    %334 = vector.load %arg9[%c1_127, %c0_128, %c0_129] : memref<2x1x32xf32, #tpu.memory_space<vmem>>, vector<1x1x32xf32>
    %335 = vector.shape_cast %334 : vector<1x1x32xf32> to vector<1x32xf32>
    %336 = vector.broadcast %335 : vector<1x32xf32> to vector<8x32xf32>
    %337 = arith.addf %333, %336 : vector<8x32xf32>
    %338 = arith.addf %225, %337 : vector<8x32xf32>
    %cst_130 = arith.constant dense<0.000000e+00> : vector<8xf32>
    %339 = vector.multi_reduction <add>, %338, %cst_130 [1] : vector<8x32xf32> to vector<8xf32>
    %340 = vector.shape_cast %339 : vector<8xf32> to vector<8x1xf32>
    %cst_131 = arith.constant 3.200000e+01 : f32
    %341 = vector.broadcast %cst_131 : f32 to vector<8x1xf32>
    %342 = arith.divf %340, %341 : vector<8x1xf32>
    %343 = vector.broadcast %342 : vector<8x1xf32> to vector<8x32xf32>
    %344 = arith.subf %338, %343 : vector<8x32xf32>
    %345 = arith.mulf %344, %344 : vector<8x32xf32>
    %cst_132 = arith.constant dense<0.000000e+00> : vector<8xf32>
    %346 = vector.multi_reduction <add>, %345, %cst_132 [1] : vector<8x32xf32> to vector<8xf32>
    %347 = vector.shape_cast %346 : vector<8xf32> to vector<8x1xf32>
    %cst_133 = arith.constant 3.200000e+01 : f32
    %348 = vector.broadcast %cst_133 : f32 to vector<8x1xf32>
    %349 = arith.divf %347, %348 : vector<8x1xf32>
    %cst_134 = arith.constant 9.99999974E-6 : f32
    %350 = vector.broadcast %cst_134 : f32 to vector<8x1xf32>
    %351 = arith.addf %349, %350 : vector<8x1xf32>
    %352 = math.rsqrt %351 : vector<8x1xf32>
    %353 = vector.broadcast %352 : vector<8x1xf32> to vector<8x32xf32>
    %354 = arith.mulf %344, %353 : vector<8x32xf32>
    %c3 = arith.constant 3 : index
    %c0_135 = arith.constant 0 : index
    %c0_136 = arith.constant 0 : index
    %355 = vector.load %arg11[%c3, %c0_135, %c0_136] : memref<6x1x32xf32, #tpu.memory_space<vmem>>, vector<1x1x32xf32>
    %356 = vector.shape_cast %355 : vector<1x1x32xf32> to vector<1x32xf32>
    %357 = vector.broadcast %356 : vector<1x32xf32> to vector<8x32xf32>
    %358 = arith.mulf %354, %357 : vector<8x32xf32>
    %c3_137 = arith.constant 3 : index
    %c0_138 = arith.constant 0 : index
    %c0_139 = arith.constant 0 : index
    %359 = vector.load %arg12[%c3_137, %c0_138, %c0_139] : memref<6x1x32xf32, #tpu.memory_space<vmem>>, vector<1x1x32xf32>
    %360 = vector.shape_cast %359 : vector<1x1x32xf32> to vector<1x32xf32>
    %361 = vector.broadcast %360 : vector<1x32xf32> to vector<8x32xf32>
    %362 = arith.addf %358, %361 : vector<8x32xf32>
    %c1_140 = arith.constant 1 : index
    %c0_141 = arith.constant 0 : index
    %c0_142 = arith.constant 0 : index
    %363 = vector.load %arg10[%c1_140, %c0_141, %c0_142] : memref<2x1x32xf32, #tpu.memory_space<vmem>>, vector<1x1x32xf32>
    %364 = vector.shape_cast %363 : vector<1x1x32xf32> to vector<1x32xf32>
    %365 = vector.broadcast %364 : vector<1x32xf32> to vector<8x32xf32>
    %366 = arith.addf %362, %365 : vector<8x32xf32>
    %cst_143 = arith.constant dense<0.000000e+00> : vector<8xf32>
    %367 = vector.multi_reduction <add>, %366, %cst_143 [1] : vector<8x32xf32> to vector<8xf32>
    %368 = vector.shape_cast %367 : vector<8xf32> to vector<8x1xf32>
    %cst_144 = arith.constant 3.200000e+01 : f32
    %369 = vector.broadcast %cst_144 : f32 to vector<8x1xf32>
    %370 = arith.divf %368, %369 : vector<8x1xf32>
    %371 = vector.broadcast %370 : vector<8x1xf32> to vector<8x32xf32>
    %372 = arith.subf %366, %371 : vector<8x32xf32>
    %373 = arith.mulf %372, %372 : vector<8x32xf32>
    %cst_145 = arith.constant dense<0.000000e+00> : vector<8xf32>
    %374 = vector.multi_reduction <add>, %373, %cst_145 [1] : vector<8x32xf32> to vector<8xf32>
    %375 = vector.shape_cast %374 : vector<8xf32> to vector<8x1xf32>
    %cst_146 = arith.constant 3.200000e+01 : f32
    %376 = vector.broadcast %cst_146 : f32 to vector<8x1xf32>
    %377 = arith.divf %375, %376 : vector<8x1xf32>
    %cst_147 = arith.constant 9.99999974E-6 : f32
    %378 = vector.broadcast %cst_147 : f32 to vector<8x1xf32>
    %379 = arith.addf %377, %378 : vector<8x1xf32>
    %380 = math.rsqrt %379 : vector<8x1xf32>
    %381 = vector.broadcast %380 : vector<8x1xf32> to vector<8x32xf32>
    %382 = arith.mulf %372, %381 : vector<8x32xf32>
    %c4 = arith.constant 4 : index
    %c0_148 = arith.constant 0 : index
    %c0_149 = arith.constant 0 : index
    %383 = vector.load %arg11[%c4, %c0_148, %c0_149] : memref<6x1x32xf32, #tpu.memory_space<vmem>>, vector<1x1x32xf32>
    %384 = vector.shape_cast %383 : vector<1x1x32xf32> to vector<1x32xf32>
    %385 = vector.broadcast %384 : vector<1x32xf32> to vector<8x32xf32>
    %386 = arith.mulf %382, %385 : vector<8x32xf32>
    %c4_150 = arith.constant 4 : index
    %c0_151 = arith.constant 0 : index
    %c0_152 = arith.constant 0 : index
    %387 = vector.load %arg12[%c4_150, %c0_151, %c0_152] : memref<6x1x32xf32, #tpu.memory_space<vmem>>, vector<1x1x32xf32>
    %388 = vector.shape_cast %387 : vector<1x1x32xf32> to vector<1x32xf32>
    %389 = vector.broadcast %388 : vector<1x32xf32> to vector<8x32xf32>
    %390 = arith.addf %386, %389 : vector<8x32xf32>
    %391 = arith.truncf %390 : vector<8x32xf32> to vector<8x32xbf16>
    %c1_153 = arith.constant 1 : index
    %c0_154 = arith.constant 0 : index
    %c0_155 = arith.constant 0 : index
    %392 = vector.load %arg13[%c1_153, %c0_154, %c0_155] : memref<2x32x2048xbf16, #tpu.memory_space<vmem>>, vector<1x32x2048xbf16>
    %393 = vector.shape_cast %392 : vector<1x32x2048xbf16> to vector<32x2048xbf16>
    %cst_156 = arith.constant dense<0.000000e+00> : vector<8x2048xf32>
    %394 = tpu.matmul %391, %393, %cst_156 {dimension_numbers = #tpu.dot_dimension_numbers<[1], [0], [0], [1], [0, 0, 1, 1], [], []>} : vector<8x32xbf16>, vector<32x2048xbf16>, vector<8x2048xf32> -> vector<8x2048xf32>
    %c1_157 = arith.constant 1 : index
    %c0_158 = arith.constant 0 : index
    %c0_159 = arith.constant 0 : index
    %395 = vector.load %arg14[%c1_157, %c0_158, %c0_159] : memref<2x1x2048xf32, #tpu.memory_space<vmem>>, vector<1x1x2048xf32>
    %396 = vector.shape_cast %395 : vector<1x1x2048xf32> to vector<1x2048xf32>
    %397 = vector.broadcast %396 : vector<1x2048xf32> to vector<8x2048xf32>
    %398 = arith.addf %394, %397 : vector<8x2048xf32>
    %cst_160 = arith.constant 0.000000e+00 : f32
    %399 = vector.broadcast %cst_160 : f32 to vector<8x2048xf32>
    %400 = arith.maximumf %398, %399 : vector<8x2048xf32>
    %401 = arith.truncf %400 : vector<8x2048xf32> to vector<8x2048xbf16>
    %c1_161 = arith.constant 1 : index
    %c0_162 = arith.constant 0 : index
    %c0_163 = arith.constant 0 : index
    %402 = vector.load %arg15[%c1_161, %c0_162, %c0_163] : memref<2x2048x32xbf16, #tpu.memory_space<vmem>>, vector<1x2048x32xbf16>
    %403 = vector.shape_cast %402 : vector<1x2048x32xbf16> to vector<2048x32xbf16>
    %cst_164 = arith.constant dense<0.000000e+00> : vector<8x32xf32>
    %404 = tpu.matmul %401, %403, %cst_164 {dimension_numbers = #tpu.dot_dimension_numbers<[1], [0], [0], [1], [0, 0, 1, 1], [], []>} : vector<8x2048xbf16>, vector<2048x32xbf16>, vector<8x32xf32> -> vector<8x32xf32>
    %c1_165 = arith.constant 1 : index
    %c0_166 = arith.constant 0 : index
    %c0_167 = arith.constant 0 : index
    %405 = vector.load %arg16[%c1_165, %c0_166, %c0_167] : memref<2x1x32xf32, #tpu.memory_space<vmem>>, vector<1x1x32xf32>
    %406 = vector.shape_cast %405 : vector<1x1x32xf32> to vector<1x32xf32>
    %407 = vector.broadcast %406 : vector<1x32xf32> to vector<8x32xf32>
    %408 = arith.addf %404, %407 : vector<8x32xf32>
    %409 = arith.addf %390, %408 : vector<8x32xf32>
    %cst_168 = arith.constant dense<0.000000e+00> : vector<8xf32>
    %410 = vector.multi_reduction <add>, %409, %cst_168 [1] : vector<8x32xf32> to vector<8xf32>
    %411 = vector.shape_cast %410 : vector<8xf32> to vector<8x1xf32>
    %cst_169 = arith.constant 3.200000e+01 : f32
    %412 = vector.broadcast %cst_169 : f32 to vector<8x1xf32>
    %413 = arith.divf %411, %412 : vector<8x1xf32>
    %414 = vector.broadcast %413 : vector<8x1xf32> to vector<8x32xf32>
    %415 = arith.subf %409, %414 : vector<8x32xf32>
    %416 = arith.mulf %415, %415 : vector<8x32xf32>
    %cst_170 = arith.constant dense<0.000000e+00> : vector<8xf32>
    %417 = vector.multi_reduction <add>, %416, %cst_170 [1] : vector<8x32xf32> to vector<8xf32>
    %418 = vector.shape_cast %417 : vector<8xf32> to vector<8x1xf32>
    %cst_171 = arith.constant 3.200000e+01 : f32
    %419 = vector.broadcast %cst_171 : f32 to vector<8x1xf32>
    %420 = arith.divf %418, %419 : vector<8x1xf32>
    %cst_172 = arith.constant 9.99999974E-6 : f32
    %421 = vector.broadcast %cst_172 : f32 to vector<8x1xf32>
    %422 = arith.addf %420, %421 : vector<8x1xf32>
    %423 = math.rsqrt %422 : vector<8x1xf32>
    %424 = vector.broadcast %423 : vector<8x1xf32> to vector<8x32xf32>
    %425 = arith.mulf %415, %424 : vector<8x32xf32>
    %c5 = arith.constant 5 : index
    %c0_173 = arith.constant 0 : index
    %c0_174 = arith.constant 0 : index
    %426 = vector.load %arg11[%c5, %c0_173, %c0_174] : memref<6x1x32xf32, #tpu.memory_space<vmem>>, vector<1x1x32xf32>
    %427 = vector.shape_cast %426 : vector<1x1x32xf32> to vector<1x32xf32>
    %428 = vector.broadcast %427 : vector<1x32xf32> to vector<8x32xf32>
    %429 = arith.mulf %425, %428 : vector<8x32xf32>
    %c5_175 = arith.constant 5 : index
    %c0_176 = arith.constant 0 : index
    %c0_177 = arith.constant 0 : index
    %430 = vector.load %arg12[%c5_175, %c0_176, %c0_177] : memref<6x1x32xf32, #tpu.memory_space<vmem>>, vector<1x1x32xf32>
    %431 = vector.shape_cast %430 : vector<1x1x32xf32> to vector<1x32xf32>
    %432 = vector.broadcast %431 : vector<1x32xf32> to vector<8x32xf32>
    %433 = arith.addf %429, %432 : vector<8x32xf32>
    %434 = arith.truncf %433 : vector<8x32xf32> to vector<8x32xbf16>
    %c0_178 = arith.constant 0 : index
    %c0_179 = arith.constant 0 : index
    %435 = vector.load %arg17[%c0_178, %c0_179] : memref<32x128xbf16, #tpu.memory_space<vmem>>, vector<32x128xbf16>
    %cst_180 = arith.constant dense<0.000000e+00> : vector<8x128xf32>
    %436 = tpu.matmul %434, %435, %cst_180 {dimension_numbers = #tpu.dot_dimension_numbers<[1], [0], [0], [1], [0, 0, 1, 1], [], []>} : vector<8x32xbf16>, vector<32x128xbf16>, vector<8x128xf32> -> vector<8x128xf32>
    %c0_181 = arith.constant 0 : index
    %c0_182 = arith.constant 0 : index
    %437 = vector.load %arg18[%c0_181, %c0_182] : memref<1x128xf32, #tpu.memory_space<vmem>>, vector<1x128xf32>
    %438 = vector.broadcast %437 : vector<1x128xf32> to vector<8x128xf32>
    %439 = arith.addf %436, %438 : vector<8x128xf32>
    %cst_183 = arith.constant dense<0xFF800000> : vector<8xf32>
    %440 = vector.multi_reduction <maximumf>, %439, %cst_183 [1] : vector<8x128xf32> to vector<8xf32>
    %441 = vector.shape_cast %440 : vector<8xf32> to vector<8x1xf32>
    %442 = vector.broadcast %441 : vector<8x1xf32> to vector<8x128xf32>
    %443 = arith.subf %439, %442 : vector<8x128xf32>
    %444 = math.exp %443 : vector<8x128xf32>
    %cst_184 = arith.constant dense<0.000000e+00> : vector<8xf32>
    %445 = vector.multi_reduction <add>, %444, %cst_184 [1] : vector<8x128xf32> to vector<8xf32>
    %446 = vector.shape_cast %445 : vector<8xf32> to vector<8x1xf32>
    %447 = math.log %446 : vector<8x1xf32>
    %448 = vector.broadcast %447 : vector<8x1xf32> to vector<8x128xf32>
    %449 = arith.subf %443, %448 : vector<8x128xf32>
    %450 = vector.shape_cast %449 : vector<8x128xf32> to vector<1x8x128xf32>
    %c0_185 = arith.constant 0 : index
    %c0_186 = arith.constant 0 : index
    %c0_187 = arith.constant 0 : index
    %451 = vector.load %arg19[%c0_185, %c0_186, %c0_187] : memref<1x8x128xf32, #tpu.memory_space<vmem>>, vector<1x8x128xf32>
    tpu.vector_store %arg19[%c0_185, %c0_186, %c0_187], %450 {strides = array<i32>} : memref<1x8x128xf32, #tpu.memory_space<vmem>>, vector<1x8x128xf32>,
    return
  }
  func.func @transform_0(%arg0: i32) -> (i32, i32, i32) {
    %c0_i32 = arith.constant 0 : i32
    %c0_i32_0 = arith.constant 0 : i32
    %c0_i32_1 = arith.constant 0 : i32
    return %arg0, %c0_i32, %c0_i32_0 : i32, i32, i32
  }
  func.func @transform_1(%arg0: i32) -> (i32, i32) {
    %c0_i32 = arith.constant 0 : i32
    %c0_i32_0 = arith.constant 0 : i32
    %c0_i32_1 = arith.constant 0 : i32
    return %c0_i32, %c0_i32_0 : i32, i32
  }
  func.func @transform_2(%arg0: i32) -> (i32, i32) {
    %c0_i32 = arith.constant 0 : i32
    %c0_i32_0 = arith.constant 0 : i32
    %c0_i32_1 = arith.constant 0 : i32
    return %c0_i32, %c0_i32_0 : i32, i32
  }
  func.func @transform_3(%arg0: i32) -> (i32, i32) {
    %c0_i32 = arith.constant 0 : i32
    %c0_i32_0 = arith.constant 0 : i32
    %c0_i32_1 = arith.constant 0 : i32
    return %c0_i32, %c0_i32_0 : i32, i32
  }
  func.func @transform_4(%arg0: i32) -> (i32, i32) {
    %c0_i32 = arith.constant 0 : i32
    %c0_i32_0 = arith.constant 0 : i32
    %c0_i32_1 = arith.constant 0 : i32
    return %c0_i32, %c0_i32_0 : i32, i32
  }
  func.func @transform_5(%arg0: i32) -> (i32, i32, i32) {
    %c0_i32 = arith.constant 0 : i32
    %c0_i32_0 = arith.constant 0 : i32
    %c0_i32_1 = arith.constant 0 : i32
    %c0_i32_2 = arith.constant 0 : i32
    return %c0_i32, %c0_i32_0, %c0_i32_1 : i32, i32, i32
  }
  func.func @transform_6(%arg0: i32) -> (i32, i32, i32) {
    %c0_i32 = arith.constant 0 : i32
    %c0_i32_0 = arith.constant 0 : i32
    %c0_i32_1 = arith.constant 0 : i32
    %c0_i32_2 = arith.constant 0 : i32
    return %c0_i32, %c0_i32_0, %c0_i32_1 : i32, i32, i32
  }
  func.func @transform_7(%arg0: i32) -> (i32, i32, i32) {
    %c0_i32 = arith.constant 0 : i32
    %c0_i32_0 = arith.constant 0 : i32
    %c0_i32_1 = arith.constant 0 : i32
    %c0_i32_2 = arith.constant 0 : i32
    return %c0_i32, %c0_i32_0, %c0_i32_1 : i32, i32, i32
  }
  func.func @transform_8(%arg0: i32) -> (i32, i32, i32) {
    %c0_i32 = arith.constant 0 : i32
    %c0_i32_0 = arith.constant 0 : i32
    %c0_i32_1 = arith.constant 0 : i32
    %c0_i32_2 = arith.constant 0 : i32
    return %c0_i32, %c0_i32_0, %c0_i32_1 : i32, i32, i32
  }
  func.func @transform_9(%arg0: i32) -> (i32, i32, i32) {
    %c0_i32 = arith.constant 0 : i32
    %c0_i32_0 = arith.constant 0 : i32
    %c0_i32_1 = arith.constant 0 : i32
    %c0_i32_2 = arith.constant 0 : i32
    return %c0_i32, %c0_i32_0, %c0_i32_1 : i32, i32, i32
  }
  func.func @transform_10(%arg0: i32) -> (i32, i32, i32) {
    %c0_i32 = arith.constant 0 : i32
    %c0_i32_0 = arith.constant 0 : i32
    %c0_i32_1 = arith.constant 0 : i32
    %c0_i32_2 = arith.constant 0 : i32
    return %c0_i32, %c0_i32_0, %c0_i32_1 : i32, i32, i32
  }
  func.func @transform_11(%arg0: i32) -> (i32, i32, i32) {
    %c0_i32 = arith.constant 0 : i32
    %c0_i32_0 = arith.constant 0 : i32
    %c0_i32_1 = arith.constant 0 : i32
    %c0_i32_2 = arith.constant 0 : i32
    return %c0_i32, %c0_i32_0, %c0_i32_1 : i32, i32, i32
  }
  func.func @transform_12(%arg0: i32) -> (i32, i32, i32) {
    %c0_i32 = arith.constant 0 : i32
    %c0_i32_0 = arith.constant 0 : i32
    %c0_i32_1 = arith.constant 0 : i32
    %c0_i32_2 = arith.constant 0 : i32
    return %c0_i32, %c0_i32_0, %c0_i32_1 : i32, i32, i32
  }
  func.func @transform_13(%arg0: i32) -> (i32, i32, i32) {
    %c0_i32 = arith.constant 0 : i32
    %c0_i32_0 = arith.constant 0 : i32
    %c0_i32_1 = arith.constant 0 : i32
    %c0_i32_2 = arith.constant 0 : i32
    return %c0_i32, %c0_i32_0, %c0_i32_1 : i32, i32, i32
  }
  func.func @transform_14(%arg0: i32) -> (i32, i32, i32) {
    %c0_i32 = arith.constant 0 : i32
    %c0_i32_0 = arith.constant 0 : i32
    %c0_i32_1 = arith.constant 0 : i32
    %c0_i32_2 = arith.constant 0 : i32
    return %c0_i32, %c0_i32_0, %c0_i32_1 : i32, i32, i32
  }
  func.func @transform_15(%arg0: i32) -> (i32, i32, i32) {
    %c0_i32 = arith.constant 0 : i32
    %c0_i32_0 = arith.constant 0 : i32
    %c0_i32_1 = arith.constant 0 : i32
    %c0_i32_2 = arith.constant 0 : i32
    return %c0_i32, %c0_i32_0, %c0_i32_1 : i32, i32, i32
  }
  func.func @transform_16(%arg0: i32) -> (i32, i32) {
    %c0_i32 = arith.constant 0 : i32
    %c0_i32_0 = arith.constant 0 : i32
    %c0_i32_1 = arith.constant 0 : i32
    return %c0_i32, %c0_i32_0 : i32, i32
  }
  func.func @transform_17(%arg0: i32) -> (i32, i32) {
    %c0_i32 = arith.constant 0 : i32
    %c0_i32_0 = arith.constant 0 : i32
    %c0_i32_1 = arith.constant 0 : i32
    return %c0_i32, %c0_i32_0 : i32, i32
  }
  func.func @transform_18(%arg0: i32) -> (i32, i32, i32) {
    %c0_i32 = arith.constant 0 : i32
    %c0_i32_0 = arith.constant 0 : i32
    %c0_i32_1 = arith.constant 0 : i32
    return %arg0, %c0_i32, %c0_i32_0 : i32, i32, i32
  }
}

</mosaic_0001>

<llo_original>
// kernel: transformer_ocr_forward.1
$region0: #{transformer_ocr_forward.1}
  #allocation0 [shape = 'u32[]', space=smem, size = 0x4, offset = 0x4, fixed_abs, tag = 'smem constant byte address 0x4 - core index']
  #allocation1 [shape = 'u32[144,128]{1,0:T(1,128)}', space=vmem, size = 0x12000, scoped, tag = 'internal scratch']
  %s0 = inlined_call_operand.vmem [shape: f32[2,8,288], index: 0, kind: input, shape index: {}]
  %s1 = inlined_call_operand.vmem [shape: bf16[288,64], index: 1, kind: input, shape index: {}]
  %s2 = inlined_call_operand.vmem [shape: f32[1,64], index: 2, kind: input, shape index: {}]
  %s3 = inlined_call_operand.vmem [shape: bf16[64,32], index: 3, kind: input, shape index: {}]
  %s4 = inlined_call_operand.vmem [shape: f32[1,32], index: 4, kind: input, shape index: {}]
  %s5 = inlined_call_operand.vmem [shape: bf16[2,32,96], index: 5, kind: input, shape index: {}]
  %s6 = inlined_call_operand.vmem [shape: f32[2,1,96], index: 6, kind: input, shape index: {}]
  %s7 = inlined_call_operand.vmem [shape: bf16[2,32,32], index: 7, kind: input, shape index: {}]
  %s8 = inlined_call_operand.vmem [shape: f32[2,1,32], index: 8, kind: input, shape index: {}]
  %s9 = inlined_call_operand.vmem [shape: f32[2,1,32], index: 9, kind: input, shape index: {}]
  %s10 = inlined_call_operand.vmem [shape: f32[6,1,32], index: 10, kind: input, shape index: {}]
  %s11 = inlined_call_operand.vmem [shape: f32[6,1,32], index: 11, kind: input, shape index: {}]
  %s12 = inlined_call_operand.vmem [shape: bf16[2,32,2048], index: 12, kind: input, shape index: {}]
  %s13 = inlined_call_operand.vmem [shape: f32[2,1,2048], index: 13, kind: input, shape index: {}]
  %s14 = inlined_call_operand.vmem [shape: bf16[2,2048,32], index: 14, kind: input, shape index: {}]
  %s15 = inlined_call_operand.vmem [shape: f32[2,1,32], index: 15, kind: input, shape index: {}]
  %s16 = inlined_call_operand.vmem [shape: bf16[32,128], index: 16, kind: input, shape index: {}]
  %s17 = inlined_call_operand.vmem [shape: f32[1,128], index: 17, kind: input, shape index: {}]
  %s18 = inlined_call_operand.vmem [shape: f32[2,8,128], index: 18, kind: output, shape index: {}]
  %s19 = sld [smem:[#allocation0]]
  $region105: #{transformer_ocr_forward.1} parent=0
    _
  %s21 = ssub.s32 1, %s19
  %s22 = scalar_select 0, %s21, %s19
  loop: start=0, step=1, limit=4
  $region2: #{transformer_ocr_forward.1} parent=0 // loop_pre_header
    _
  $region3: #{transformer_ocr_forward.1} parent=0 // loop_header
    %s24 = sphi 0, %s28
    %p25 = scmp.ge.s32.totalorder %s24, 4
    %s34 = sphi 0, %s36
    %s37 = sphi 0, %s34
    %s38 = sphi 0, %s37
    %s54 = sphi 0, %s38
    %s58 = sphi 0, %s58
    %s60 = sphi 0, %s58
    %s61 = sphi 0, %s60
    %s75 = sphi 0, %s61
    %s79 = sphi 0, %s79
    %s81 = sphi 0, %s79
    %s82 = sphi 0, %s81
    %s96 = sphi 0, %s82
    %s100 = sphi 0, %s100
    %s102 = sphi 0, %s100
    %s103 = sphi 0, %s102
    %s117 = sphi 0, %s103
    %s121 = sphi 0, %s121
    %s123 = sphi 0, %s121
    %s124 = sphi 0, %s123
    %s138 = sphi 0, %s124
    %s142 = sphi 0, %s142
    %s144 = sphi 0, %s142
    %s145 = sphi 0, %s144
    %s159 = sphi 0, %s145
    %s163 = sphi 0, %s163
    %s165 = sphi 0, %s163
    %s166 = sphi 0, %s165
    %s180 = sphi 0, %s166
    %s184 = sphi 0, %s184
    %s186 = sphi 0, %s184
    %s187 = sphi 0, %s186
    %s201 = sphi 0, %s187
    %s205 = sphi 0, %s205
    %s207 = sphi 0, %s205
    %s208 = sphi 0, %s207
    %s222 = sphi 0, %s208
    %s226 = sphi 0, %s226
    %s228 = sphi 0, %s226
    %s229 = sphi 0, %s228
    %s243 = sphi 0, %s229
    %s247 = sphi 0, %s247
    %s249 = sphi 0, %s247
    %s250 = sphi 0, %s249
    %s264 = sphi 0, %s250
    %s268 = sphi 0, %s268
    %s270 = sphi 0, %s268
    %s271 = sphi 0, %s270
    %s285 = sphi 0, %s271
    %s289 = sphi 0, %s289
    %s291 = sphi 0, %s289
    %s292 = sphi 0, %s291
    %s306 = sphi 0, %s292
    %s310 = sphi 0, %s310
    %s312 = sphi 0, %s310
    %s313 = sphi 0, %s312
    %s327 = sphi 0, %s313
    %s331 = sphi 0, %s331
    %s333 = sphi 0, %s331
    %s334 = sphi 0, %s333
    %s348 = sphi 0, %s334
    %s352 = sphi 0, %s352
    %s354 = sphi 0, %s352
    %s355 = sphi 0, %s354
    %s369 = sphi 0, %s355
    %s373 = sphi 0, %s373
    %s375 = sphi 0, %s373
    %s376 = sphi 0, %s375
    %s390 = sphi 0, %s376
    %s394 = sphi 0, %s394
    %s396 = sphi 0, %s394
    %s397 = sphi 0, %s396
    %s411 = sphi 0, %s397
    %s417 = sphi 0, %s419
    %s420 = sphi 0, %s417
    %s421 = sphi 0, %s420
    %s437 = sphi 0, %s421
  $region4: #{transformer_ocr_forward.1} parent=0 // loop_header_branch
    %27 = sbr.rel (%p25) target = $region8
  $region5: #{transformer_ocr_forward.1} parent=0 // loop_body
    %s29 = ssub.s32 %s24, 1
    %s30 = ssub.s32 %s24, 2
    %s31 = sadd.s32 %s24, 1
    %s32 = ssub.s32 %s24, %s31
    %p33 = scmp.eq.s32.totalorder %s32, 0
    %s35 = sadd.s32 %s34, 1
    %s36 = scalar_select %p33, %s34, %s35
    %p39 = pneg %p33
    %p40 = scmp.eq.s32.totalorder %s24, 1
    %p41 = por %p39, %p40
    %p42 = scmp.ne.s32.totalorder %s34, %s37
    %p43 = scmp.eq.s32.totalorder %s24, 0
    %p44 = por %p42, %p43
    %p45 = scmp.ne.s32.totalorder %s34, %s37
    %p46 = scmp.eq.s32.totalorder %s29, 1
    %p47 = por %p45, %p46
    %p48 = scmp.ne.s32.totalorder %s37, %s38
    %p49 = scmp.eq.s32.totalorder %s29, 0
    %p50 = por %p48, %p49
    %p51 = scmp.ne.s32.totalorder %s37, %s38
    %p52 = scmp.eq.s32.totalorder %s30, 1
    %p53 = por %p51, %p52
    %p55 = scmp.ne.s32.totalorder %s38, %s54
    %p56 = scmp.eq.s32.totalorder %s30, 0
    %p57 = por %p55, %p56
    %s59 = sadd.s32 %s58, 1
    %p62 = scmp.eq.s32.totalorder %s24, 1
    %p63 = scmp.ne.s32.totalorder %s58, %s60
    %p64 = scmp.eq.s32.totalorder %s24, 0
    %p65 = por %p63, %p64
    %p66 = scmp.ne.s32.totalorder %s58, %s60
    %p67 = scmp.eq.s32.totalorder %s29, 1
    %p68 = por %p66, %p67
    %p69 = scmp.ne.s32.totalorder %s60, %s61
    %p70 = scmp.eq.s32.totalorder %s29, 0
    %p71 = por %p69, %p70
    %p72 = scmp.ne.s32.totalorder %s60, %s61
    %p73 = scmp.eq.s32.totalorder %s30, 1
    %p74 = por %p72, %p73
    %p76 = scmp.ne.s32.totalorder %s61, %s75
    %p77 = scmp.eq.s32.totalorder %s30, 0
    %p78 = por %p76, %p77
    %s80 = sadd.s32 %s79, 1
    %p83 = scmp.eq.s32.totalorder %s24, 1
    %p84 = scmp.ne.s32.totalorder %s79, %s81
    %p85 = scmp.eq.s32.totalorder %s24, 0
    %p86 = por %p84, %p85
    %p87 = scmp.ne.s32.totalorder %s79, %s81
    %p88 = scmp.eq.s32.totalorder %s29, 1
    %p89 = por %p87, %p88
    %p90 = scmp.ne.s32.totalorder %s81, %s82
    %p91 = scmp.eq.s32.totalorder %s29, 0
    %p92 = por %p90, %p91
    %p93 = scmp.ne.s32.totalorder %s81, %s82
    %p94 = scmp.eq.s32.totalorder %s30, 1
    %p95 = por %p93, %p94
    %p97 = scmp.ne.s32.totalorder %s82, %s96
    %p98 = scmp.eq.s32.totalorder %s30, 0
    %p99 = por %p97, %p98
    %s101 = sadd.s32 %s100, 1
    %p104 = scmp.eq.s32.totalorder %s24, 1
    %p105 = scmp.ne.s32.totalorder %s100, %s102
    %p106 = scmp.eq.s32.totalorder %s24, 0
    %p107 = por %p105, %p106
    %p108 = scmp.ne.s32.totalorder %s100, %s102
    %p109 = scmp.eq.s32.totalorder %s29, 1
    %p110 = por %p108, %p109
    %p111 = scmp.ne.s32.totalorder %s102, %s103
    %p112 = scmp.eq.s32.totalorder %s29, 0
    %p113 = por %p111, %p112
    %p114 = scmp.ne.s32.totalorder %s102, %s103
    %p115 = scmp.eq.s32.totalorder %s30, 1
    %p116 = por %p114, %p115
    %p118 = scmp.ne.s32.totalorder %s103, %s117
    %p119 = scmp.eq.s32.totalorder %s30, 0
    %p120 = por %p118, %p119
    %s122 = sadd.s32 %s121, 1
    %p125 = scmp.eq.s32.totalorder %s24, 1
    %p126 = scmp.ne.s32.totalorder %s121, %s123
    %p127 = scmp.eq.s32.totalorder %s24, 0
    %p128 = por %p126, %p127
    %p129 = scmp.ne.s32.totalorder %s121, %s123
    %p130 = scmp.eq.s32.totalorder %s29, 1
    %p131 = por %p129, %p130
    %p132 = scmp.ne.s32.totalorder %s123, %s124
    %p133 = scmp.eq.s32.totalorder %s29, 0
    %p134 = por %p132, %p133
    %p135 = scmp.ne.s32.totalorder %s123, %s124
    %p136 = scmp.eq.s32.totalorder %s30, 1
    %p137 = por %p135, %p136
    %p139 = scmp.ne.s32.totalorder %s124, %s138
    %p140 = scmp.eq.s32.totalorder %s30, 0
    %p141 = por %p139, %p140
    %s143 = sadd.s32 %s142, 1
    %p146 = scmp.eq.s32.totalorder %s24, 1
    %p147 = scmp.ne.s32.totalorder %s142, %s144
    %p148 = scmp.eq.s32.totalorder %s24, 0
    %p149 = por %p147, %p148
    %p150 = scmp.ne.s32.totalorder %s142, %s144
    %p151 = scmp.eq.s32.totalorder %s29, 1
    %p152 = por %p150, %p151
    %p153 = scmp.ne.s32.totalorder %s144, %s145
    %p154 = scmp.eq.s32.totalorder %s29, 0
    %p155 = por %p153, %p154
    %p156 = scmp.ne.s32.totalorder %s144, %s145
    %p157 = scmp.eq.s32.totalorder %s30, 1
    %p158 = por %p156, %p157
    %p160 = scmp.ne.s32.totalorder %s145, %s159
    %p161 = scmp.eq.s32.totalorder %s30, 0
    %p162 = por %p160, %p161
    %s164 = sadd.s32 %s163, 1
    %p167 = scmp.eq.s32.totalorder %s24, 1
    %p168 = scmp.ne.s32.totalorder %s163, %s165
    %p169 = scmp.eq.s32.totalorder %s24, 0
    %p170 = por %p168, %p169
    %p171 = scmp.ne.s32.totalorder %s163, %s165
    %p172 = scmp.eq.s32.totalorder %s29, 1
    %p173 = por %p171, %p172
    %p174 = scmp.ne.s32.totalorder %s165, %s166
    %p175 = scmp.eq.s32.totalorder %s29, 0
    %p176 = por %p174, %p175
    %p177 = scmp.ne.s32.totalorder %s165, %s166
    %p178 = scmp.eq.s32.totalorder %s30, 1
    %p179 = por %p177, %p178
    %p181 = scmp.ne.s32.totalorder %s166, %s180
    %p182 = scmp.eq.s32.totalorder %s30, 0
    %p183 = por %p181, %p182
    %s185 = sadd.s32 %s184, 1
    %p188 = scmp.eq.s32.totalorder %s24, 1
    %p189 = scmp.ne.s32.totalorder %s184, %s186
    %p190 = scmp.eq.s32.totalorder %s24, 0
    %p191 = por %p189, %p190
    %p192 = scmp.ne.s32.totalorder %s184, %s186
    %p193 = scmp.eq.s32.totalorder %s29, 1
    %p194 = por %p192, %p193
    %p195 = scmp.ne.s32.totalorder %s186, %s187
    %p196 = scmp.eq.s32.totalorder %s29, 0
    %p197 = por %p195, %p196
    %p198 = scmp.ne.s32.totalorder %s186, %s187
    %p199 = scmp.eq.s32.totalorder %s30, 1
    %p200 = por %p198, %p199
    %p202 = scmp.ne.s32.totalorder %s187, %s201
    %p203 = scmp.eq.s32.totalorder %s30, 0
    %p204 = por %p202, %p203
    %s206 = sadd.s32 %s205, 1
    %p209 = scmp.eq.s32.totalorder %s24, 1
    %p210 = scmp.ne.s32.totalorder %s205, %s207
    %p211 = scmp.eq.s32.totalorder %s24, 0
    %p212 = por %p210, %p211
    %p213 = scmp.ne.s32.totalorder %s205, %s207
    %p214 = scmp.eq.s32.totalorder %s29, 1
    %p215 = por %p213, %p214
    %p216 = scmp.ne.s32.totalorder %s207, %s208
    %p217 = scmp.eq.s32.totalorder %s29, 0
    %p218 = por %p216, %p217
    %p219 = scmp.ne.s32.totalorder %s207, %s208
    %p220 = scmp.eq.s32.totalorder %s30, 1
    %p221 = por %p219, %p220
    %p223 = scmp.ne.s32.totalorder %s208, %s222
    %p224 = scmp.eq.s32.totalorder %s30, 0
    %p225 = por %p223, %p224
    %s227 = sadd.s32 %s226, 1
    %p230 = scmp.eq.s32.totalorder %s24, 1
    %p231 = scmp.ne.s32.totalorder %s226, %s228
    %p232 = scmp.eq.s32.totalorder %s24, 0
    %p233 = por %p231, %p232
    %p234 = scmp.ne.s32.totalorder %s226, %s228
    %p235 = scmp.eq.s32.totalorder %s29, 1
    %p236 = por %p234, %p235
    %p237 = scmp.ne.s32.totalorder %s228, %s229
    %p238 = scmp.eq.s32.totalorder %s29, 0
    %p239 = por %p237, %p238
    %p240 = scmp.ne.s32.totalorder %s228, %s229
    %p241 = scmp.eq.s32.totalorder %s30, 1
    %p242 = por %p240, %p241
    %p244 = scmp.ne.s32.totalorder %s229, %s243
    %p245 = scmp.eq.s32.totalorder %s30, 0
    %p246 = por %p244, %p245
    %s248 = sadd.s32 %s247, 1
    %p251 = scmp.eq.s32.totalorder %s24, 1
    %p252 = scmp.ne.s32.totalorder %s247, %s249
    %p253 = scmp.eq.s32.totalorder %s24, 0
    %p254 = por %p252, %p253
    %p255 = scmp.ne.s32.totalorder %s247, %s249
    %p256 = scmp.eq.s32.totalorder %s29, 1
    %p257 = por %p255, %p256
    %p258 = scmp.ne.s32.totalorder %s249, %s250
    %p259 = scmp.eq.s32.totalorder %s29, 0
    %p260 = por %p258, %p259
    %p261 = scmp.ne.s32.totalorder %s249, %s250
    %p262 = scmp.eq.s32.totalorder %s30, 1
    %p263 = por %p261, %p262
    %p265 = scmp.ne.s32.totalorder %s250, %s264
    %p266 = scmp.eq.s32.totalorder %s30, 0
    %p267 = por %p265, %p266
    %s269 = sadd.s32 %s268, 1
    %p272 = scmp.eq.s32.totalorder %s24, 1
    %p273 = scmp.ne.s32.totalorder %s268, %s270
    %p274 = scmp.eq.s32.totalorder %s24, 0
    %p275 = por %p273, %p274
    %p276 = scmp.ne.s32.totalorder %s268, %s270
    %p277 = scmp.eq.s32.totalorder %s29, 1
    %p278 = por %p276, %p277
    %p279 = scmp.ne.s32.totalorder %s270, %s271
    %p280 = scmp.eq.s32.totalorder %s29, 0
    %p281 = por %p279, %p280
    %p282 = scmp.ne.s32.totalorder %s270, %s271
    %p283 = scmp.eq.s32.totalorder %s30, 1
    %p284 = por %p282, %p283
    %p286 = scmp.ne.s32.totalorder %s271, %s285
    %p287 = scmp.eq.s32.totalorder %s30, 0
    %p288 = por %p286, %p287
    %s290 = sadd.s32 %s289, 1
    %p293 = scmp.eq.s32.totalorder %s24, 1
    %p294 = scmp.ne.s32.totalorder %s289, %s291
    %p295 = scmp.eq.s32.totalorder %s24, 0
    %p296 = por %p294, %p295
    %p297 = scmp.ne.s32.totalorder %s289, %s291
    %p298 = scmp.eq.s32.totalorder %s29, 1
    %p299 = por %p297, %p298
    %p300 = scmp.ne.s32.totalorder %s291, %s292
    %p301 = scmp.eq.s32.totalorder %s29, 0
    %p302 = por %p300, %p301
    %p303 = scmp.ne.s32.totalorder %s291, %s292
    %p304 = scmp.eq.s32.totalorder %s30, 1
    %p305 = por %p303, %p304
    %p307 = scmp.ne.s32.totalorder %s292, %s306
    %p308 = scmp.eq.s32.totalorder %s30, 0
    %p309 = por %p307, %p308
    %s311 = sadd.s32 %s310, 1
    %p314 = scmp.eq.s32.totalorder %s24, 1
    %p315 = scmp.ne.s32.totalorder %s310, %s312
    %p316 = scmp.eq.s32.totalorder %s24, 0
    %p317 = por %p315, %p316
    %p318 = scmp.ne.s32.totalorder %s310, %s312
    %p319 = scmp.eq.s32.totalorder %s29, 1
    %p320 = por %p318, %p319
    %p321 = scmp.ne.s32.totalorder %s312, %s313
    %p322 = scmp.eq.s32.totalorder %s29, 0
    %p323 = por %p321, %p322
    %p324 = scmp.ne.s32.totalorder %s312, %s313
    %p325 = scmp.eq.s32.totalorder %s30, 1
    %p326 = por %p324, %p325
    %p328 = scmp.ne.s32.totalorder %s313, %s327
    %p329 = scmp.eq.s32.totalorder %s30, 0
    %p330 = por %p328, %p329
    %s332 = sadd.s32 %s331, 1
    %p335 = scmp.eq.s32.totalorder %s24, 1
    %p336 = scmp.ne.s32.totalorder %s331, %s333
    %p337 = scmp.eq.s32.totalorder %s24, 0
    %p338 = por %p336, %p337
    %p339 = scmp.ne.s32.totalorder %s331, %s333
    %p340 = scmp.eq.s32.totalorder %s29, 1
    %p341 = por %p339, %p340
    %p342 = scmp.ne.s32.totalorder %s333, %s334
    %p343 = scmp.eq.s32.totalorder %s29, 0
    %p344 = por %p342, %p343
    %p345 = scmp.ne.s32.totalorder %s333, %s334
    %p346 = scmp.eq.s32.totalorder %s30, 1
    %p347 = por %p345, %p346
    %p349 = scmp.ne.s32.totalorder %s334, %s348
    %p350 = scmp.eq.s32.totalorder %s30, 0
    %p351 = por %p349, %p350
    %s353 = sadd.s32 %s352, 1
    %p356 = scmp.eq.s32.totalorder %s24, 1
    %p357 = scmp.ne.s32.totalorder %s352, %s354
    %p358 = scmp.eq.s32.totalorder %s24, 0
    %p359 = por %p357, %p358
    %p360 = scmp.ne.s32.totalorder %s352, %s354
    %p361 = scmp.eq.s32.totalorder %s29, 1
    %p362 = por %p360, %p361
    %p363 = scmp.ne.s32.totalorder %s354, %s355
    %p364 = scmp.eq.s32.totalorder %s29, 0
    %p365 = por %p363, %p364
    %p366 = scmp.ne.s32.totalorder %s354, %s355
    %p367 = scmp.eq.s32.totalorder %s30, 1
    %p368 = por %p366, %p367
    %p370 = scmp.ne.s32.totalorder %s355, %s369
    %p371 = scmp.eq.s32.totalorder %s30, 0
    %p372 = por %p370, %p371
    %s374 = sadd.s32 %s373, 1
    %p377 = scmp.eq.s32.totalorder %s24, 1
    %p378 = scmp.ne.s32.totalorder %s373, %s375
    %p379 = scmp.eq.s32.totalorder %s24, 0
    %p380 = por %p378, %p379
    %p381 = scmp.ne.s32.totalorder %s373, %s375
    %p382 = scmp.eq.s32.totalorder %s29, 1
    %p383 = por %p381, %p382
    %p384 = scmp.ne.s32.totalorder %s375, %s376
    %p385 = scmp.eq.s32.totalorder %s29, 0
    %p386 = por %p384, %p385
    %p387 = scmp.ne.s32.totalorder %s375, %s376
    %p388 = scmp.eq.s32.totalorder %s30, 1
    %p389 = por %p387, %p388
    %p391 = scmp.ne.s32.totalorder %s376, %s390
    %p392 = scmp.eq.s32.totalorder %s30, 0
    %p393 = por %p391, %p392
    %s395 = sadd.s32 %s394, 1
    %p398 = scmp.eq.s32.totalorder %s24, 1
    %p399 = scmp.ne.s32.totalorder %s394, %s396
    %p400 = scmp.eq.s32.totalorder %s24, 0
    %p401 = por %p399, %p400
    %p402 = scmp.ne.s32.totalorder %s394, %s396
    %p403 = scmp.eq.s32.totalorder %s29, 1
    %p404 = por %p402, %p403
    %p405 = scmp.ne.s32.totalorder %s396, %s397
    %p406 = scmp.eq.s32.totalorder %s29, 0
    %p407 = por %p405, %p406
    %p408 = scmp.ne.s32.totalorder %s396, %s397
    %p409 = scmp.eq.s32.totalorder %s30, 1
    %p410 = por %p408, %p409
    %p412 = scmp.ne.s32.totalorder %s397, %s411
    %p413 = scmp.eq.s32.totalorder %s30, 0
    %p414 = por %p412, %p413
    %s415 = ssub.s32 %s24, %s31
    %p416 = scmp.eq.s32.totalorder %s415, 0
    %s418 = sadd.s32 %s417, 1
    %s419 = scalar_select %p416, %s417, %s418
    %p422 = pneg %p416
    %p423 = scmp.eq.s32.totalorder %s24, 1
    %p424 = por %p422, %p423
    %p425 = scmp.ne.s32.totalorder %s417, %s420
    %p426 = scmp.eq.s32.totalorder %s24, 0
    %p427 = por %p425, %p426
    %p428 = scmp.ne.s32.totalorder %s417, %s420
    %p429 = scmp.eq.s32.totalorder %s29, 1
    %p430 = por %p428, %p429
    %p431 = scmp.ne.s32.totalorder %s420, %s421
    %p432 = scmp.eq.s32.totalorder %s29, 0
    %p433 = por %p431, %p432
    %p434 = scmp.ne.s32.totalorder %s420, %s421
    %p435 = scmp.eq.s32.totalorder %s30, 1
    %p436 = por %p434, %p435
    %p438 = scmp.ne.s32.totalorder %s421, %s437
    %p439 = scmp.eq.s32.totalorder %s30, 0
    %p440 = por %p438, %p439
    %p441 = scmp.le.s32.totalorder 1, %s24
    %p442 = scmp.lt.s32.totalorder %s24, 3
    %p443 = pnand %p441, %p442
    %p444 = pneg %p443
    // Predicated region
    $region9: #{transformer_ocr_forward.1} parent=5 // pred_check
      _
    $region10: #{transformer_ocr_forward.1} parent=5 // pred_check_branch
      %446 = sbr.rel (%p443) target = $region12
    $region11: #{transformer_ocr_forward.1} parent=5 // pred_region
      %s447 = ssub.s32 %s24, 1
      // Predicated region
      $region13: #{transformer_ocr_forward.1} parent=11 // pred_check
        %p448 = pneg %p71
      $region14: #{transformer_ocr_forward.1} parent=11 // pred_check_branch
        %450 = sbr.rel (%p448) target = $region16
      $region15: #{transformer_ocr_forward.1} parent=11 // pred_region
        _
      $region16: #{transformer_ocr_forward.1} parent=11 // pred_fallthru
        _
      // Predicated region
      $region17: #{transformer_ocr_forward.1} parent=11 // pred_check
        %p451 = pneg %p92
      $region18: #{transformer_ocr_forward.1} parent=11 // pred_check_branch
        %453 = sbr.rel (%p451) target = $region20
      $region19: #{transformer_ocr_forward.1} parent=11 // pred_region
        _
      $region20: #{transformer_ocr_forward.1} parent=11 // pred_fallthru
        _
      // Predicated region
      $region21: #{transformer_ocr_forward.1} parent=11 // pred_check
        %p454 = pneg %p113
      $region22: #{transformer_ocr_forward.1} parent=11 // pred_check_branch
        %456 = sbr.rel (%p454) target = $region24
      $region23: #{transformer_ocr_forward.1} parent=11 // pred_region
        _
      $region24: #{transformer_ocr_forward.1} parent=11 // pred_fallthru
        _
      // Predicated region
      $region25: #{transformer_ocr_forward.1} parent=11 // pred_check
        %p457 = pneg %p134
      $region26: #{transformer_ocr_forward.1} parent=11 // pred_check_branch
        %459 = sbr.rel (%p457) target = $region28
      $region27: #{transformer_ocr_forward.1} parent=11 // pred_region
        _
      $region28: #{transformer_ocr_forward.1} parent=11 // pred_fallthru
        _
      // Predicated region
      $region29: #{transformer_ocr_forward.1} parent=11 // pred_check
        %p460 = pneg %p155
      $region30: #{transformer_ocr_forward.1} parent=11 // pred_check_branch
        %462 = sbr.rel (%p460) target = $region32
      $region31: #{transformer_ocr_forward.1} parent=11 // pred_region
        _
      $region32: #{transformer_ocr_forward.1} parent=11 // pred_fallthru
        _
      // Predicated region
      $region33: #{transformer_ocr_forward.1} parent=11 // pred_check
        %p463 = pneg %p176
      $region34: #{transformer_ocr_forward.1} parent=11 // pred_check_branch
        %465 = sbr.rel (%p463) target = $region36
      $region35: #{transformer_ocr_forward.1} parent=11 // pred_region
        _
      $region36: #{transformer_ocr_forward.1} parent=11 // pred_fallthru
        _
      // Predicated region
      $region37: #{transformer_ocr_forward.1} parent=11 // pred_check
        %p466 = pneg %p197
      $region38: #{transformer_ocr_forward.1} parent=11 // pred_check_branch
        %468 = sbr.rel (%p466) target = $region40
      $region39: #{transformer_ocr_forward.1} parent=11 // pred_region
        _
      $region40: #{transformer_ocr_forward.1} parent=11 // pred_fallthru
        _
      // Predicated region
      $region41: #{transformer_ocr_forward.1} parent=11 // pred_check
        %p469 = pneg %p218
      $region42: #{transformer_ocr_forward.1} parent=11 // pred_check_branch
        %471 = sbr.rel (%p469) target = $region44
      $region43: #{transformer_ocr_forward.1} parent=11 // pred_region
        _
      $region44: #{transformer_ocr_forward.1} parent=11 // pred_fallthru
        _
      // Predicated region
      $region45: #{transformer_ocr_forward.1} parent=11 // pred_check
        %p472 = pneg %p239
      $region46: #{transformer_ocr_forward.1} parent=11 // pred_check_branch
        %474 = sbr.rel (%p472) target = $region48
      $region47: #{transformer_ocr_forward.1} parent=11 // pred_region
        _
      $region48: #{transformer_ocr_forward.1} parent=11 // pred_fallthru
        _
      // Predicated region
      $region49: #{transformer_ocr_forward.1} parent=11 // pred_check
        %p475 = pneg %p260
      $region50: #{transformer_ocr_forward.1} parent=11 // pred_check_branch
        %477 = sbr.rel (%p475) target = $region52
      $region51: #{transformer_ocr_forward.1} parent=11 // pred_region
        _
      $region52: #{transformer_ocr_forward.1} parent=11 // pred_fallthru
        _
      // Predicated region
      $region53: #{transformer_ocr_forward.1} parent=11 // pred_check
        %p478 = pneg %p281
      $region54: #{transformer_ocr_forward.1} parent=11 // pred_check_branch
        %480 = sbr.rel (%p478) target = $region56
      $region55: #{transformer_ocr_forward.1} parent=11 // pred_region
        _
      $region56: #{transformer_ocr_forward.1} parent=11 // pred_fallthru
        _
      // Predicated region
      $region57: #{transformer_ocr_forward.1} parent=11 // pred_check
        %p481 = pneg %p302
      $region58: #{transformer_ocr_forward.1} parent=11 // pred_check_branch
        %483 = sbr.rel (%p481) target = $region60
      $region59: #{transformer_ocr_forward.1} parent=11 // pred_region
        _
      $region60: #{transformer_ocr_forward.1} parent=11 // pred_fallthru
        _
      // Predicated region
      $region61: #{transformer_ocr_forward.1} parent=11 // pred_check
        %p484 = pneg %p323
      $region62: #{transformer_ocr_forward.1} parent=11 // pred_check_branch
        %486 = sbr.rel (%p484) target = $region64
      $region63: #{transformer_ocr_forward.1} parent=11 // pred_region
        _
      $region64: #{transformer_ocr_forward.1} parent=11 // pred_fallthru
        _
      // Predicated region
      $region65: #{transformer_ocr_forward.1} parent=11 // pred_check
        %p487 = pneg %p344
      $region66: #{transformer_ocr_forward.1} parent=11 // pred_check_branch
        %489 = sbr.rel (%p487) target = $region68
      $region67: #{transformer_ocr_forward.1} parent=11 // pred_region
        _
      $region68: #{transformer_ocr_forward.1} parent=11 // pred_fallthru
        _
      // Predicated region
      $region69: #{transformer_ocr_forward.1} parent=11 // pred_check
        %p490 = pneg %p365
      $region70: #{transformer_ocr_forward.1} parent=11 // pred_check_branch
        %492 = sbr.rel (%p490) target = $region72
      $region71: #{transformer_ocr_forward.1} parent=11 // pred_region
        _
      $region72: #{transformer_ocr_forward.1} parent=11 // pred_fallthru
        _
      // Predicated region
      $region73: #{transformer_ocr_forward.1} parent=11 // pred_check
        %p493 = pneg %p386
      $region74: #{transformer_ocr_forward.1} parent=11 // pred_check_branch
        %495 = sbr.rel (%p493) target = $region76
      $region75: #{transformer_ocr_forward.1} parent=11 // pred_region
        _
      $region76: #{transformer_ocr_forward.1} parent=11 // pred_fallthru
        _
      // Predicated region
      $region77: #{transformer_ocr_forward.1} parent=11 // pred_check
        %p496 = pneg %p407
      $region78: #{transformer_ocr_forward.1} parent=11 // pred_check_branch
        %498 = sbr.rel (%p496) target = $region80
      $region79: #{transformer_ocr_forward.1} parent=11 // pred_region
        _
      $region80: #{transformer_ocr_forward.1} parent=11 // pred_fallthru
        _
    $region12: #{transformer_ocr_forward.1} parent=5 // pred_fallthru
      _
    %p499 = scmp.lt.s32.totalorder %s24, 2
    // Predicated region
    $region81: #{transformer_ocr_forward.1} parent=5 // pred_check
      %p500 = pneg %p499
    $region82: #{transformer_ocr_forward.1} parent=5 // pred_check_branch
      %502 = sbr.rel (%p500) target = $region84
    $region83: #{transformer_ocr_forward.1} parent=5 // pred_region
      // Predicated region
      $region85: #{transformer_ocr_forward.1} parent=83 // pred_check
        %p503 = pneg %p44
      $region86: #{transformer_ocr_forward.1} parent=83 // pred_check_branch
        %505 = sbr.rel (%p503) target = $region88
      $region87: #{transformer_ocr_forward.1} parent=83 // pred_region
        %p506 = scmp.lt.s32.totalorder %s24, 1
        %s507 = scalar_select %p506, %s24, 1
        %s508 = smul.addr %s507, 3
        %s509 = smul.addr %s508, 8
        %s510 = scalar_lea.vmem %s0, %s509
      $region88: #{transformer_ocr_forward.1} parent=83 // pred_fallthru
        _
    $region84: #{transformer_ocr_forward.1} parent=5 // pred_fallthru
      _
    %p511 = scmp.le.s32.totalorder 1, %s24
    %p512 = scmp.lt.s32.totalorder %s24, 3
    %p513 = pnand %p511, %p512
    %p514 = pneg %p513
    // Predicated region
    $region89: #{transformer_ocr_forward.1} parent=5 // pred_check
      _
    $region90: #{transformer_ocr_forward.1} parent=5 // pred_check_branch
      %516 = sbr.rel (%p513) target = $region92
    $region91: #{transformer_ocr_forward.1} parent=5 // pred_region
      %s517 = ssub.s32 %s24, 1
      %p518 = scmp.lt.s32.totalorder %s29, 1
      %s519 = scalar_select %p518, %s29, 1
      %s520 = smul.addr %s519, 3
      %s521 = smul.addr %s520, 8
      %s522 = scalar_lea.vmem %s0, %s521
      %p523 = pneg %p50
      %p524 = pneg %p47
      %p525 = pneg %p71
      %p526 = pneg %p68
      %p527 = pneg %p92
      %p528 = pneg %p89
      %p529 = pneg %p113
      %p530 = pneg %p110
      %p531 = pneg %p134
      %p532 = pneg %p131
      %p533 = pneg %p155
      %p534 = pneg %p152
      %p535 = pneg %p176
      %p536 = pneg %p173
      %p537 = pneg %p197
      %p538 = pneg %p194
      %p539 = pneg %p218
      %p540 = pneg %p215
      %p541 = pneg %p239
      %p542 = pneg %p236
      %p543 = pneg %p260
      %p544 = pneg %p257
      %p545 = pneg %p281
      %p546 = pneg %p278
      %p547 = pneg %p302
      %p548 = pneg %p299
      %p549 = pneg %p323
      %p550 = pneg %p320
      %p551 = pneg %p344
      %p552 = pneg %p341
      %p553 = pneg %p365
      %p554 = pneg %p362
      %p555 = pneg %p386
      %p556 = pneg %p383
      %p557 = pneg %p407
      %p558 = pneg %p404
      %p559 = pneg %p433
      %p560 = pneg %p430
      %p561 = scmp.lt.s32.totalorder %s29, 1
      %s562 = scalar_select %p561, %s29, 1
      %s563 = smul.addr %s562, 8
      %s564 = scalar_lea.vmem %s18, %s563
      %p565 = scmp.lt.s32.totalorder %s29, 1
      %s566 = scalar_select %p565, %s29, 1
      %s567 = smul.addr %s566, 3
      %s568 = smul.addr %s567, 8
      %s569 = scalar_lea.vmem %s0, %s568
      %p570 = scmp.lt.s32.totalorder %s29, 1
      %s571 = scalar_select %p570, %s29, 1
      %s572 = smul.addr %s571, 8
      %s573 = scalar_lea.vmem %s18, %s572
      %v575 = vld [vmem:[%s569] sm:$0xff]
      %v576 = vld [vmem:[%s569 + $0x8] sm:$0xff]
      %v577 = vld [vmem:[%s569 + $0x10] sm:$0xff]
      %v578 = vpack.c.bf16 %v575, %v575
      %v579 = vpack.c.bf16 %v576, %v576
      %v580 = vpack.c.bf16 %v577, %v577
      %v581 = vld [vmem:[%s1] sm:$0xf]
      %v582 = vld [vmem:[%s1 + $0x4] sm:$0xf]
      %v583 = vld [vmem:[%s1 + $0x8] sm:$0xf]
      %v584 = vld [vmem:[%s1 + $0xc] sm:$0xf]
      %v585 = vld [vmem:[%s1 + $0x10] sm:$0xf]
      %v586 = vld [vmem:[%s1 + $0x14] sm:$0xf]
      %v587 = vld [vmem:[%s1 + $0x18] sm:$0xf]
      %v588 = vld [vmem:[%s1 + $0x1c] sm:$0xf]
      %v589 = vld [vmem:[%s1 + $0x20] sm:$0xf]
      %v590 = vld [vmem:[%s1 + $0x24] sm:$0xf]
      %v591 = vld [vmem:[%s1 + $0x28] sm:$0xf]
      %v592 = vld [vmem:[%s1 + $0x2c] sm:$0xf]
      %v593 = vld [vmem:[%s1 + $0x30] sm:$0xf]
      %v594 = vld [vmem:[%s1 + $0x34] sm:$0xf]
      %v595 = vld [vmem:[%s1 + $0x38] sm:$0xf]
      %v596 = vld [vmem:[%s1 + $0x3c] sm:$0xf]
      %v597 = vld [vmem:[%s1 + $0x40] sm:$0xf]
      %v598 = vld [vmem:[%s1 + $0x44] sm:$0xf]
      %v599 = vld [vmem:[%s1 + $0x48] sm:$0xf]
      %v600 = vld [vmem:[%s1 + $0x4c] sm:$0xf]
      %v601 = vld [vmem:[%s1 + $0x50] sm:$0xf]
      %v602 = vld [vmem:[%s1 + $0x54] sm:$0xf]
      %v603 = vld [vmem:[%s1 + $0x58] sm:$0xf]
      %v604 = vld [vmem:[%s1 + $0x5c] sm:$0xf]
      %v605 = vld [vmem:[%s1 + $0x60] sm:$0xf]
      %v606 = vld [vmem:[%s1 + $0x64] sm:$0xf]
      %v607 = vld [vmem:[%s1 + $0x68] sm:$0xf]
      %v608 = vld [vmem:[%s1 + $0x6c] sm:$0xf]
      %v609 = vld [vmem:[%s1 + $0x70] sm:$0xf]
      %v610 = vld [vmem:[%s1 + $0x74] sm:$0xf]
      %v611 = vld [vmem:[%s1 + $0x78] sm:$0xf]
      %v612 = vld [vmem:[%s1 + $0x7c] sm:$0xf]
      %v613 = vld [vmem:[%s1 + $0x80] sm:$0xf]
      %v614 = vld [vmem:[%s1 + $0x84] sm:$0xf]
      %v615 = vld [vmem:[%s1 + $0x88] sm:$0xf]
      %v616 = vld [vmem:[%s1 + $0x8c] sm:$0xf]
      %v617 = vld [vmem:[%s2] sm:$0x1]
      %v619 = vlaneseq
      %v620 = vshrl.u32 %v619, 7
      %v621 = vsub.s32 0, %v620
      %v622 = vrot.slane %v617, %v621
      %v660 = vunpack.c.l.b16 %v581
      %v661 = vunpack.c.l.b16 %v582
      %v662 = vunpack.c.l.b16 %v583
      %v663 = vunpack.c.l.b16 %v584
      %v664 = vunpack.c.l.b16 %v585
      %v665 = vunpack.c.l.b16 %v586
      %v666 = vunpack.c.l.b16 %v587
      %v667 = vunpack.c.l.b16 %v588
      %v668 = vunpack.c.l.b16 %v589
      %v669 = vunpack.c.l.b16 %v590
      %v670 = vunpack.c.l.b16 %v591
      %v671 = vunpack.c.l.b16 %v592
      %v672 = vunpack.c.l.b16 %v593
      %v673 = vunpack.c.l.b16 %v594
      %v674 = vunpack.c.l.b16 %v595
      %v675 = vunpack.c.l.b16 %v596
      %v676 = vunpack.c.l.b16 %v597
      %v677 = vunpack.c.l.b16 %v598
      %v678 = vunpack.c.l.b16 %v599
      %v679 = vunpack.c.l.b16 %v600
      %v680 = vunpack.c.l.b16 %v601
      %v681 = vunpack.c.l.b16 %v602
      %v682 = vunpack.c.l.b16 %v603
      %v683 = vunpack.c.l.b16 %v604
      %v684 = vunpack.c.l.b16 %v605
      %v685 = vunpack.c.l.b16 %v606
      %v686 = vunpack.c.l.b16 %v607
      %v687 = vunpack.c.l.b16 %v608
      %v688 = vunpack.c.l.b16 %v609
      %v689 = vunpack.c.l.b16 %v610
      %v690 = vunpack.c.l.b16 %v611
      %v691 = vunpack.c.l.b16 %v612
      %v692 = vunpack.c.l.b16 %v613
      %v693 = vunpack.c.l.b16 %v614
      %v694 = vunpack.c.l.b16 %v615
      %v695 = vunpack.c.l.b16 %v616
      %v696 = vpack.c.b16 %v661, %v660
      %v697 = vpack.c.b16 %v663, %v662
      %v698 = vpack.c.b16 %v665, %v664
      %v699 = vpack.c.b16 %v667, %v666
      %v700 = vpack.c.b16 %v669, %v668
      %v701 = vpack.c.b16 %v671, %v670
      %v702 = vpack.c.b16 %v673, %v672
      %v703 = vpack.c.b16 %v675, %v674
      %v704 = vpack.c.b16 %v677, %v676
      %v705 = vpack.c.b16 %v679, %v678
      %v706 = vpack.c.b16 %v681, %v680
      %v707 = vpack.c.b16 %v683, %v682
      %v708 = vpack.c.b16 %v685, %v684
      %v709 = vpack.c.b16 %v687, %v686
      %v710 = vpack.c.b16 %v689, %v688
      %v711 = vpack.c.b16 %v691, %v690
      %v712 = vpack.c.b16 %v693, %v692
      %v713 = vpack.c.b16 %v695, %v694
      %vm732 = vcmask 261120
      %v734 = vsel %vm732, %v580, 0
      %736 = vmatprep.subr.bf16.mxu0 0
      %737 = vmatpush1.bf16.msra.mxu0 %v703
      %738 = vmatprep.subr.bf16.mxu0 0
      %739 = vmatpush1.bf16.msra.mxu0 %v702
      %740 = vmatprep.subr.bf16.mxu0 0
      %741 = vmatpush1.bf16.msra.mxu0 %v701
      %742 = vmatprep.subr.bf16.mxu0 0
      %743 = vmatpush1.bf16.msra.mxu0 %v700
      %744 = vmatprep.subr.bf16.mxu0 0
      %745 = vmatpush1.bf16.msra.mxu0 %v699
      %746 = vmatprep.subr.bf16.mxu0 0
      %747 = vmatpush1.bf16.msra.mxu0 %v698
      %748 = vmatprep.subr.bf16.mxu0 0
      %749 = vmatpush1.bf16.msra.mxu0 %v697
      %750 = vmatprep.subr.bf16.mxu0 0
      %751 = vmatpush1.bf16.msra.mxu0 %v696
      %752 = vmatprep.subr.bf16.mxu0 0
      %753 = vmatpush2.bf16.msra.mxu0 %v711
      %754 = vmatprep.subr.bf16.mxu0 0
      %755 = vmatpush2.bf16.msra.mxu0 %v710
      %756 = vmatprep.subr.bf16.mxu0 0
      %757 = vmatpush2.bf16.msra.mxu0 %v709
      %758 = vmatprep.subr.bf16.mxu0 0
      %759 = vmatpush2.bf16.msra.mxu0 %v708
      %760 = vmatprep.subr.bf16.mxu0 0
      %761 = vmatpush2.bf16.msra.mxu0 %v707
      %762 = vmatprep.subr.bf16.mxu0 0
      %763 = vmatpush2.bf16.msra.mxu0 %v706
      %764 = vmatprep.subr.bf16.mxu0 0
      %765 = vmatpush2.bf16.msra.mxu0 %v705
      %766 = vmatprep.subr.bf16.mxu0 0
      %767 = vmatpush2.bf16.msra.mxu0 %v704
      %768 = vmatprep.mubr.bf16.mxu0 %v579
      %769 = vmatmul.mubr.bf16.gmra.mxu0 %v578
      %v770 = vpop.f32.mrf.mxu0
      %v771 = vadd.f32 %v622, %v770
      %v772 = vpop.f32.mrf.mxu0
      %v773 = vpop.f32.mrf.mxu0
      %v774 = vpop.f32.mrf.mxu0
      %775 = vdwg.mxu0
      %776 = vmatprep.subr.bf16.mxu0 0
      %777 = vmatpush1.bf16.msra.mxu0 0
      %778 = vmatprep.subr.bf16.mxu0 0
      %779 = vmatpush1.bf16.msra.mxu0 0
      %780 = vmatprep.subr.bf16.mxu0 0
      %781 = vmatpush1.bf16.msra.mxu0 0
      %782 = vmatprep.subr.bf16.mxu0 0
      %783 = vmatpush1.bf16.msra.mxu0 0
      %784 = vmatprep.subr.bf16.mxu0 0
      %785 = vmatpush1.bf16.msra.mxu0 0
      %786 = vmatprep.subr.bf16.mxu0 0
      %787 = vmatpush1.bf16.msra.mxu0 0
      %788 = vmatprep.subr.bf16.mxu0 0
      %789 = vmatpush1.bf16.msra.mxu0 %v713
      %790 = vmatprep.subr.bf16.mxu0 0
      %791 = vmatpush1.bf16.msra.mxu0 %v712
      %792 = vmatprep.subr.bf16.mxu0 0
      %793 = vmatpush2.bf16.msra.mxu0 0
      %794 = vmatprep.subr.bf16.mxu0 0
      %795 = vmatpush2.bf16.msra.mxu0 0
      %796 = vmatprep.subr.bf16.mxu0 0
      %797 = vmatpush2.bf16.msra.mxu0 0
      %798 = vmatprep.subr.bf16.mxu0 0
      %799 = vmatpush2.bf16.msra.mxu0 0
      %800 = vmatprep.subr.bf16.mxu0 0
      %801 = vmatpush2.bf16.msra.mxu0 0
      %802 = vmatprep.subr.bf16.mxu0 0
      %803 = vmatpush2.bf16.msra.mxu0 0
      %804 = vmatprep.subr.bf16.mxu0 0
      %805 = vmatpush2.bf16.msra.mxu0 0
      %806 = vmatprep.subr.bf16.mxu0 0
      %807 = vmatpush2.bf16.msra.mxu0 0
      %808 = vmatprep.mubr.bf16.mxu0 0
      %809 = vmatmul.mubr.bf16.gmra.mxu0 %v734
      %v810 = vpop.f32.mrf.mxu0
      %v811 = vadd.f32 %v771, %v810
      %v812 = vpop.f32.mrf.mxu0
      %v813 = vpop.f32.mrf.mxu0
      %v814 = vpop.f32.mrf.mxu0
      %815 = vdwg.mxu0
      %v816 = vmax.f32 %v811, 0.0
      %v817 = vpack.c.bf16 %v816, %v816
      %v818 = vld [vmem:[%s3] sm:$0xf]
      %v819 = vld [vmem:[%s3 + $0x4] sm:$0xf]
      %v820 = vld [vmem:[%s3 + $0x8] sm:$0xf]
      %v821 = vld [vmem:[%s3 + $0xc] sm:$0xf]
      %v822 = vld [vmem:[%s3 + $0x10] sm:$0xf]
      %v823 = vld [vmem:[%s3 + $0x14] sm:$0xf]
      %v824 = vld [vmem:[%s3 + $0x18] sm:$0xf]
      %v825 = vld [vmem:[%s3 + $0x1c] sm:$0xf]
      %v826 = vld [vmem:[%s4] sm:$0x1]
      %v828 = vlaneseq
      %v829 = vshrl.u32 %v828, 7
      %v830 = vsub.s32 0, %v829
      %v831 = vrot.slane %v826, %v830
      %v841 = vunpack.c.l.b16 %v818
      %v842 = vunpack.c.l.b16 %v819
      %v843 = vunpack.c.l.b16 %v820
      %v844 = vunpack.c.l.b16 %v821
      %v845 = vunpack.c.l.b16 %v822
      %v846 = vunpack.c.l.b16 %v823
      %v847 = vunpack.c.l.b16 %v824
      %v848 = vunpack.c.l.b16 %v825
      %v849 = vpack.c.b16 %v842, %v841
      %v850 = vpack.c.b16 %v844, %v843
      %v851 = vpack.c.b16 %v846, %v845
      %v852 = vpack.c.b16 %v848, %v847
      %vm857 = vcmask 523264
      %v859 = vsel %vm857, %v817, 0
      %861 = vmatprep.subr.bf16.mxu0 0
      %862 = vmatpush1.bf16.msra.mxu0 0
      %863 = vmatprep.subr.bf16.mxu0 0
      %864 = vmatpush1.bf16.msra.mxu0 0
      %865 = vmatprep.subr.bf16.mxu0 0
      %866 = vmatpush1.bf16.msra.mxu0 0
      %867 = vmatprep.subr.bf16.mxu0 0
      %868 = vmatpush1.bf16.msra.mxu0 0
      %869 = vmatprep.subr.bf16.mxu0 0
      %870 = vmatpush1.bf16.msra.mxu0 %v852
      %871 = vmatprep.subr.bf16.mxu0 0
      %872 = vmatpush1.bf16.msra.mxu0 %v851
      %873 = vmatprep.subr.bf16.mxu0 0
      %874 = vmatpush1.bf16.msra.mxu0 %v850
      %875 = vmatprep.subr.bf16.mxu0 0
      %876 = vmatpush1.bf16.msra.mxu0 %v849
      %877 = vmatprep.subr.bf16.mxu0 0
      %878 = vmatpush2.bf16.msra.mxu0 0
      %879 = vmatprep.subr.bf16.mxu0 0
      %880 = vmatpush2.bf16.msra.mxu0 0
      %881 = vmatprep.subr.bf16.mxu0 0
      %882 = vmatpush2.bf16.msra.mxu0 0
      %883 = vmatprep.subr.bf16.mxu0 0
      %884 = vmatpush2.bf16.msra.mxu0 0
      %885 = vmatprep.subr.bf16.mxu0 0
      %886 = vmatpush2.bf16.msra.mxu0 0
      %887 = vmatprep.subr.bf16.mxu0 0
      %888 = vmatpush2.bf16.msra.mxu0 0
      %889 = vmatprep.subr.bf16.mxu0 0
      %890 = vmatpush2.bf16.msra.mxu0 0
      %891 = vmatprep.subr.bf16.mxu0 0
      %892 = vmatpush2.bf16.msra.mxu0 0
      %893 = vmatprep.mubr.bf16.mxu0 0
      %894 = vmatmul.mubr.bf16.gmra.mxu0 %v859
      %v895 = vpop.f32.mrf.mxu0
      %v896 = vadd.f32 %v831, %v895
      %v897 = vpop.f32.mrf.mxu0
      %v898 = vpop.f32.mrf.mxu0
      %v899 = vpop.f32.mrf.mxu0
      %900 = vdwg.mxu0
      %v901 = vmax.f32 %v896, 0.0
      %v902 = vpack.c.bf16 %v901, %v901
      %v903 = vld [vmem:[%s5] sm:$0xf]
      %v904 = vld [vmem:[%s5 + $0x4] sm:$0xf]
      %v905 = vld [vmem:[%s5 + $0x8] sm:$0xf]
      %v906 = vld [vmem:[%s5 + $0xc] sm:$0xf]
      %v907 = vld [vmem:[%s6] sm:$0x1]
      %v909 = vlaneseq
      %v910 = vshrl.u32 %v909, 7
      %v911 = vsub.s32 0, %v910
      %v912 = vrot.slane %v907, %v911
      %v918 = vunpack.c.l.b16 %v903
      %v919 = vunpack.c.l.b16 %v904
      %v920 = vunpack.c.l.b16 %v905
      %v921 = vunpack.c.l.b16 %v906
      %v922 = vpack.c.b16 %v919, %v918
      %v923 = vpack.c.b16 %v921, %v920
      %v927 = vsel %vm732, %v902, 0
      %929 = vmatprep.subr.bf16.mxu0 0
      %930 = vmatpush1.bf16.msra.mxu0 0
      %931 = vmatprep.subr.bf16.mxu0 0
      %932 = vmatpush1.bf16.msra.mxu0 0
      %933 = vmatprep.subr.bf16.mxu0 0
      %934 = vmatpush1.bf16.msra.mxu0 0
      %935 = vmatprep.subr.bf16.mxu0 0
      %936 = vmatpush1.bf16.msra.mxu0 0
      %937 = vmatprep.subr.bf16.mxu0 0
      %938 = vmatpush1.bf16.msra.mxu0 0
      %939 = vmatprep.subr.bf16.mxu0 0
      %940 = vmatpush1.bf16.msra.mxu0 0
      %941 = vmatprep.subr.bf16.mxu0 0
      %942 = vmatpush1.bf16.msra.mxu0 %v923
      %943 = vmatprep.subr.bf16.mxu0 0
      %944 = vmatpush1.bf16.msra.mxu0 %v922
      %945 = vmatprep.subr.bf16.mxu0 0
      %946 = vmatpush2.bf16.msra.mxu0 0
      %947 = vmatprep.subr.bf16.mxu0 0
      %948 = vmatpush2.bf16.msra.mxu0 0
      %949 = vmatprep.subr.bf16.mxu0 0
      %950 = vmatpush2.bf16.msra.mxu0 0
      %951 = vmatprep.subr.bf16.mxu0 0
      %952 = vmatpush2.bf16.msra.mxu0 0
      %953 = vmatprep.subr.bf16.mxu0 0
      %954 = vmatpush2.bf16.msra.mxu0 0
      %955 = vmatprep.subr.bf16.mxu0 0
      %956 = vmatpush2.bf16.msra.mxu0 0
      %957 = vmatprep.subr.bf16.mxu0 0
      %958 = vmatpush2.bf16.msra.mxu0 0
      %959 = vmatprep.subr.bf16.mxu0 0
      %960 = vmatpush2.bf16.msra.mxu0 0
      %961 = vmatprep.mubr.bf16.mxu0 0
      %962 = vmatmul.mubr.bf16.gmra.mxu0 %v927
      %v963 = vpop.f32.mrf.mxu0
      %v964 = vadd.f32 %v912, %v963
      %v965 = vpop.f32.mrf.mxu0
      %v966 = vpop.f32.mrf.mxu0
      %v967 = vpop.f32.mrf.mxu0
      %968 = vdwg.mxu0
      %v969 = vld [vmem:[%s7] sm:$0xf]
      %v970 = vld [vmem:[%s7 + $0x4] sm:$0xf]
      %v971 = vld [vmem:[%s7 + $0x8] sm:$0xf]
      %v972 = vld [vmem:[%s7 + $0xc] sm:$0xf]
      %v973 = vpack.c.bf16 %v964, %v964
      %975 = vrot.lane.b32.xlu0 %v973, 96
      %v976 = vpop.permute.xlu0 %975
      %vm977 = vcmask 64512
      %v979 = vsel %vm977, %v973, 0
      %v982 = vsel %vm977, %v976, 0
      %984 = vmatprep.subr.bf16.mxu0 0
      %985 = vmatpush1.bf16.xpose.msra.mxu0 0
      %986 = vmatprep.subr.bf16.mxu0 0
      %987 = vmatpush1.bf16.xpose.msra.mxu0 0
      %988 = vmatprep.subr.bf16.mxu0 0
      %989 = vmatpush1.bf16.xpose.msra.mxu0 0
      %990 = vmatprep.subr.bf16.mxu0 0
      %991 = vmatpush1.bf16.xpose.msra.mxu0 0
      %992 = vmatprep.subr.bf16.mxu0 0
      %993 = vmatpush1.bf16.xpose.msra.mxu0 0
      %994 = vmatprep.subr.bf16.mxu0 0
      %995 = vmatpush1.bf16.xpose.msra.mxu0 0
      %996 = vmatprep.subr.bf16.mxu0 0
      %997 = vmatpush1.bf16.xpose.msra.mxu0 0
      %998 = vmatprep.subr.bf16.mxu0 0
      %999 = vmatpush1.bf16.xpose.msra.mxu0 %v982
      %1000 = vmatprep.subr.bf16.mxu0 0
      %1001 = vmatpush2.bf16.xpose.msra.mxu0 0
      %1002 = vmatprep.subr.bf16.mxu0 0
      %1003 = vmatpush2.bf16.xpose.msra.mxu0 0
      %1004 = vmatprep.subr.bf16.mxu0 0
      %1005 = vmatpush2.bf16.xpose.msra.mxu0 0
      %1006 = vmatprep.subr.bf16.mxu0 0
      %1007 = vmatpush2.bf16.xpose.msra.mxu0 0
      %1008 = vmatprep.subr.bf16.mxu0 0
      %1009 = vmatpush2.bf16.xpose.msra.mxu0 0
      %1010 = vmatprep.subr.bf16.mxu0 0
      %1011 = vmatpush2.bf16.xpose.msra.mxu0 0
      %1012 = vmatprep.subr.bf16.mxu0 0
      %1013 = vmatpush2.bf16.xpose.msra.mxu0 0
      %1014 = vmatprep.subr.bf16.mxu0 0
      %1015 = vmatpush2.bf16.xpose.msra.mxu0 0
      %1016 = vmatprep.mubr.bf16.mxu0 0
      %1017 = vmatmul.mubr.bf16.gmra.mxu0 %v979
      %v1018 = vpop.f32.mrf.mxu0
      %v1019 = vadd.f32 0.0, %v1018
      %v1020 = vpop.f32.mrf.mxu0
      %v1021 = vpop.f32.mrf.mxu0
      %v1022 = vpop.f32.mrf.mxu0
      %1023 = vdwg.mxu0
      %v1024 = vsel %vm977, %v1019, -inf
      %1025 = vmax.xlane.f32.xlu0 %v1024
      %v1026 = vpop.xlane.xlu0 %1025
      %v1027 = vsub.f32 %v1019, %v1026
      %v1028 = vmul.f32 %v1027, 1.442695
      %v1029 = vpow.pop %v1028
      %v1030 = vsel %vm977, %v1029, 0.0
      %1031 = vadd.xlane.f32.xlu0 %v1030
      %v1032 = vpop.xlane.xlu0 %1031
      %v1033 = vrcp.pop %v1032
      %v1034 = vmul.f32 %v1029, %v1033
      %v1035 = vpack.c.bf16 %v1034, %v1034
      %1036 = vrot.lane.b32.xlu0 %v973, 64
      %v1037 = vpop.permute.xlu0 %1036
      %v1039 = vsel %vm977, %v1035, 0
      %vm1041 = vcmask 1043456
      %v1043 = vsel %vm1041, %v1037, 0
      %1045 = vmatprep.subr.bf16.mxu0 0
      %1046 = vmatpush1.bf16.msra.mxu0 0
      %1047 = vmatprep.subr.bf16.mxu0 0
      %1048 = vmatpush1.bf16.msra.mxu0 0
      %1049 = vmatprep.subr.bf16.mxu0 0
      %1050 = vmatpush1.bf16.msra.mxu0 0
      %1051 = vmatprep.subr.bf16.mxu0 0
      %1052 = vmatpush1.bf16.msra.mxu0 0
      %1053 = vmatprep.subr.bf16.mxu0 0
      %1054 = vmatpush1.bf16.msra.mxu0 0
      %1055 = vmatprep.subr.bf16.mxu0 0
      %1056 = vmatpush1.bf16.msra.mxu0 0
      %1057 = vmatprep.subr.bf16.mxu0 0
      %1058 = vmatpush1.bf16.msra.mxu0 0
      %1059 = vmatprep.subr.bf16.mxu0 0
      %1060 = vmatpush1.bf16.msra.mxu0 %v1043
      %1061 = vmatprep.subr.bf16.mxu0 0
      %1062 = vmatpush2.bf16.msra.mxu0 0
      %1063 = vmatprep.subr.bf16.mxu0 0
      %1064 = vmatpush2.bf16.msra.mxu0 0
      %1065 = vmatprep.subr.bf16.mxu0 0
      %1066 = vmatpush2.bf16.msra.mxu0 0
      %1067 = vmatprep.subr.bf16.mxu0 0
      %1068 = vmatpush2.bf16.msra.mxu0 0
      %1069 = vmatprep.subr.bf16.mxu0 0
      %1070 = vmatpush2.bf16.msra.mxu0 0
      %1071 = vmatprep.subr.bf16.mxu0 0
      %1072 = vmatpush2.bf16.msra.mxu0 0
      %1073 = vmatprep.subr.bf16.mxu0 0
      %1074 = vmatpush2.bf16.msra.mxu0 0
      %1075 = vmatprep.subr.bf16.mxu0 0
      %1076 = vmatpush2.bf16.msra.mxu0 0
      %1077 = vmatprep.mubr.bf16.mxu0 0
      %1078 = vmatmul.mubr.bf16.gmra.mxu0 %v1039
      %v1079 = vpop.f32.mrf.mxu0
      %v1080 = vadd.f32 0.0, %v1079
      %v1081 = vpop.f32.mrf.mxu0
      %v1082 = vpop.f32.mrf.mxu0
      %v1083 = vpop.f32.mrf.mxu0
      %1084 = vdwg.mxu0
      %v1085 = vpack.c.bf16 %v1080, %v1080
      %1086 = vrot.lane.b32.xlu0 %v973, 120
      %v1087 = vpop.permute.xlu0 %1086
      %1088 = vrot.lane.b32.xlu0 %v973, 88
      %v1089 = vpop.permute.xlu0 %1088
      %v1091 = vsel %vm977, %v1087, 0
      %v1094 = vsel %vm977, %v1089, 0
      %1096 = vmatprep.subr.bf16.mxu0 0
      %1097 = vmatpush1.bf16.xpose.msra.mxu0 0
      %1098 = vmatprep.subr.bf16.mxu0 0
      %1099 = vmatpush1.bf16.xpose.msra.mxu0 0
      %1100 = vmatprep.subr.bf16.mxu0 0
      %1101 = vmatpush1.bf16.xpose.msra.mxu0 0
      %1102 = vmatprep.subr.bf16.mxu0 0
      %1103 = vmatpush1.bf16.xpose.msra.mxu0 0
      %1104 = vmatprep.subr.bf16.mxu0 0
      %1105 = vmatpush1.bf16.xpose.msra.mxu0 0
      %1106 = vmatprep.subr.bf16.mxu0 0
      %1107 = vmatpush1.bf16.xpose.msra.mxu0 0
      %1108 = vmatprep.subr.bf16.mxu0 0
      %1109 = vmatpush1.bf16.xpose.msra.mxu0 0
      %1110 = vmatprep.subr.bf16.mxu0 0
      %1111 = vmatpush1.bf16.xpose.msra.mxu0 %v1094
      %1112 = vmatprep.subr.bf16.mxu0 0
      %1113 = vmatpush2.bf16.xpose.msra.mxu0 0
      %1114 = vmatprep.subr.bf16.mxu0 0
      %1115 = vmatpush2.bf16.xpose.msra.mxu0 0
      %1116 = vmatprep.subr.bf16.mxu0 0
      %1117 = vmatpush2.bf16.xpose.msra.mxu0 0
      %1118 = vmatprep.subr.bf16.mxu0 0
      %1119 = vmatpush2.bf16.xpose.msra.mxu0 0
      %1120 = vmatprep.subr.bf16.mxu0 0
      %1121 = vmatpush2.bf16.xpose.msra.mxu0 0
      %1122 = vmatprep.subr.bf16.mxu0 0
      %1123 = vmatpush2.bf16.xpose.msra.mxu0 0
      %1124 = vmatprep.subr.bf16.mxu0 0
      %1125 = vmatpush2.bf16.xpose.msra.mxu0 0
      %1126 = vmatprep.subr.bf16.mxu0 0
      %1127 = vmatpush2.bf16.xpose.msra.mxu0 0
      %1128 = vmatprep.mubr.bf16.mxu0 0
      %1129 = vmatmul.mubr.bf16.gmra.mxu0 %v1091
      %v1130 = vpop.f32.mrf.mxu0
      %v1131 = vadd.f32 0.0, %v1130
      %v1132 = vpop.f32.mrf.mxu0
      %v1133 = vpop.f32.mrf.mxu0
      %v1134 = vpop.f32.mrf.mxu0
      %1135 = vdwg.mxu0
      %v1136 = vsel %vm977, %v1131, -inf
      %1137 = vmax.xlane.f32.xlu0 %v1136
      %v1138 = vpop.xlane.xlu0 %1137
      %v1139 = vsub.f32 %v1131, %v1138
      %v1140 = vmul.f32 %v1139, 1.442695
      %v1141 = vpow.pop %v1140
      %v1142 = vsel %vm977, %v1141, 0.0
      %1143 = vadd.xlane.f32.xlu0 %v1142
      %v1144 = vpop.xlane.xlu0 %1143
      %v1145 = vrcp.pop %v1144
      %v1146 = vmul.f32 %v1141, %v1145
      %v1147 = vpack.c.bf16 %v1146, %v1146
      %1148 = vrot.lane.b32.xlu0 %v973, 56
      %v1149 = vpop.permute.xlu0 %1148
      %v1151 = vsel %vm977, %v1147, 0
      %v1154 = vsel %vm1041, %v1149, 0
      %1156 = vmatprep.subr.bf16.mxu0 0
      %1157 = vmatpush1.bf16.msra.mxu0 0
      %1158 = vmatprep.subr.bf16.mxu0 0
      %1159 = vmatpush1.bf16.msra.mxu0 0
      %1160 = vmatprep.subr.bf16.mxu0 0
      %1161 = vmatpush1.bf16.msra.mxu0 0
      %1162 = vmatprep.subr.bf16.mxu0 0
      %1163 = vmatpush1.bf16.msra.mxu0 0
      %1164 = vmatprep.subr.bf16.mxu0 0
      %1165 = vmatpush1.bf16.msra.mxu0 0
      %1166 = vmatprep.subr.bf16.mxu0 0
      %1167 = vmatpush1.bf16.msra.mxu0 0
      %1168 = vmatprep.subr.bf16.mxu0 0
      %1169 = vmatpush1.bf16.msra.mxu0 0
      %1170 = vmatprep.subr.bf16.mxu0 0
      %1171 = vmatpush1.bf16.msra.mxu0 %v1154
      %1172 = vmatprep.subr.bf16.mxu0 0
      %1173 = vmatpush2.bf16.msra.mxu0 0
      %1174 = vmatprep.subr.bf16.mxu0 0
      %1175 = vmatpush2.bf16.msra.mxu0 0
      %1176 = vmatprep.subr.bf16.mxu0 0
      %1177 = vmatpush2.bf16.msra.mxu0 0
      %1178 = vmatprep.subr.bf16.mxu0 0
      %1179 = vmatpush2.bf16.msra.mxu0 0
      %1180 = vmatprep.subr.bf16.mxu0 0
      %1181 = vmatpush2.bf16.msra.mxu0 0
      %1182 = vmatprep.subr.bf16.mxu0 0
      %1183 = vmatpush2.bf16.msra.mxu0 0
      %1184 = vmatprep.subr.bf16.mxu0 0
      %1185 = vmatpush2.bf16.msra.mxu0 0
      %1186 = vmatprep.subr.bf16.mxu0 0
      %1187 = vmatpush2.bf16.msra.mxu0 0
      %1188 = vmatprep.mubr.bf16.mxu0 0
      %1189 = vmatmul.mubr.bf16.gmra.mxu0 %v1151
      %v1190 = vpop.f32.mrf.mxu0
      %v1191 = vadd.f32 0.0, %v1190
      %v1192 = vpop.f32.mrf.mxu0
      %v1193 = vpop.f32.mrf.mxu0
      %v1194 = vpop.f32.mrf.mxu0
      %1195 = vdwg.mxu0
      %v1196 = vpack.c.bf16 %v1191, %v1191
      %v1198 = vsel %vm977, %v1196, 0
      %v1201 = vsel %vm1041, %v970, 0
      %1203 = vmatprep.subr.bf16.mxu0 0
      %1204 = vmatpush1.bf16.msra.mxu0 0
      %1205 = vmatprep.subr.bf16.mxu0 0
      %1206 = vmatpush1.bf16.msra.mxu0 0
      %1207 = vmatprep.subr.bf16.mxu0 0
      %1208 = vmatpush1.bf16.msra.mxu0 0
      %1209 = vmatprep.subr.bf16.mxu0 0
      %1210 = vmatpush1.bf16.msra.mxu0 0
      %1211 = vmatprep.subr.bf16.mxu0 0
      %1212 = vmatpush1.bf16.msra.mxu0 0
      %1213 = vmatprep.subr.bf16.mxu0 0
      %1214 = vmatpush1.bf16.msra.mxu0 0
      %1215 = vmatprep.subr.bf16.mxu0 0
      %1216 = vmatpush1.bf16.msra.mxu0 0
      %1217 = vmatprep.subr.bf16.mxu0 0
      %1218 = vmatpush1.bf16.msra.mxu0 %v1201
      %1219 = vmatprep.subr.bf16.mxu0 0
      %1220 = vmatpush2.bf16.msra.mxu0 0
      %1221 = vmatprep.subr.bf16.mxu0 0
      %1222 = vmatpush2.bf16.msra.mxu0 0
      %1223 = vmatprep.subr.bf16.mxu0 0
      %1224 = vmatpush2.bf16.msra.mxu0 0
      %1225 = vmatprep.subr.bf16.mxu0 0
      %1226 = vmatpush2.bf16.msra.mxu0 0
      %1227 = vmatprep.subr.bf16.mxu0 0
      %1228 = vmatpush2.bf16.msra.mxu0 0
      %1229 = vmatprep.subr.bf16.mxu0 0
      %1230 = vmatpush2.bf16.msra.mxu0 0
      %1231 = vmatprep.subr.bf16.mxu0 0
      %1232 = vmatpush2.bf16.msra.mxu0 0
      %1233 = vmatprep.subr.bf16.mxu0 0
      %1234 = vmatpush2.bf16.msra.mxu0 0
      %1235 = vmatprep.mubr.bf16.mxu0 0
      %1236 = vmatmul.mubr.bf16.gmra.mxu0 %v1198
      %v1237 = vpop.f32.mrf.mxu0
      %v1238 = vadd.f32 0.0, %v1237
      %v1239 = vpop.f32.mrf.mxu0
      %v1240 = vpop.f32.mrf.mxu0
      %v1241 = vpop.f32.mrf.mxu0
      %1242 = vdwg.mxu0
      %v1244 = vsel %vm977, %v1085, 0
      %v1247 = vsel %vm1041, %v969, 0
      %1249 = vmatprep.subr.bf16.mxu0 0
      %1250 = vmatpush1.bf16.msra.mxu0 0
      %1251 = vmatprep.subr.bf16.mxu0 0
      %1252 = vmatpush1.bf16.msra.mxu0 0
      %1253 = vmatprep.subr.bf16.mxu0 0
      %1254 = vmatpush1.bf16.msra.mxu0 0
      %1255 = vmatprep.subr.bf16.mxu0 0
      %1256 = vmatpush1.bf16.msra.mxu0 0
      %1257 = vmatprep.subr.bf16.mxu0 0
      %1258 = vmatpush1.bf16.msra.mxu0 0
      %1259 = vmatprep.subr.bf16.mxu0 0
      %1260 = vmatpush1.bf16.msra.mxu0 0
      %1261 = vmatprep.subr.bf16.mxu0 0
      %1262 = vmatpush1.bf16.msra.mxu0 0
      %1263 = vmatprep.subr.bf16.mxu0 0
      %1264 = vmatpush1.bf16.msra.mxu0 %v1247
      %1265 = vmatprep.subr.bf16.mxu0 0
      %1266 = vmatpush2.bf16.msra.mxu0 0
      %1267 = vmatprep.subr.bf16.mxu0 0
      %1268 = vmatpush2.bf16.msra.mxu0 0
      %1269 = vmatprep.subr.bf16.mxu0 0
      %1270 = vmatpush2.bf16.msra.mxu0 0
      %1271 = vmatprep.subr.bf16.mxu0 0
      %1272 = vmatpush2.bf16.msra.mxu0 0
      %1273 = vmatprep.subr.bf16.mxu0 0
      %1274 = vmatpush2.bf16.msra.mxu0 0
      %1275 = vmatprep.subr.bf16.mxu0 0
      %1276 = vmatpush2.bf16.msra.mxu0 0
      %1277 = vmatprep.subr.bf16.mxu0 0
      %1278 = vmatpush2.bf16.msra.mxu0 0
      %1279 = vmatprep.subr.bf16.mxu0 0
      %1280 = vmatpush2.bf16.msra.mxu0 0
      %1281 = vmatprep.mubr.bf16.mxu0 0
      %1282 = vmatmul.mubr.bf16.gmra.mxu0 %v1244
      %v1283 = vpop.f32.mrf.mxu0
      %v1284 = vadd.f32 %v1238, %v1283
      %v1285 = vpop.f32.mrf.mxu0
      %v1286 = vpop.f32.mrf.mxu0
      %v1287 = vpop.f32.mrf.mxu0
      %1288 = vdwg.mxu0
      %1289 = vrot.lane.b32.xlu0 %v973, 112
      %v1290 = vpop.permute.xlu0 %1289
      %1291 = vrot.lane.b32.xlu0 %v973, 80
      %v1292 = vpop.permute.xlu0 %1291
      %v1294 = vsel %vm977, %v1290, 0
      %v1297 = vsel %vm977, %v1292, 0
      %1299 = vmatprep.subr.bf16.mxu0 0
      %1300 = vmatpush1.bf16.xpose.msra.mxu0 0
      %1301 = vmatprep.subr.bf16.mxu0 0
      %1302 = vmatpush1.bf16.xpose.msra.mxu0 0
      %1303 = vmatprep.subr.bf16.mxu0 0
      %1304 = vmatpush1.bf16.xpose.msra.mxu0 0
      %1305 = vmatprep.subr.bf16.mxu0 0
      %1306 = vmatpush1.bf16.xpose.msra.mxu0 0
      %1307 = vmatprep.subr.bf16.mxu0 0
      %1308 = vmatpush1.bf16.xpose.msra.mxu0 0
      %1309 = vmatprep.subr.bf16.mxu0 0
      %1310 = vmatpush1.bf16.xpose.msra.mxu0 0
      %1311 = vmatprep.subr.bf16.mxu0 0
      %1312 = vmatpush1.bf16.xpose.msra.mxu0 0
      %1313 = vmatprep.subr.bf16.mxu0 0
      %1314 = vmatpush1.bf16.xpose.msra.mxu0 %v1297
      %1315 = vmatprep.subr.bf16.mxu0 0
      %1316 = vmatpush2.bf16.xpose.msra.mxu0 0
      %1317 = vmatprep.subr.bf16.mxu0 0
      %1318 = vmatpush2.bf16.xpose.msra.mxu0 0
      %1319 = vmatprep.subr.bf16.mxu0 0
      %1320 = vmatpush2.bf16.xpose.msra.mxu0 0
      %1321 = vmatprep.subr.bf16.mxu0 0
      %1322 = vmatpush2.bf16.xpose.msra.mxu0 0
      %1323 = vmatprep.subr.bf16.mxu0 0
      %1324 = vmatpush2.bf16.xpose.msra.mxu0 0
      %1325 = vmatprep.subr.bf16.mxu0 0
      %1326 = vmatpush2.bf16.xpose.msra.mxu0 0
      %1327 = vmatprep.subr.bf16.mxu0 0
      %1328 = vmatpush2.bf16.xpose.msra.mxu0 0
      %1329 = vmatprep.subr.bf16.mxu0 0
      %1330 = vmatpush2.bf16.xpose.msra.mxu0 0
      %1331 = vmatprep.mubr.bf16.mxu0 0
      %1332 = vmatmul.mubr.bf16.gmra.mxu0 %v1294
      %v1333 = vpop.f32.mrf.mxu0
      %v1334 = vadd.f32 0.0, %v1333
      %v1335 = vpop.f32.mrf.mxu0
      %v1336 = vpop.f32.mrf.mxu0
      %v1337 = vpop.f32.mrf.mxu0
      %1338 = vdwg.mxu0
      %v1339 = vsel %vm977, %v1334, -inf
      %1340 = vmax.xlane.f32.xlu0 %v1339
      %v1341 = vpop.xlane.xlu0 %1340
      %v1342 = vsub.f32 %v1334, %v1341
      %v1343 = vmul.f32 %v1342, 1.442695
      %v1344 = vpow.pop %v1343
      %v1345 = vsel %vm977, %v1344, 0.0
      %1346 = vadd.xlane.f32.xlu0 %v1345
      %v1347 = vpop.xlane.xlu0 %1346
      %v1348 = vrcp.pop %v1347
      %v1349 = vmul.f32 %v1344, %v1348
      %v1350 = vpack.c.bf16 %v1349, %v1349
      %1351 = vrot.lane.b32.xlu0 %v973, 48
      %v1352 = vpop.permute.xlu0 %1351
      %v1354 = vsel %vm977, %v1350, 0
      %v1357 = vsel %vm1041, %v1352, 0
      %1359 = vmatprep.subr.bf16.mxu0 0
      %1360 = vmatpush1.bf16.msra.mxu0 0
      %1361 = vmatprep.subr.bf16.mxu0 0
      %1362 = vmatpush1.bf16.msra.mxu0 0
      %1363 = vmatprep.subr.bf16.mxu0 0
      %1364 = vmatpush1.bf16.msra.mxu0 0
      %1365 = vmatprep.subr.bf16.mxu0 0
      %1366 = vmatpush1.bf16.msra.mxu0 0
      %1367 = vmatprep.subr.bf16.mxu0 0
      %1368 = vmatpush1.bf16.msra.mxu0 0
      %1369 = vmatprep.subr.bf16.mxu0 0
      %1370 = vmatpush1.bf16.msra.mxu0 0
      %1371 = vmatprep.subr.bf16.mxu0 0
      %1372 = vmatpush1.bf16.msra.mxu0 0
      %1373 = vmatprep.subr.bf16.mxu0 0
      %1374 = vmatpush1.bf16.msra.mxu0 %v1357
      %1375 = vmatprep.subr.bf16.mxu0 0
      %1376 = vmatpush2.bf16.msra.mxu0 0
      %1377 = vmatprep.subr.bf16.mxu0 0
      %1378 = vmatpush2.bf16.msra.mxu0 0
      %1379 = vmatprep.subr.bf16.mxu0 0
      %1380 = vmatpush2.bf16.msra.mxu0 0
      %1381 = vmatprep.subr.bf16.mxu0 0
      %1382 = vmatpush2.bf16.msra.mxu0 0
      %1383 = vmatprep.subr.bf16.mxu0 0
      %1384 = vmatpush2.bf16.msra.mxu0 0
      %1385 = vmatprep.subr.bf16.mxu0 0
      %1386 = vmatpush2.bf16.msra.mxu0 0
      %1387 = vmatprep.subr.bf16.mxu0 0
      %1388 = vmatpush2.bf16.msra.mxu0 0
      %1389 = vmatprep.subr.bf16.mxu0 0
      %1390 = vmatpush2.bf16.msra.mxu0 0
      %1391 = vmatprep.mubr.bf16.mxu0 0
      %1392 = vmatmul.mubr.bf16.gmra.mxu0 %v1354
      %v1393 = vpop.f32.mrf.mxu0
      %v1394 = vadd.f32 0.0, %v1393
      %v1395 = vpop.f32.mrf.mxu0
      %v1396 = vpop.f32.mrf.mxu0
      %v1397 = vpop.f32.mrf.mxu0
      %1398 = vdwg.mxu0
      %v1399 = vpack.c.bf16 %v1394, %v1394
      %v1401 = vsel %vm977, %v1399, 0
      %v1404 = vsel %vm1041, %v971, 0
      %1406 = vmatprep.subr.bf16.mxu0 0
      %1407 = vmatpush1.bf16.msra.mxu0 0
      %1408 = vmatprep.subr.bf16.mxu0 0
      %1409 = vmatpush1.bf16.msra.mxu0 0
      %1410 = vmatprep.subr.bf16.mxu0 0
      %1411 = vmatpush1.bf16.msra.mxu0 0
      %1412 = vmatprep.subr.bf16.mxu0 0
      %1413 = vmatpush1.bf16.msra.mxu0 0
      %1414 = vmatprep.subr.bf16.mxu0 0
      %1415 = vmatpush1.bf16.msra.mxu0 0
      %1416 = vmatprep.subr.bf16.mxu0 0
      %1417 = vmatpush1.bf16.msra.mxu0 0
      %1418 = vmatprep.subr.bf16.mxu0 0
      %1419 = vmatpush1.bf16.msra.mxu0 0
      %1420 = vmatprep.subr.bf16.mxu0 0
      %1421 = vmatpush1.bf16.msra.mxu0 %v1404
      %1422 = vmatprep.subr.bf16.mxu0 0
      %1423 = vmatpush2.bf16.msra.mxu0 0
      %1424 = vmatprep.subr.bf16.mxu0 0
      %1425 = vmatpush2.bf16.msra.mxu0 0
      %1426 = vmatprep.subr.bf16.mxu0 0
      %1427 = vmatpush2.bf16.msra.mxu0 0
      %1428 = vmatprep.subr.bf16.mxu0 0
      %1429 = vmatpush2.bf16.msra.mxu0 0
      %1430 = vmatprep.subr.bf16.mxu0 0
      %1431 = vmatpush2.bf16.msra.mxu0 0
      %1432 = vmatprep.subr.bf16.mxu0 0
      %1433 = vmatpush2.bf16.msra.mxu0 0
      %1434 = vmatprep.subr.bf16.mxu0 0
      %1435 = vmatpush2.bf16.msra.mxu0 0
      %1436 = vmatprep.subr.bf16.mxu0 0
      %1437 = vmatpush2.bf16.msra.mxu0 0
      %1438 = vmatprep.mubr.bf16.mxu0 0
      %1439 = vmatmul.mubr.bf16.gmra.mxu0 %v1401
      %v1440 = vpop.f32.mrf.mxu0
      %v1441 = vadd.f32 0.0, %v1440
      %v1442 = vpop.f32.mrf.mxu0
      %v1443 = vpop.f32.mrf.mxu0
      %v1444 = vpop.f32.mrf.mxu0
      %1445 = vdwg.mxu0
      %v1446 = vadd.f32 %v1284, %v1441
      %1447 = vrot.lane.b32.xlu0 %v973, 104
      %v1448 = vpop.permute.xlu0 %1447
      %1449 = vrot.lane.b32.xlu0 %v973, 72
      %v1450 = vpop.permute.xlu0 %1449
      %v1452 = vsel %vm977, %v1448, 0
      %v1455 = vsel %vm977, %v1450, 0
      %1457 = vmatprep.subr.bf16.mxu0 0
      %1458 = vmatpush1.bf16.xpose.msra.mxu0 0
      %1459 = vmatprep.subr.bf16.mxu0 0
      %1460 = vmatpush1.bf16.xpose.msra.mxu0 0
      %1461 = vmatprep.subr.bf16.mxu0 0
      %1462 = vmatpush1.bf16.xpose.msra.mxu0 0
      %1463 = vmatprep.subr.bf16.mxu0 0
      %1464 = vmatpush1.bf16.xpose.msra.mxu0 0
      %1465 = vmatprep.subr.bf16.mxu0 0
      %1466 = vmatpush1.bf16.xpose.msra.mxu0 0
      %1467 = vmatprep.subr.bf16.mxu0 0
      %1468 = vmatpush1.bf16.xpose.msra.mxu0 0
      %1469 = vmatprep.subr.bf16.mxu0 0
      %1470 = vmatpush1.bf16.xpose.msra.mxu0 0
      %1471 = vmatprep.subr.bf16.mxu0 0
      %1472 = vmatpush1.bf16.xpose.msra.mxu0 %v1455
      %1473 = vmatprep.subr.bf16.mxu0 0
      %1474 = vmatpush2.bf16.xpose.msra.mxu0 0
      %1475 = vmatprep.subr.bf16.mxu0 0
      %1476 = vmatpush2.bf16.xpose.msra.mxu0 0
      %1477 = vmatprep.subr.bf16.mxu0 0
      %1478 = vmatpush2.bf16.xpose.msra.mxu0 0
      %1479 = vmatprep.subr.bf16.mxu0 0
      %1480 = vmatpush2.bf16.xpose.msra.mxu0 0
      %1481 = vmatprep.subr.bf16.mxu0 0
      %1482 = vmatpush2.bf16.xpose.msra.mxu0 0
      %1483 = vmatprep.subr.bf16.mxu0 0
      %1484 = vmatpush2.bf16.xpose.msra.mxu0 0
      %1485 = vmatprep.subr.bf16.mxu0 0
      %1486 = vmatpush2.bf16.xpose.msra.mxu0 0
      %1487 = vmatprep.subr.bf16.mxu0 0
      %1488 = vmatpush2.bf16.xpose.msra.mxu0 0
      %1489 = vmatprep.mubr.bf16.mxu0 0
      %1490 = vmatmul.mubr.bf16.gmra.mxu0 %v1452
      %v1491 = vpop.f32.mrf.mxu0
      %v1492 = vadd.f32 0.0, %v1491
      %v1493 = vpop.f32.mrf.mxu0
      %v1494 = vpop.f32.mrf.mxu0
      %v1495 = vpop.f32.mrf.mxu0
      %1496 = vdwg.mxu0
      %v1497 = vsel %vm977, %v1492, -inf
      %1498 = vmax.xlane.f32.xlu0 %v1497
      %v1499 = vpop.xlane.xlu0 %1498
      %v1500 = vsub.f32 %v1492, %v1499
      %v1501 = vmul.f32 %v1500, 1.442695
      %v1502 = vpow.pop %v1501
      %v1503 = vsel %vm977, %v1502, 0.0
      %1504 = vadd.xlane.f32.xlu0 %v1503
      %v1505 = vpop.xlane.xlu0 %1504
      %v1506 = vrcp.pop %v1505
      %v1507 = vmul.f32 %v1502, %v1506
      %v1508 = vpack.c.bf16 %v1507, %v1507
      %1509 = vrot.lane.b32.xlu0 %v973, 40
      %v1510 = vpop.permute.xlu0 %1509
      %v1512 = vsel %vm977, %v1508, 0
      %v1515 = vsel %vm1041, %v1510, 0
      %1517 = vmatprep.subr.bf16.mxu0 0
      %1518 = vmatpush1.bf16.msra.mxu0 0
      %1519 = vmatprep.subr.bf16.mxu0 0
      %1520 = vmatpush1.bf16.msra.mxu0 0
      %1521 = vmatprep.subr.bf16.mxu0 0
      %1522 = vmatpush1.bf16.msra.mxu0 0
      %1523 = vmatprep.subr.bf16.mxu0 0
      %1524 = vmatpush1.bf16.msra.mxu0 0
      %1525 = vmatprep.subr.bf16.mxu0 0
      %1526 = vmatpush1.bf16.msra.mxu0 0
      %1527 = vmatprep.subr.bf16.mxu0 0
      %1528 = vmatpush1.bf16.msra.mxu0 0
      %1529 = vmatprep.subr.bf16.mxu0 0
      %1530 = vmatpush1.bf16.msra.mxu0 0
      %1531 = vmatprep.subr.bf16.mxu0 0
      %1532 = vmatpush1.bf16.msra.mxu0 %v1515
      %1533 = vmatprep.subr.bf16.mxu0 0
      %1534 = vmatpush2.bf16.msra.mxu0 0
      %1535 = vmatprep.subr.bf16.mxu0 0
      %1536 = vmatpush2.bf16.msra.mxu0 0
      %1537 = vmatprep.subr.bf16.mxu0 0
      %1538 = vmatpush2.bf16.msra.mxu0 0
      %1539 = vmatprep.subr.bf16.mxu0 0
      %1540 = vmatpush2.bf16.msra.mxu0 0
      %1541 = vmatprep.subr.bf16.mxu0 0
      %1542 = vmatpush2.bf16.msra.mxu0 0
      %1543 = vmatprep.subr.bf16.mxu0 0
      %1544 = vmatpush2.bf16.msra.mxu0 0
      %1545 = vmatprep.subr.bf16.mxu0 0
      %1546 = vmatpush2.bf16.msra.mxu0 0
      %1547 = vmatprep.subr.bf16.mxu0 0
      %1548 = vmatpush2.bf16.msra.mxu0 0
      %1549 = vmatprep.mubr.bf16.mxu0 0
      %1550 = vmatmul.mubr.bf16.gmra.mxu0 %v1512
      %v1551 = vpop.f32.mrf.mxu0
      %v1552 = vadd.f32 0.0, %v1551
      %v1553 = vpop.f32.mrf.mxu0
      %v1554 = vpop.f32.mrf.mxu0
      %v1555 = vpop.f32.mrf.mxu0
      %1556 = vdwg.mxu0
      %v1557 = vpack.c.bf16 %v1552, %v1552
      %v1559 = vsel %vm977, %v1557, 0
      %v1562 = vsel %vm1041, %v972, 0
      %1564 = vmatprep.subr.bf16.mxu0 0
      %1565 = vmatpush1.bf16.msra.mxu0 0
      %1566 = vmatprep.subr.bf16.mxu0 0
      %1567 = vmatpush1.bf16.msra.mxu0 0
      %1568 = vmatprep.subr.bf16.mxu0 0
      %1569 = vmatpush1.bf16.msra.mxu0 0
      %1570 = vmatprep.subr.bf16.mxu0 0
      %1571 = vmatpush1.bf16.msra.mxu0 0
      %1572 = vmatprep.subr.bf16.mxu0 0
      %1573 = vmatpush1.bf16.msra.mxu0 0
      %1574 = vmatprep.subr.bf16.mxu0 0
      %1575 = vmatpush1.bf16.msra.mxu0 0
      %1576 = vmatprep.subr.bf16.mxu0 0
      %1577 = vmatpush1.bf16.msra.mxu0 0
      %1578 = vmatprep.subr.bf16.mxu0 0
      %1579 = vmatpush1.bf16.msra.mxu0 %v1562
      %1580 = vmatprep.subr.bf16.mxu0 0
      %1581 = vmatpush2.bf16.msra.mxu0 0
      %1582 = vmatprep.subr.bf16.mxu0 0
      %1583 = vmatpush2.bf16.msra.mxu0 0
      %1584 = vmatprep.subr.bf16.mxu0 0
      %1585 = vmatpush2.bf16.msra.mxu0 0
      %1586 = vmatprep.subr.bf16.mxu0 0
      %1587 = vmatpush2.bf16.msra.mxu0 0
      %1588 = vmatprep.subr.bf16.mxu0 0
      %1589 = vmatpush2.bf16.msra.mxu0 0
      %1590 = vmatprep.subr.bf16.mxu0 0
      %1591 = vmatpush2.bf16.msra.mxu0 0
      %1592 = vmatprep.subr.bf16.mxu0 0
      %1593 = vmatpush2.bf16.msra.mxu0 0
      %1594 = vmatprep.subr.bf16.mxu0 0
      %1595 = vmatpush2.bf16.msra.mxu0 0
      %1596 = vmatprep.mubr.bf16.mxu0 0
      %1597 = vmatmul.mubr.bf16.gmra.mxu0 %v1559
      %v1598 = vpop.f32.mrf.mxu0
      %v1599 = vadd.f32 0.0, %v1598
      %v1600 = vpop.f32.mrf.mxu0
      %v1601 = vpop.f32.mrf.mxu0
      %v1602 = vpop.f32.mrf.mxu0
      %1603 = vdwg.mxu0
      %v1604 = vadd.f32 %v1446, %v1599
      %v1605 = vld [vmem:[%s8] sm:$0x1]
      %v1607 = vlaneseq
      %v1608 = vshrl.u32 %v1607, 7
      %v1609 = vsub.s32 0, %v1608
      %v1610 = vrot.slane %v1605, %v1609
      %v1612 = vadd.f32 %v1604, %v1610
      %v1613 = vadd.f32 %v901, %v1612
      %v1614 = vsel %vm732, %v1613, 0.0
      %1615 = vadd.xlane.f32.xlu0 %v1614
      %v1616 = vpop.xlane.xlu0 %1615
      %v1617 = vrcp.pop 32.0
      %v1618 = vmul.f32 %v1616, %v1617
      %v1619 = vsub.f32 %v1613, %v1618
      %v1620 = vmul.f32 %v1619, %v1619
      %v1621 = vsel %vm732, %v1620, 0.0
      %1622 = vadd.xlane.f32.xlu0 %v1621
      %v1623 = vpop.xlane.xlu0 %1622
      %v1624 = vmul.f32 %v1623, %v1617
      %v1625 = vadd.f32 %v1624, 1e-05
      %v1626 = vrsqrt.pop %v1625
      %v1627 = vmul.f32 %v1619, %v1626
      %v1628 = vld [vmem:[%s10] sm:$0x1]
      %v1630 = vlaneseq
      %v1631 = vshrl.u32 %v1630, 7
      %v1632 = vsub.s32 0, %v1631
      %v1633 = vrot.slane %v1628, %v1632
      %v1635 = vmul.f32 %v1627, %v1633
      %v1636 = vld [vmem:[%s11] sm:$0x1]
      %v1638 = vlaneseq
      %v1639 = vshrl.u32 %v1638, 7
      %v1640 = vsub.s32 0, %v1639
      %v1641 = vrot.slane %v1636, %v1640
      %v1643 = vadd.f32 %v1635, %v1641
      %v1644 = vld [vmem:[%s9] sm:$0x1]
      %v1646 = vlaneseq
      %v1647 = vshrl.u32 %v1646, 7
      %v1648 = vsub.s32 0, %v1647
      %v1649 = vrot.slane %v1644, %v1648
      %v1651 = vadd.f32 %v1643, %v1649
      %v1652 = vsel %vm732, %v1651, 0.0
      %1653 = vadd.xlane.f32.xlu0 %v1652
      %v1654 = vpop.xlane.xlu0 %1653
      %v1655 = vmul.f32 %v1654, %v1617
      %v1656 = vsub.f32 %v1651, %v1655
      %v1657 = vmul.f32 %v1656, %v1656
      %v1658 = vsel %vm732, %v1657, 0.0
      %1659 = vadd.xlane.f32.xlu0 %v1658
      %v1660 = vpop.xlane.xlu0 %1659
      %v1661 = vmul.f32 %v1660, %v1617
      %v1662 = vadd.f32 %v1661, 1e-05
      %v1663 = vrsqrt.pop %v1662
      %v1664 = vmul.f32 %v1656, %v1663
      %s1665 = scalar_lea.vmem %s10, 1
      %v1666 = vld [vmem:[%s1665] sm:$0x1]
      %v1668 = vlaneseq
      %v1669 = vshrl.u32 %v1668, 7
      %v1670 = vsub.s32 0, %v1669
      %v1671 = vrot.slane %v1666, %v1670
      %v1673 = vmul.f32 %v1664, %v1671
      %s1674 = scalar_lea.vmem %s11, 1
      %v1675 = vld [vmem:[%s1674] sm:$0x1]
      %v1677 = vlaneseq
      %v1678 = vshrl.u32 %v1677, 7
      %v1679 = vsub.s32 0, %v1678
      %v1680 = vrot.slane %v1675, %v1679
      %v1682 = vadd.f32 %v1673, %v1680
      %v1683 = vpack.c.bf16 %v1682, %v1682
      %v1684 = vld [vmem:[%s12] sm:$0xff]
      %v1685 = vld [vmem:[%s12 + $0x8] sm:$0xff]
      %v1686 = vld [vmem:[%s12 + $0x10] sm:$0xff]
      %v1687 = vld [vmem:[%s12 + $0x18] sm:$0xff]
      %v1688 = vld [vmem:[%s12 + $0x20] sm:$0xff]
      %v1689 = vld [vmem:[%s12 + $0x28] sm:$0xff]
      %v1690 = vld [vmem:[%s12 + $0x30] sm:$0xff]
      %v1691 = vld [vmem:[%s12 + $0x38] sm:$0xff]
      %v1692 = vld [vmem:[%s12 + $0x40] sm:$0xff]
      %v1693 = vld [vmem:[%s12 + $0x48] sm:$0xff]
      %v1694 = vld [vmem:[%s12 + $0x50] sm:$0xff]
      %v1695 = vld [vmem:[%s12 + $0x58] sm:$0xff]
      %v1696 = vld [vmem:[%s12 + $0x60] sm:$0xff]
      %v1697 = vld [vmem:[%s12 + $0x68] sm:$0xff]
      %v1698 = vld [vmem:[%s12 + $0x70] sm:$0xff]
      %v1699 = vld [vmem:[%s12 + $0x78] sm:$0xff]
      %v1700 = vld [vmem:[%s12 + $0x80] sm:$0xff]
      %v1701 = vld [vmem:[%s12 + $0x88] sm:$0xff]
      %v1702 = vld [vmem:[%s12 + $0x90] sm:$0xff]
      %v1703 = vld [vmem:[%s12 + $0x98] sm:$0xff]
      %v1704 = vld [vmem:[%s12 + $0xa0] sm:$0xff]
      %v1705 = vld [vmem:[%s12 + $0xa8] sm:$0xff]
      %v1706 = vld [vmem:[%s12 + $0xb0] sm:$0xff]
      %v1707 = vld [vmem:[%s12 + $0xb8] sm:$0xff]
      %v1708 = vld [vmem:[%s12 + $0xc0] sm:$0xff]
      %v1709 = vld [vmem:[%s12 + $0xc8] sm:$0xff]
      %v1710 = vld [vmem:[%s12 + $0xd0] sm:$0xff]
      %v1711 = vld [vmem:[%s12 + $0xd8] sm:$0xff]
      %v1712 = vld [vmem:[%s12 + $0xe0] sm:$0xff]
      %v1713 = vld [vmem:[%s12 + $0xe8] sm:$0xff]
      %v1714 = vld [vmem:[%s12 + $0xf0] sm:$0xff]
      %v1715 = vld [vmem:[%s12 + $0xf8] sm:$0xff]
      %v1716 = vld [vmem:[%s13] sm:$0xff]
      %v1717 = vld [vmem:[%s13 + $0x8] sm:$0xff]
      %v1720 = vlaneseq
      %v1721 = vshrl.u32 %v1720, 7
      %v1722 = vsub.s32 0, %v1721
      %v1723 = vrot.slane %v1716, %v1722
      %v1724 = vlaneseq
      %v1725 = vshrl.u32 %v1724, 7
      %v1726 = vsub.s32 1, %v1725
      %v1727 = vrot.slane %v1716, %v1726
      %v1728 = vlaneseq
      %v1729 = vshrl.u32 %v1728, 7
      %v1730 = vsub.s32 2, %v1729
      %v1731 = vrot.slane %v1716, %v1730
      %v1732 = vlaneseq
      %v1733 = vshrl.u32 %v1732, 7
      %v1734 = vsub.s32 3, %v1733
      %v1735 = vrot.slane %v1716, %v1734
      %v1736 = vlaneseq
      %v1737 = vshrl.u32 %v1736, 7
      %v1738 = vsub.s32 4, %v1737
      %v1739 = vrot.slane %v1716, %v1738
      %v1740 = vlaneseq
      %v1741 = vshrl.u32 %v1740, 7
      %v1742 = vsub.s32 5, %v1741
      %v1743 = vrot.slane %v1716, %v1742
      %v1744 = vlaneseq
      %v1745 = vshrl.u32 %v1744, 7
      %v1746 = vsub.s32 6, %v1745
      %v1747 = vrot.slane %v1716, %v1746
      %v1748 = vlaneseq
      %v1749 = vshrl.u32 %v1748, 7
      %v1750 = vsub.s32 7, %v1749
      %v1751 = vrot.slane %v1716, %v1750
      %v1752 = vlaneseq
      %v1753 = vshrl.u32 %v1752, 7
      %v1754 = vsub.s32 0, %v1753
      %v1755 = vrot.slane %v1717, %v1754
      %v1756 = vlaneseq
      %v1757 = vshrl.u32 %v1756, 7
      %v1758 = vsub.s32 1, %v1757
      %v1759 = vrot.slane %v1717, %v1758
      %v1760 = vlaneseq
      %v1761 = vshrl.u32 %v1760, 7
      %v1762 = vsub.s32 2, %v1761
      %v1763 = vrot.slane %v1717, %v1762
      %v1764 = vlaneseq
      %v1765 = vshrl.u32 %v1764, 7
      %v1766 = vsub.s32 3, %v1765
      %v1767 = vrot.slane %v1717, %v1766
      %v1768 = vlaneseq
      %v1769 = vshrl.u32 %v1768, 7
      %v1770 = vsub.s32 4, %v1769
      %v1771 = vrot.slane %v1717, %v1770
      %v1772 = vlaneseq
      %v1773 = vshrl.u32 %v1772, 7
      %v1774 = vsub.s32 5, %v1773
      %v1775 = vrot.slane %v1717, %v1774
      %v1776 = vlaneseq
      %v1777 = vshrl.u32 %v1776, 7
      %v1778 = vsub.s32 6, %v1777
      %v1779 = vrot.slane %v1717, %v1778
      %v1780 = vlaneseq
      %v1781 = vshrl.u32 %v1780, 7
      %v1782 = vsub.s32 7, %v1781
      %v1783 = vrot.slane %v1717, %v1782
      %v1832 = vunpack.c.l.b16 %v1684
      %v1833 = vunpack.c.h.b16 %v1684
      %v1834 = vunpack.c.l.b16 %v1685
      %v1835 = vunpack.c.h.b16 %v1685
      %v1836 = vunpack.c.l.b16 %v1686
      %v1837 = vunpack.c.h.b16 %v1686
      %v1838 = vunpack.c.l.b16 %v1687
      %v1839 = vunpack.c.h.b16 %v1687
      %v1840 = vunpack.c.l.b16 %v1688
      %v1841 = vunpack.c.h.b16 %v1688
      %v1842 = vunpack.c.l.b16 %v1689
      %v1843 = vunpack.c.h.b16 %v1689
      %v1844 = vunpack.c.l.b16 %v1690
      %v1845 = vunpack.c.h.b16 %v1690
      %v1846 = vunpack.c.l.b16 %v1691
      %v1847 = vunpack.c.h.b16 %v1691
      %v1848 = vunpack.c.l.b16 %v1692
      %v1849 = vunpack.c.h.b16 %v1692
      %v1850 = vunpack.c.l.b16 %v1693
      %v1851 = vunpack.c.h.b16 %v1693
      %v1852 = vunpack.c.l.b16 %v1694
      %v1853 = vunpack.c.h.b16 %v1694
      %v1854 = vunpack.c.l.b16 %v1695
      %v1855 = vunpack.c.h.b16 %v1695
      %v1856 = vunpack.c.l.b16 %v1696
      %v1857 = vunpack.c.h.b16 %v1696
      %v1858 = vunpack.c.l.b16 %v1697
      %v1859 = vunpack.c.h.b16 %v1697
      %v1860 = vunpack.c.l.b16 %v1698
      %v1861 = vunpack.c.h.b16 %v1698
      %v1862 = vunpack.c.l.b16 %v1699
      %v1863 = vunpack.c.h.b16 %v1699
      %v1864 = vunpack.c.l.b16 %v1700
      %v1865 = vunpack.c.h.b16 %v1700
      %v1866 = vunpack.c.l.b16 %v1701
      %v1867 = vunpack.c.h.b16 %v1701
      %v1868 = vunpack.c.l.b16 %v1702
      %v1869 = vunpack.c.h.b16 %v1702
      %v1870 = vunpack.c.l.b16 %v1703
      %v1871 = vunpack.c.h.b16 %v1703
      %v1872 = vunpack.c.l.b16 %v1704
      %v1873 = vunpack.c.h.b16 %v1704
      %v1874 = vunpack.c.l.b16 %v1705
      %v1875 = vunpack.c.h.b16 %v1705
      %v1876 = vunpack.c.l.b16 %v1706
      %v1877 = vunpack.c.h.b16 %v1706
      %v1878 = vunpack.c.l.b16 %v1707
      %v1879 = vunpack.c.h.b16 %v1707
      %v1880 = vunpack.c.l.b16 %v1708
      %v1881 = vunpack.c.h.b16 %v1708
      %v1882 = vunpack.c.l.b16 %v1709
      %v1883 = vunpack.c.h.b16 %v1709
      %v1884 = vunpack.c.l.b16 %v1710
      %v1885 = vunpack.c.h.b16 %v1710
      %v1886 = vunpack.c.l.b16 %v1711
      %v1887 = vunpack.c.h.b16 %v1711
      %v1888 = vunpack.c.l.b16 %v1712
      %v1889 = vunpack.c.h.b16 %v1712
      %v1890 = vunpack.c.l.b16 %v1713
      %v1891 = vunpack.c.h.b16 %v1713
      %v1892 = vunpack.c.l.b16 %v1714
      %v1893 = vunpack.c.h.b16 %v1714
      %v1894 = vunpack.c.l.b16 %v1715
      %v1895 = vunpack.c.h.b16 %v1715
      %v1896 = vpack.c.b16 %v1848, %v1832
      %v1897 = vpack.c.b16 %v1849, %v1833
      %v1898 = vpack.c.b16 %v1850, %v1834
      %v1899 = vpack.c.b16 %v1851, %v1835
      %v1900 = vpack.c.b16 %v1852, %v1836
      %v1901 = vpack.c.b16 %v1853, %v1837
      %v1902 = vpack.c.b16 %v1854, %v1838
      %v1903 = vpack.c.b16 %v1855, %v1839
      %v1904 = vpack.c.b16 %v1856, %v1840
      %v1905 = vpack.c.b16 %v1857, %v1841
      %v1906 = vpack.c.b16 %v1858, %v1842
      %v1907 = vpack.c.b16 %v1859, %v1843
      %v1908 = vpack.c.b16 %v1860, %v1844
      %v1909 = vpack.c.b16 %v1861, %v1845
      %v1910 = vpack.c.b16 %v1862, %v1846
      %v1911 = vpack.c.b16 %v1863, %v1847
      %v1912 = vpack.c.b16 %v1880, %v1864
      %v1913 = vpack.c.b16 %v1881, %v1865
      %v1914 = vpack.c.b16 %v1882, %v1866
      %v1915 = vpack.c.b16 %v1883, %v1867
      %v1916 = vpack.c.b16 %v1884, %v1868
      %v1917 = vpack.c.b16 %v1885, %v1869
      %v1918 = vpack.c.b16 %v1886, %v1870
      %v1919 = vpack.c.b16 %v1887, %v1871
      %v1920 = vpack.c.b16 %v1888, %v1872
      %v1921 = vpack.c.b16 %v1889, %v1873
      %v1922 = vpack.c.b16 %v1890, %v1874
      %v1923 = vpack.c.b16 %v1891, %v1875
      %v1924 = vpack.c.b16 %v1892, %v1876
      %v1925 = vpack.c.b16 %v1893, %v1877
      %v1926 = vpack.c.b16 %v1894, %v1878
      %v1927 = vpack.c.b16 %v1895, %v1879
      %v1961 = vsel %vm732, %v1683, 0
      %1963 = vmatprep.subr.bf16.mxu0 0
      %1964 = vmatpush1.bf16.msra.mxu0 0
      %1965 = vmatprep.subr.bf16.mxu0 0
      %1966 = vmatpush1.bf16.msra.mxu0 0
      %1967 = vmatprep.subr.bf16.mxu0 0
      %1968 = vmatpush1.bf16.msra.mxu0 0
      %1969 = vmatprep.subr.bf16.mxu0 0
      %1970 = vmatpush1.bf16.msra.mxu0 0
      %1971 = vmatprep.subr.bf16.mxu0 0
      %1972 = vmatpush1.bf16.msra.mxu0 0
      %1973 = vmatprep.subr.bf16.mxu0 0
      %1974 = vmatpush1.bf16.msra.mxu0 0
      %1975 = vmatprep.subr.bf16.mxu0 %v1913
      %1976 = vmatpush1.bf16.msra.mxu0 %v1912
      %1977 = vmatprep.subr.bf16.mxu0 %v1897
      %1978 = vmatpush1.bf16.msra.mxu0 %v1896
      %1979 = vmatprep.subr.bf16.mxu0 0
      %1980 = vmatpush2.bf16.msra.mxu0 0
      %1981 = vmatprep.subr.bf16.mxu0 0
      %1982 = vmatpush2.bf16.msra.mxu0 0
      %1983 = vmatprep.subr.bf16.mxu0 0
      %1984 = vmatpush2.bf16.msra.mxu0 0
      %1985 = vmatprep.subr.bf16.mxu0 0
      %1986 = vmatpush2.bf16.msra.mxu0 0
      %1987 = vmatprep.subr.bf16.mxu0 0
      %1988 = vmatpush2.bf16.msra.mxu0 0
      %1989 = vmatprep.subr.bf16.mxu0 0
      %1990 = vmatpush2.bf16.msra.mxu0 0
      %1991 = vmatprep.subr.bf16.mxu0 0
      %1992 = vmatpush2.bf16.msra.mxu0 0
      %1993 = vmatprep.subr.bf16.mxu0 0
      %1994 = vmatpush2.bf16.msra.mxu0 0
      %1995 = vmatprep.mubr.bf16.mxu0 0
      %1996 = vmatmul.mubr.bf16.gmra.mxu0 %v1961
      %v1997 = vpop.f32.mrf.mxu0
      %v1998 = vadd.f32 %v1723, %v1997
      %v1999 = vpop.f32.mrf.mxu0
      %v2000 = vadd.f32 %v1727, %v1999
      %v2001 = vpop.f32.mrf.mxu0
      %v2002 = vpop.f32.mrf.mxu0
      %2003 = vdwg.mxu0
      %2004 = vmatprep.subr.bf16.mxu0 0
      %2005 = vmatpush1.bf16.msra.mxu0 0
      %2006 = vmatprep.subr.bf16.mxu0 0
      %2007 = vmatpush1.bf16.msra.mxu0 0
      %2008 = vmatprep.subr.bf16.mxu0 0
      %2009 = vmatpush1.bf16.msra.mxu0 0
      %2010 = vmatprep.subr.bf16.mxu0 0
      %2011 = vmatpush1.bf16.msra.mxu0 0
      %2012 = vmatprep.subr.bf16.mxu0 0
      %2013 = vmatpush1.bf16.msra.mxu0 0
      %2014 = vmatprep.subr.bf16.mxu0 0
      %2015 = vmatpush1.bf16.msra.mxu0 0
      %2016 = vmatprep.subr.bf16.mxu0 %v1915
      %2017 = vmatpush1.bf16.msra.mxu0 %v1914
      %2018 = vmatprep.subr.bf16.mxu0 %v1899
      %2019 = vmatpush1.bf16.msra.mxu0 %v1898
      %2020 = vmatprep.subr.bf16.mxu0 0
      %2021 = vmatpush2.bf16.msra.mxu0 0
      %2022 = vmatprep.subr.bf16.mxu0 0
      %2023 = vmatpush2.bf16.msra.mxu0 0
      %2024 = vmatprep.subr.bf16.mxu0 0
      %2025 = vmatpush2.bf16.msra.mxu0 0
      %2026 = vmatprep.subr.bf16.mxu0 0
      %2027 = vmatpush2.bf16.msra.mxu0 0
      %2028 = vmatprep.subr.bf16.mxu0 0
      %2029 = vmatpush2.bf16.msra.mxu0 0
      %2030 = vmatprep.subr.bf16.mxu0 0
      %2031 = vmatpush2.bf16.msra.mxu0 0
      %2032 = vmatprep.subr.bf16.mxu0 0
      %2033 = vmatpush2.bf16.msra.mxu0 0
      %2034 = vmatprep.subr.bf16.mxu0 0
      %2035 = vmatpush2.bf16.msra.mxu0 0
      %2036 = vmatprep.mubr.bf16.mxu0 0
      %2037 = vmatmul.mubr.bf16.gmra.mxu0 %v1961
      %v2038 = vpop.f32.mrf.mxu0
      %v2039 = vadd.f32 %v1731, %v2038
      %v2040 = vpop.f32.mrf.mxu0
      %v2041 = vadd.f32 %v1735, %v2040
      %v2042 = vpop.f32.mrf.mxu0
      %v2043 = vpop.f32.mrf.mxu0
      %2044 = vdwg.mxu0
      %2045 = vmatprep.subr.bf16.mxu0 0
      %2046 = vmatpush1.bf16.msra.mxu0 0
      %2047 = vmatprep.subr.bf16.mxu0 0
      %2048 = vmatpush1.bf16.msra.mxu0 0
      %2049 = vmatprep.subr.bf16.mxu0 0
      %2050 = vmatpush1.bf16.msra.mxu0 0
      %2051 = vmatprep.subr.bf16.mxu0 0
      %2052 = vmatpush1.bf16.msra.mxu0 0
      %2053 = vmatprep.subr.bf16.mxu0 0
      %2054 = vmatpush1.bf16.msra.mxu0 0
      %2055 = vmatprep.subr.bf16.mxu0 0
      %2056 = vmatpush1.bf16.msra.mxu0 0
      %2057 = vmatprep.subr.bf16.mxu0 %v1917
      %2058 = vmatpush1.bf16.msra.mxu0 %v1916
      %2059 = vmatprep.subr.bf16.mxu0 %v1901
      %2060 = vmatpush1.bf16.msra.mxu0 %v1900
      %2061 = vmatprep.subr.bf16.mxu0 0
      %2062 = vmatpush2.bf16.msra.mxu0 0
      %2063 = vmatprep.subr.bf16.mxu0 0
      %2064 = vmatpush2.bf16.msra.mxu0 0
      %2065 = vmatprep.subr.bf16.mxu0 0
      %2066 = vmatpush2.bf16.msra.mxu0 0
      %2067 = vmatprep.subr.bf16.mxu0 0
      %2068 = vmatpush2.bf16.msra.mxu0 0
      %2069 = vmatprep.subr.bf16.mxu0 0
      %2070 = vmatpush2.bf16.msra.mxu0 0
      %2071 = vmatprep.subr.bf16.mxu0 0
      %2072 = vmatpush2.bf16.msra.mxu0 0
      %2073 = vmatprep.subr.bf16.mxu0 0
      %2074 = vmatpush2.bf16.msra.mxu0 0
      %2075 = vmatprep.subr.bf16.mxu0 0
      %2076 = vmatpush2.bf16.msra.mxu0 0
      %2077 = vmatprep.mubr.bf16.mxu0 0
      %2078 = vmatmul.mubr.bf16.gmra.mxu0 %v1961
      %v2079 = vpop.f32.mrf.mxu0
      %v2080 = vadd.f32 %v1739, %v2079
      %v2081 = vpop.f32.mrf.mxu0
      %v2082 = vadd.f32 %v1743, %v2081
      %v2083 = vpop.f32.mrf.mxu0
      %v2084 = vpop.f32.mrf.mxu0
      %2085 = vdwg.mxu0
      %2086 = vmatprep.subr.bf16.mxu0 0
      %2087 = vmatpush1.bf16.msra.mxu0 0
      %2088 = vmatprep.subr.bf16.mxu0 0
      %2089 = vmatpush1.bf16.msra.mxu0 0
      %2090 = vmatprep.subr.bf16.mxu0 0
      %2091 = vmatpush1.bf16.msra.mxu0 0
      %2092 = vmatprep.subr.bf16.mxu0 0
      %2093 = vmatpush1.bf16.msra.mxu0 0
      %2094 = vmatprep.subr.bf16.mxu0 0
      %2095 = vmatpush1.bf16.msra.mxu0 0
      %2096 = vmatprep.subr.bf16.mxu0 0
      %2097 = vmatpush1.bf16.msra.mxu0 0
      %2098 = vmatprep.subr.bf16.mxu0 %v1919
      %2099 = vmatpush1.bf16.msra.mxu0 %v1918
      %2100 = vmatprep.subr.bf16.mxu0 %v1903
      %2101 = vmatpush1.bf16.msra.mxu0 %v1902
      %2102 = vmatprep.subr.bf16.mxu0 0
      %2103 = vmatpush2.bf16.msra.mxu0 0
      %2104 = vmatprep.subr.bf16.mxu0 0
      %2105 = vmatpush2.bf16.msra.mxu0 0
      %2106 = vmatprep.subr.bf16.mxu0 0
      %2107 = vmatpush2.bf16.msra.mxu0 0
      %2108 = vmatprep.subr.bf16.mxu0 0
      %2109 = vmatpush2.bf16.msra.mxu0 0
      %2110 = vmatprep.subr.bf16.mxu0 0
      %2111 = vmatpush2.bf16.msra.mxu0 0
      %2112 = vmatprep.subr.bf16.mxu0 0
      %2113 = vmatpush2.bf16.msra.mxu0 0
      %2114 = vmatprep.subr.bf16.mxu0 0
      %2115 = vmatpush2.bf16.msra.mxu0 0
      %2116 = vmatprep.subr.bf16.mxu0 0
      %2117 = vmatpush2.bf16.msra.mxu0 0
      %2118 = vmatprep.mubr.bf16.mxu0 0
      %2119 = vmatmul.mubr.bf16.gmra.mxu0 %v1961
      %v2120 = vpop.f32.mrf.mxu0
      %v2121 = vadd.f32 %v1747, %v2120
      %v2122 = vpop.f32.mrf.mxu0
      %v2123 = vadd.f32 %v1751, %v2122
      %v2124 = vpop.f32.mrf.mxu0
      %v2125 = vpop.f32.mrf.mxu0
      %2126 = vdwg.mxu0
      %2127 = vmatprep.subr.bf16.mxu0 0
      %2128 = vmatpush1.bf16.msra.mxu0 0
      %2129 = vmatprep.subr.bf16.mxu0 0
      %2130 = vmatpush1.bf16.msra.mxu0 0
      %2131 = vmatprep.subr.bf16.mxu0 0
      %2132 = vmatpush1.bf16.msra.mxu0 0
      %2133 = vmatprep.subr.bf16.mxu0 0
      %2134 = vmatpush1.bf16.msra.mxu0 0
      %2135 = vmatprep.subr.bf16.mxu0 0
      %2136 = vmatpush1.bf16.msra.mxu0 0
      %2137 = vmatprep.subr.bf16.mxu0 0
      %2138 = vmatpush1.bf16.msra.mxu0 0
      %2139 = vmatprep.subr.bf16.mxu0 %v1921
      %2140 = vmatpush1.bf16.msra.mxu0 %v1920
      %2141 = vmatprep.subr.bf16.mxu0 %v1905
      %2142 = vmatpush1.bf16.msra.mxu0 %v1904
      %2143 = vmatprep.subr.bf16.mxu0 0
      %2144 = vmatpush2.bf16.msra.mxu0 0
      %2145 = vmatprep.subr.bf16.mxu0 0
      %2146 = vmatpush2.bf16.msra.mxu0 0
      %2147 = vmatprep.subr.bf16.mxu0 0
      %2148 = vmatpush2.bf16.msra.mxu0 0
      %2149 = vmatprep.subr.bf16.mxu0 0
      %2150 = vmatpush2.bf16.msra.mxu0 0
      %2151 = vmatprep.subr.bf16.mxu0 0
      %2152 = vmatpush2.bf16.msra.mxu0 0
      %2153 = vmatprep.subr.bf16.mxu0 0
      %2154 = vmatpush2.bf16.msra.mxu0 0
      %2155 = vmatprep.subr.bf16.mxu0 0
      %2156 = vmatpush2.bf16.msra.mxu0 0
      %2157 = vmatprep.subr.bf16.mxu0 0
      %2158 = vmatpush2.bf16.msra.mxu0 0
      %2159 = vmatprep.mubr.bf16.mxu0 0
      %2160 = vmatmul.mubr.bf16.gmra.mxu0 %v1961
      %v2161 = vpop.f32.mrf.mxu0
      %v2162 = vadd.f32 %v1755, %v2161
      %v2163 = vpop.f32.mrf.mxu0
      %v2164 = vadd.f32 %v1759, %v2163
      %v2165 = vpop.f32.mrf.mxu0
      %v2166 = vpop.f32.mrf.mxu0
      %2167 = vdwg.mxu0
      %2168 = vmatprep.subr.bf16.mxu0 0
      %2169 = vmatpush1.bf16.msra.mxu0 0
      %2170 = vmatprep.subr.bf16.mxu0 0
      %2171 = vmatpush1.bf16.msra.mxu0 0
      %2172 = vmatprep.subr.bf16.mxu0 0
      %2173 = vmatpush1.bf16.msra.mxu0 0
      %2174 = vmatprep.subr.bf16.mxu0 0
      %2175 = vmatpush1.bf16.msra.mxu0 0
      %2176 = vmatprep.subr.bf16.mxu0 0
      %2177 = vmatpush1.bf16.msra.mxu0 0
      %2178 = vmatprep.subr.bf16.mxu0 0
      %2179 = vmatpush1.bf16.msra.mxu0 0
      %2180 = vmatprep.subr.bf16.mxu0 %v1923
      %2181 = vmatpush1.bf16.msra.mxu0 %v1922
      %2182 = vmatprep.subr.bf16.mxu0 %v1907
      %2183 = vmatpush1.bf16.msra.mxu0 %v1906
      %2184 = vmatprep.subr.bf16.mxu0 0
      %2185 = vmatpush2.bf16.msra.mxu0 0
      %2186 = vmatprep.subr.bf16.mxu0 0
      %2187 = vmatpush2.bf16.msra.mxu0 0
      %2188 = vmatprep.subr.bf16.mxu0 0
      %2189 = vmatpush2.bf16.msra.mxu0 0
      %2190 = vmatprep.subr.bf16.mxu0 0
      %2191 = vmatpush2.bf16.msra.mxu0 0
      %2192 = vmatprep.subr.bf16.mxu0 0
      %2193 = vmatpush2.bf16.msra.mxu0 0
      %2194 = vmatprep.subr.bf16.mxu0 0
      %2195 = vmatpush2.bf16.msra.mxu0 0
      %2196 = vmatprep.subr.bf16.mxu0 0
      %2197 = vmatpush2.bf16.msra.mxu0 0
      %2198 = vmatprep.subr.bf16.mxu0 0
      %2199 = vmatpush2.bf16.msra.mxu0 0
      %2200 = vmatprep.mubr.bf16.mxu0 0
      %2201 = vmatmul.mubr.bf16.gmra.mxu0 %v1961
      %v2202 = vpop.f32.mrf.mxu0
      %v2203 = vadd.f32 %v1763, %v2202
      %v2204 = vpop.f32.mrf.mxu0
      %v2205 = vadd.f32 %v1767, %v2204
      %v2206 = vpop.f32.mrf.mxu0
      %v2207 = vpop.f32.mrf.mxu0
      %2208 = vdwg.mxu0
      %2209 = vmatprep.subr.bf16.mxu0 0
      %2210 = vmatpush1.bf16.msra.mxu0 0
      %2211 = vmatprep.subr.bf16.mxu0 0
      %2212 = vmatpush1.bf16.msra.mxu0 0
      %2213 = vmatprep.subr.bf16.mxu0 0
      %2214 = vmatpush1.bf16.msra.mxu0 0
      %2215 = vmatprep.subr.bf16.mxu0 0
      %2216 = vmatpush1.bf16.msra.mxu0 0
      %2217 = vmatprep.subr.bf16.mxu0 0
      %2218 = vmatpush1.bf16.msra.mxu0 0
      %2219 = vmatprep.subr.bf16.mxu0 0
      %2220 = vmatpush1.bf16.msra.mxu0 0
      %2221 = vmatprep.subr.bf16.mxu0 %v1925
      %2222 = vmatpush1.bf16.msra.mxu0 %v1924
      %2223 = vmatprep.subr.bf16.mxu0 %v1909
      %2224 = vmatpush1.bf16.msra.mxu0 %v1908
      %2225 = vmatprep.subr.bf16.mxu0 0
      %2226 = vmatpush2.bf16.msra.mxu0 0
      %2227 = vmatprep.subr.bf16.mxu0 0
      %2228 = vmatpush2.bf16.msra.mxu0 0
      %2229 = vmatprep.subr.bf16.mxu0 0
      %2230 = vmatpush2.bf16.msra.mxu0 0
      %2231 = vmatprep.subr.bf16.mxu0 0
      %2232 = vmatpush2.bf16.msra.mxu0 0
      %2233 = vmatprep.subr.bf16.mxu0 0
      %2234 = vmatpush2.bf16.msra.mxu0 0
      %2235 = vmatprep.subr.bf16.mxu0 0
      %2236 = vmatpush2.bf16.msra.mxu0 0
      %2237 = vmatprep.subr.bf16.mxu0 0
      %2238 = vmatpush2.bf16.msra.mxu0 0
      %2239 = vmatprep.subr.bf16.mxu0 0
      %2240 = vmatpush2.bf16.msra.mxu0 0
      %2241 = vmatprep.mubr.bf16.mxu0 0
      %2242 = vmatmul.mubr.bf16.gmra.mxu0 %v1961
      %v2243 = vpop.f32.mrf.mxu0
      %v2244 = vadd.f32 %v1771, %v2243
      %v2245 = vpop.f32.mrf.mxu0
      %v2246 = vadd.f32 %v1775, %v2245
      %v2247 = vpop.f32.mrf.mxu0
      %v2248 = vpop.f32.mrf.mxu0
      %2249 = vdwg.mxu0
      %2250 = vmatprep.subr.bf16.mxu0 0
      %2251 = vmatpush1.bf16.msra.mxu0 0
      %2252 = vmatprep.subr.bf16.mxu0 0
      %2253 = vmatpush1.bf16.msra.mxu0 0
      %2254 = vmatprep.subr.bf16.mxu0 0
      %2255 = vmatpush1.bf16.msra.mxu0 0
      %2256 = vmatprep.subr.bf16.mxu0 0
      %2257 = vmatpush1.bf16.msra.mxu0 0
      %2258 = vmatprep.subr.bf16.mxu0 0
      %2259 = vmatpush1.bf16.msra.mxu0 0
      %2260 = vmatprep.subr.bf16.mxu0 0
      %2261 = vmatpush1.bf16.msra.mxu0 0
      %2262 = vmatprep.subr.bf16.mxu0 %v1927
      %2263 = vmatpush1.bf16.msra.mxu0 %v1926
      %2264 = vmatprep.subr.bf16.mxu0 %v1911
      %2265 = vmatpush1.bf16.msra.mxu0 %v1910
      %2266 = vmatprep.subr.bf16.mxu0 0
      %2267 = vmatpush2.bf16.msra.mxu0 0
      %2268 = vmatprep.subr.bf16.mxu0 0
      %2269 = vmatpush2.bf16.msra.mxu0 0
      %2270 = vmatprep.subr.bf16.mxu0 0
      %2271 = vmatpush2.bf16.msra.mxu0 0
      %2272 = vmatprep.subr.bf16.mxu0 0
      %2273 = vmatpush2.bf16.msra.mxu0 0
      %2274 = vmatprep.subr.bf16.mxu0 0
      %2275 = vmatpush2.bf16.msra.mxu0 0
      %2276 = vmatprep.subr.bf16.mxu0 0
      %2277 = vmatpush2.bf16.msra.mxu0 0
      %2278 = vmatprep.subr.bf16.mxu0 0
      %2279 = vmatpush2.bf16.msra.mxu0 0
      %2280 = vmatprep.subr.bf16.mxu0 0
      %2281 = vmatpush2.bf16.msra.mxu0 0
      %2282 = vmatprep.mubr.bf16.mxu0 0
      %2283 = vmatmul.mubr.bf16.gmra.mxu0 %v1961
      %v2284 = vpop.f32.mrf.mxu0
      %v2285 = vadd.f32 %v1779, %v2284
      %v2286 = vpop.f32.mrf.mxu0
      %v2287 = vadd.f32 %v1783, %v2286
      %v2288 = vpop.f32.mrf.mxu0
      %v2289 = vpop.f32.mrf.mxu0
      %2290 = vdwg.mxu0
      %v2291 = vmax.f32 %v1998, 0.0
      %v2292 = vmax.f32 %v2000, 0.0
      %v2293 = vmax.f32 %v2039, 0.0
      %v2294 = vmax.f32 %v2041, 0.0
      %v2295 = vmax.f32 %v2080, 0.0
      %v2296 = vmax.f32 %v2082, 0.0
      %v2297 = vmax.f32 %v2121, 0.0
      %v2298 = vmax.f32 %v2123, 0.0
      %v2299 = vmax.f32 %v2162, 0.0
      %v2300 = vmax.f32 %v2164, 0.0
      %v2301 = vmax.f32 %v2203, 0.0
      %v2302 = vmax.f32 %v2205, 0.0
      %v2303 = vmax.f32 %v2244, 0.0
      %v2304 = vmax.f32 %v2246, 0.0
      %v2305 = vmax.f32 %v2285, 0.0
      %v2306 = vmax.f32 %v2287, 0.0
      %v2307 = vpack.c.bf16 %v2291, %v2291
      %v2308 = vpack.c.bf16 %v2292, %v2292
      %v2309 = vpack.c.bf16 %v2293, %v2293
      %v2310 = vpack.c.bf16 %v2294, %v2294
      %v2311 = vpack.c.bf16 %v2295, %v2295
      %v2312 = vpack.c.bf16 %v2296, %v2296
      %v2313 = vpack.c.bf16 %v2297, %v2297
      %v2314 = vpack.c.bf16 %v2298, %v2298
      %v2315 = vpack.c.bf16 %v2299, %v2299
      %v2316 = vpack.c.bf16 %v2300, %v2300
      %v2317 = vpack.c.bf16 %v2301, %v2301
      %v2318 = vpack.c.bf16 %v2302, %v2302
      %v2319 = vpack.c.bf16 %v2303, %v2303
      %v2320 = vpack.c.bf16 %v2304, %v2304
      %v2321 = vpack.c.bf16 %v2305, %v2305
      %v2322 = vpack.c.bf16 %v2306, %v2306
      %v2323 = vld [vmem:[%s14] sm:$0xf]
      %v2324 = vld [vmem:[%s14 + $0x4] sm:$0xf]
      %v2325 = vld [vmem:[%s14 + $0x8] sm:$0xf]
      %v2326 = vld [vmem:[%s14 + $0xc] sm:$0xf]
      %v2327 = vld [vmem:[%s14 + $0x10] sm:$0xf]
      %v2328 = vld [vmem:[%s14 + $0x14] sm:$0xf]
      %v2329 = vld [vmem:[%s14 + $0x18] sm:$0xf]
      %v2330 = vld [vmem:[%s14 + $0x1c] sm:$0xf]
      %v2331 = vld [vmem:[%s14 + $0x20] sm:$0xf]
      %v2332 = vld [vmem:[%s14 + $0x24] sm:$0xf]
      %v2333 = vld [vmem:[%s14 + $0x28] sm:$0xf]
      %v2334 = vld [vmem:[%s14 + $0x2c] sm:$0xf]
      %v2335 = vld [vmem:[%s14 + $0x30] sm:$0xf]
      %v2336 = vld [vmem:[%s14 + $0x34] sm:$0xf]
      %v2337 = vld [vmem:[%s14 + $0x38] sm:$0xf]
      %v2338 = vld [vmem:[%s14 + $0x3c] sm:$0xf]
      %v2339 = vld [vmem:[%s14 + $0x40] sm:$0xf]
      %v2340 = vld [vmem:[%s14 + $0x44] sm:$0xf]
      %v2341 = vld [vmem:[%s14 + $0x48] sm:$0xf]
      %v2342 = vld [vmem:[%s14 + $0x4c] sm:$0xf]
      %v2343 = vld [vmem:[%s14 + $0x50] sm:$0xf]
      %v2344 = vld [vmem:[%s14 + $0x54] sm:$0xf]
      %v2345 = vld [vmem:[%s14 + $0x58] sm:$0xf]
      %v2346 = vld [vmem:[%s14 + $0x5c] sm:$0xf]
      %v2347 = vld [vmem:[%s14 + $0x60] sm:$0xf]
      %v2348 = vld [vmem:[%s14 + $0x64] sm:$0xf]
      %v2349 = vld [vmem:[%s14 + $0x68] sm:$0xf]
      %v2350 = vld [vmem:[%s14 + $0x6c] sm:$0xf]
      %v2351 = vld [vmem:[%s14 + $0x70] sm:$0xf]
      %v2352 = vld [vmem:[%s14 + $0x74] sm:$0xf]
      %v2353 = vld [vmem:[%s14 + $0x78] sm:$0xf]
      %v2354 = vld [vmem:[%s14 + $0x7c] sm:$0xf]
      %v2355 = vld [vmem:[%s14 + $0x80] sm:$0xf]
      %v2356 = vld [vmem:[%s14 + $0x84] sm:$0xf]
      %v2357 = vld [vmem:[%s14 + $0x88] sm:$0xf]
      %v2358 = vld [vmem:[%s14 + $0x8c] sm:$0xf]
      %v2359 = vld [vmem:[%s14 + $0x90] sm:$0xf]
      %v2360 = vld [vmem:[%s14 + $0x94] sm:$0xf]
      %v2361 = vld [vmem:[%s14 + $0x98] sm:$0xf]
      %v2362 = vld [vmem:[%s14 + $0x9c] sm:$0xf]
      %v2363 = vld [vmem:[%s14 + $0xa0] sm:$0xf]
      %v2364 = vld [vmem:[%s14 + $0xa4] sm:$0xf]
      %v2365 = vld [vmem:[%s14 + $0xa8] sm:$0xf]
      %v2366 = vld [vmem:[%s14 + $0xac] sm:$0xf]
      %v2367 = vld [vmem:[%s14 + $0xb0] sm:$0xf]
      %v2368 = vld [vmem:[%s14 + $0xb4] sm:$0xf]
      %v2369 = vld [vmem:[%s14 + $0xb8] sm:$0xf]
      %v2370 = vld [vmem:[%s14 + $0xbc] sm:$0xf]
      %v2371 = vld [vmem:[%s14 + $0xc0] sm:$0xf]
      %v2372 = vld [vmem:[%s14 + $0xc4] sm:$0xf]
      %v2373 = vld [vmem:[%s14 + $0xc8] sm:$0xf]
      %v2374 = vld [vmem:[%s14 + $0xcc] sm:$0xf]
      %v2375 = vld [vmem:[%s14 + $0xd0] sm:$0xf]
      %v2376 = vld [vmem:[%s14 + $0xd4] sm:$0xf]
      %v2377 = vld [vmem:[%s14 + $0xd8] sm:$0xf]
      %v2378 = vld [vmem:[%s14 + $0xdc] sm:$0xf]
      %v2379 = vld [vmem:[%s14 + $0xe0] sm:$0xf]
      %v2380 = vld [vmem:[%s14 + $0xe4] sm:$0xf]
      %v2381 = vld [vmem:[%s14 + $0xe8] sm:$0xf]
      %v2382 = vld [vmem:[%s14 + $0xec] sm:$0xf]
      %v2383 = vld [vmem:[%s14 + $0xf0] sm:$0xf]
      %v2384 = vld [vmem:[%s14 + $0xf4] sm:$0xf]
      %v2385 = vld [vmem:[%s14 + $0xf8] sm:$0xf]
      %v2386 = vld [vmem:[%s14 + $0xfc] sm:$0xf]
      %v2387 = vld [vmem:[%s14 + $0x100] sm:$0xf]
      %v2388 = vld [vmem:[%s14 + $0x104] sm:$0xf]
      %v2389 = vld [vmem:[%s14 + $0x108] sm:$0xf]
      %v2390 = vld [vmem:[%s14 + $0x10c] sm:$0xf]
      %v2391 = vld [vmem:[%s14 + $0x110] sm:$0xf]
      %v2392 = vld [vmem:[%s14 + $0x114] sm:$0xf]
      %v2393 = vld [vmem:[%s14 + $0x118] sm:$0xf]
      %v2394 = vld [vmem:[%s14 + $0x11c] sm:$0xf]
      %v2395 = vld [vmem:[%s14 + $0x120] sm:$0xf]
      %v2396 = vld [vmem:[%s14 + $0x124] sm:$0xf]
      %v2397 = vld [vmem:[%s14 + $0x128] sm:$0xf]
      %v2398 = vld [vmem:[%s14 + $0x12c] sm:$0xf]
      %v2399 = vld [vmem:[%s14 + $0x130] sm:$0xf]
      %v2400 = vld [vmem:[%s14 + $0x134] sm:$0xf]
      %v2401 = vld [vmem:[%s14 + $0x138] sm:$0xf]
      %v2402 = vld [vmem:[%s14 + $0x13c] sm:$0xf]
      %v2403 = vld [vmem:[%s14 + $0x140] sm:$0xf]
      %v2404 = vld [vmem:[%s14 + $0x144] sm:$0xf]
      %v2405 = vld [vmem:[%s14 + $0x148] sm:$0xf]
      %v2406 = vld [vmem:[%s14 + $0x14c] sm:$0xf]
      %v2407 = vld [vmem:[%s14 + $0x150] sm:$0xf]
      %v2408 = vld [vmem:[%s14 + $0x154] sm:$0xf]
      %v2409 = vld [vmem:[%s14 + $0x158] sm:$0xf]
      %v2410 = vld [vmem:[%s14 + $0x15c] sm:$0xf]
      %v2411 = vld [vmem:[%s14 + $0x160] sm:$0xf]
      %v2412 = vld [vmem:[%s14 + $0x164] sm:$0xf]
      %v2413 = vld [vmem:[%s14 + $0x168] sm:$0xf]
      %v2414 = vld [vmem:[%s14 + $0x16c] sm:$0xf]
      %v2415 = vld [vmem:[%s14 + $0x170] sm:$0xf]
      %v2416 = vld [vmem:[%s14 + $0x174] sm:$0xf]
      %v2417 = vld [vmem:[%s14 + $0x178] sm:$0xf]
      %v2418 = vld [vmem:[%s14 + $0x17c] sm:$0xf]
      %v2419 = vld [vmem:[%s14 + $0x180] sm:$0xf]
      %v2420 = vld [vmem:[%s14 + $0x184] sm:$0xf]
      %v2421 = vld [vmem:[%s14 + $0x188] sm:$0xf]
      %v2422 = vld [vmem:[%s14 + $0x18c] sm:$0xf]
      %v2423 = vld [vmem:[%s14 + $0x190] sm:$0xf]
      %v2424 = vld [vmem:[%s14 + $0x194] sm:$0xf]
      %v2425 = vld [vmem:[%s14 + $0x198] sm:$0xf]
      %v2426 = vld [vmem:[%s14 + $0x19c] sm:$0xf]
      %v2427 = vld [vmem:[%s14 + $0x1a0] sm:$0xf]
      %v2428 = vld [vmem:[%s14 + $0x1a4] sm:$0xf]
      %v2429 = vld [vmem:[%s14 + $0x1a8] sm:$0xf]
      %v2430 = vld [vmem:[%s14 + $0x1ac] sm:$0xf]
      %v2431 = vld [vmem:[%s14 + $0x1b0] sm:$0xf]
      %v2432 = vld [vmem:[%s14 + $0x1b4] sm:$0xf]
      %v2433 = vld [vmem:[%s14 + $0x1b8] sm:$0xf]
      %v2434 = vld [vmem:[%s14 + $0x1bc] sm:$0xf]
      %v2435 = vld [vmem:[%s14 + $0x1c0] sm:$0xf]
      %v2436 = vld [vmem:[%s14 + $0x1c4] sm:$0xf]
      %v2437 = vld [vmem:[%s14 + $0x1c8] sm:$0xf]
      %v2438 = vld [vmem:[%s14 + $0x1cc] sm:$0xf]
      %v2439 = vld [vmem:[%s14 + $0x1d0] sm:$0xf]
      %v2440 = vld [vmem:[%s14 + $0x1d4] sm:$0xf]
      %v2441 = vld [vmem:[%s14 + $0x1d8] sm:$0xf]
      %v2442 = vld [vmem:[%s14 + $0x1dc] sm:$0xf]
      %v2443 = vld [vmem:[%s14 + $0x1e0] sm:$0xf]
      %v2444 = vld [vmem:[%s14 + $0x1e4] sm:$0xf]
      %v2445 = vld [vmem:[%s14 + $0x1e8] sm:$0xf]
      %v2446 = vld [vmem:[%s14 + $0x1ec] sm:$0xf]
      %v2447 = vld [vmem:[%s14 + $0x1f0] sm:$0xf]
      %v2448 = vld [vmem:[%s14 + $0x1f4] sm:$0xf]
      %v2449 = vld [vmem:[%s14 + $0x1f8] sm:$0xf]
      %v2450 = vld [vmem:[%s14 + $0x1fc] sm:$0xf]
      %v2451 = vld [vmem:[%s14 + $0x200] sm:$0xf]
      %v2452 = vld [vmem:[%s14 + $0x204] sm:$0xf]
      %v2453 = vld [vmem:[%s14 + $0x208] sm:$0xf]
      %v2454 = vld [vmem:[%s14 + $0x20c] sm:$0xf]
      %v2455 = vld [vmem:[%s14 + $0x210] sm:$0xf]
      %v2456 = vld [vmem:[%s14 + $0x214] sm:$0xf]
      %v2457 = vld [vmem:[%s14 + $0x218] sm:$0xf]
      %v2458 = vld [vmem:[%s14 + $0x21c] sm:$0xf]
      %v2459 = vld [vmem:[%s14 + $0x220] sm:$0xf]
      %v2460 = vld [vmem:[%s14 + $0x224] sm:$0xf]
      %v2461 = vld [vmem:[%s14 + $0x228] sm:$0xf]
      %v2462 = vld [vmem:[%s14 + $0x22c] sm:$0xf]
      %v2463 = vld [vmem:[%s14 + $0x230] sm:$0xf]
      %v2464 = vld [vmem:[%s14 + $0x234] sm:$0xf]
      %v2465 = vld [vmem:[%s14 + $0x238] sm:$0xf]
      %v2466 = vld [vmem:[%s14 + $0x23c] sm:$0xf]
      %v2467 = vld [vmem:[%s14 + $0x240] sm:$0xf]
      %v2468 = vld [vmem:[%s14 + $0x244] sm:$0xf]
      %v2469 = vld [vmem:[%s14 + $0x248] sm:$0xf]
      %v2470 = vld [vmem:[%s14 + $0x24c] sm:$0xf]
      %v2471 = vld [vmem:[%s14 + $0x250] sm:$0xf]
      %v2472 = vld [vmem:[%s14 + $0x254] sm:$0xf]
      %v2473 = vld [vmem:[%s14 + $0x258] sm:$0xf]
      %v2474 = vld [vmem:[%s14 + $0x25c] sm:$0xf]
      %v2475 = vld [vmem:[%s14 + $0x260] sm:$0xf]
      %v2476 = vld [vmem:[%s14 + $0x264] sm:$0xf]
      %v2477 = vld [vmem:[%s14 + $0x268] sm:$0xf]
      %v2478 = vld [vmem:[%s14 + $0x26c] sm:$0xf]
      %v2479 = vld [vmem:[%s14 + $0x270] sm:$0xf]
      %v2480 = vld [vmem:[%s14 + $0x274] sm:$0xf]
      %v2481 = vld [vmem:[%s14 + $0x278] sm:$0xf]
      %v2482 = vld [vmem:[%s14 + $0x27c] sm:$0xf]
      %v2483 = vld [vmem:[%s14 + $0x280] sm:$0xf]
      %v2484 = vld [vmem:[%s14 + $0x284] sm:$0xf]
      %v2485 = vld [vmem:[%s14 + $0x288] sm:$0xf]
      %v2486 = vld [vmem:[%s14 + $0x28c] sm:$0xf]
      %v2487 = vld [vmem:[%s14 + $0x290] sm:$0xf]
      %v2488 = vld [vmem:[%s14 + $0x294] sm:$0xf]
      %v2489 = vld [vmem:[%s14 + $0x298] sm:$0xf]
      %v2490 = vld [vmem:[%s14 + $0x29c] sm:$0xf]
      %v2491 = vld [vmem:[%s14 + $0x2a0] sm:$0xf]
      %v2492 = vld [vmem:[%s14 + $0x2a4] sm:$0xf]
      %v2493 = vld [vmem:[%s14 + $0x2a8] sm:$0xf]
      %v2494 = vld [vmem:[%s14 + $0x2ac] sm:$0xf]
      %v2495 = vld [vmem:[%s14 + $0x2b0] sm:$0xf]
      %v2496 = vld [vmem:[%s14 + $0x2b4] sm:$0xf]
      %v2497 = vld [vmem:[%s14 + $0x2b8] sm:$0xf]
      %v2498 = vld [vmem:[%s14 + $0x2bc] sm:$0xf]
      %v2499 = vld [vmem:[%s14 + $0x2c0] sm:$0xf]
      %v2500 = vld [vmem:[%s14 + $0x2c4] sm:$0xf]
      %v2501 = vld [vmem:[%s14 + $0x2c8] sm:$0xf]
      %v2502 = vld [vmem:[%s14 + $0x2cc] sm:$0xf]
      %v2503 = vld [vmem:[%s14 + $0x2d0] sm:$0xf]
      %v2504 = vld [vmem:[%s14 + $0x2d4] sm:$0xf]
      %v2505 = vld [vmem:[%s14 + $0x2d8] sm:$0xf]
      %v2506 = vld [vmem:[%s14 + $0x2dc] sm:$0xf]
      %v2507 = vld [vmem:[%s14 + $0x2e0] sm:$0xf]
      %v2508 = vld [vmem:[%s14 + $0x2e4] sm:$0xf]
      %v2509 = vld [vmem:[%s14 + $0x2e8] sm:$0xf]
      %v2510 = vld [vmem:[%s14 + $0x2ec] sm:$0xf]
      %v2511 = vld [vmem:[%s14 + $0x2f0] sm:$0xf]
      %v2512 = vld [vmem:[%s14 + $0x2f4] sm:$0xf]
      %v2513 = vld [vmem:[%s14 + $0x2f8] sm:$0xf]
      %v2514 = vld [vmem:[%s14 + $0x2fc] sm:$0xf]
      %v2515 = vld [vmem:[%s14 + $0x300] sm:$0xf]
      %v2516 = vld [vmem:[%s14 + $0x304] sm:$0xf]
      %v2517 = vld [vmem:[%s14 + $0x308] sm:$0xf]
      %v2518 = vld [vmem:[%s14 + $0x30c] sm:$0xf]
      %v2519 = vld [vmem:[%s14 + $0x310] sm:$0xf]
      %v2520 = vld [vmem:[%s14 + $0x314] sm:$0xf]
      %v2521 = vld [vmem:[%s14 + $0x318] sm:$0xf]
      %v2522 = vld [vmem:[%s14 + $0x31c] sm:$0xf]
      %v2523 = vld [vmem:[%s14 + $0x320] sm:$0xf]
      %v2524 = vld [vmem:[%s14 + $0x324] sm:$0xf]
      %v2525 = vld [vmem:[%s14 + $0x328] sm:$0xf]
      %v2526 = vld [vmem:[%s14 + $0x32c] sm:$0xf]
      %v2527 = vld [vmem:[%s14 + $0x330] sm:$0xf]
      %v2528 = vld [vmem:[%s14 + $0x334] sm:$0xf]
      %v2529 = vld [vmem:[%s14 + $0x338] sm:$0xf]
      %v2530 = vld [vmem:[%s14 + $0x33c] sm:$0xf]
      %v2531 = vld [vmem:[%s14 + $0x340] sm:$0xf]
      %v2532 = vld [vmem:[%s14 + $0x344] sm:$0xf]
      %v2533 = vld [vmem:[%s14 + $0x348] sm:$0xf]
      %v2534 = vld [vmem:[%s14 + $0x34c] sm:$0xf]
      %v2535 = vld [vmem:[%s14 + $0x350] sm:$0xf]
      %v2536 = vld [vmem:[%s14 + $0x354] sm:$0xf]
      %v2537 = vld [vmem:[%s14 + $0x358] sm:$0xf]
      %v2538 = vld [vmem:[%s14 + $0x35c] sm:$0xf]
      %v2539 = vld [vmem:[%s14 + $0x360] sm:$0xf]
      %v2540 = vld [vmem:[%s14 + $0x364] sm:$0xf]
      %v2541 = vld [vmem:[%s14 + $0x368] sm:$0xf]
      %v2542 = vld [vmem:[%s14 + $0x36c] sm:$0xf]
      %v2543 = vld [vmem:[%s14 + $0x370] sm:$0xf]
      %v2544 = vld [vmem:[%s14 + $0x374] sm:$0xf]
      %v2545 = vld [vmem:[%s14 + $0x378] sm:$0xf]
      %v2546 = vld [vmem:[%s14 + $0x37c] sm:$0xf]
      %v2547 = vld [vmem:[%s14 + $0x380] sm:$0xf]
      %v2548 = vld [vmem:[%s14 + $0x384] sm:$0xf]
      %v2549 = vld [vmem:[%s14 + $0x388] sm:$0xf]
      %v2550 = vld [vmem:[%s14 + $0x38c] sm:$0xf]
      %v2551 = vld [vmem:[%s14 + $0x390] sm:$0xf]
      %v2552 = vld [vmem:[%s14 + $0x394] sm:$0xf]
      %v2553 = vld [vmem:[%s14 + $0x398] sm:$0xf]
      %v2554 = vld [vmem:[%s14 + $0x39c] sm:$0xf]
      %v2555 = vld [vmem:[%s14 + $0x3a0] sm:$0xf]
      %v2556 = vld [vmem:[%s14 + $0x3a4] sm:$0xf]
      %v2557 = vld [vmem:[%s14 + $0x3a8] sm:$0xf]
      %v2558 = vld [vmem:[%s14 + $0x3ac] sm:$0xf]
      %v2559 = vld [vmem:[%s14 + $0x3b0] sm:$0xf]
      %v2560 = vld [vmem:[%s14 + $0x3b4] sm:$0xf]
      %v2561 = vld [vmem:[%s14 + $0x3b8] sm:$0xf]
      %v2562 = vld [vmem:[%s14 + $0x3bc] sm:$0xf]
      %v2563 = vld [vmem:[%s14 + $0x3c0] sm:$0xf]
      %v2564 = vld [vmem:[%s14 + $0x3c4] sm:$0xf]
      %v2565 = vld [vmem:[%s14 + $0x3c8] sm:$0xf]
      %v2566 = vld [vmem:[%s14 + $0x3cc] sm:$0xf]
      %v2567 = vld [vmem:[%s14 + $0x3d0] sm:$0xf]
      %v2568 = vld [vmem:[%s14 + $0x3d4] sm:$0xf]
      %v2569 = vld [vmem:[%s14 + $0x3d8] sm:$0xf]
      %v2570 = vld [vmem:[%s14 + $0x3dc] sm:$0xf]
      %v2571 = vld [vmem:[%s14 + $0x3e0] sm:$0xf]
      %v2572 = vld [vmem:[%s14 + $0x3e4] sm:$0xf]
      %v2573 = vld [vmem:[%s14 + $0x3e8] sm:$0xf]
      %v2574 = vld [vmem:[%s14 + $0x3ec] sm:$0xf]
      %v2575 = vld [vmem:[%s14 + $0x3f0] sm:$0xf]
      %v2576 = vld [vmem:[%s14 + $0x3f4] sm:$0xf]
      %v2577 = vld [vmem:[%s14 + $0x3f8] sm:$0xf]
      %v2578 = vld [vmem:[%s14 + $0x3fc] sm:$0xf]
      %v2579 = vld [vmem:[%s15] sm:$0x1]
      %v2581 = vlaneseq
      %v2582 = vshrl.u32 %v2581, 7
      %v2583 = vsub.s32 0, %v2582
      %v2584 = vrot.slane %v2579, %v2583
      %v2842 = vunpack.c.l.b16 %v2323
      %v2843 = vunpack.c.l.b16 %v2324
      %v2844 = vunpack.c.l.b16 %v2325
      %v2845 = vunpack.c.l.b16 %v2326
      %v2846 = vunpack.c.l.b16 %v2327
      %v2847 = vunpack.c.l.b16 %v2328
      %v2848 = vunpack.c.l.b16 %v2329
      %v2849 = vunpack.c.l.b16 %v2330
      %v2850 = vunpack.c.l.b16 %v2331
      %v2851 = vunpack.c.l.b16 %v2332
      %v2852 = vunpack.c.l.b16 %v2333
      %v2853 = vunpack.c.l.b16 %v2334
      %v2854 = vunpack.c.l.b16 %v2335
      %v2855 = vunpack.c.l.b16 %v2336
      %v2856 = vunpack.c.l.b16 %v2337
      %v2857 = vunpack.c.l.b16 %v2338
      %v2858 = vunpack.c.l.b16 %v2339
      %v2859 = vunpack.c.l.b16 %v2340
      %v2860 = vunpack.c.l.b16 %v2341
      %v2861 = vunpack.c.l.b16 %v2342
      %v2862 = vunpack.c.l.b16 %v2343
      %v2863 = vunpack.c.l.b16 %v2344
      %v2864 = vunpack.c.l.b16 %v2345
      %v2865 = vunpack.c.l.b16 %v2346
      %v2866 = vunpack.c.l.b16 %v2347
      %v2867 = vunpack.c.l.b16 %v2348
      %v2868 = vunpack.c.l.b16 %v2349
      %v2869 = vunpack.c.l.b16 %v2350
      %v2870 = vunpack.c.l.b16 %v2351
      %v2871 = vunpack.c.l.b16 %v2352
      %v2872 = vunpack.c.l.b16 %v2353
      %v2873 = vunpack.c.l.b16 %v2354
      %v2874 = vunpack.c.l.b16 %v2355
      %v2875 = vunpack.c.l.b16 %v2356
      %v2876 = vunpack.c.l.b16 %v2357
      %v2877 = vunpack.c.l.b16 %v2358
      %v2878 = vunpack.c.l.b16 %v2359
      %v2879 = vunpack.c.l.b16 %v2360
      %v2880 = vunpack.c.l.b16 %v2361
      %v2881 = vunpack.c.l.b16 %v2362
      %v2882 = vunpack.c.l.b16 %v2363
      %v2883 = vunpack.c.l.b16 %v2364
      %v2884 = vunpack.c.l.b16 %v2365
      %v2885 = vunpack.c.l.b16 %v2366
      %v2886 = vunpack.c.l.b16 %v2367
      %v2887 = vunpack.c.l.b16 %v2368
      %v2888 = vunpack.c.l.b16 %v2369
      %v2889 = vunpack.c.l.b16 %v2370
      %v2890 = vunpack.c.l.b16 %v2371
      %v2891 = vunpack.c.l.b16 %v2372
      %v2892 = vunpack.c.l.b16 %v2373
      %v2893 = vunpack.c.l.b16 %v2374
      %v2894 = vunpack.c.l.b16 %v2375
      %v2895 = vunpack.c.l.b16 %v2376
      %v2896 = vunpack.c.l.b16 %v2377
      %v2897 = vunpack.c.l.b16 %v2378
      %v2898 = vunpack.c.l.b16 %v2379
      %v2899 = vunpack.c.l.b16 %v2380
      %v2900 = vunpack.c.l.b16 %v2381
      %v2901 = vunpack.c.l.b16 %v2382
      %v2902 = vunpack.c.l.b16 %v2383
      %v2903 = vunpack.c.l.b16 %v2384
      %v2904 = vunpack.c.l.b16 %v2385
      %v2905 = vunpack.c.l.b16 %v2386
      %v2906 = vunpack.c.l.b16 %v2387
      %v2907 = vunpack.c.l.b16 %v2388
      %v2908 = vunpack.c.l.b16 %v2389
      %v2909 = vunpack.c.l.b16 %v2390
      %v2910 = vunpack.c.l.b16 %v2391
      %v2911 = vunpack.c.l.b16 %v2392
      %v2912 = vunpack.c.l.b16 %v2393
      %v2913 = vunpack.c.l.b16 %v2394
      %v2914 = vunpack.c.l.b16 %v2395
      %v2915 = vunpack.c.l.b16 %v2396
      %v2916 = vunpack.c.l.b16 %v2397
      %v2917 = vunpack.c.l.b16 %v2398
      %v2918 = vunpack.c.l.b16 %v2399
      %v2919 = vunpack.c.l.b16 %v2400
      %v2920 = vunpack.c.l.b16 %v2401
      %v2921 = vunpack.c.l.b16 %v2402
      %v2922 = vunpack.c.l.b16 %v2403
      %v2923 = vunpack.c.l.b16 %v2404
      %v2924 = vunpack.c.l.b16 %v2405
      %v2925 = vunpack.c.l.b16 %v2406
      %v2926 = vunpack.c.l.b16 %v2407
      %v2927 = vunpack.c.l.b16 %v2408
      %v2928 = vunpack.c.l.b16 %v2409
      %v2929 = vunpack.c.l.b16 %v2410
      %v2930 = vunpack.c.l.b16 %v2411
      %v2931 = vunpack.c.l.b16 %v2412
      %v2932 = vunpack.c.l.b16 %v2413
      %v2933 = vunpack.c.l.b16 %v2414
      %v2934 = vunpack.c.l.b16 %v2415
      %v2935 = vunpack.c.l.b16 %v2416
      %v2936 = vunpack.c.l.b16 %v2417
      %v2937 = vunpack.c.l.b16 %v2418
      %v2938 = vunpack.c.l.b16 %v2419
      %v2939 = vunpack.c.l.b16 %v2420
      %v2940 = vunpack.c.l.b16 %v2421
      %v2941 = vunpack.c.l.b16 %v2422
      %v2942 = vunpack.c.l.b16 %v2423
      %v2943 = vunpack.c.l.b16 %v2424
      %v2944 = vunpack.c.l.b16 %v2425
      %v2945 = vunpack.c.l.b16 %v2426
      %v2946 = vunpack.c.l.b16 %v2427
      %v2947 = vunpack.c.l.b16 %v2428
      %v2948 = vunpack.c.l.b16 %v2429
      %v2949 = vunpack.c.l.b16 %v2430
      %v2950 = vunpack.c.l.b16 %v2431
      %v2951 = vunpack.c.l.b16 %v2432
      %v2952 = vunpack.c.l.b16 %v2433
      %v2953 = vunpack.c.l.b16 %v2434
      %v2954 = vunpack.c.l.b16 %v2435
      %v2955 = vunpack.c.l.b16 %v2436
      %v2956 = vunpack.c.l.b16 %v2437
      %v2957 = vunpack.c.l.b16 %v2438
      %v2958 = vunpack.c.l.b16 %v2439
      %v2959 = vunpack.c.l.b16 %v2440
      %v2960 = vunpack.c.l.b16 %v2441
      %v2961 = vunpack.c.l.b16 %v2442
      %v2962 = vunpack.c.l.b16 %v2443
      %v2963 = vunpack.c.l.b16 %v2444
      %v2964 = vunpack.c.l.b16 %v2445
      %v2965 = vunpack.c.l.b16 %v2446
      %v2966 = vunpack.c.l.b16 %v2447
      %v2967 = vunpack.c.l.b16 %v2448
      %v2968 = vunpack.c.l.b16 %v2449
      %v2969 = vunpack.c.l.b16 %v2450
      %v2970 = vunpack.c.l.b16 %v2451
      %v2971 = vunpack.c.l.b16 %v2452
      %v2972 = vunpack.c.l.b16 %v2453
      %v2973 = vunpack.c.l.b16 %v2454
      %v2974 = vunpack.c.l.b16 %v2455
      %v2975 = vunpack.c.l.b16 %v2456
      %v2976 = vunpack.c.l.b16 %v2457
      %v2977 = vunpack.c.l.b16 %v2458
      %v2978 = vunpack.c.l.b16 %v2459
      %v2979 = vunpack.c.l.b16 %v2460
      %v2980 = vunpack.c.l.b16 %v2461
      %v2981 = vunpack.c.l.b16 %v2462
      %v2982 = vunpack.c.l.b16 %v2463
      %v2983 = vunpack.c.l.b16 %v2464
      %v2984 = vunpack.c.l.b16 %v2465
      %v2985 = vunpack.c.l.b16 %v2466
      %v2986 = vunpack.c.l.b16 %v2467
      %v2987 = vunpack.c.l.b16 %v2468
      %v2988 = vunpack.c.l.b16 %v2469
      %v2989 = vunpack.c.l.b16 %v2470
      %v2990 = vunpack.c.l.b16 %v2471
      %v2991 = vunpack.c.l.b16 %v2472
      %v2992 = vunpack.c.l.b16 %v2473
      %v2993 = vunpack.c.l.b16 %v2474
      %v2994 = vunpack.c.l.b16 %v2475
      %v2995 = vunpack.c.l.b16 %v2476
      %v2996 = vunpack.c.l.b16 %v2477
      %v2997 = vunpack.c.l.b16 %v2478
      %v2998 = vunpack.c.l.b16 %v2479
      %v2999 = vunpack.c.l.b16 %v2480
      %v3000 = vunpack.c.l.b16 %v2481
      %v3001 = vunpack.c.l.b16 %v2482
      %v3002 = vunpack.c.l.b16 %v2483
      %v3003 = vunpack.c.l.b16 %v2484
      %v3004 = vunpack.c.l.b16 %v2485
      %v3005 = vunpack.c.l.b16 %v2486
      %v3006 = vunpack.c.l.b16 %v2487
      %v3007 = vunpack.c.l.b16 %v2488
      %v3008 = vunpack.c.l.b16 %v2489
      %v3009 = vunpack.c.l.b16 %v2490
      %v3010 = vunpack.c.l.b16 %v2491
      %v3011 = vunpack.c.l.b16 %v2492
      %v3012 = vunpack.c.l.b16 %v2493
      %v3013 = vunpack.c.l.b16 %v2494
      %v3014 = vunpack.c.l.b16 %v2495
      %v3015 = vunpack.c.l.b16 %v2496
      %v3016 = vunpack.c.l.b16 %v2497
      %v3017 = vunpack.c.l.b16 %v2498
      %v3018 = vunpack.c.l.b16 %v2499
      %v3019 = vunpack.c.l.b16 %v2500
      %v3020 = vunpack.c.l.b16 %v2501
      %v3021 = vunpack.c.l.b16 %v2502
      %v3022 = vunpack.c.l.b16 %v2503
      %v3023 = vunpack.c.l.b16 %v2504
      %v3024 = vunpack.c.l.b16 %v2505
      %v3025 = vunpack.c.l.b16 %v2506
      %v3026 = vunpack.c.l.b16 %v2507
      %v3027 = vunpack.c.l.b16 %v2508
      %v3028 = vunpack.c.l.b16 %v2509
      %v3029 = vunpack.c.l.b16 %v2510
      %v3030 = vunpack.c.l.b16 %v2511
      %v3031 = vunpack.c.l.b16 %v2512
      %v3032 = vunpack.c.l.b16 %v2513
      %v3033 = vunpack.c.l.b16 %v2514
      %v3034 = vunpack.c.l.b16 %v2515
      %v3035 = vunpack.c.l.b16 %v2516
      %v3036 = vunpack.c.l.b16 %v2517
      %v3037 = vunpack.c.l.b16 %v2518
      %v3038 = vunpack.c.l.b16 %v2519
      %v3039 = vunpack.c.l.b16 %v2520
      %v3040 = vunpack.c.l.b16 %v2521
      %v3041 = vunpack.c.l.b16 %v2522
      %v3042 = vunpack.c.l.b16 %v2523
      %v3043 = vunpack.c.l.b16 %v2524
      %v3044 = vunpack.c.l.b16 %v2525
      %v3045 = vunpack.c.l.b16 %v2526
      %v3046 = vunpack.c.l.b16 %v2527
      %v3047 = vunpack.c.l.b16 %v2528
      %v3048 = vunpack.c.l.b16 %v2529
      %v3049 = vunpack.c.l.b16 %v2530
      %v3050 = vunpack.c.l.b16 %v2531
      %v3051 = vunpack.c.l.b16 %v2532
      %v3052 = vunpack.c.l.b16 %v2533
      %v3053 = vunpack.c.l.b16 %v2534
      %v3054 = vunpack.c.l.b16 %v2535
      %v3055 = vunpack.c.l.b16 %v2536
      %v3056 = vunpack.c.l.b16 %v2537
      %v3057 = vunpack.c.l.b16 %v2538
      %v3058 = vunpack.c.l.b16 %v2539
      %v3059 = vunpack.c.l.b16 %v2540
      %v3060 = vunpack.c.l.b16 %v2541
      %v3061 = vunpack.c.l.b16 %v2542
      %v3062 = vunpack.c.l.b16 %v2543
      %v3063 = vunpack.c.l.b16 %v2544
      %v3064 = vunpack.c.l.b16 %v2545
      %v3065 = vunpack.c.l.b16 %v2546
      %v3066 = vunpack.c.l.b16 %v2547
      %v3067 = vunpack.c.l.b16 %v2548
      %v3068 = vunpack.c.l.b16 %v2549
      %v3069 = vunpack.c.l.b16 %v2550
      %v3070 = vunpack.c.l.b16 %v2551
      %v3071 = vunpack.c.l.b16 %v2552
      %v3072 = vunpack.c.l.b16 %v2553
      %v3073 = vunpack.c.l.b16 %v2554
      %v3074 = vunpack.c.l.b16 %v2555
      %v3075 = vunpack.c.l.b16 %v2556
      %v3076 = vunpack.c.l.b16 %v2557
      %v3077 = vunpack.c.l.b16 %v2558
      %v3078 = vunpack.c.l.b16 %v2559
      %v3079 = vunpack.c.l.b16 %v2560
      %v3080 = vunpack.c.l.b16 %v2561
      %v3081 = vunpack.c.l.b16 %v2562
      %v3082 = vunpack.c.l.b16 %v2563
      %v3083 = vunpack.c.l.b16 %v2564
      %v3084 = vunpack.c.l.b16 %v2565
      %v3085 = vunpack.c.l.b16 %v2566
      %v3086 = vunpack.c.l.b16 %v2567
      %v3087 = vunpack.c.l.b16 %v2568
      %v3088 = vunpack.c.l.b16 %v2569
      %v3089 = vunpack.c.l.b16 %v2570
      %v3090 = vunpack.c.l.b16 %v2571
      %v3091 = vunpack.c.l.b16 %v2572
      %v3092 = vunpack.c.l.b16 %v2573
      %v3093 = vunpack.c.l.b16 %v2574
      %v3094 = vunpack.c.l.b16 %v2575
      %v3095 = vunpack.c.l.b16 %v2576
      %v3096 = vunpack.c.l.b16 %v2577
      %v3097 = vunpack.c.l.b16 %v2578
      %v3098 = vpack.c.b16 %v2843, %v2842
      %v3099 = vpack.c.b16 %v2845, %v2844
      %v3100 = vpack.c.b16 %v2847, %v2846
      %v3101 = vpack.c.b16 %v2849, %v2848
      %v3102 = vpack.c.b16 %v2851, %v2850
      %v3103 = vpack.c.b16 %v2853, %v2852
      %v3104 = vpack.c.b16 %v2855, %v2854
      %v3105 = vpack.c.b16 %v2857, %v2856
      %v3106 = vpack.c.b16 %v2859, %v2858
      %v3107 = vpack.c.b16 %v2861, %v2860
      %v3108 = vpack.c.b16 %v2863, %v2862
      %v3109 = vpack.c.b16 %v2865, %v2864
      %v3110 = vpack.c.b16 %v2867, %v2866
      %v3111 = vpack.c.b16 %v2869, %v2868
      %v3112 = vpack.c.b16 %v2871, %v2870
      %v3113 = vpack.c.b16 %v2873, %v2872
      %v3114 = vpack.c.b16 %v2875, %v2874
      %v3115 = vpack.c.b16 %v2877, %v2876
      %v3116 = vpack.c.b16 %v2879, %v2878
      %v3117 = vpack.c.b16 %v2881, %v2880
      %v3118 = vpack.c.b16 %v2883, %v2882
      %v3119 = vpack.c.b16 %v2885, %v2884
      %v3120 = vpack.c.b16 %v2887, %v2886
      %v3121 = vpack.c.b16 %v2889, %v2888
      %v3122 = vpack.c.b16 %v2891, %v2890
      %v3123 = vpack.c.b16 %v2893, %v2892
      %v3124 = vpack.c.b16 %v2895, %v2894
      %v3125 = vpack.c.b16 %v2897, %v2896
      %v3126 = vpack.c.b16 %v2899, %v2898
      %v3127 = vpack.c.b16 %v2901, %v2900
      %v3128 = vpack.c.b16 %v2903, %v2902
      %v3129 = vpack.c.b16 %v2905, %v2904
      %v3130 = vpack.c.b16 %v2907, %v2906
      %v3131 = vpack.c.b16 %v2909, %v2908
      %v3132 = vpack.c.b16 %v2911, %v2910
      %v3133 = vpack.c.b16 %v2913, %v2912
      %v3134 = vpack.c.b16 %v2915, %v2914
      %v3135 = vpack.c.b16 %v2917, %v2916
      %v3136 = vpack.c.b16 %v2919, %v2918
      %v3137 = vpack.c.b16 %v2921, %v2920
      %v3138 = vpack.c.b16 %v2923, %v2922
      %v3139 = vpack.c.b16 %v2925, %v2924
      %v3140 = vpack.c.b16 %v2927, %v2926
      %v3141 = vpack.c.b16 %v2929, %v2928
      %v3142 = vpack.c.b16 %v2931, %v2930
      %v3143 = vpack.c.b16 %v2933, %v2932
      %v3144 = vpack.c.b16 %v2935, %v2934
      %v3145 = vpack.c.b16 %v2937, %v2936
      %v3146 = vpack.c.b16 %v2939, %v2938
      %v3147 = vpack.c.b16 %v2941, %v2940
      %v3148 = vpack.c.b16 %v2943, %v2942
      %v3149 = vpack.c.b16 %v2945, %v2944
      %v3150 = vpack.c.b16 %v2947, %v2946
      %v3151 = vpack.c.b16 %v2949, %v2948
      %v3152 = vpack.c.b16 %v2951, %v2950
      %v3153 = vpack.c.b16 %v2953, %v2952
      %v3154 = vpack.c.b16 %v2955, %v2954
      %v3155 = vpack.c.b16 %v2957, %v2956
      %v3156 = vpack.c.b16 %v2959, %v2958
      %v3157 = vpack.c.b16 %v2961, %v2960
      %v3158 = vpack.c.b16 %v2963, %v2962
      %v3159 = vpack.c.b16 %v2965, %v2964
      %v3160 = vpack.c.b16 %v2967, %v2966
      %v3161 = vpack.c.b16 %v2969, %v2968
      %v3162 = vpack.c.b16 %v2971, %v2970
      %v3163 = vpack.c.b16 %v2973, %v2972
      %v3164 = vpack.c.b16 %v2975, %v2974
      %v3165 = vpack.c.b16 %v2977, %v2976
      %v3166 = vpack.c.b16 %v2979, %v2978
      %v3167 = vpack.c.b16 %v2981, %v2980
      %v3168 = vpack.c.b16 %v2983, %v2982
      %v3169 = vpack.c.b16 %v2985, %v2984
      %v3170 = vpack.c.b16 %v2987, %v2986
      %v3171 = vpack.c.b16 %v2989, %v2988
      %v3172 = vpack.c.b16 %v2991, %v2990
      %v3173 = vpack.c.b16 %v2993, %v2992
      %v3174 = vpack.c.b16 %v2995, %v2994
      %v3175 = vpack.c.b16 %v2997, %v2996
      %v3176 = vpack.c.b16 %v2999, %v2998
      %v3177 = vpack.c.b16 %v3001, %v3000
      %v3178 = vpack.c.b16 %v3003, %v3002
      %v3179 = vpack.c.b16 %v3005, %v3004
      %v3180 = vpack.c.b16 %v3007, %v3006
      %v3181 = vpack.c.b16 %v3009, %v3008
      %v3182 = vpack.c.b16 %v3011, %v3010
      %v3183 = vpack.c.b16 %v3013, %v3012
      %v3184 = vpack.c.b16 %v3015, %v3014
      %v3185 = vpack.c.b16 %v3017, %v3016
      %v3186 = vpack.c.b16 %v3019, %v3018
      %v3187 = vpack.c.b16 %v3021, %v3020
      %v3188 = vpack.c.b16 %v3023, %v3022
      %v3189 = vpack.c.b16 %v3025, %v3024
      %v3190 = vpack.c.b16 %v3027, %v3026
      %v3191 = vpack.c.b16 %v3029, %v3028
      %v3192 = vpack.c.b16 %v3031, %v3030
      %v3193 = vpack.c.b16 %v3033, %v3032
      %v3194 = vpack.c.b16 %v3035, %v3034
      %v3195 = vpack.c.b16 %v3037, %v3036
      %v3196 = vpack.c.b16 %v3039, %v3038
      %v3197 = vpack.c.b16 %v3041, %v3040
      %v3198 = vpack.c.b16 %v3043, %v3042
      %v3199 = vpack.c.b16 %v3045, %v3044
      %v3200 = vpack.c.b16 %v3047, %v3046
      %v3201 = vpack.c.b16 %v3049, %v3048
      %v3202 = vpack.c.b16 %v3051, %v3050
      %v3203 = vpack.c.b16 %v3053, %v3052
      %v3204 = vpack.c.b16 %v3055, %v3054
      %v3205 = vpack.c.b16 %v3057, %v3056
      %v3206 = vpack.c.b16 %v3059, %v3058
      %v3207 = vpack.c.b16 %v3061, %v3060
      %v3208 = vpack.c.b16 %v3063, %v3062
      %v3209 = vpack.c.b16 %v3065, %v3064
      %v3210 = vpack.c.b16 %v3067, %v3066
      %v3211 = vpack.c.b16 %v3069, %v3068
      %v3212 = vpack.c.b16 %v3071, %v3070
      %v3213 = vpack.c.b16 %v3073, %v3072
      %v3214 = vpack.c.b16 %v3075, %v3074
      %v3215 = vpack.c.b16 %v3077, %v3076
      %v3216 = vpack.c.b16 %v3079, %v3078
      %v3217 = vpack.c.b16 %v3081, %v3080
      %v3218 = vpack.c.b16 %v3083, %v3082
      %v3219 = vpack.c.b16 %v3085, %v3084
      %v3220 = vpack.c.b16 %v3087, %v3086
      %v3221 = vpack.c.b16 %v3089, %v3088
      %v3222 = vpack.c.b16 %v3091, %v3090
      %v3223 = vpack.c.b16 %v3093, %v3092
      %v3224 = vpack.c.b16 %v3095, %v3094
      %v3225 = vpack.c.b16 %v3097, %v3096
      %3354 = vmatprep.subr.bf16.mxu0 0
      %3355 = vmatpush1.bf16.msra.mxu0 %v3105
      %3356 = vmatprep.subr.bf16.mxu0 0
      %3357 = vmatpush1.bf16.msra.mxu0 %v3104
      %3358 = vmatprep.subr.bf16.mxu0 0
      %3359 = vmatpush1.bf16.msra.mxu0 %v3103
      %3360 = vmatprep.subr.bf16.mxu0 0
      %3361 = vmatpush1.bf16.msra.mxu0 %v3102
      %3362 = vmatprep.subr.bf16.mxu0 0
      %3363 = vmatpush1.bf16.msra.mxu0 %v3101
      %3364 = vmatprep.subr.bf16.mxu0 0
      %3365 = vmatpush1.bf16.msra.mxu0 %v3100
      %3366 = vmatprep.subr.bf16.mxu0 0
      %3367 = vmatpush1.bf16.msra.mxu0 %v3099
      %3368 = vmatprep.subr.bf16.mxu0 0
      %3369 = vmatpush1.bf16.msra.mxu0 %v3098
      %3370 = vmatprep.subr.bf16.mxu0 0
      %3371 = vmatpush2.bf16.msra.mxu0 %v3113
      %3372 = vmatprep.subr.bf16.mxu0 0
      %3373 = vmatpush2.bf16.msra.mxu0 %v3112
      %3374 = vmatprep.subr.bf16.mxu0 0
      %3375 = vmatpush2.bf16.msra.mxu0 %v3111
      %3376 = vmatprep.subr.bf16.mxu0 0
      %3377 = vmatpush2.bf16.msra.mxu0 %v3110
      %3378 = vmatprep.subr.bf16.mxu0 0
      %3379 = vmatpush2.bf16.msra.mxu0 %v3109
      %3380 = vmatprep.subr.bf16.mxu0 0
      %3381 = vmatpush2.bf16.msra.mxu0 %v3108
      %3382 = vmatprep.subr.bf16.mxu0 0
      %3383 = vmatpush2.bf16.msra.mxu0 %v3107
      %3384 = vmatprep.subr.bf16.mxu0 0
      %3385 = vmatpush2.bf16.msra.mxu0 %v3106
      %3386 = vmatprep.mubr.bf16.mxu0 %v2308
      %3387 = vmatmul.mubr.bf16.gmra.mxu0 %v2307
      %v3388 = vpop.f32.mrf.mxu0
      %v3389 = vadd.f32 %v2584, %v3388
      %v3390 = vpop.f32.mrf.mxu0
      %v3391 = vpop.f32.mrf.mxu0
      %v3392 = vpop.f32.mrf.mxu0
      %3393 = vdwg.mxu0
      %3394 = vmatprep.subr.bf16.mxu0 0
      %3395 = vmatpush1.bf16.msra.mxu0 %v3121
      %3396 = vmatprep.subr.bf16.mxu0 0
      %3397 = vmatpush1.bf16.msra.mxu0 %v3120
      %3398 = vmatprep.subr.bf16.mxu0 0
      %3399 = vmatpush1.bf16.msra.mxu0 %v3119
      %3400 = vmatprep.subr.bf16.mxu0 0
      %3401 = vmatpush1.bf16.msra.mxu0 %v3118
      %3402 = vmatprep.subr.bf16.mxu0 0
      %3403 = vmatpush1.bf16.msra.mxu0 %v3117
      %3404 = vmatprep.subr.bf16.mxu0 0
      %3405 = vmatpush1.bf16.msra.mxu0 %v3116
      %3406 = vmatprep.subr.bf16.mxu0 0
      %3407 = vmatpush1.bf16.msra.mxu0 %v3115
      %3408 = vmatprep.subr.bf16.mxu0 0
      %3409 = vmatpush1.bf16.msra.mxu0 %v3114
      %3410 = vmatprep.subr.bf16.mxu0 0
      %3411 = vmatpush2.bf16.msra.mxu0 %v3129
      %3412 = vmatprep.subr.bf16.mxu0 0
      %3413 = vmatpush2.bf16.msra.mxu0 %v3128
      %3414 = vmatprep.subr.bf16.mxu0 0
      %3415 = vmatpush2.bf16.msra.mxu0 %v3127
      %3416 = vmatprep.subr.bf16.mxu0 0
      %3417 = vmatpush2.bf16.msra.mxu0 %v3126
      %3418 = vmatprep.subr.bf16.mxu0 0
      %3419 = vmatpush2.bf16.msra.mxu0 %v3125
      %3420 = vmatprep.subr.bf16.mxu0 0
      %3421 = vmatpush2.bf16.msra.mxu0 %v3124
      %3422 = vmatprep.subr.bf16.mxu0 0
      %3423 = vmatpush2.bf16.msra.mxu0 %v3123
      %3424 = vmatprep.subr.bf16.mxu0 0
      %3425 = vmatpush2.bf16.msra.mxu0 %v3122
      %3426 = vmatprep.mubr.bf16.mxu0 %v2310
      %3427 = vmatmul.mubr.bf16.gmra.mxu0 %v2309
      %v3428 = vpop.f32.mrf.mxu0
      %v3429 = vadd.f32 %v3389, %v3428
      %v3430 = vpop.f32.mrf.mxu0
      %v3431 = vpop.f32.mrf.mxu0
      %v3432 = vpop.f32.mrf.mxu0
      %3433 = vdwg.mxu0
      %3434 = vmatprep.subr.bf16.mxu0 0
      %3435 = vmatpush1.bf16.msra.mxu0 %v3137
      %3436 = vmatprep.subr.bf16.mxu0 0
      %3437 = vmatpush1.bf16.msra.mxu0 %v3136
      %3438 = vmatprep.subr.bf16.mxu0 0
      %3439 = vmatpush1.bf16.msra.mxu0 %v3135
      %3440 = vmatprep.subr.bf16.mxu0 0
      %3441 = vmatpush1.bf16.msra.mxu0 %v3134
      %3442 = vmatprep.subr.bf16.mxu0 0
      %3443 = vmatpush1.bf16.msra.mxu0 %v3133
      %3444 = vmatprep.subr.bf16.mxu0 0
      %3445 = vmatpush1.bf16.msra.mxu0 %v3132
      %3446 = vmatprep.subr.bf16.mxu0 0
      %3447 = vmatpush1.bf16.msra.mxu0 %v3131
      %3448 = vmatprep.subr.bf16.mxu0 0
      %3449 = vmatpush1.bf16.msra.mxu0 %v3130
      %3450 = vmatprep.subr.bf16.mxu0 0
      %3451 = vmatpush2.bf16.msra.mxu0 %v3145
      %3452 = vmatprep.subr.bf16.mxu0 0
      %3453 = vmatpush2.bf16.msra.mxu0 %v3144
      %3454 = vmatprep.subr.bf16.mxu0 0
      %3455 = vmatpush2.bf16.msra.mxu0 %v3143
      %3456 = vmatprep.subr.bf16.mxu0 0
      %3457 = vmatpush2.bf16.msra.mxu0 %v3142
      %3458 = vmatprep.subr.bf16.mxu0 0
      %3459 = vmatpush2.bf16.msra.mxu0 %v3141
      %3460 = vmatprep.subr.bf16.mxu0 0
      %3461 = vmatpush2.bf16.msra.mxu0 %v3140
      %3462 = vmatprep.subr.bf16.mxu0 0
      %3463 = vmatpush2.bf16.msra.mxu0 %v3139
      %3464 = vmatprep.subr.bf16.mxu0 0
      %3465 = vmatpush2.bf16.msra.mxu0 %v3138
      %3466 = vmatprep.mubr.bf16.mxu0 %v2312
      %3467 = vmatmul.mubr.bf16.gmra.mxu0 %v2311
      %v3468 = vpop.f32.mrf.mxu0
      %v3469 = vadd.f32 %v3429, %v3468
      %v3470 = vpop.f32.mrf.mxu0
      %v3471 = vpop.f32.mrf.mxu0
      %v3472 = vpop.f32.mrf.mxu0
      %3473 = vdwg.mxu0
      %3474 = vmatprep.subr.bf16.mxu0 0
      %3475 = vmatpush1.bf16.msra.mxu0 %v3153
      %3476 = vmatprep.subr.bf16.mxu0 0
      %3477 = vmatpush1.bf16.msra.mxu0 %v3152
      %3478 = vmatprep.subr.bf16.mxu0 0
      %3479 = vmatpush1.bf16.msra.mxu0 %v3151
      %3480 = vmatprep.subr.bf16.mxu0 0
      %3481 = vmatpush1.bf16.msra.mxu0 %v3150
      %3482 = vmatprep.subr.bf16.mxu0 0
      %3483 = vmatpush1.bf16.msra.mxu0 %v3149
      %3484 = vmatprep.subr.bf16.mxu0 0
      %3485 = vmatpush1.bf16.msra.mxu0 %v3148
      %3486 = vmatprep.subr.bf16.mxu0 0
      %3487 = vmatpush1.bf16.msra.mxu0 %v3147
      %3488 = vmatprep.subr.bf16.mxu0 0
      %3489 = vmatpush1.bf16.msra.mxu0 %v3146
      %3490 = vmatprep.subr.bf16.mxu0 0
      %3491 = vmatpush2.bf16.msra.mxu0 %v3161
      %3492 = vmatprep.subr.bf16.mxu0 0
      %3493 = vmatpush2.bf16.msra.mxu0 %v3160
      %3494 = vmatprep.subr.bf16.mxu0 0
      %3495 = vmatpush2.bf16.msra.mxu0 %v3159
      %3496 = vmatprep.subr.bf16.mxu0 0
      %3497 = vmatpush2.bf16.msra.mxu0 %v3158
      %3498 = vmatprep.subr.bf16.mxu0 0
      %3499 = vmatpush2.bf16.msra.mxu0 %v3157
      %3500 = vmatprep.subr.bf16.mxu0 0
      %3501 = vmatpush2.bf16.msra.mxu0 %v3156
      %3502 = vmatprep.subr.bf16.mxu0 0
      %3503 = vmatpush2.bf16.msra.mxu0 %v3155
      %3504 = vmatprep.subr.bf16.mxu0 0
      %3505 = vmatpush2.bf16.msra.mxu0 %v3154
      %3506 = vmatprep.mubr.bf16.mxu0 %v2314
      %3507 = vmatmul.mubr.bf16.gmra.mxu0 %v2313
      %v3508 = vpop.f32.mrf.mxu0
      %v3509 = vadd.f32 %v3469, %v3508
      %v3510 = vpop.f32.mrf.mxu0
      %v3511 = vpop.f32.mrf.mxu0
      %v3512 = vpop.f32.mrf.mxu0
      %3513 = vdwg.mxu0
      %3514 = vmatprep.subr.bf16.mxu0 0
      %3515 = vmatpush1.bf16.msra.mxu0 %v3169
      %3516 = vmatprep.subr.bf16.mxu0 0
      %3517 = vmatpush1.bf16.msra.mxu0 %v3168
      %3518 = vmatprep.subr.bf16.mxu0 0
      %3519 = vmatpush1.bf16.msra.mxu0 %v3167
      %3520 = vmatprep.subr.bf16.mxu0 0
      %3521 = vmatpush1.bf16.msra.mxu0 %v3166
      %3522 = vmatprep.subr.bf16.mxu0 0
      %3523 = vmatpush1.bf16.msra.mxu0 %v3165
      %3524 = vmatprep.subr.bf16.mxu0 0
      %3525 = vmatpush1.bf16.msra.mxu0 %v3164
      %3526 = vmatprep.subr.bf16.mxu0 0
      %3527 = vmatpush1.bf16.msra.mxu0 %v3163
      %3528 = vmatprep.subr.bf16.mxu0 0
      %3529 = vmatpush1.bf16.msra.mxu0 %v3162
      %3530 = vmatprep.subr.bf16.mxu0 0
      %3531 = vmatpush2.bf16.msra.mxu0 %v3177
      %3532 = vmatprep.subr.bf16.mxu0 0
      %3533 = vmatpush2.bf16.msra.mxu0 %v3176
      %3534 = vmatprep.subr.bf16.mxu0 0
      %3535 = vmatpush2.bf16.msra.mxu0 %v3175
      %3536 = vmatprep.subr.bf16.mxu0 0
      %3537 = vmatpush2.bf16.msra.mxu0 %v3174
      %3538 = vmatprep.subr.bf16.mxu0 0
      %3539 = vmatpush2.bf16.msra.mxu0 %v3173
      %3540 = vmatprep.subr.bf16.mxu0 0
      %3541 = vmatpush2.bf16.msra.mxu0 %v3172
      %3542 = vmatprep.subr.bf16.mxu0 0
      %3543 = vmatpush2.bf16.msra.mxu0 %v3171
      %3544 = vmatprep.subr.bf16.mxu0 0
      %3545 = vmatpush2.bf16.msra.mxu0 %v3170
      %3546 = vmatprep.mubr.bf16.mxu0 %v2316
      %3547 = vmatmul.mubr.bf16.gmra.mxu0 %v2315
      %v3548 = vpop.f32.mrf.mxu0
      %v3549 = vadd.f32 %v3509, %v3548
      %v3550 = vpop.f32.mrf.mxu0
      %v3551 = vpop.f32.mrf.mxu0
      %v3552 = vpop.f32.mrf.mxu0
      %3553 = vdwg.mxu0
      %3554 = vmatprep.subr.bf16.mxu0 0
      %3555 = vmatpush1.bf16.msra.mxu0 %v3185
      %3556 = vmatprep.subr.bf16.mxu0 0
      %3557 = vmatpush1.bf16.msra.mxu0 %v3184
      %3558 = vmatprep.subr.bf16.mxu0 0
      %3559 = vmatpush1.bf16.msra.mxu0 %v3183
      %3560 = vmatprep.subr.bf16.mxu0 0
      %3561 = vmatpush1.bf16.msra.mxu0 %v3182
      %3562 = vmatprep.subr.bf16.mxu0 0
      %3563 = vmatpush1.bf16.msra.mxu0 %v3181
      %3564 = vmatprep.subr.bf16.mxu0 0
      %3565 = vmatpush1.bf16.msra.mxu0 %v3180
      %3566 = vmatprep.subr.bf16.mxu0 0
      %3567 = vmatpush1.bf16.msra.mxu0 %v3179
      %3568 = vmatprep.subr.bf16.mxu0 0
      %3569 = vmatpush1.bf16.msra.mxu0 %v3178
      %3570 = vmatprep.subr.bf16.mxu0 0
      %3571 = vmatpush2.bf16.msra.mxu0 %v3193
      %3572 = vmatprep.subr.bf16.mxu0 0
      %3573 = vmatpush2.bf16.msra.mxu0 %v3192
      %3574 = vmatprep.subr.bf16.mxu0 0
      %3575 = vmatpush2.bf16.msra.mxu0 %v3191
      %3576 = vmatprep.subr.bf16.mxu0 0
      %3577 = vmatpush2.bf16.msra.mxu0 %v3190
      %3578 = vmatprep.subr.bf16.mxu0 0
      %3579 = vmatpush2.bf16.msra.mxu0 %v3189
      %3580 = vmatprep.subr.bf16.mxu0 0
      %3581 = vmatpush2.bf16.msra.mxu0 %v3188
      %3582 = vmatprep.subr.bf16.mxu0 0
      %3583 = vmatpush2.bf16.msra.mxu0 %v3187
      %3584 = vmatprep.subr.bf16.mxu0 0
      %3585 = vmatpush2.bf16.msra.mxu0 %v3186
      %3586 = vmatprep.mubr.bf16.mxu0 %v2318
      %3587 = vmatmul.mubr.bf16.gmra.mxu0 %v2317
      %v3588 = vpop.f32.mrf.mxu0
      %v3589 = vadd.f32 %v3549, %v3588
      %v3590 = vpop.f32.mrf.mxu0
      %v3591 = vpop.f32.mrf.mxu0
      %v3592 = vpop.f32.mrf.mxu0
      %3593 = vdwg.mxu0
      %3594 = vmatprep.subr.bf16.mxu0 0
      %3595 = vmatpush1.bf16.msra.mxu0 %v3201
      %3596 = vmatprep.subr.bf16.mxu0 0
      %3597 = vmatpush1.bf16.msra.mxu0 %v3200
      %3598 = vmatprep.subr.bf16.mxu0 0
      %3599 = vmatpush1.bf16.msra.mxu0 %v3199
      %3600 = vmatprep.subr.bf16.mxu0 0
      %3601 = vmatpush1.bf16.msra.mxu0 %v3198
      %3602 = vmatprep.subr.bf16.mxu0 0
      %3603 = vmatpush1.bf16.msra.mxu0 %v3197
      %3604 = vmatprep.subr.bf16.mxu0 0
      %3605 = vmatpush1.bf16.msra.mxu0 %v3196
      %3606 = vmatprep.subr.bf16.mxu0 0
      %3607 = vmatpush1.bf16.msra.mxu0 %v3195
      %3608 = vmatprep.subr.bf16.mxu0 0
      %3609 = vmatpush1.bf16.msra.mxu0 %v3194
      %3610 = vmatprep.subr.bf16.mxu0 0
      %3611 = vmatpush2.bf16.msra.mxu0 %v3209
      %3612 = vmatprep.subr.bf16.mxu0 0
      %3613 = vmatpush2.bf16.msra.mxu0 %v3208
      %3614 = vmatprep.subr.bf16.mxu0 0
      %3615 = vmatpush2.bf16.msra.mxu0 %v3207
      %3616 = vmatprep.subr.bf16.mxu0 0
      %3617 = vmatpush2.bf16.msra.mxu0 %v3206
      %3618 = vmatprep.subr.bf16.mxu0 0
      %3619 = vmatpush2.bf16.msra.mxu0 %v3205
      %3620 = vmatprep.subr.bf16.mxu0 0
      %3621 = vmatpush2.bf16.msra.mxu0 %v3204
      %3622 = vmatprep.subr.bf16.mxu0 0
      %3623 = vmatpush2.bf16.msra.mxu0 %v3203
      %3624 = vmatprep.subr.bf16.mxu0 0
      %3625 = vmatpush2.bf16.msra.mxu0 %v3202
      %3626 = vmatprep.mubr.bf16.mxu0 %v2320
      %3627 = vmatmul.mubr.bf16.gmra.mxu0 %v2319
      %v3628 = vpop.f32.mrf.mxu0
      %v3629 = vadd.f32 %v3589, %v3628
      %v3630 = vpop.f32.mrf.mxu0
      %v3631 = vpop.f32.mrf.mxu0
      %v3632 = vpop.f32.mrf.mxu0
      %3633 = vdwg.mxu0
      %3634 = vmatprep.subr.bf16.mxu0 0
      %3635 = vmatpush1.bf16.msra.mxu0 %v3217
      %3636 = vmatprep.subr.bf16.mxu0 0
      %3637 = vmatpush1.bf16.msra.mxu0 %v3216
      %3638 = vmatprep.subr.bf16.mxu0 0
      %3639 = vmatpush1.bf16.msra.mxu0 %v3215
      %3640 = vmatprep.subr.bf16.mxu0 0
      %3641 = vmatpush1.bf16.msra.mxu0 %v3214
      %3642 = vmatprep.subr.bf16.mxu0 0
      %3643 = vmatpush1.bf16.msra.mxu0 %v3213
      %3644 = vmatprep.subr.bf16.mxu0 0
      %3645 = vmatpush1.bf16.msra.mxu0 %v3212
      %3646 = vmatprep.subr.bf16.mxu0 0
      %3647 = vmatpush1.bf16.msra.mxu0 %v3211
      %3648 = vmatprep.subr.bf16.mxu0 0
      %3649 = vmatpush1.bf16.msra.mxu0 %v3210
      %3650 = vmatprep.subr.bf16.mxu0 0
      %3651 = vmatpush2.bf16.msra.mxu0 %v3225
      %3652 = vmatprep.subr.bf16.mxu0 0
      %3653 = vmatpush2.bf16.msra.mxu0 %v3224
      %3654 = vmatprep.subr.bf16.mxu0 0
      %3655 = vmatpush2.bf16.msra.mxu0 %v3223
      %3656 = vmatprep.subr.bf16.mxu0 0
      %3657 = vmatpush2.bf16.msra.mxu0 %v3222
      %3658 = vmatprep.subr.bf16.mxu0 0
      %3659 = vmatpush2.bf16.msra.mxu0 %v3221
      %3660 = vmatprep.subr.bf16.mxu0 0
      %3661 = vmatpush2.bf16.msra.mxu0 %v3220
      %3662 = vmatprep.subr.bf16.mxu0 0
      %3663 = vmatpush2.bf16.msra.mxu0 %v3219
      %3664 = vmatprep.subr.bf16.mxu0 0
      %3665 = vmatpush2.bf16.msra.mxu0 %v3218
      %3666 = vmatprep.mubr.bf16.mxu0 %v2322
      %3667 = vmatmul.mubr.bf16.gmra.mxu0 %v2321
      %v3668 = vpop.f32.mrf.mxu0
      %v3669 = vadd.f32 %v3629, %v3668
      %v3670 = vpop.f32.mrf.mxu0
      %v3671 = vpop.f32.mrf.mxu0
      %v3672 = vpop.f32.mrf.mxu0
      %3673 = vdwg.mxu0
      %v3674 = vadd.f32 %v1682, %v3669
      %v3675 = vsel %vm732, %v3674, 0.0
      %3676 = vadd.xlane.f32.xlu0 %v3675
      %v3677 = vpop.xlane.xlu0 %3676
      %v3678 = vmul.f32 %v3677, %v1617
      %v3679 = vsub.f32 %v3674, %v3678
      %v3680 = vmul.f32 %v3679, %v3679
      %v3681 = vsel %vm732, %v3680, 0.0
      %3682 = vadd.xlane.f32.xlu0 %v3681
      %v3683 = vpop.xlane.xlu0 %3682
      %v3684 = vmul.f32 %v3683, %v1617
      %v3685 = vadd.f32 %v3684, 1e-05
      %v3686 = vrsqrt.pop %v3685
      %v3687 = vmul.f32 %v3679, %v3686
      %s3688 = scalar_lea.vmem %s10, 2
      %v3689 = vld [vmem:[%s3688] sm:$0x1]
      %v3691 = vlaneseq
      %v3692 = vshrl.u32 %v3691, 7
      %v3693 = vsub.s32 0, %v3692
      %v3694 = vrot.slane %v3689, %v3693
      %v3696 = vmul.f32 %v3687, %v3694
      %s3697 = scalar_lea.vmem %s11, 2
      %v3698 = vld [vmem:[%s3697] sm:$0x1]
      %v3700 = vlaneseq
      %v3701 = vshrl.u32 %v3700, 7
      %v3702 = vsub.s32 0, %v3701
      %v3703 = vrot.slane %v3698, %v3702
      %v3705 = vadd.f32 %v3696, %v3703
      %v3706 = vpack.c.bf16 %v3705, %v3705
      %s3707 = scalar_lea.vmem %s5, 16
      %v3708 = vld [vmem:[%s3707] sm:$0xf]
      %v3709 = vld [vmem:[%s3707 + $0x4] sm:$0xf]
      %v3710 = vld [vmem:[%s3707 + $0x8] sm:$0xf]
      %v3711 = vld [vmem:[%s3707 + $0xc] sm:$0xf]
      %s3712 = scalar_lea.vmem %s6, 1
      %v3713 = vld [vmem:[%s3712] sm:$0x1]
      %v3715 = vlaneseq
      %v3716 = vshrl.u32 %v3715, 7
      %v3717 = vsub.s32 0, %v3716
      %v3718 = vrot.slane %v3713, %v3717
      %v3724 = vunpack.c.l.b16 %v3708
      %v3725 = vunpack.c.l.b16 %v3709
      %v3726 = vunpack.c.l.b16 %v3710
      %v3727 = vunpack.c.l.b16 %v3711
      %v3728 = vpack.c.b16 %v3725, %v3724
      %v3729 = vpack.c.b16 %v3727, %v3726
      %v3733 = vsel %vm732, %v3706, 0
      %3735 = vmatprep.subr.bf16.mxu0 0
      %3736 = vmatpush1.bf16.msra.mxu0 0
      %3737 = vmatprep.subr.bf16.mxu0 0
      %3738 = vmatpush1.bf16.msra.mxu0 0
      %3739 = vmatprep.subr.bf16.mxu0 0
      %3740 = vmatpush1.bf16.msra.mxu0 0
      %3741 = vmatprep.subr.bf16.mxu0 0
      %3742 = vmatpush1.bf16.msra.mxu0 0
      %3743 = vmatprep.subr.bf16.mxu0 0
      %3744 = vmatpush1.bf16.msra.mxu0 0
      %3745 = vmatprep.subr.bf16.mxu0 0
      %3746 = vmatpush1.bf16.msra.mxu0 0
      %3747 = vmatprep.subr.bf16.mxu0 0
      %3748 = vmatpush1.bf16.msra.mxu0 %v3729
      %3749 = vmatprep.subr.bf16.mxu0 0
      %3750 = vmatpush1.bf16.msra.mxu0 %v3728
      %3751 = vmatprep.subr.bf16.mxu0 0
      %3752 = vmatpush2.bf16.msra.mxu0 0
      %3753 = vmatprep.subr.bf16.mxu0 0
      %3754 = vmatpush2.bf16.msra.mxu0 0
      %3755 = vmatprep.subr.bf16.mxu0 0
      %3756 = vmatpush2.bf16.msra.mxu0 0
      %3757 = vmatprep.subr.bf16.mxu0 0
      %3758 = vmatpush2.bf16.msra.mxu0 0
      %3759 = vmatprep.subr.bf16.mxu0 0
      %3760 = vmatpush2.bf16.msra.mxu0 0
      %3761 = vmatprep.subr.bf16.mxu0 0
      %3762 = vmatpush2.bf16.msra.mxu0 0
      %3763 = vmatprep.subr.bf16.mxu0 0
      %3764 = vmatpush2.bf16.msra.mxu0 0
      %3765 = vmatprep.subr.bf16.mxu0 0
      %3766 = vmatpush2.bf16.msra.mxu0 0
      %3767 = vmatprep.mubr.bf16.mxu0 0
      %3768 = vmatmul.mubr.bf16.gmra.mxu0 %v3733
      %v3769 = vpop.f32.mrf.mxu0
      %v3770 = vadd.f32 %v3718, %v3769
      %v3771 = vpop.f32.mrf.mxu0
      %v3772 = vpop.f32.mrf.mxu0
      %v3773 = vpop.f32.mrf.mxu0
      %3774 = vdwg.mxu0
      %s3775 = scalar_lea.vmem %s7, 16
      %v3776 = vld [vmem:[%s3775] sm:$0xf]
      %v3777 = vld [vmem:[%s3775 + $0x4] sm:$0xf]
      %v3778 = vld [vmem:[%s3775 + $0x8] sm:$0xf]
      %v3779 = vld [vmem:[%s3775 + $0xc] sm:$0xf]
      %v3780 = vpack.c.bf16 %v3770, %v3770
      %3782 = vrot.lane.b32.xlu0 %v3780, 96
      %v3783 = vpop.permute.xlu0 %3782
      %v3785 = vsel %vm977, %v3780, 0
      %v3788 = vsel %vm977, %v3783, 0
      %3790 = vmatprep.subr.bf16.mxu0 0
      %3791 = vmatpush1.bf16.xpose.msra.mxu0 0
      %3792 = vmatprep.subr.bf16.mxu0 0
      %3793 = vmatpush1.bf16.xpose.msra.mxu0 0
      %3794 = vmatprep.subr.bf16.mxu0 0
      %3795 = vmatpush1.bf16.xpose.msra.mxu0 0
      %3796 = vmatprep.subr.bf16.mxu0 0
      %3797 = vmatpush1.bf16.xpose.msra.mxu0 0
      %3798 = vmatprep.subr.bf16.mxu0 0
      %3799 = vmatpush1.bf16.xpose.msra.mxu0 0
      %3800 = vmatprep.subr.bf16.mxu0 0
      %3801 = vmatpush1.bf16.xpose.msra.mxu0 0
      %3802 = vmatprep.subr.bf16.mxu0 0
      %3803 = vmatpush1.bf16.xpose.msra.mxu0 0
      %3804 = vmatprep.subr.bf16.mxu0 0
      %3805 = vmatpush1.bf16.xpose.msra.mxu0 %v3788
      %3806 = vmatprep.subr.bf16.mxu0 0
      %3807 = vmatpush2.bf16.xpose.msra.mxu0 0
      %3808 = vmatprep.subr.bf16.mxu0 0
      %3809 = vmatpush2.bf16.xpose.msra.mxu0 0
      %3810 = vmatprep.subr.bf16.mxu0 0
      %3811 = vmatpush2.bf16.xpose.msra.mxu0 0
      %3812 = vmatprep.subr.bf16.mxu0 0
      %3813 = vmatpush2.bf16.xpose.msra.mxu0 0
      %3814 = vmatprep.subr.bf16.mxu0 0
      %3815 = vmatpush2.bf16.xpose.msra.mxu0 0
      %3816 = vmatprep.subr.bf16.mxu0 0
      %3817 = vmatpush2.bf16.xpose.msra.mxu0 0
      %3818 = vmatprep.subr.bf16.mxu0 0
      %3819 = vmatpush2.bf16.xpose.msra.mxu0 0
      %3820 = vmatprep.subr.bf16.mxu0 0
      %3821 = vmatpush2.bf16.xpose.msra.mxu0 0
      %3822 = vmatprep.mubr.bf16.mxu0 0
      %3823 = vmatmul.mubr.bf16.gmra.mxu0 %v3785
      %v3824 = vpop.f32.mrf.mxu0
      %v3825 = vadd.f32 0.0, %v3824
      %v3826 = vpop.f32.mrf.mxu0
      %v3827 = vpop.f32.mrf.mxu0
      %v3828 = vpop.f32.mrf.mxu0
      %3829 = vdwg.mxu0
      %v3830 = vsel %vm977, %v3825, -inf
      %3831 = vmax.xlane.f32.xlu0 %v3830
      %v3832 = vpop.xlane.xlu0 %3831
      %v3833 = vsub.f32 %v3825, %v3832
      %v3834 = vmul.f32 %v3833, 1.442695
      %v3835 = vpow.pop %v3834
      %v3836 = vsel %vm977, %v3835, 0.0
      %3837 = vadd.xlane.f32.xlu0 %v3836
      %v3838 = vpop.xlane.xlu0 %3837
      %v3839 = vrcp.pop %v3838
      %v3840 = vmul.f32 %v3835, %v3839
      %v3841 = vpack.c.bf16 %v3840, %v3840
      %3842 = vrot.lane.b32.xlu0 %v3780, 64
      %v3843 = vpop.permute.xlu0 %3842
      %v3845 = vsel %vm977, %v3841, 0
      %v3848 = vsel %vm1041, %v3843, 0
      %3850 = vmatprep.subr.bf16.mxu0 0
      %3851 = vmatpush1.bf16.msra.mxu0 0
      %3852 = vmatprep.subr.bf16.mxu0 0
      %3853 = vmatpush1.bf16.msra.mxu0 0
      %3854 = vmatprep.subr.bf16.mxu0 0
      %3855 = vmatpush1.bf16.msra.mxu0 0
      %3856 = vmatprep.subr.bf16.mxu0 0
      %3857 = vmatpush1.bf16.msra.mxu0 0
      %3858 = vmatprep.subr.bf16.mxu0 0
      %3859 = vmatpush1.bf16.msra.mxu0 0
      %3860 = vmatprep.subr.bf16.mxu0 0
      %3861 = vmatpush1.bf16.msra.mxu0 0
      %3862 = vmatprep.subr.bf16.mxu0 0
      %3863 = vmatpush1.bf16.msra.mxu0 0
      %3864 = vmatprep.subr.bf16.mxu0 0
      %3865 = vmatpush1.bf16.msra.mxu0 %v3848
      %3866 = vmatprep.subr.bf16.mxu0 0
      %3867 = vmatpush2.bf16.msra.mxu0 0
      %3868 = vmatprep.subr.bf16.mxu0 0
      %3869 = vmatpush2.bf16.msra.mxu0 0
      %3870 = vmatprep.subr.bf16.mxu0 0
      %3871 = vmatpush2.bf16.msra.mxu0 0
      %3872 = vmatprep.subr.bf16.mxu0 0
      %3873 = vmatpush2.bf16.msra.mxu0 0
      %3874 = vmatprep.subr.bf16.mxu0 0
      %3875 = vmatpush2.bf16.msra.mxu0 0
      %3876 = vmatprep.subr.bf16.mxu0 0
      %3877 = vmatpush2.bf16.msra.mxu0 0
      %3878 = vmatprep.subr.bf16.mxu0 0
      %3879 = vmatpush2.bf16.msra.mxu0 0
      %3880 = vmatprep.subr.bf16.mxu0 0
      %3881 = vmatpush2.bf16.msra.mxu0 0
      %3882 = vmatprep.mubr.bf16.mxu0 0
      %3883 = vmatmul.mubr.bf16.gmra.mxu0 %v3845
      %v3884 = vpop.f32.mrf.mxu0
      %v3885 = vadd.f32 0.0, %v3884
      %v3886 = vpop.f32.mrf.mxu0
      %v3887 = vpop.f32.mrf.mxu0
      %v3888 = vpop.f32.mrf.mxu0
      %3889 = vdwg.mxu0
      %v3890 = vpack.c.bf16 %v3885, %v3885
      %3891 = vrot.lane.b32.xlu0 %v3780, 120
      %v3892 = vpop.permute.xlu0 %3891
      %3893 = vrot.lane.b32.xlu0 %v3780, 88
      %v3894 = vpop.permute.xlu0 %3893
      %v3896 = vsel %vm977, %v3892, 0
      %v3899 = vsel %vm977, %v3894, 0
      %3901 = vmatprep.subr.bf16.mxu0 0
      %3902 = vmatpush1.bf16.xpose.msra.mxu0 0
      %3903 = vmatprep.subr.bf16.mxu0 0
      %3904 = vmatpush1.bf16.xpose.msra.mxu0 0
      %3905 = vmatprep.subr.bf16.mxu0 0
      %3906 = vmatpush1.bf16.xpose.msra.mxu0 0
      %3907 = vmatprep.subr.bf16.mxu0 0
      %3908 = vmatpush1.bf16.xpose.msra.mxu0 0
      %3909 = vmatprep.subr.bf16.mxu0 0
      %3910 = vmatpush1.bf16.xpose.msra.mxu0 0
      %3911 = vmatprep.subr.bf16.mxu0 0
      %3912 = vmatpush1.bf16.xpose.msra.mxu0 0
      %3913 = vmatprep.subr.bf16.mxu0 0
      %3914 = vmatpush1.bf16.xpose.msra.mxu0 0
      %3915 = vmatprep.subr.bf16.mxu0 0
      %3916 = vmatpush1.bf16.xpose.msra.mxu0 %v3899
      %3917 = vmatprep.subr.bf16.mxu0 0
      %3918 = vmatpush2.bf16.xpose.msra.mxu0 0
      %3919 = vmatprep.subr.bf16.mxu0 0
      %3920 = vmatpush2.bf16.xpose.msra.mxu0 0
      %3921 = vmatprep.subr.bf16.mxu0 0
      %3922 = vmatpush2.bf16.xpose.msra.mxu0 0
      %3923 = vmatprep.subr.bf16.mxu0 0
      %3924 = vmatpush2.bf16.xpose.msra.mxu0 0
      %3925 = vmatprep.subr.bf16.mxu0 0
      %3926 = vmatpush2.bf16.xpose.msra.mxu0 0
      %3927 = vmatprep.subr.bf16.mxu0 0
      %3928 = vmatpush2.bf16.xpose.msra.mxu0 0
      %3929 = vmatprep.subr.bf16.mxu0 0
      %3930 = vmatpush2.bf16.xpose.msra.mxu0 0
      %3931 = vmatprep.subr.bf16.mxu0 0
      %3932 = vmatpush2.bf16.xpose.msra.mxu0 0
      %3933 = vmatprep.mubr.bf16.mxu0 0
      %3934 = vmatmul.mubr.bf16.gmra.mxu0 %v3896
      %v3935 = vpop.f32.mrf.mxu0
      %v3936 = vadd.f32 0.0, %v3935
      %v3937 = vpop.f32.mrf.mxu0
      %v3938 = vpop.f32.mrf.mxu0
      %v3939 = vpop.f32.mrf.mxu0
      %3940 = vdwg.mxu0
      %v3941 = vsel %vm977, %v3936, -inf
      %3942 = vmax.xlane.f32.xlu0 %v3941
      %v3943 = vpop.xlane.xlu0 %3942
      %v3944 = vsub.f32 %v3936, %v3943
      %v3945 = vmul.f32 %v3944, 1.442695
      %v3946 = vpow.pop %v3945
      %v3947 = vsel %vm977, %v3946, 0.0
      %3948 = vadd.xlane.f32.xlu0 %v3947
      %v3949 = vpop.xlane.xlu0 %3948
      %v3950 = vrcp.pop %v3949
      %v3951 = vmul.f32 %v3946, %v3950
      %v3952 = vpack.c.bf16 %v3951, %v3951
      %3953 = vrot.lane.b32.xlu0 %v3780, 56
      %v3954 = vpop.permute.xlu0 %3953
      %v3956 = vsel %vm977, %v3952, 0
      %v3959 = vsel %vm1041, %v3954, 0
      %3961 = vmatprep.subr.bf16.mxu0 0
      %3962 = vmatpush1.bf16.msra.mxu0 0
      %3963 = vmatprep.subr.bf16.mxu0 0
      %3964 = vmatpush1.bf16.msra.mxu0 0
      %3965 = vmatprep.subr.bf16.mxu0 0
      %3966 = vmatpush1.bf16.msra.mxu0 0
      %3967 = vmatprep.subr.bf16.mxu0 0
      %3968 = vmatpush1.bf16.msra.mxu0 0
      %3969 = vmatprep.subr.bf16.mxu0 0
      %3970 = vmatpush1.bf16.msra.mxu0 0
      %3971 = vmatprep.subr.bf16.mxu0 0
      %3972 = vmatpush1.bf16.msra.mxu0 0
      %3973 = vmatprep.subr.bf16.mxu0 0
      %3974 = vmatpush1.bf16.msra.mxu0 0
      %3975 = vmatprep.subr.bf16.mxu0 0
      %3976 = vmatpush1.bf16.msra.mxu0 %v3959
      %3977 = vmatprep.subr.bf16.mxu0 0
      %3978 = vmatpush2.bf16.msra.mxu0 0
      %3979 = vmatprep.subr.bf16.mxu0 0
      %3980 = vmatpush2.bf16.msra.mxu0 0
      %3981 = vmatprep.subr.bf16.mxu0 0
      %3982 = vmatpush2.bf16.msra.mxu0 0
      %3983 = vmatprep.subr.bf16.mxu0 0
      %3984 = vmatpush2.bf16.msra.mxu0 0
      %3985 = vmatprep.subr.bf16.mxu0 0
      %3986 = vmatpush2.bf16.msra.mxu0 0
      %3987 = vmatprep.subr.bf16.mxu0 0
      %3988 = vmatpush2.bf16.msra.mxu0 0
      %3989 = vmatprep.subr.bf16.mxu0 0
      %3990 = vmatpush2.bf16.msra.mxu0 0
      %3991 = vmatprep.subr.bf16.mxu0 0
      %3992 = vmatpush2.bf16.msra.mxu0 0
      %3993 = vmatprep.mubr.bf16.mxu0 0
      %3994 = vmatmul.mubr.bf16.gmra.mxu0 %v3956
      %v3995 = vpop.f32.mrf.mxu0
      %v3996 = vadd.f32 0.0, %v3995
      %v3997 = vpop.f32.mrf.mxu0
      %v3998 = vpop.f32.mrf.mxu0
      %v3999 = vpop.f32.mrf.mxu0
      %4000 = vdwg.mxu0
      %v4001 = vpack.c.bf16 %v3996, %v3996
      %v4003 = vsel %vm977, %v4001, 0
      %v4006 = vsel %vm1041, %v3777, 0
      %4008 = vmatprep.subr.bf16.mxu0 0
      %4009 = vmatpush1.bf16.msra.mxu0 0
      %4010 = vmatprep.subr.bf16.mxu0 0
      %4011 = vmatpush1.bf16.msra.mxu0 0
      %4012 = vmatprep.subr.bf16.mxu0 0
      %4013 = vmatpush1.bf16.msra.mxu0 0
      %4014 = vmatprep.subr.bf16.mxu0 0
      %4015 = vmatpush1.bf16.msra.mxu0 0
      %4016 = vmatprep.subr.bf16.mxu0 0
      %4017 = vmatpush1.bf16.msra.mxu0 0
      %4018 = vmatprep.subr.bf16.mxu0 0
      %4019 = vmatpush1.bf16.msra.mxu0 0
      %4020 = vmatprep.subr.bf16.mxu0 0
      %4021 = vmatpush1.bf16.msra.mxu0 0
      %4022 = vmatprep.subr.bf16.mxu0 0
      %4023 = vmatpush1.bf16.msra.mxu0 %v4006
      %4024 = vmatprep.subr.bf16.mxu0 0
      %4025 = vmatpush2.bf16.msra.mxu0 0
      %4026 = vmatprep.subr.bf16.mxu0 0
      %4027 = vmatpush2.bf16.msra.mxu0 0
      %4028 = vmatprep.subr.bf16.mxu0 0
      %4029 = vmatpush2.bf16.msra.mxu0 0
      %4030 = vmatprep.subr.bf16.mxu0 0
      %4031 = vmatpush2.bf16.msra.mxu0 0
      %4032 = vmatprep.subr.bf16.mxu0 0
      %4033 = vmatpush2.bf16.msra.mxu0 0
      %4034 = vmatprep.subr.bf16.mxu0 0
      %4035 = vmatpush2.bf16.msra.mxu0 0
      %4036 = vmatprep.subr.bf16.mxu0 0
      %4037 = vmatpush2.bf16.msra.mxu0 0
      %4038 = vmatprep.subr.bf16.mxu0 0
      %4039 = vmatpush2.bf16.msra.mxu0 0
      %4040 = vmatprep.mubr.bf16.mxu0 0
      %4041 = vmatmul.mubr.bf16.gmra.mxu0 %v4003
      %v4042 = vpop.f32.mrf.mxu0
      %v4043 = vadd.f32 0.0, %v4042
      %v4044 = vpop.f32.mrf.mxu0
      %v4045 = vpop.f32.mrf.mxu0
      %v4046 = vpop.f32.mrf.mxu0
      %4047 = vdwg.mxu0
      %v4049 = vsel %vm977, %v3890, 0
      %v4052 = vsel %vm1041, %v3776, 0
      %4054 = vmatprep.subr.bf16.mxu0 0
      %4055 = vmatpush1.bf16.msra.mxu0 0
      %4056 = vmatprep.subr.bf16.mxu0 0
      %4057 = vmatpush1.bf16.msra.mxu0 0
      %4058 = vmatprep.subr.bf16.mxu0 0
      %4059 = vmatpush1.bf16.msra.mxu0 0
      %4060 = vmatprep.subr.bf16.mxu0 0
      %4061 = vmatpush1.bf16.msra.mxu0 0
      %4062 = vmatprep.subr.bf16.mxu0 0
      %4063 = vmatpush1.bf16.msra.mxu0 0
      %4064 = vmatprep.subr.bf16.mxu0 0
      %4065 = vmatpush1.bf16.msra.mxu0 0
      %4066 = vmatprep.subr.bf16.mxu0 0
      %4067 = vmatpush1.bf16.msra.mxu0 0
      %4068 = vmatprep.subr.bf16.mxu0 0
      %4069 = vmatpush1.bf16.msra.mxu0 %v4052
      %4070 = vmatprep.subr.bf16.mxu0 0
      %4071 = vmatpush2.bf16.msra.mxu0 0
      %4072 = vmatprep.subr.bf16.mxu0 0
      %4073 = vmatpush2.bf16.msra.mxu0 0
      %4074 = vmatprep.subr.bf16.mxu0 0
      %4075 = vmatpush2.bf16.msra.mxu0 0
      %4076 = vmatprep.subr.bf16.mxu0 0
      %4077 = vmatpush2.bf16.msra.mxu0 0
      %4078 = vmatprep.subr.bf16.mxu0 0
      %4079 = vmatpush2.bf16.msra.mxu0 0
      %4080 = vmatprep.subr.bf16.mxu0 0
      %4081 = vmatpush2.bf16.msra.mxu0 0
      %4082 = vmatprep.subr.bf16.mxu0 0
      %4083 = vmatpush2.bf16.msra.mxu0 0
      %4084 = vmatprep.subr.bf16.mxu0 0
      %4085 = vmatpush2.bf16.msra.mxu0 0
      %4086 = vmatprep.mubr.bf16.mxu0 0
      %4087 = vmatmul.mubr.bf16.gmra.mxu0 %v4049
      %v4088 = vpop.f32.mrf.mxu0
      %v4089 = vadd.f32 %v4043, %v4088
      %v4090 = vpop.f32.mrf.mxu0
      %v4091 = vpop.f32.mrf.mxu0
      %v4092 = vpop.f32.mrf.mxu0
      %4093 = vdwg.mxu0
      %4094 = vrot.lane.b32.xlu0 %v3780, 112
      %v4095 = vpop.permute.xlu0 %4094
      %4096 = vrot.lane.b32.xlu0 %v3780, 80
      %v4097 = vpop.permute.xlu0 %4096
      %v4099 = vsel %vm977, %v4095, 0
      %v4102 = vsel %vm977, %v4097, 0
      %4104 = vmatprep.subr.bf16.mxu0 0
      %4105 = vmatpush1.bf16.xpose.msra.mxu0 0
      %4106 = vmatprep.subr.bf16.mxu0 0
      %4107 = vmatpush1.bf16.xpose.msra.mxu0 0
      %4108 = vmatprep.subr.bf16.mxu0 0
      %4109 = vmatpush1.bf16.xpose.msra.mxu0 0
      %4110 = vmatprep.subr.bf16.mxu0 0
      %4111 = vmatpush1.bf16.xpose.msra.mxu0 0
      %4112 = vmatprep.subr.bf16.mxu0 0
      %4113 = vmatpush1.bf16.xpose.msra.mxu0 0
      %4114 = vmatprep.subr.bf16.mxu0 0
      %4115 = vmatpush1.bf16.xpose.msra.mxu0 0
      %4116 = vmatprep.subr.bf16.mxu0 0
      %4117 = vmatpush1.bf16.xpose.msra.mxu0 0
      %4118 = vmatprep.subr.bf16.mxu0 0
      %4119 = vmatpush1.bf16.xpose.msra.mxu0 %v4102
      %4120 = vmatprep.subr.bf16.mxu0 0
      %4121 = vmatpush2.bf16.xpose.msra.mxu0 0
      %4122 = vmatprep.subr.bf16.mxu0 0
      %4123 = vmatpush2.bf16.xpose.msra.mxu0 0
      %4124 = vmatprep.subr.bf16.mxu0 0
      %4125 = vmatpush2.bf16.xpose.msra.mxu0 0
      %4126 = vmatprep.subr.bf16.mxu0 0
      %4127 = vmatpush2.bf16.xpose.msra.mxu0 0
      %4128 = vmatprep.subr.bf16.mxu0 0
      %4129 = vmatpush2.bf16.xpose.msra.mxu0 0
      %4130 = vmatprep.subr.bf16.mxu0 0
      %4131 = vmatpush2.bf16.xpose.msra.mxu0 0
      %4132 = vmatprep.subr.bf16.mxu0 0
      %4133 = vmatpush2.bf16.xpose.msra.mxu0 0
      %4134 = vmatprep.subr.bf16.mxu0 0
      %4135 = vmatpush2.bf16.xpose.msra.mxu0 0
      %4136 = vmatprep.mubr.bf16.mxu0 0
      %4137 = vmatmul.mubr.bf16.gmra.mxu0 %v4099
      %v4138 = vpop.f32.mrf.mxu0
      %v4139 = vadd.f32 0.0, %v4138
      %v4140 = vpop.f32.mrf.mxu0
      %v4141 = vpop.f32.mrf.mxu0
      %v4142 = vpop.f32.mrf.mxu0
      %4143 = vdwg.mxu0
      %v4144 = vsel %vm977, %v4139, -inf
      %4145 = vmax.xlane.f32.xlu0 %v4144
      %v4146 = vpop.xlane.xlu0 %4145
      %v4147 = vsub.f32 %v4139, %v4146
      %v4148 = vmul.f32 %v4147, 1.442695
      %v4149 = vpow.pop %v4148
      %v4150 = vsel %vm977, %v4149, 0.0
      %4151 = vadd.xlane.f32.xlu0 %v4150
      %v4152 = vpop.xlane.xlu0 %4151
      %v4153 = vrcp.pop %v4152
      %v4154 = vmul.f32 %v4149, %v4153
      %v4155 = vpack.c.bf16 %v4154, %v4154
      %4156 = vrot.lane.b32.xlu0 %v3780, 48
      %v4157 = vpop.permute.xlu0 %4156
      %v4159 = vsel %vm977, %v4155, 0
      %v4162 = vsel %vm1041, %v4157, 0
      %4164 = vmatprep.subr.bf16.mxu0 0
      %4165 = vmatpush1.bf16.msra.mxu0 0
      %4166 = vmatprep.subr.bf16.mxu0 0
      %4167 = vmatpush1.bf16.msra.mxu0 0
      %4168 = vmatprep.subr.bf16.mxu0 0
      %4169 = vmatpush1.bf16.msra.mxu0 0
      %4170 = vmatprep.subr.bf16.mxu0 0
      %4171 = vmatpush1.bf16.msra.mxu0 0
      %4172 = vmatprep.subr.bf16.mxu0 0
      %4173 = vmatpush1.bf16.msra.mxu0 0
      %4174 = vmatprep.subr.bf16.mxu0 0
      %4175 = vmatpush1.bf16.msra.mxu0 0
      %4176 = vmatprep.subr.bf16.mxu0 0
      %4177 = vmatpush1.bf16.msra.mxu0 0
      %4178 = vmatprep.subr.bf16.mxu0 0
      %4179 = vmatpush1.bf16.msra.mxu0 %v4162
      %4180 = vmatprep.subr.bf16.mxu0 0
      %4181 = vmatpush2.bf16.msra.mxu0 0
      %4182 = vmatprep.subr.bf16.mxu0 0
      %4183 = vmatpush2.bf16.msra.mxu0 0
      %4184 = vmatprep.subr.bf16.mxu0 0
      %4185 = vmatpush2.bf16.msra.mxu0 0
      %4186 = vmatprep.subr.bf16.mxu0 0
      %4187 = vmatpush2.bf16.msra.mxu0 0
      %4188 = vmatprep.subr.bf16.mxu0 0
      %4189 = vmatpush2.bf16.msra.mxu0 0
      %4190 = vmatprep.subr.bf16.mxu0 0
      %4191 = vmatpush2.bf16.msra.mxu0 0
      %4192 = vmatprep.subr.bf16.mxu0 0
      %4193 = vmatpush2.bf16.msra.mxu0 0
      %4194 = vmatprep.subr.bf16.mxu0 0
      %4195 = vmatpush2.bf16.msra.mxu0 0
      %4196 = vmatprep.mubr.bf16.mxu0 0
      %4197 = vmatmul.mubr.bf16.gmra.mxu0 %v4159
      %v4198 = vpop.f32.mrf.mxu0
      %v4199 = vadd.f32 0.0, %v4198
      %v4200 = vpop.f32.mrf.mxu0
      %v4201 = vpop.f32.mrf.mxu0
      %v4202 = vpop.f32.mrf.mxu0
      %4203 = vdwg.mxu0
      %v4204 = vpack.c.bf16 %v4199, %v4199
      %v4206 = vsel %vm977, %v4204, 0
      %v4209 = vsel %vm1041, %v3778, 0
      %4211 = vmatprep.subr.bf16.mxu0 0
      %4212 = vmatpush1.bf16.msra.mxu0 0
      %4213 = vmatprep.subr.bf16.mxu0 0
      %4214 = vmatpush1.bf16.msra.mxu0 0
      %4215 = vmatprep.subr.bf16.mxu0 0
      %4216 = vmatpush1.bf16.msra.mxu0 0
      %4217 = vmatprep.subr.bf16.mxu0 0
      %4218 = vmatpush1.bf16.msra.mxu0 0
      %4219 = vmatprep.subr.bf16.mxu0 0
      %4220 = vmatpush1.bf16.msra.mxu0 0
      %4221 = vmatprep.subr.bf16.mxu0 0
      %4222 = vmatpush1.bf16.msra.mxu0 0
      %4223 = vmatprep.subr.bf16.mxu0 0
      %4224 = vmatpush1.bf16.msra.mxu0 0
      %4225 = vmatprep.subr.bf16.mxu0 0
      %4226 = vmatpush1.bf16.msra.mxu0 %v4209
      %4227 = vmatprep.subr.bf16.mxu0 0
      %4228 = vmatpush2.bf16.msra.mxu0 0
      %4229 = vmatprep.subr.bf16.mxu0 0
      %4230 = vmatpush2.bf16.msra.mxu0 0
      %4231 = vmatprep.subr.bf16.mxu0 0
      %4232 = vmatpush2.bf16.msra.mxu0 0
      %4233 = vmatprep.subr.bf16.mxu0 0
      %4234 = vmatpush2.bf16.msra.mxu0 0
      %4235 = vmatprep.subr.bf16.mxu0 0
      %4236 = vmatpush2.bf16.msra.mxu0 0
      %4237 = vmatprep.subr.bf16.mxu0 0
      %4238 = vmatpush2.bf16.msra.mxu0 0
      %4239 = vmatprep.subr.bf16.mxu0 0
      %4240 = vmatpush2.bf16.msra.mxu0 0
      %4241 = vmatprep.subr.bf16.mxu0 0
      %4242 = vmatpush2.bf16.msra.mxu0 0
      %4243 = vmatprep.mubr.bf16.mxu0 0
      %4244 = vmatmul.mubr.bf16.gmra.mxu0 %v4206
      %v4245 = vpop.f32.mrf.mxu0
      %v4246 = vadd.f32 0.0, %v4245
      %v4247 = vpop.f32.mrf.mxu0
      %v4248 = vpop.f32.mrf.mxu0
      %v4249 = vpop.f32.mrf.mxu0
      %4250 = vdwg.mxu0
      %v4251 = vadd.f32 %v4089, %v4246
      %4252 = vrot.lane.b32.xlu0 %v3780, 104
      %v4253 = vpop.permute.xlu0 %4252
      %4254 = vrot.lane.b32.xlu0 %v3780, 72
      %v4255 = vpop.permute.xlu0 %4254
      %v4257 = vsel %vm977, %v4253, 0
      %v4260 = vsel %vm977, %v4255, 0
      %4262 = vmatprep.subr.bf16.mxu0 0
      %4263 = vmatpush1.bf16.xpose.msra.mxu0 0
      %4264 = vmatprep.subr.bf16.mxu0 0
      %4265 = vmatpush1.bf16.xpose.msra.mxu0 0
      %4266 = vmatprep.subr.bf16.mxu0 0
      %4267 = vmatpush1.bf16.xpose.msra.mxu0 0
      %4268 = vmatprep.subr.bf16.mxu0 0
      %4269 = vmatpush1.bf16.xpose.msra.mxu0 0
      %4270 = vmatprep.subr.bf16.mxu0 0
      %4271 = vmatpush1.bf16.xpose.msra.mxu0 0
      %4272 = vmatprep.subr.bf16.mxu0 0
      %4273 = vmatpush1.bf16.xpose.msra.mxu0 0
      %4274 = vmatprep.subr.bf16.mxu0 0
      %4275 = vmatpush1.bf16.xpose.msra.mxu0 0
      %4276 = vmatprep.subr.bf16.mxu0 0
      %4277 = vmatpush1.bf16.xpose.msra.mxu0 %v4260
      %4278 = vmatprep.subr.bf16.mxu0 0
      %4279 = vmatpush2.bf16.xpose.msra.mxu0 0
      %4280 = vmatprep.subr.bf16.mxu0 0
      %4281 = vmatpush2.bf16.xpose.msra.mxu0 0
      %4282 = vmatprep.subr.bf16.mxu0 0
      %4283 = vmatpush2.bf16.xpose.msra.mxu0 0
      %4284 = vmatprep.subr.bf16.mxu0 0
      %4285 = vmatpush2.bf16.xpose.msra.mxu0 0
      %4286 = vmatprep.subr.bf16.mxu0 0
      %4287 = vmatpush2.bf16.xpose.msra.mxu0 0
      %4288 = vmatprep.subr.bf16.mxu0 0
      %4289 = vmatpush2.bf16.xpose.msra.mxu0 0
      %4290 = vmatprep.subr.bf16.mxu0 0
      %4291 = vmatpush2.bf16.xpose.msra.mxu0 0
      %4292 = vmatprep.subr.bf16.mxu0 0
      %4293 = vmatpush2.bf16.xpose.msra.mxu0 0
      %4294 = vmatprep.mubr.bf16.mxu0 0
      %4295 = vmatmul.mubr.bf16.gmra.mxu0 %v4257
      %v4296 = vpop.f32.mrf.mxu0
      %v4297 = vadd.f32 0.0, %v4296
      %v4298 = vpop.f32.mrf.mxu0
      %v4299 = vpop.f32.mrf.mxu0
      %v4300 = vpop.f32.mrf.mxu0
      %4301 = vdwg.mxu0
      %v4302 = vsel %vm977, %v4297, -inf
      %4303 = vmax.xlane.f32.xlu0 %v4302
      %v4304 = vpop.xlane.xlu0 %4303
      %v4305 = vsub.f32 %v4297, %v4304
      %v4306 = vmul.f32 %v4305, 1.442695
      %v4307 = vpow.pop %v4306
      %v4308 = vsel %vm977, %v4307, 0.0
      %4309 = vadd.xlane.f32.xlu0 %v4308
      %v4310 = vpop.xlane.xlu0 %4309
      %v4311 = vrcp.pop %v4310
      %v4312 = vmul.f32 %v4307, %v4311
      %v4313 = vpack.c.bf16 %v4312, %v4312
      %4314 = vrot.lane.b32.xlu0 %v3780, 40
      %v4315 = vpop.permute.xlu0 %4314
      %v4317 = vsel %vm977, %v4313, 0
      %v4320 = vsel %vm1041, %v4315, 0
      %4322 = vmatprep.subr.bf16.mxu0 0
      %4323 = vmatpush1.bf16.msra.mxu0 0
      %4324 = vmatprep.subr.bf16.mxu0 0
      %4325 = vmatpush1.bf16.msra.mxu0 0
      %4326 = vmatprep.subr.bf16.mxu0 0
      %4327 = vmatpush1.bf16.msra.mxu0 0
      %4328 = vmatprep.subr.bf16.mxu0 0
      %4329 = vmatpush1.bf16.msra.mxu0 0
      %4330 = vmatprep.subr.bf16.mxu0 0
      %4331 = vmatpush1.bf16.msra.mxu0 0
      %4332 = vmatprep.subr.bf16.mxu0 0
      %4333 = vmatpush1.bf16.msra.mxu0 0
      %4334 = vmatprep.subr.bf16.mxu0 0
      %4335 = vmatpush1.bf16.msra.mxu0 0
      %4336 = vmatprep.subr.bf16.mxu0 0
      %4337 = vmatpush1.bf16.msra.mxu0 %v4320
      %4338 = vmatprep.subr.bf16.mxu0 0
      %4339 = vmatpush2.bf16.msra.mxu0 0
      %4340 = vmatprep.subr.bf16.mxu0 0
      %4341 = vmatpush2.bf16.msra.mxu0 0
      %4342 = vmatprep.subr.bf16.mxu0 0
      %4343 = vmatpush2.bf16.msra.mxu0 0
      %4344 = vmatprep.subr.bf16.mxu0 0
      %4345 = vmatpush2.bf16.msra.mxu0 0
      %4346 = vmatprep.subr.bf16.mxu0 0
      %4347 = vmatpush2.bf16.msra.mxu0 0
      %4348 = vmatprep.subr.bf16.mxu0 0
      %4349 = vmatpush2.bf16.msra.mxu0 0
      %4350 = vmatprep.subr.bf16.mxu0 0
      %4351 = vmatpush2.bf16.msra.mxu0 0
      %4352 = vmatprep.subr.bf16.mxu0 0
      %4353 = vmatpush2.bf16.msra.mxu0 0
      %4354 = vmatprep.mubr.bf16.mxu0 0
      %4355 = vmatmul.mubr.bf16.gmra.mxu0 %v4317
      %v4356 = vpop.f32.mrf.mxu0
      %v4357 = vadd.f32 0.0, %v4356
      %v4358 = vpop.f32.mrf.mxu0
      %v4359 = vpop.f32.mrf.mxu0
      %v4360 = vpop.f32.mrf.mxu0
      %4361 = vdwg.mxu0
      %v4362 = vpack.c.bf16 %v4357, %v4357
      %v4364 = vsel %vm977, %v4362, 0
      %v4367 = vsel %vm1041, %v3779, 0
      %4369 = vmatprep.subr.bf16.mxu0 0
      %4370 = vmatpush1.bf16.msra.mxu0 0
      %4371 = vmatprep.subr.bf16.mxu0 0
      %4372 = vmatpush1.bf16.msra.mxu0 0
      %4373 = vmatprep.subr.bf16.mxu0 0
      %4374 = vmatpush1.bf16.msra.mxu0 0
      %4375 = vmatprep.subr.bf16.mxu0 0
      %4376 = vmatpush1.bf16.msra.mxu0 0
      %4377 = vmatprep.subr.bf16.mxu0 0
      %4378 = vmatpush1.bf16.msra.mxu0 0
      %4379 = vmatprep.subr.bf16.mxu0 0
      %4380 = vmatpush1.bf16.msra.mxu0 0
      %4381 = vmatprep.subr.bf16.mxu0 0
      %4382 = vmatpush1.bf16.msra.mxu0 0
      %4383 = vmatprep.subr.bf16.mxu0 0
      %4384 = vmatpush1.bf16.msra.mxu0 %v4367
      %4385 = vmatprep.subr.bf16.mxu0 0
      %4386 = vmatpush2.bf16.msra.mxu0 0
      %4387 = vmatprep.subr.bf16.mxu0 0
      %4388 = vmatpush2.bf16.msra.mxu0 0
      %4389 = vmatprep.subr.bf16.mxu0 0
      %4390 = vmatpush2.bf16.msra.mxu0 0
      %4391 = vmatprep.subr.bf16.mxu0 0
      %4392 = vmatpush2.bf16.msra.mxu0 0
      %4393 = vmatprep.subr.bf16.mxu0 0
      %4394 = vmatpush2.bf16.msra.mxu0 0
      %4395 = vmatprep.subr.bf16.mxu0 0
      %4396 = vmatpush2.bf16.msra.mxu0 0
      %4397 = vmatprep.subr.bf16.mxu0 0
      %4398 = vmatpush2.bf16.msra.mxu0 0
      %4399 = vmatprep.subr.bf16.mxu0 0
      %4400 = vmatpush2.bf16.msra.mxu0 0
      %4401 = vmatprep.mubr.bf16.mxu0 0
      %4402 = vmatmul.mubr.bf16.gmra.mxu0 %v4364
      %v4403 = vpop.f32.mrf.mxu0
      %v4404 = vadd.f32 0.0, %v4403
      %v4405 = vpop.f32.mrf.mxu0
      %v4406 = vpop.f32.mrf.mxu0
      %v4407 = vpop.f32.mrf.mxu0
      %4408 = vdwg.mxu0
      %v4409 = vadd.f32 %v4251, %v4404
      %s4410 = scalar_lea.vmem %s8, 1
      %v4411 = vld [vmem:[%s4410] sm:$0x1]
      %v4413 = vlaneseq
      %v4414 = vshrl.u32 %v4413, 7
      %v4415 = vsub.s32 0, %v4414
      %v4416 = vrot.slane %v4411, %v4415
      %v4418 = vadd.f32 %v4409, %v4416
      %v4419 = vadd.f32 %v3705, %v4418
      %v4420 = vsel %vm732, %v4419, 0.0
      %4421 = vadd.xlane.f32.xlu0 %v4420
      %v4422 = vpop.xlane.xlu0 %4421
      %v4423 = vmul.f32 %v4422, %v1617
      %v4424 = vsub.f32 %v4419, %v4423
      %v4425 = vmul.f32 %v4424, %v4424
      %v4426 = vsel %vm732, %v4425, 0.0
      %4427 = vadd.xlane.f32.xlu0 %v4426
      %v4428 = vpop.xlane.xlu0 %4427
      %v4429 = vmul.f32 %v4428, %v1617
      %v4430 = vadd.f32 %v4429, 1e-05
      %v4431 = vrsqrt.pop %v4430
      %v4432 = vmul.f32 %v4424, %v4431
      %s4433 = scalar_lea.vmem %s10, 3
      %v4434 = vld [vmem:[%s4433] sm:$0x1]
      %v4436 = vlaneseq
      %v4437 = vshrl.u32 %v4436, 7
      %v4438 = vsub.s32 0, %v4437
      %v4439 = vrot.slane %v4434, %v4438
      %v4441 = vmul.f32 %v4432, %v4439
      %s4442 = scalar_lea.vmem %s11, 3
      %v4443 = vld [vmem:[%s4442] sm:$0x1]
      %v4445 = vlaneseq
      %v4446 = vshrl.u32 %v4445, 7
      %v4447 = vsub.s32 0, %v4446
      %v4448 = vrot.slane %v4443, %v4447
      %v4450 = vadd.f32 %v4441, %v4448
      %s4451 = scalar_lea.vmem %s9, 1
      %v4452 = vld [vmem:[%s4451] sm:$0x1]
      %v4454 = vlaneseq
      %v4455 = vshrl.u32 %v4454, 7
      %v4456 = vsub.s32 0, %v4455
      %v4457 = vrot.slane %v4452, %v4456
      %v4459 = vadd.f32 %v4450, %v4457
      %v4460 = vsel %vm732, %v4459, 0.0
      %4461 = vadd.xlane.f32.xlu0 %v4460
      %v4462 = vpop.xlane.xlu0 %4461
      %v4463 = vmul.f32 %v4462, %v1617
      %v4464 = vsub.f32 %v4459, %v4463
      %v4465 = vmul.f32 %v4464, %v4464
      %v4466 = vsel %vm732, %v4465, 0.0
      %4467 = vadd.xlane.f32.xlu0 %v4466
      %v4468 = vpop.xlane.xlu0 %4467
      %v4469 = vmul.f32 %v4468, %v1617
      %v4470 = vadd.f32 %v4469, 1e-05
      %v4471 = vrsqrt.pop %v4470
      %v4472 = vmul.f32 %v4464, %v4471
      %s4473 = scalar_lea.vmem %s10, 4
      %v4474 = vld [vmem:[%s4473] sm:$0x1]
      %v4476 = vlaneseq
      %v4477 = vshrl.u32 %v4476, 7
      %v4478 = vsub.s32 0, %v4477
      %v4479 = vrot.slane %v4474, %v4478
      %v4481 = vmul.f32 %v4472, %v4479
      %s4482 = scalar_lea.vmem %s11, 4
      %v4483 = vld [vmem:[%s4482] sm:$0x1]
      %v4485 = vlaneseq
      %v4486 = vshrl.u32 %v4485, 7
      %v4487 = vsub.s32 0, %v4486
      %v4488 = vrot.slane %v4483, %v4487
      %v4490 = vadd.f32 %v4481, %v4488
      %v4491 = vpack.c.bf16 %v4490, %v4490
      %s4492 = scalar_lea.vmem %s12, 256
      %v4493 = vld [vmem:[%s4492] sm:$0xff]
      %v4494 = vld [vmem:[%s4492 + $0x8] sm:$0xff]
      %v4495 = vld [vmem:[%s4492 + $0x10] sm:$0xff]
      %v4496 = vld [vmem:[%s4492 + $0x18] sm:$0xff]
      %v4497 = vld [vmem:[%s4492 + $0x20] sm:$0xff]
      %v4498 = vld [vmem:[%s4492 + $0x28] sm:$0xff]
      %v4499 = vld [vmem:[%s4492 + $0x30] sm:$0xff]
      %v4500 = vld [vmem:[%s4492 + $0x38] sm:$0xff]
      %v4501 = vld [vmem:[%s4492 + $0x40] sm:$0xff]
      %v4502 = vld [vmem:[%s4492 + $0x48] sm:$0xff]
      %v4503 = vld [vmem:[%s4492 + $0x50] sm:$0xff]
      %v4504 = vld [vmem:[%s4492 + $0x58] sm:$0xff]
      %v4505 = vld [vmem:[%s4492 + $0x60] sm:$0xff]
      %v4506 = vld [vmem:[%s4492 + $0x68] sm:$0xff]
      %v4507 = vld [vmem:[%s4492 + $0x70] sm:$0xff]
      %v4508 = vld [vmem:[%s4492 + $0x78] sm:$0xff]
      %v4509 = vld [vmem:[%s4492 + $0x80] sm:$0xff]
      %v4510 = vld [vmem:[%s4492 + $0x88] sm:$0xff]
      %v4511 = vld [vmem:[%s4492 + $0x90] sm:$0xff]
      %v4512 = vld [vmem:[%s4492 + $0x98] sm:$0xff]
      %v4513 = vld [vmem:[%s4492 + $0xa0] sm:$0xff]
      %v4514 = vld [vmem:[%s4492 + $0xa8] sm:$0xff]
      %v4515 = vld [vmem:[%s4492 + $0xb0] sm:$0xff]
      %v4516 = vld [vmem:[%s4492 + $0xb8] sm:$0xff]
      %v4517 = vld [vmem:[%s4492 + $0xc0] sm:$0xff]
      %v4518 = vld [vmem:[%s4492 + $0xc8] sm:$0xff]
      %v4519 = vld [vmem:[%s4492 + $0xd0] sm:$0xff]
      %v4520 = vld [vmem:[%s4492 + $0xd8] sm:$0xff]
      %v4521 = vld [vmem:[%s4492 + $0xe0] sm:$0xff]
      %v4522 = vld [vmem:[%s4492 + $0xe8] sm:$0xff]
      %v4523 = vld [vmem:[%s4492 + $0xf0] sm:$0xff]
      %v4524 = vld [vmem:[%s4492 + $0xf8] sm:$0xff]
      %s4525 = scalar_lea.vmem %s13, 16
      %v4526 = vld [vmem:[%s4525] sm:$0xff]
      %v4527 = vld [vmem:[%s4525 + $0x8] sm:$0xff]
      %v4530 = vlaneseq
      %v4531 = vshrl.u32 %v4530, 7
      %v4532 = vsub.s32 0, %v4531
      %v4533 = vrot.slane %v4526, %v4532
      %v4534 = vlaneseq
      %v4535 = vshrl.u32 %v4534, 7
      %v4536 = vsub.s32 1, %v4535
      %v4537 = vrot.slane %v4526, %v4536
      %v4538 = vlaneseq
      %v4539 = vshrl.u32 %v4538, 7
      %v4540 = vsub.s32 2, %v4539
      %v4541 = vrot.slane %v4526, %v4540
      %v4542 = vlaneseq
      %v4543 = vshrl.u32 %v4542, 7
      %v4544 = vsub.s32 3, %v4543
      %v4545 = vrot.slane %v4526, %v4544
      %v4546 = vlaneseq
      %v4547 = vshrl.u32 %v4546, 7
      %v4548 = vsub.s32 4, %v4547
      %v4549 = vrot.slane %v4526, %v4548
      %v4550 = vlaneseq
      %v4551 = vshrl.u32 %v4550, 7
      %v4552 = vsub.s32 5, %v4551
      %v4553 = vrot.slane %v4526, %v4552
      %v4554 = vlaneseq
      %v4555 = vshrl.u32 %v4554, 7
      %v4556 = vsub.s32 6, %v4555
      %v4557 = vrot.slane %v4526, %v4556
      %v4558 = vlaneseq
      %v4559 = vshrl.u32 %v4558, 7
      %v4560 = vsub.s32 7, %v4559
      %v4561 = vrot.slane %v4526, %v4560
      %v4562 = vlaneseq
      %v4563 = vshrl.u32 %v4562, 7
      %v4564 = vsub.s32 0, %v4563
      %v4565 = vrot.slane %v4527, %v4564
      %v4566 = vlaneseq
      %v4567 = vshrl.u32 %v4566, 7
      %v4568 = vsub.s32 1, %v4567
      %v4569 = vrot.slane %v4527, %v4568
      %v4570 = vlaneseq
      %v4571 = vshrl.u32 %v4570, 7
      %v4572 = vsub.s32 2, %v4571
      %v4573 = vrot.slane %v4527, %v4572
      %v4574 = vlaneseq
      %v4575 = vshrl.u32 %v4574, 7
      %v4576 = vsub.s32 3, %v4575
      %v4577 = vrot.slane %v4527, %v4576
      %v4578 = vlaneseq
      %v4579 = vshrl.u32 %v4578, 7
      %v4580 = vsub.s32 4, %v4579
      %v4581 = vrot.slane %v4527, %v4580
      %v4582 = vlaneseq
      %v4583 = vshrl.u32 %v4582, 7
      %v4584 = vsub.s32 5, %v4583
      %v4585 = vrot.slane %v4527, %v4584
      %v4586 = vlaneseq
      %v4587 = vshrl.u32 %v4586, 7
      %v4588 = vsub.s32 6, %v4587
      %v4589 = vrot.slane %v4527, %v4588
      %v4590 = vlaneseq
      %v4591 = vshrl.u32 %v4590, 7
      %v4592 = vsub.s32 7, %v4591
      %v4593 = vrot.slane %v4527, %v4592
      %v4642 = vunpack.c.l.b16 %v4493
      %v4643 = vunpack.c.h.b16 %v4493
      %v4644 = vunpack.c.l.b16 %v4494
      %v4645 = vunpack.c.h.b16 %v4494
      %v4646 = vunpack.c.l.b16 %v4495
      %v4647 = vunpack.c.h.b16 %v4495
      %v4648 = vunpack.c.l.b16 %v4496
      %v4649 = vunpack.c.h.b16 %v4496
      %v4650 = vunpack.c.l.b16 %v4497
      %v4651 = vunpack.c.h.b16 %v4497
      %v4652 = vunpack.c.l.b16 %v4498
      %v4653 = vunpack.c.h.b16 %v4498
      %v4654 = vunpack.c.l.b16 %v4499
      %v4655 = vunpack.c.h.b16 %v4499
      %v4656 = vunpack.c.l.b16 %v4500
      %v4657 = vunpack.c.h.b16 %v4500
      %v4658 = vunpack.c.l.b16 %v4501
      %v4659 = vunpack.c.h.b16 %v4501
      %v4660 = vunpack.c.l.b16 %v4502
      %v4661 = vunpack.c.h.b16 %v4502
      %v4662 = vunpack.c.l.b16 %v4503
      %v4663 = vunpack.c.h.b16 %v4503
      %v4664 = vunpack.c.l.b16 %v4504
      %v4665 = vunpack.c.h.b16 %v4504
      %v4666 = vunpack.c.l.b16 %v4505
      %v4667 = vunpack.c.h.b16 %v4505
      %v4668 = vunpack.c.l.b16 %v4506
      %v4669 = vunpack.c.h.b16 %v4506
      %v4670 = vunpack.c.l.b16 %v4507
      %v4671 = vunpack.c.h.b16 %v4507
      %v4672 = vunpack.c.l.b16 %v4508
      %v4673 = vunpack.c.h.b16 %v4508
      %v4674 = vunpack.c.l.b16 %v4509
      %v4675 = vunpack.c.h.b16 %v4509
      %v4676 = vunpack.c.l.b16 %v4510
      %v4677 = vunpack.c.h.b16 %v4510
      %v4678 = vunpack.c.l.b16 %v4511
      %v4679 = vunpack.c.h.b16 %v4511
      %v4680 = vunpack.c.l.b16 %v4512
      %v4681 = vunpack.c.h.b16 %v4512
      %v4682 = vunpack.c.l.b16 %v4513
      %v4683 = vunpack.c.h.b16 %v4513
      %v4684 = vunpack.c.l.b16 %v4514
      %v4685 = vunpack.c.h.b16 %v4514
      %v4686 = vunpack.c.l.b16 %v4515
      %v4687 = vunpack.c.h.b16 %v4515
      %v4688 = vunpack.c.l.b16 %v4516
      %v4689 = vunpack.c.h.b16 %v4516
      %v4690 = vunpack.c.l.b16 %v4517
      %v4691 = vunpack.c.h.b16 %v4517
      %v4692 = vunpack.c.l.b16 %v4518
      %v4693 = vunpack.c.h.b16 %v4518
      %v4694 = vunpack.c.l.b16 %v4519
      %v4695 = vunpack.c.h.b16 %v4519
      %v4696 = vunpack.c.l.b16 %v4520
      %v4697 = vunpack.c.h.b16 %v4520
      %v4698 = vunpack.c.l.b16 %v4521
      %v4699 = vunpack.c.h.b16 %v4521
      %v4700 = vunpack.c.l.b16 %v4522
      %v4701 = vunpack.c.h.b16 %v4522
      %v4702 = vunpack.c.l.b16 %v4523
      %v4703 = vunpack.c.h.b16 %v4523
      %v4704 = vunpack.c.l.b16 %v4524
      %v4705 = vunpack.c.h.b16 %v4524
      %v4706 = vpack.c.b16 %v4658, %v4642
      %v4707 = vpack.c.b16 %v4659, %v4643
      %v4708 = vpack.c.b16 %v4660, %v4644
      %v4709 = vpack.c.b16 %v4661, %v4645
      %v4710 = vpack.c.b16 %v4662, %v4646
      %v4711 = vpack.c.b16 %v4663, %v4647
      %v4712 = vpack.c.b16 %v4664, %v4648
      %v4713 = vpack.c.b16 %v4665, %v4649
      %v4714 = vpack.c.b16 %v4666, %v4650
      %v4715 = vpack.c.b16 %v4667, %v4651
      %v4716 = vpack.c.b16 %v4668, %v4652
      %v4717 = vpack.c.b16 %v4669, %v4653
      %v4718 = vpack.c.b16 %v4670, %v4654
      %v4719 = vpack.c.b16 %v4671, %v4655
      %v4720 = vpack.c.b16 %v4672, %v4656
      %v4721 = vpack.c.b16 %v4673, %v4657
      %v4722 = vpack.c.b16 %v4690, %v4674
      %v4723 = vpack.c.b16 %v4691, %v4675
      %v4724 = vpack.c.b16 %v4692, %v4676
      %v4725 = vpack.c.b16 %v4693, %v4677
      %v4726 = vpack.c.b16 %v4694, %v4678
      %v4727 = vpack.c.b16 %v4695, %v4679
      %v4728 = vpack.c.b16 %v4696, %v4680
      %v4729 = vpack.c.b16 %v4697, %v4681
      %v4730 = vpack.c.b16 %v4698, %v4682
      %v4731 = vpack.c.b16 %v4699, %v4683
      %v4732 = vpack.c.b16 %v4700, %v4684
      %v4733 = vpack.c.b16 %v4701, %v4685
      %v4734 = vpack.c.b16 %v4702, %v4686
      %v4735 = vpack.c.b16 %v4703, %v4687
      %v4736 = vpack.c.b16 %v4704, %v4688
      %v4737 = vpack.c.b16 %v4705, %v4689
      %v4771 = vsel %vm732, %v4491, 0
      %4773 = vmatprep.subr.bf16.mxu0 0
      %4774 = vmatpush1.bf16.msra.mxu0 0
      %4775 = vmatprep.subr.bf16.mxu0 0
      %4776 = vmatpush1.bf16.msra.mxu0 0
      %4777 = vmatprep.subr.bf16.mxu0 0
      %4778 = vmatpush1.bf16.msra.mxu0 0
      %4779 = vmatprep.subr.bf16.mxu0 0
      %4780 = vmatpush1.bf16.msra.mxu0 0
      %4781 = vmatprep.subr.bf16.mxu0 0
      %4782 = vmatpush1.bf16.msra.mxu0 0
      %4783 = vmatprep.subr.bf16.mxu0 0
      %4784 = vmatpush1.bf16.msra.mxu0 0
      %4785 = vmatprep.subr.bf16.mxu0 %v4723
      %4786 = vmatpush1.bf16.msra.mxu0 %v4722
      %4787 = vmatprep.subr.bf16.mxu0 %v4707
      %4788 = vmatpush1.bf16.msra.mxu0 %v4706
      %4789 = vmatprep.subr.bf16.mxu0 0
      %4790 = vmatpush2.bf16.msra.mxu0 0
      %4791 = vmatprep.subr.bf16.mxu0 0
      %4792 = vmatpush2.bf16.msra.mxu0 0
      %4793 = vmatprep.subr.bf16.mxu0 0
      %4794 = vmatpush2.bf16.msra.mxu0 0
      %4795 = vmatprep.subr.bf16.mxu0 0
      %4796 = vmatpush2.bf16.msra.mxu0 0
      %4797 = vmatprep.subr.bf16.mxu0 0
      %4798 = vmatpush2.bf16.msra.mxu0 0
      %4799 = vmatprep.subr.bf16.mxu0 0
      %4800 = vmatpush2.bf16.msra.mxu0 0
      %4801 = vmatprep.subr.bf16.mxu0 0
      %4802 = vmatpush2.bf16.msra.mxu0 0
      %4803 = vmatprep.subr.bf16.mxu0 0
      %4804 = vmatpush2.bf16.msra.mxu0 0
      %4805 = vmatprep.mubr.bf16.mxu0 0
      %4806 = vmatmul.mubr.bf16.gmra.mxu0 %v4771
      %v4807 = vpop.f32.mrf.mxu0
      %v4808 = vadd.f32 %v4533, %v4807
      %v4809 = vpop.f32.mrf.mxu0
      %v4810 = vadd.f32 %v4537, %v4809
      %v4811 = vpop.f32.mrf.mxu0
      %v4812 = vpop.f32.mrf.mxu0
      %4813 = vdwg.mxu0
      %4814 = vmatprep.subr.bf16.mxu0 0
      %4815 = vmatpush1.bf16.msra.mxu0 0
      %4816 = vmatprep.subr.bf16.mxu0 0
      %4817 = vmatpush1.bf16.msra.mxu0 0
      %4818 = vmatprep.subr.bf16.mxu0 0
      %4819 = vmatpush1.bf16.msra.mxu0 0
      %4820 = vmatprep.subr.bf16.mxu0 0
      %4821 = vmatpush1.bf16.msra.mxu0 0
      %4822 = vmatprep.subr.bf16.mxu0 0
      %4823 = vmatpush1.bf16.msra.mxu0 0
      %4824 = vmatprep.subr.bf16.mxu0 0
      %4825 = vmatpush1.bf16.msra.mxu0 0
      %4826 = vmatprep.subr.bf16.mxu0 %v4725
      %4827 = vmatpush1.bf16.msra.mxu0 %v4724
      %4828 = vmatprep.subr.bf16.mxu0 %v4709
      %4829 = vmatpush1.bf16.msra.mxu0 %v4708
      %4830 = vmatprep.subr.bf16.mxu0 0
      %4831 = vmatpush2.bf16.msra.mxu0 0
      %4832 = vmatprep.subr.bf16.mxu0 0
      %4833 = vmatpush2.bf16.msra.mxu0 0
      %4834 = vmatprep.subr.bf16.mxu0 0
      %4835 = vmatpush2.bf16.msra.mxu0 0
      %4836 = vmatprep.subr.bf16.mxu0 0
      %4837 = vmatpush2.bf16.msra.mxu0 0
      %4838 = vmatprep.subr.bf16.mxu0 0
      %4839 = vmatpush2.bf16.msra.mxu0 0
      %4840 = vmatprep.subr.bf16.mxu0 0
      %4841 = vmatpush2.bf16.msra.mxu0 0
      %4842 = vmatprep.subr.bf16.mxu0 0
      %4843 = vmatpush2.bf16.msra.mxu0 0
      %4844 = vmatprep.subr.bf16.mxu0 0
      %4845 = vmatpush2.bf16.msra.mxu0 0
      %4846 = vmatprep.mubr.bf16.mxu0 0
      %4847 = vmatmul.mubr.bf16.gmra.mxu0 %v4771
      %v4848 = vpop.f32.mrf.mxu0
      %v4849 = vadd.f32 %v4541, %v4848
      %v4850 = vpop.f32.mrf.mxu0
      %v4851 = vadd.f32 %v4545, %v4850
      %v4852 = vpop.f32.mrf.mxu0
      %v4853 = vpop.f32.mrf.mxu0
      %4854 = vdwg.mxu0
      %4855 = vmatprep.subr.bf16.mxu0 0
      %4856 = vmatpush1.bf16.msra.mxu0 0
      %4857 = vmatprep.subr.bf16.mxu0 0
      %4858 = vmatpush1.bf16.msra.mxu0 0
      %4859 = vmatprep.subr.bf16.mxu0 0
      %4860 = vmatpush1.bf16.msra.mxu0 0
      %4861 = vmatprep.subr.bf16.mxu0 0
      %4862 = vmatpush1.bf16.msra.mxu0 0
      %4863 = vmatprep.subr.bf16.mxu0 0
      %4864 = vmatpush1.bf16.msra.mxu0 0
      %4865 = vmatprep.subr.bf16.mxu0 0
      %4866 = vmatpush1.bf16.msra.mxu0 0
      %4867 = vmatprep.subr.bf16.mxu0 %v4727
      %4868 = vmatpush1.bf16.msra.mxu0 %v4726
      %4869 = vmatprep.subr.bf16.mxu0 %v4711
      %4870 = vmatpush1.bf16.msra.mxu0 %v4710
      %4871 = vmatprep.subr.bf16.mxu0 0
      %4872 = vmatpush2.bf16.msra.mxu0 0
      %4873 = vmatprep.subr.bf16.mxu0 0
      %4874 = vmatpush2.bf16.msra.mxu0 0
      %4875 = vmatprep.subr.bf16.mxu0 0
      %4876 = vmatpush2.bf16.msra.mxu0 0
      %4877 = vmatprep.subr.bf16.mxu0 0
      %4878 = vmatpush2.bf16.msra.mxu0 0
      %4879 = vmatprep.subr.bf16.mxu0 0
      %4880 = vmatpush2.bf16.msra.mxu0 0
      %4881 = vmatprep.subr.bf16.mxu0 0
      %4882 = vmatpush2.bf16.msra.mxu0 0
      %4883 = vmatprep.subr.bf16.mxu0 0
      %4884 = vmatpush2.bf16.msra.mxu0 0
      %4885 = vmatprep.subr.bf16.mxu0 0
      %4886 = vmatpush2.bf16.msra.mxu0 0
      %4887 = vmatprep.mubr.bf16.mxu0 0
      %4888 = vmatmul.mubr.bf16.gmra.mxu0 %v4771
      %v4889 = vpop.f32.mrf.mxu0
      %v4890 = vadd.f32 %v4549, %v4889
      %v4891 = vpop.f32.mrf.mxu0
      %v4892 = vadd.f32 %v4553, %v4891
      %v4893 = vpop.f32.mrf.mxu0
      %v4894 = vpop.f32.mrf.mxu0
      %4895 = vdwg.mxu0
      %4896 = vmatprep.subr.bf16.mxu0 0
      %4897 = vmatpush1.bf16.msra.mxu0 0
      %4898 = vmatprep.subr.bf16.mxu0 0
      %4899 = vmatpush1.bf16.msra.mxu0 0
      %4900 = vmatprep.subr.bf16.mxu0 0
      %4901 = vmatpush1.bf16.msra.mxu0 0
      %4902 = vmatprep.subr.bf16.mxu0 0
      %4903 = vmatpush1.bf16.msra.mxu0 0
      %4904 = vmatprep.subr.bf16.mxu0 0
      %4905 = vmatpush1.bf16.msra.mxu0 0
      %4906 = vmatprep.subr.bf16.mxu0 0
      %4907 = vmatpush1.bf16.msra.mxu0 0
      %4908 = vmatprep.subr.bf16.mxu0 %v4729
      %4909 = vmatpush1.bf16.msra.mxu0 %v4728
      %4910 = vmatprep.subr.bf16.mxu0 %v4713
      %4911 = vmatpush1.bf16.msra.mxu0 %v4712
      %4912 = vmatprep.subr.bf16.mxu0 0
      %4913 = vmatpush2.bf16.msra.mxu0 0
      %4914 = vmatprep.subr.bf16.mxu0 0
      %4915 = vmatpush2.bf16.msra.mxu0 0
      %4916 = vmatprep.subr.bf16.mxu0 0
      %4917 = vmatpush2.bf16.msra.mxu0 0
      %4918 = vmatprep.subr.bf16.mxu0 0
      %4919 = vmatpush2.bf16.msra.mxu0 0
      %4920 = vmatprep.subr.bf16.mxu0 0
      %4921 = vmatpush2.bf16.msra.mxu0 0
      %4922 = vmatprep.subr.bf16.mxu0 0
      %4923 = vmatpush2.bf16.msra.mxu0 0
      %4924 = vmatprep.subr.bf16.mxu0 0
      %4925 = vmatpush2.bf16.msra.mxu0 0
      %4926 = vmatprep.subr.bf16.mxu0 0
      %4927 = vmatpush2.bf16.msra.mxu0 0
      %4928 = vmatprep.mubr.bf16.mxu0 0
      %4929 = vmatmul.mubr.bf16.gmra.mxu0 %v4771
      %v4930 = vpop.f32.mrf.mxu0
      %v4931 = vadd.f32 %v4557, %v4930
      %v4932 = vpop.f32.mrf.mxu0
      %v4933 = vadd.f32 %v4561, %v4932
      %v4934 = vpop.f32.mrf.mxu0
      %v4935 = vpop.f32.mrf.mxu0
      %4936 = vdwg.mxu0
      %4937 = vmatprep.subr.bf16.mxu0 0
      %4938 = vmatpush1.bf16.msra.mxu0 0
      %4939 = vmatprep.subr.bf16.mxu0 0
      %4940 = vmatpush1.bf16.msra.mxu0 0
      %4941 = vmatprep.subr.bf16.mxu0 0
      %4942 = vmatpush1.bf16.msra.mxu0 0
      %4943 = vmatprep.subr.bf16.mxu0 0
      %4944 = vmatpush1.bf16.msra.mxu0 0
      %4945 = vmatprep.subr.bf16.mxu0 0
      %4946 = vmatpush1.bf16.msra.mxu0 0
      %4947 = vmatprep.subr.bf16.mxu0 0
      %4948 = vmatpush1.bf16.msra.mxu0 0
      %4949 = vmatprep.subr.bf16.mxu0 %v4731
      %4950 = vmatpush1.bf16.msra.mxu0 %v4730
      %4951 = vmatprep.subr.bf16.mxu0 %v4715
      %4952 = vmatpush1.bf16.msra.mxu0 %v4714
      %4953 = vmatprep.subr.bf16.mxu0 0
      %4954 = vmatpush2.bf16.msra.mxu0 0
      %4955 = vmatprep.subr.bf16.mxu0 0
      %4956 = vmatpush2.bf16.msra.mxu0 0
      %4957 = vmatprep.subr.bf16.mxu0 0
      %4958 = vmatpush2.bf16.msra.mxu0 0
      %4959 = vmatprep.subr.bf16.mxu0 0
      %4960 = vmatpush2.bf16.msra.mxu0 0
      %4961 = vmatprep.subr.bf16.mxu0 0
      %4962 = vmatpush2.bf16.msra.mxu0 0
      %4963 = vmatprep.subr.bf16.mxu0 0
      %4964 = vmatpush2.bf16.msra.mxu0 0
      %4965 = vmatprep.subr.bf16.mxu0 0
      %4966 = vmatpush2.bf16.msra.mxu0 0
      %4967 = vmatprep.subr.bf16.mxu0 0
      %4968 = vmatpush2.bf16.msra.mxu0 0
      %4969 = vmatprep.mubr.bf16.mxu0 0
      %4970 = vmatmul.mubr.bf16.gmra.mxu0 %v4771
      %v4971 = vpop.f32.mrf.mxu0
      %v4972 = vadd.f32 %v4565, %v4971
      %v4973 = vpop.f32.mrf.mxu0
      %v4974 = vadd.f32 %v4569, %v4973
      %v4975 = vpop.f32.mrf.mxu0
      %v4976 = vpop.f32.mrf.mxu0
      %4977 = vdwg.mxu0
      %4978 = vmatprep.subr.bf16.mxu0 0
      %4979 = vmatpush1.bf16.msra.mxu0 0
      %4980 = vmatprep.subr.bf16.mxu0 0
      %4981 = vmatpush1.bf16.msra.mxu0 0
      %4982 = vmatprep.subr.bf16.mxu0 0
      %4983 = vmatpush1.bf16.msra.mxu0 0
      %4984 = vmatprep.subr.bf16.mxu0 0
      %4985 = vmatpush1.bf16.msra.mxu0 0
      %4986 = vmatprep.subr.bf16.mxu0 0
      %4987 = vmatpush1.bf16.msra.mxu0 0
      %4988 = vmatprep.subr.bf16.mxu0 0
      %4989 = vmatpush1.bf16.msra.mxu0 0
      %4990 = vmatprep.subr.bf16.mxu0 %v4733
      %4991 = vmatpush1.bf16.msra.mxu0 %v4732
      %4992 = vmatprep.subr.bf16.mxu0 %v4717
      %4993 = vmatpush1.bf16.msra.mxu0 %v4716
      %4994 = vmatprep.subr.bf16.mxu0 0
      %4995 = vmatpush2.bf16.msra.mxu0 0
      %4996 = vmatprep.subr.bf16.mxu0 0
      %4997 = vmatpush2.bf16.msra.mxu0 0
      %4998 = vmatprep.subr.bf16.mxu0 0
      %4999 = vmatpush2.bf16.msra.mxu0 0
      %5000 = vmatprep.subr.bf16.mxu0 0
      %5001 = vmatpush2.bf16.msra.mxu0 0
      %5002 = vmatprep.subr.bf16.mxu0 0
      %5003 = vmatpush2.bf16.msra.mxu0 0
      %5004 = vmatprep.subr.bf16.mxu0 0
      %5005 = vmatpush2.bf16.msra.mxu0 0
      %5006 = vmatprep.subr.bf16.mxu0 0
      %5007 = vmatpush2.bf16.msra.mxu0 0
      %5008 = vmatprep.subr.bf16.mxu0 0
      %5009 = vmatpush2.bf16.msra.mxu0 0
      %5010 = vmatprep.mubr.bf16.mxu0 0
      %5011 = vmatmul.mubr.bf16.gmra.mxu0 %v4771
      %v5012 = vpop.f32.mrf.mxu0
      %v5013 = vadd.f32 %v4573, %v5012
      %v5014 = vpop.f32.mrf.mxu0
      %v5015 = vadd.f32 %v4577, %v5014
      %v5016 = vpop.f32.mrf.mxu0
      %v5017 = vpop.f32.mrf.mxu0
      %5018 = vdwg.mxu0
      %5019 = vmatprep.subr.bf16.mxu0 0
      %5020 = vmatpush1.bf16.msra.mxu0 0
      %5021 = vmatprep.subr.bf16.mxu0 0
      %5022 = vmatpush1.bf16.msra.mxu0 0
      %5023 = vmatprep.subr.bf16.mxu0 0
      %5024 = vmatpush1.bf16.msra.mxu0 0
      %5025 = vmatprep.subr.bf16.mxu0 0
      %5026 = vmatpush1.bf16.msra.mxu0 0
      %5027 = vmatprep.subr.bf16.mxu0 0
      %5028 = vmatpush1.bf16.msra.mxu0 0
      %5029 = vmatprep.subr.bf16.mxu0 0
      %5030 = vmatpush1.bf16.msra.mxu0 0
      %5031 = vmatprep.subr.bf16.mxu0 %v4735
      %5032 = vmatpush1.bf16.msra.mxu0 %v4734
      %5033 = vmatprep.subr.bf16.mxu0 %v4719
      %5034 = vmatpush1.bf16.msra.mxu0 %v4718
      %5035 = vmatprep.subr.bf16.mxu0 0
      %5036 = vmatpush2.bf16.msra.mxu0 0
      %5037 = vmatprep.subr.bf16.mxu0 0
      %5038 = vmatpush2.bf16.msra.mxu0 0
      %5039 = vmatprep.subr.bf16.mxu0 0
      %5040 = vmatpush2.bf16.msra.mxu0 0
      %5041 = vmatprep.subr.bf16.mxu0 0
      %5042 = vmatpush2.bf16.msra.mxu0 0
      %5043 = vmatprep.subr.bf16.mxu0 0
      %5044 = vmatpush2.bf16.msra.mxu0 0
      %5045 = vmatprep.subr.bf16.mxu0 0
      %5046 = vmatpush2.bf16.msra.mxu0 0
      %5047 = vmatprep.subr.bf16.mxu0 0
      %5048 = vmatpush2.bf16.msra.mxu0 0
      %5049 = vmatprep.subr.bf16.mxu0 0
      %5050 = vmatpush2.bf16.msra.mxu0 0
      %5051 = vmatprep.mubr.bf16.mxu0 0
      %5052 = vmatmul.mubr.bf16.gmra.mxu0 %v4771
      %v5053 = vpop.f32.mrf.mxu0
      %v5054 = vadd.f32 %v4581, %v5053
      %v5055 = vpop.f32.mrf.mxu0
      %v5056 = vadd.f32 %v4585, %v5055
      %v5057 = vpop.f32.mrf.mxu0
      %v5058 = vpop.f32.mrf.mxu0
      %5059 = vdwg.mxu0
      %5060 = vmatprep.subr.bf16.mxu0 0
      %5061 = vmatpush1.bf16.msra.mxu0 0
      %5062 = vmatprep.subr.bf16.mxu0 0
      %5063 = vmatpush1.bf16.msra.mxu0 0
      %5064 = vmatprep.subr.bf16.mxu0 0
      %5065 = vmatpush1.bf16.msra.mxu0 0
      %5066 = vmatprep.subr.bf16.mxu0 0
      %5067 = vmatpush1.bf16.msra.mxu0 0
      %5068 = vmatprep.subr.bf16.mxu0 0
      %5069 = vmatpush1.bf16.msra.mxu0 0
      %5070 = vmatprep.subr.bf16.mxu0 0
      %5071 = vmatpush1.bf16.msra.mxu0 0
      %5072 = vmatprep.subr.bf16.mxu0 %v4737
      %5073 = vmatpush1.bf16.msra.mxu0 %v4736
      %5074 = vmatprep.subr.bf16.mxu0 %v4721
      %5075 = vmatpush1.bf16.msra.mxu0 %v4720
      %5076 = vmatprep.subr.bf16.mxu0 0
      %5077 = vmatpush2.bf16.msra.mxu0 0
      %5078 = vmatprep.subr.bf16.mxu0 0
      %5079 = vmatpush2.bf16.msra.mxu0 0
      %5080 = vmatprep.subr.bf16.mxu0 0
      %5081 = vmatpush2.bf16.msra.mxu0 0
      %5082 = vmatprep.subr.bf16.mxu0 0
      %5083 = vmatpush2.bf16.msra.mxu0 0
      %5084 = vmatprep.subr.bf16.mxu0 0
      %5085 = vmatpush2.bf16.msra.mxu0 0
      %5086 = vmatprep.subr.bf16.mxu0 0
      %5087 = vmatpush2.bf16.msra.mxu0 0
      %5088 = vmatprep.subr.bf16.mxu0 0
      %5089 = vmatpush2.bf16.msra.mxu0 0
      %5090 = vmatprep.subr.bf16.mxu0 0
      %5091 = vmatpush2.bf16.msra.mxu0 0
      %5092 = vmatprep.mubr.bf16.mxu0 0
      %5093 = vmatmul.mubr.bf16.gmra.mxu0 %v4771
      %v5094 = vpop.f32.mrf.mxu0
      %v5095 = vadd.f32 %v4589, %v5094
      %v5096 = vpop.f32.mrf.mxu0
      %v5097 = vadd.f32 %v4593, %v5096
      %v5098 = vpop.f32.mrf.mxu0
      %v5099 = vpop.f32.mrf.mxu0
      %5100 = vdwg.mxu0
      %v5101 = vmax.f32 %v4808, 0.0
      %v5102 = vmax.f32 %v4810, 0.0
      %v5103 = vmax.f32 %v4849, 0.0
      %v5104 = vmax.f32 %v4851, 0.0
      %v5105 = vmax.f32 %v4890, 0.0
      %v5106 = vmax.f32 %v4892, 0.0
      %v5107 = vmax.f32 %v4931, 0.0
      %v5108 = vmax.f32 %v4933, 0.0
      %v5109 = vmax.f32 %v4972, 0.0
      %v5110 = vmax.f32 %v4974, 0.0
      %v5111 = vmax.f32 %v5013, 0.0
      %v5112 = vmax.f32 %v5015, 0.0
      %v5113 = vmax.f32 %v5054, 0.0
      %v5114 = vmax.f32 %v5056, 0.0
      %v5115 = vmax.f32 %v5095, 0.0
      %v5116 = vmax.f32 %v5097, 0.0
      %v5117 = vpack.c.bf16 %v5101, %v5101
      %v5118 = vpack.c.bf16 %v5102, %v5102
      %v5119 = vpack.c.bf16 %v5103, %v5103
      %v5120 = vpack.c.bf16 %v5104, %v5104
      %v5121 = vpack.c.bf16 %v5105, %v5105
      %v5122 = vpack.c.bf16 %v5106, %v5106
      %v5123 = vpack.c.bf16 %v5107, %v5107
      %v5124 = vpack.c.bf16 %v5108, %v5108
      %v5125 = vpack.c.bf16 %v5109, %v5109
      %v5126 = vpack.c.bf16 %v5110, %v5110
      %v5127 = vpack.c.bf16 %v5111, %v5111
      %v5128 = vpack.c.bf16 %v5112, %v5112
      %v5129 = vpack.c.bf16 %v5113, %v5113
      %v5130 = vpack.c.bf16 %v5114, %v5114
      %v5131 = vpack.c.bf16 %v5115, %v5115
      %v5132 = vpack.c.bf16 %v5116, %v5116
      %s5133 = scalar_lea.vmem %s14, 1024
      %v5134 = vld [vmem:[%s5133] sm:$0xf]
      %v5135 = vld [vmem:[%s5133 + $0x4] sm:$0xf]
      %v5136 = vld [vmem:[%s5133 + $0x8] sm:$0xf]
      %v5137 = vld [vmem:[%s5133 + $0xc] sm:$0xf]
      %v5138 = vld [vmem:[%s5133 + $0x10] sm:$0xf]
      %v5139 = vld [vmem:[%s5133 + $0x14] sm:$0xf]
      %v5140 = vld [vmem:[%s5133 + $0x18] sm:$0xf]
      %v5141 = vld [vmem:[%s5133 + $0x1c] sm:$0xf]
      %v5142 = vld [vmem:[%s5133 + $0x20] sm:$0xf]
      %v5143 = vld [vmem:[%s5133 + $0x24] sm:$0xf]
      %v5144 = vld [vmem:[%s5133 + $0x28] sm:$0xf]
      %v5145 = vld [vmem:[%s5133 + $0x2c] sm:$0xf]
      %v5146 = vld [vmem:[%s5133 + $0x30] sm:$0xf]
      %v5147 = vld [vmem:[%s5133 + $0x34] sm:$0xf]
      %v5148 = vld [vmem:[%s5133 + $0x38] sm:$0xf]
      %v5149 = vld [vmem:[%s5133 + $0x3c] sm:$0xf]
      %v5150 = vld [vmem:[%s5133 + $0x40] sm:$0xf]
      %v5151 = vld [vmem:[%s5133 + $0x44] sm:$0xf]
      %v5152 = vld [vmem:[%s5133 + $0x48] sm:$0xf]
      %v5153 = vld [vmem:[%s5133 + $0x4c] sm:$0xf]
      %v5154 = vld [vmem:[%s5133 + $0x50] sm:$0xf]
      %v5155 = vld [vmem:[%s5133 + $0x54] sm:$0xf]
      %v5156 = vld [vmem:[%s5133 + $0x58] sm:$0xf]
      %v5157 = vld [vmem:[%s5133 + $0x5c] sm:$0xf]
      %v5158 = vld [vmem:[%s5133 + $0x60] sm:$0xf]
      %v5159 = vld [vmem:[%s5133 + $0x64] sm:$0xf]
      %v5160 = vld [vmem:[%s5133 + $0x68] sm:$0xf]
      %v5161 = vld [vmem:[%s5133 + $0x6c] sm:$0xf]
      %v5162 = vld [vmem:[%s5133 + $0x70] sm:$0xf]
      %v5163 = vld [vmem:[%s5133 + $0x74] sm:$0xf]
      %v5164 = vld [vmem:[%s5133 + $0x78] sm:$0xf]
      %v5165 = vld [vmem:[%s5133 + $0x7c] sm:$0xf]
      %v5166 = vld [vmem:[%s5133 + $0x80] sm:$0xf]
      %v5167 = vld [vmem:[%s5133 + $0x84] sm:$0xf]
      %v5168 = vld [vmem:[%s5133 + $0x88] sm:$0xf]
      %v5169 = vld [vmem:[%s5133 + $0x8c] sm:$0xf]
      %v5170 = vld [vmem:[%s5133 + $0x90] sm:$0xf]
      %v5171 = vld [vmem:[%s5133 + $0x94] sm:$0xf]
      %v5172 = vld [vmem:[%s5133 + $0x98] sm:$0xf]
      %v5173 = vld [vmem:[%s5133 + $0x9c] sm:$0xf]
      %v5174 = vld [vmem:[%s5133 + $0xa0] sm:$0xf]
      %v5175 = vld [vmem:[%s5133 + $0xa4] sm:$0xf]
      %v5176 = vld [vmem:[%s5133 + $0xa8] sm:$0xf]
      %v5177 = vld [vmem:[%s5133 + $0xac] sm:$0xf]
      %v5178 = vld [vmem:[%s5133 + $0xb0] sm:$0xf]
      %v5179 = vld [vmem:[%s5133 + $0xb4] sm:$0xf]
      %v5180 = vld [vmem:[%s5133 + $0xb8] sm:$0xf]
      %v5181 = vld [vmem:[%s5133 + $0xbc] sm:$0xf]
      %v5182 = vld [vmem:[%s5133 + $0xc0] sm:$0xf]
      %v5183 = vld [vmem:[%s5133 + $0xc4] sm:$0xf]
      %v5184 = vld [vmem:[%s5133 + $0xc8] sm:$0xf]
      %v5185 = vld [vmem:[%s5133 + $0xcc] sm:$0xf]
      %v5186 = vld [vmem:[%s5133 + $0xd0] sm:$0xf]
      %v5187 = vld [vmem:[%s5133 + $0xd4] sm:$0xf]
      %v5188 = vld [vmem:[%s5133 + $0xd8] sm:$0xf]
      %v5189 = vld [vmem:[%s5133 + $0xdc] sm:$0xf]
      %v5190 = vld [vmem:[%s5133 + $0xe0] sm:$0xf]
      %v5191 = vld [vmem:[%s5133 + $0xe4] sm:$0xf]
      %v5192 = vld [vmem:[%s5133 + $0xe8] sm:$0xf]
      %v5193 = vld [vmem:[%s5133 + $0xec] sm:$0xf]
      %v5194 = vld [vmem:[%s5133 + $0xf0] sm:$0xf]
      %v5195 = vld [vmem:[%s5133 + $0xf4] sm:$0xf]
      %v5196 = vld [vmem:[%s5133 + $0xf8] sm:$0xf]
      %v5197 = vld [vmem:[%s5133 + $0xfc] sm:$0xf]
      %v5198 = vld [vmem:[%s5133 + $0x100] sm:$0xf]
      %v5199 = vld [vmem:[%s5133 + $0x104] sm:$0xf]
      %v5200 = vld [vmem:[%s5133 + $0x108] sm:$0xf]
      %v5201 = vld [vmem:[%s5133 + $0x10c] sm:$0xf]
      %v5202 = vld [vmem:[%s5133 + $0x110] sm:$0xf]
      %v5203 = vld [vmem:[%s5133 + $0x114] sm:$0xf]
      %v5204 = vld [vmem:[%s5133 + $0x118] sm:$0xf]
      %v5205 = vld [vmem:[%s5133 + $0x11c] sm:$0xf]
      %v5206 = vld [vmem:[%s5133 + $0x120] sm:$0xf]
      %v5207 = vld [vmem:[%s5133 + $0x124] sm:$0xf]
      %v5208 = vld [vmem:[%s5133 + $0x128] sm:$0xf]
      %v5209 = vld [vmem:[%s5133 + $0x12c] sm:$0xf]
      %v5210 = vld [vmem:[%s5133 + $0x130] sm:$0xf]
      %v5211 = vld [vmem:[%s5133 + $0x134] sm:$0xf]
      %v5212 = vld [vmem:[%s5133 + $0x138] sm:$0xf]
      %v5213 = vld [vmem:[%s5133 + $0x13c] sm:$0xf]
      %v5214 = vld [vmem:[%s5133 + $0x140] sm:$0xf]
      %v5215 = vld [vmem:[%s5133 + $0x144] sm:$0xf]
      %v5216 = vld [vmem:[%s5133 + $0x148] sm:$0xf]
      %v5217 = vld [vmem:[%s5133 + $0x14c] sm:$0xf]
      %v5218 = vld [vmem:[%s5133 + $0x150] sm:$0xf]
      %v5219 = vld [vmem:[%s5133 + $0x154] sm:$0xf]
      %v5220 = vld [vmem:[%s5133 + $0x158] sm:$0xf]
      %v5221 = vld [vmem:[%s5133 + $0x15c] sm:$0xf]
      %v5222 = vld [vmem:[%s5133 + $0x160] sm:$0xf]
      %v5223 = vld [vmem:[%s5133 + $0x164] sm:$0xf]
      %v5224 = vld [vmem:[%s5133 + $0x168] sm:$0xf]
      %v5225 = vld [vmem:[%s5133 + $0x16c] sm:$0xf]
      %v5226 = vld [vmem:[%s5133 + $0x170] sm:$0xf]
      %v5227 = vld [vmem:[%s5133 + $0x174] sm:$0xf]
      %v5228 = vld [vmem:[%s5133 + $0x178] sm:$0xf]
      %v5229 = vld [vmem:[%s5133 + $0x17c] sm:$0xf]
      %v5230 = vld [vmem:[%s5133 + $0x180] sm:$0xf]
      %v5231 = vld [vmem:[%s5133 + $0x184] sm:$0xf]
      %v5232 = vld [vmem:[%s5133 + $0x188] sm:$0xf]
      %v5233 = vld [vmem:[%s5133 + $0x18c] sm:$0xf]
      %v5234 = vld [vmem:[%s5133 + $0x190] sm:$0xf]
      %v5235 = vld [vmem:[%s5133 + $0x194] sm:$0xf]
      %v5236 = vld [vmem:[%s5133 + $0x198] sm:$0xf]
      %v5237 = vld [vmem:[%s5133 + $0x19c] sm:$0xf]
      %v5238 = vld [vmem:[%s5133 + $0x1a0] sm:$0xf]
      %v5239 = vld [vmem:[%s5133 + $0x1a4] sm:$0xf]
      %v5240 = vld [vmem:[%s5133 + $0x1a8] sm:$0xf]
      %v5241 = vld [vmem:[%s5133 + $0x1ac] sm:$0xf]
      %v5242 = vld [vmem:[%s5133 + $0x1b0] sm:$0xf]
      %v5243 = vld [vmem:[%s5133 + $0x1b4] sm:$0xf]
      %v5244 = vld [vmem:[%s5133 + $0x1b8] sm:$0xf]
      %v5245 = vld [vmem:[%s5133 + $0x1bc] sm:$0xf]
      %v5246 = vld [vmem:[%s5133 + $0x1c0] sm:$0xf]
      %v5247 = vld [vmem:[%s5133 + $0x1c4] sm:$0xf]
      %v5248 = vld [vmem:[%s5133 + $0x1c8] sm:$0xf]
      %v5249 = vld [vmem:[%s5133 + $0x1cc] sm:$0xf]
      %v5250 = vld [vmem:[%s5133 + $0x1d0] sm:$0xf]
      %v5251 = vld [vmem:[%s5133 + $0x1d4] sm:$0xf]
      %v5252 = vld [vmem:[%s5133 + $0x1d8] sm:$0xf]
      %v5253 = vld [vmem:[%s5133 + $0x1dc] sm:$0xf]
      %v5254 = vld [vmem:[%s5133 + $0x1e0] sm:$0xf]
      %v5255 = vld [vmem:[%s5133 + $0x1e4] sm:$0xf]
      %v5256 = vld [vmem:[%s5133 + $0x1e8] sm:$0xf]
      %v5257 = vld [vmem:[%s5133 + $0x1ec] sm:$0xf]
      %v5258 = vld [vmem:[%s5133 + $0x1f0] sm:$0xf]
      %v5259 = vld [vmem:[%s5133 + $0x1f4] sm:$0xf]
      %v5260 = vld [vmem:[%s5133 + $0x1f8] sm:$0xf]
      %v5261 = vld [vmem:[%s5133 + $0x1fc] sm:$0xf]
      %v5262 = vld [vmem:[%s5133 + $0x200] sm:$0xf]
      %v5263 = vld [vmem:[%s5133 + $0x204] sm:$0xf]
      %v5264 = vld [vmem:[%s5133 + $0x208] sm:$0xf]
      %v5265 = vld [vmem:[%s5133 + $0x20c] sm:$0xf]
      %v5266 = vld [vmem:[%s5133 + $0x210] sm:$0xf]
      %v5267 = vld [vmem:[%s5133 + $0x214] sm:$0xf]
      %v5268 = vld [vmem:[%s5133 + $0x218] sm:$0xf]
      %v5269 = vld [vmem:[%s5133 + $0x21c] sm:$0xf]
      %v5270 = vld [vmem:[%s5133 + $0x220] sm:$0xf]
      %v5271 = vld [vmem:[%s5133 + $0x224] sm:$0xf]
      %v5272 = vld [vmem:[%s5133 + $0x228] sm:$0xf]
      %v5273 = vld [vmem:[%s5133 + $0x22c] sm:$0xf]
      %v5274 = vld [vmem:[%s5133 + $0x230] sm:$0xf]
      %v5275 = vld [vmem:[%s5133 + $0x234] sm:$0xf]
      %v5276 = vld [vmem:[%s5133 + $0x238] sm:$0xf]
      %v5277 = vld [vmem:[%s5133 + $0x23c] sm:$0xf]
      %v5278 = vld [vmem:[%s5133 + $0x240] sm:$0xf]
      %v5279 = vld [vmem:[%s5133 + $0x244] sm:$0xf]
      %v5280 = vld [vmem:[%s5133 + $0x248] sm:$0xf]
      %v5281 = vld [vmem:[%s5133 + $0x24c] sm:$0xf]
      %v5282 = vld [vmem:[%s5133 + $0x250] sm:$0xf]
      %v5283 = vld [vmem:[%s5133 + $0x254] sm:$0xf]
      %v5284 = vld [vmem:[%s5133 + $0x258] sm:$0xf]
      %v5285 = vld [vmem:[%s5133 + $0x25c] sm:$0xf]
      %v5286 = vld [vmem:[%s5133 + $0x260] sm:$0xf]
      %v5287 = vld [vmem:[%s5133 + $0x264] sm:$0xf]
      %v5288 = vld [vmem:[%s5133 + $0x268] sm:$0xf]
      %v5289 = vld [vmem:[%s5133 + $0x26c] sm:$0xf]
      %v5290 = vld [vmem:[%s5133 + $0x270] sm:$0xf]
      %v5291 = vld [vmem:[%s5133 + $0x274] sm:$0xf]
      %v5292 = vld [vmem:[%s5133 + $0x278] sm:$0xf]
      %v5293 = vld [vmem:[%s5133 + $0x27c] sm:$0xf]
      %v5294 = vld [vmem:[%s5133 + $0x280] sm:$0xf]
      %v5295 = vld [vmem:[%s5133 + $0x284] sm:$0xf]
      %v5296 = vld [vmem:[%s5133 + $0x288] sm:$0xf]
      %v5297 = vld [vmem:[%s5133 + $0x28c] sm:$0xf]
      %v5298 = vld [vmem:[%s5133 + $0x290] sm:$0xf]
      %v5299 = vld [vmem:[%s5133 + $0x294] sm:$0xf]
      %v5300 = vld [vmem:[%s5133 + $0x298] sm:$0xf]
      %v5301 = vld [vmem:[%s5133 + $0x29c] sm:$0xf]
      %v5302 = vld [vmem:[%s5133 + $0x2a0] sm:$0xf]
      %v5303 = vld [vmem:[%s5133 + $0x2a4] sm:$0xf]
      %v5304 = vld [vmem:[%s5133 + $0x2a8] sm:$0xf]
      %v5305 = vld [vmem:[%s5133 + $0x2ac] sm:$0xf]
      %v5306 = vld [vmem:[%s5133 + $0x2b0] sm:$0xf]
      %v5307 = vld [vmem:[%s5133 + $0x2b4] sm:$0xf]
      %v5308 = vld [vmem:[%s5133 + $0x2b8] sm:$0xf]
      %v5309 = vld [vmem:[%s5133 + $0x2bc] sm:$0xf]
      %v5310 = vld [vmem:[%s5133 + $0x2c0] sm:$0xf]
      %v5311 = vld [vmem:[%s5133 + $0x2c4] sm:$0xf]
      %v5312 = vld [vmem:[%s5133 + $0x2c8] sm:$0xf]
      %v5313 = vld [vmem:[%s5133 + $0x2cc] sm:$0xf]
      %v5314 = vld [vmem:[%s5133 + $0x2d0] sm:$0xf]
      %v5315 = vld [vmem:[%s5133 + $0x2d4] sm:$0xf]
      %v5316 = vld [vmem:[%s5133 + $0x2d8] sm:$0xf]
      %v5317 = vld [vmem:[%s5133 + $0x2dc] sm:$0xf]
      %v5318 = vld [vmem:[%s5133 + $0x2e0] sm:$0xf]
      %v5319 = vld [vmem:[%s5133 + $0x2e4] sm:$0xf]
      %v5320 = vld [vmem:[%s5133 + $0x2e8] sm:$0xf]
      %v5321 = vld [vmem:[%s5133 + $0x2ec] sm:$0xf]
      %v5322 = vld [vmem:[%s5133 + $0x2f0] sm:$0xf]
      %v5323 = vld [vmem:[%s5133 + $0x2f4] sm:$0xf]
      %v5324 = vld [vmem:[%s5133 + $0x2f8] sm:$0xf]
      %v5325 = vld [vmem:[%s5133 + $0x2fc] sm:$0xf]
      %v5326 = vld [vmem:[%s5133 + $0x300] sm:$0xf]
      %v5327 = vld [vmem:[%s5133 + $0x304] sm:$0xf]
      %v5328 = vld [vmem:[%s5133 + $0x308] sm:$0xf]
      %v5329 = vld [vmem:[%s5133 + $0x30c] sm:$0xf]
      %v5330 = vld [vmem:[%s5133 + $0x310] sm:$0xf]
      %v5331 = vld [vmem:[%s5133 + $0x314] sm:$0xf]
      %v5332 = vld [vmem:[%s5133 + $0x318] sm:$0xf]
      %v5333 = vld [vmem:[%s5133 + $0x31c] sm:$0xf]
      %v5334 = vld [vmem:[%s5133 + $0x320] sm:$0xf]
      %v5335 = vld [vmem:[%s5133 + $0x324] sm:$0xf]
      %v5336 = vld [vmem:[%s5133 + $0x328] sm:$0xf]
      %v5337 = vld [vmem:[%s5133 + $0x32c] sm:$0xf]
      %v5338 = vld [vmem:[%s5133 + $0x330] sm:$0xf]
      %v5339 = vld [vmem:[%s5133 + $0x334] sm:$0xf]
      %v5340 = vld [vmem:[%s5133 + $0x338] sm:$0xf]
      %v5341 = vld [vmem:[%s5133 + $0x33c] sm:$0xf]
      %v5342 = vld [vmem:[%s5133 + $0x340] sm:$0xf]
      %v5343 = vld [vmem:[%s5133 + $0x344] sm:$0xf]
      %v5344 = vld [vmem:[%s5133 + $0x348] sm:$0xf]
      %v5345 = vld [vmem:[%s5133 + $0x34c] sm:$0xf]
      %v5346 = vld [vmem:[%s5133 + $0x350] sm:$0xf]
      %v5347 = vld [vmem:[%s5133 + $0x354] sm:$0xf]
      %v5348 = vld [vmem:[%s5133 + $0x358] sm:$0xf]
      %v5349 = vld [vmem:[%s5133 + $0x35c] sm:$0xf]
      %v5350 = vld [vmem:[%s5133 + $0x360] sm:$0xf]
      %v5351 = vld [vmem:[%s5133 + $0x364] sm:$0xf]
      %v5352 = vld [vmem:[%s5133 + $0x368] sm:$0xf]
      %v5353 = vld [vmem:[%s5133 + $0x36c] sm:$0xf]
      %v5354 = vld [vmem:[%s5133 + $0x370] sm:$0xf]
      %v5355 = vld [vmem:[%s5133 + $0x374] sm:$0xf]
      %v5356 = vld [vmem:[%s5133 + $0x378] sm:$0xf]
      %v5357 = vld [vmem:[%s5133 + $0x37c] sm:$0xf]
      %v5358 = vld [vmem:[%s5133 + $0x380] sm:$0xf]
      %v5359 = vld [vmem:[%s5133 + $0x384] sm:$0xf]
      %v5360 = vld [vmem:[%s5133 + $0x388] sm:$0xf]
      %v5361 = vld [vmem:[%s5133 + $0x38c] sm:$0xf]
      %v5362 = vld [vmem:[%s5133 + $0x390] sm:$0xf]
      %v5363 = vld [vmem:[%s5133 + $0x394] sm:$0xf]
      %v5364 = vld [vmem:[%s5133 + $0x398] sm:$0xf]
      %v5365 = vld [vmem:[%s5133 + $0x39c] sm:$0xf]
      %v5366 = vld [vmem:[%s5133 + $0x3a0] sm:$0xf]
      %v5367 = vld [vmem:[%s5133 + $0x3a4] sm:$0xf]
      %v5368 = vld [vmem:[%s5133 + $0x3a8] sm:$0xf]
      %v5369 = vld [vmem:[%s5133 + $0x3ac] sm:$0xf]
      %v5370 = vld [vmem:[%s5133 + $0x3b0] sm:$0xf]
      %v5371 = vld [vmem:[%s5133 + $0x3b4] sm:$0xf]
      %v5372 = vld [vmem:[%s5133 + $0x3b8] sm:$0xf]
      %v5373 = vld [vmem:[%s5133 + $0x3bc] sm:$0xf]
      %v5374 = vld [vmem:[%s5133 + $0x3c0] sm:$0xf]
      %v5375 = vld [vmem:[%s5133 + $0x3c4] sm:$0xf]
      %v5376 = vld [vmem:[%s5133 + $0x3c8] sm:$0xf]
      %v5377 = vld [vmem:[%s5133 + $0x3cc] sm:$0xf]
      %v5378 = vld [vmem:[%s5133 + $0x3d0] sm:$0xf]
      %v5379 = vld [vmem:[%s5133 + $0x3d4] sm:$0xf]
      %v5380 = vld [vmem:[%s5133 + $0x3d8] sm:$0xf]
      %v5381 = vld [vmem:[%s5133 + $0x3dc] sm:$0xf]
      %v5382 = vld [vmem:[%s5133 + $0x3e0] sm:$0xf]
      %v5383 = vld [vmem:[%s5133 + $0x3e4] sm:$0xf]
      %v5384 = vld [vmem:[%s5133 + $0x3e8] sm:$0xf]
      %v5385 = vld [vmem:[%s5133 + $0x3ec] sm:$0xf]
      %v5386 = vld [vmem:[%s5133 + $0x3f0] sm:$0xf]
      %v5387 = vld [vmem:[%s5133 + $0x3f4] sm:$0xf]
      %v5388 = vld [vmem:[%s5133 + $0x3f8] sm:$0xf]
      %v5389 = vld [vmem:[%s5133 + $0x3fc] sm:$0xf]
      %s5390 = scalar_lea.vmem %s15, 1
      %v5391 = vld [vmem:[%s5390] sm:$0x1]
      %v5393 = vlaneseq
      %v5394 = vshrl.u32 %v5393, 7
      %v5395 = vsub.s32 0, %v5394
      %v5396 = vrot.slane %v5391, %v5395
      %v5654 = vunpack.c.l.b16 %v5134
      %v5655 = vunpack.c.l.b16 %v5135
      %v5656 = vunpack.c.l.b16 %v5136
      %v5657 = vunpack.c.l.b16 %v5137
      %v5658 = vunpack.c.l.b16 %v5138
      %v5659 = vunpack.c.l.b16 %v5139
      %v5660 = vunpack.c.l.b16 %v5140
      %v5661 = vunpack.c.l.b16 %v5141
      %v5662 = vunpack.c.l.b16 %v5142
      %v5663 = vunpack.c.l.b16 %v5143
      %v5664 = vunpack.c.l.b16 %v5144
      %v5665 = vunpack.c.l.b16 %v5145
      %v5666 = vunpack.c.l.b16 %v5146
      %v5667 = vunpack.c.l.b16 %v5147
      %v5668 = vunpack.c.l.b16 %v5148
      %v5669 = vunpack.c.l.b16 %v5149
      %v5670 = vunpack.c.l.b16 %v5150
      %v5671 = vunpack.c.l.b16 %v5151
      %v5672 = vunpack.c.l.b16 %v5152
      %v5673 = vunpack.c.l.b16 %v5153
      %v5674 = vunpack.c.l.b16 %v5154
      %v5675 = vunpack.c.l.b16 %v5155
      %v5676 = vunpack.c.l.b16 %v5156
      %v5677 = vunpack.c.l.b16 %v5157
      %v5678 = vunpack.c.l.b16 %v5158
      %v5679 = vunpack.c.l.b16 %v5159
      %v5680 = vunpack.c.l.b16 %v5160
      %v5681 = vunpack.c.l.b16 %v5161
      %v5682 = vunpack.c.l.b16 %v5162
      %v5683 = vunpack.c.l.b16 %v5163
      %v5684 = vunpack.c.l.b16 %v5164
      %v5685 = vunpack.c.l.b16 %v5165
      %v5686 = vunpack.c.l.b16 %v5166
      %v5687 = vunpack.c.l.b16 %v5167
      %v5688 = vunpack.c.l.b16 %v5168
      %v5689 = vunpack.c.l.b16 %v5169
      %v5690 = vunpack.c.l.b16 %v5170
      %v5691 = vunpack.c.l.b16 %v5171
      %v5692 = vunpack.c.l.b16 %v5172
      %v5693 = vunpack.c.l.b16 %v5173
      %v5694 = vunpack.c.l.b16 %v5174
      %v5695 = vunpack.c.l.b16 %v5175
      %v5696 = vunpack.c.l.b16 %v5176
      %v5697 = vunpack.c.l.b16 %v5177
      %v5698 = vunpack.c.l.b16 %v5178
      %v5699 = vunpack.c.l.b16 %v5179
      %v5700 = vunpack.c.l.b16 %v5180
      %v5701 = vunpack.c.l.b16 %v5181
      %v5702 = vunpack.c.l.b16 %v5182
      %v5703 = vunpack.c.l.b16 %v5183
      %v5704 = vunpack.c.l.b16 %v5184
      %v5705 = vunpack.c.l.b16 %v5185
      %v5706 = vunpack.c.l.b16 %v5186
      %v5707 = vunpack.c.l.b16 %v5187
      %v5708 = vunpack.c.l.b16 %v5188
      %v5709 = vunpack.c.l.b16 %v5189
      %v5710 = vunpack.c.l.b16 %v5190
      %v5711 = vunpack.c.l.b16 %v5191
      %v5712 = vunpack.c.l.b16 %v5192
      %v5713 = vunpack.c.l.b16 %v5193
      %v5714 = vunpack.c.l.b16 %v5194
      %v5715 = vunpack.c.l.b16 %v5195
      %v5716 = vunpack.c.l.b16 %v5196
      %v5717 = vunpack.c.l.b16 %v5197
      %v5718 = vunpack.c.l.b16 %v5198
      %v5719 = vunpack.c.l.b16 %v5199
      %v5720 = vunpack.c.l.b16 %v5200
      %v5721 = vunpack.c.l.b16 %v5201
      %v5722 = vunpack.c.l.b16 %v5202
      %v5723 = vunpack.c.l.b16 %v5203
      %v5724 = vunpack.c.l.b16 %v5204
      %v5725 = vunpack.c.l.b16 %v5205
      %v5726 = vunpack.c.l.b16 %v5206
      %v5727 = vunpack.c.l.b16 %v5207
      %v5728 = vunpack.c.l.b16 %v5208
      %v5729 = vunpack.c.l.b16 %v5209
      %v5730 = vunpack.c.l.b16 %v5210
      %v5731 = vunpack.c.l.b16 %v5211
      %v5732 = vunpack.c.l.b16 %v5212
      %v5733 = vunpack.c.l.b16 %v5213
      %v5734 = vunpack.c.l.b16 %v5214
      %v5735 = vunpack.c.l.b16 %v5215
      %v5736 = vunpack.c.l.b16 %v5216
      %v5737 = vunpack.c.l.b16 %v5217
      %v5738 = vunpack.c.l.b16 %v5218
      %v5739 = vunpack.c.l.b16 %v5219
      %v5740 = vunpack.c.l.b16 %v5220
      %v5741 = vunpack.c.l.b16 %v5221
      %v5742 = vunpack.c.l.b16 %v5222
      %v5743 = vunpack.c.l.b16 %v5223
      %v5744 = vunpack.c.l.b16 %v5224
      %v5745 = vunpack.c.l.b16 %v5225
      %v5746 = vunpack.c.l.b16 %v5226
      %v5747 = vunpack.c.l.b16 %v5227
      %v5748 = vunpack.c.l.b16 %v5228
      %v5749 = vunpack.c.l.b16 %v5229
      %v5750 = vunpack.c.l.b16 %v5230
      %v5751 = vunpack.c.l.b16 %v5231
      %v5752 = vunpack.c.l.b16 %v5232
      %v5753 = vunpack.c.l.b16 %v5233
      %v5754 = vunpack.c.l.b16 %v5234
      %v5755 = vunpack.c.l.b16 %v5235
      %v5756 = vunpack.c.l.b16 %v5236
      %v5757 = vunpack.c.l.b16 %v5237
      %v5758 = vunpack.c.l.b16 %v5238
      %v5759 = vunpack.c.l.b16 %v5239
      %v5760 = vunpack.c.l.b16 %v5240
      %v5761 = vunpack.c.l.b16 %v5241
      %v5762 = vunpack.c.l.b16 %v5242
      %v5763 = vunpack.c.l.b16 %v5243
      %v5764 = vunpack.c.l.b16 %v5244
      %v5765 = vunpack.c.l.b16 %v5245
      %v5766 = vunpack.c.l.b16 %v5246
      %v5767 = vunpack.c.l.b16 %v5247
      %v5768 = vunpack.c.l.b16 %v5248
      %v5769 = vunpack.c.l.b16 %v5249
      %v5770 = vunpack.c.l.b16 %v5250
      %v5771 = vunpack.c.l.b16 %v5251
      %v5772 = vunpack.c.l.b16 %v5252
      %v5773 = vunpack.c.l.b16 %v5253
      %v5774 = vunpack.c.l.b16 %v5254
      %v5775 = vunpack.c.l.b16 %v5255
      %v5776 = vunpack.c.l.b16 %v5256
      %v5777 = vunpack.c.l.b16 %v5257
      %v5778 = vunpack.c.l.b16 %v5258
      %v5779 = vunpack.c.l.b16 %v5259
      %v5780 = vunpack.c.l.b16 %v5260
      %v5781 = vunpack.c.l.b16 %v5261
      %v5782 = vunpack.c.l.b16 %v5262
      %v5783 = vunpack.c.l.b16 %v5263
      %v5784 = vunpack.c.l.b16 %v5264
      %v5785 = vunpack.c.l.b16 %v5265
      %v5786 = vunpack.c.l.b16 %v5266
      %v5787 = vunpack.c.l.b16 %v5267
      %v5788 = vunpack.c.l.b16 %v5268
      %v5789 = vunpack.c.l.b16 %v5269
      %v5790 = vunpack.c.l.b16 %v5270
      %v5791 = vunpack.c.l.b16 %v5271
      %v5792 = vunpack.c.l.b16 %v5272
      %v5793 = vunpack.c.l.b16 %v5273
      %v5794 = vunpack.c.l.b16 %v5274
      %v5795 = vunpack.c.l.b16 %v5275
      %v5796 = vunpack.c.l.b16 %v5276
      %v5797 = vunpack.c.l.b16 %v5277
      %v5798 = vunpack.c.l.b16 %v5278
      %v5799 = vunpack.c.l.b16 %v5279
      %v5800 = vunpack.c.l.b16 %v5280
      %v5801 = vunpack.c.l.b16 %v5281
      %v5802 = vunpack.c.l.b16 %v5282
      %v5803 = vunpack.c.l.b16 %v5283
      %v5804 = vunpack.c.l.b16 %v5284
      %v5805 = vunpack.c.l.b16 %v5285
      %v5806 = vunpack.c.l.b16 %v5286
      %v5807 = vunpack.c.l.b16 %v5287
      %v5808 = vunpack.c.l.b16 %v5288
      %v5809 = vunpack.c.l.b16 %v5289
      %v5810 = vunpack.c.l.b16 %v5290
      %v5811 = vunpack.c.l.b16 %v5291
      %v5812 = vunpack.c.l.b16 %v5292
      %v5813 = vunpack.c.l.b16 %v5293
      %v5814 = vunpack.c.l.b16 %v5294
      %v5815 = vunpack.c.l.b16 %v5295
      %v5816 = vunpack.c.l.b16 %v5296
      %v5817 = vunpack.c.l.b16 %v5297
      %v5818 = vunpack.c.l.b16 %v5298
      %v5819 = vunpack.c.l.b16 %v5299
      %v5820 = vunpack.c.l.b16 %v5300
      %v5821 = vunpack.c.l.b16 %v5301
      %v5822 = vunpack.c.l.b16 %v5302
      %v5823 = vunpack.c.l.b16 %v5303
      %v5824 = vunpack.c.l.b16 %v5304
      %v5825 = vunpack.c.l.b16 %v5305
      %v5826 = vunpack.c.l.b16 %v5306
      %v5827 = vunpack.c.l.b16 %v5307
      %v5828 = vunpack.c.l.b16 %v5308
      %v5829 = vunpack.c.l.b16 %v5309
      %v5830 = vunpack.c.l.b16 %v5310
      %v5831 = vunpack.c.l.b16 %v5311
      %v5832 = vunpack.c.l.b16 %v5312
      %v5833 = vunpack.c.l.b16 %v5313
      %v5834 = vunpack.c.l.b16 %v5314
      %v5835 = vunpack.c.l.b16 %v5315
      %v5836 = vunpack.c.l.b16 %v5316
      %v5837 = vunpack.c.l.b16 %v5317
      %v5838 = vunpack.c.l.b16 %v5318
      %v5839 = vunpack.c.l.b16 %v5319
      %v5840 = vunpack.c.l.b16 %v5320
      %v5841 = vunpack.c.l.b16 %v5321
      %v5842 = vunpack.c.l.b16 %v5322
      %v5843 = vunpack.c.l.b16 %v5323
      %v5844 = vunpack.c.l.b16 %v5324
      %v5845 = vunpack.c.l.b16 %v5325
      %v5846 = vunpack.c.l.b16 %v5326
      %v5847 = vunpack.c.l.b16 %v5327
      %v5848 = vunpack.c.l.b16 %v5328
      %v5849 = vunpack.c.l.b16 %v5329
      %v5850 = vunpack.c.l.b16 %v5330
      %v5851 = vunpack.c.l.b16 %v5331
      %v5852 = vunpack.c.l.b16 %v5332
      %v5853 = vunpack.c.l.b16 %v5333
      %v5854 = vunpack.c.l.b16 %v5334
      %v5855 = vunpack.c.l.b16 %v5335
      %v5856 = vunpack.c.l.b16 %v5336
      %v5857 = vunpack.c.l.b16 %v5337
      %v5858 = vunpack.c.l.b16 %v5338
      %v5859 = vunpack.c.l.b16 %v5339
      %v5860 = vunpack.c.l.b16 %v5340
      %v5861 = vunpack.c.l.b16 %v5341
      %v5862 = vunpack.c.l.b16 %v5342
      %v5863 = vunpack.c.l.b16 %v5343
      %v5864 = vunpack.c.l.b16 %v5344
      %v5865 = vunpack.c.l.b16 %v5345
      %v5866 = vunpack.c.l.b16 %v5346
      %v5867 = vunpack.c.l.b16 %v5347
      %v5868 = vunpack.c.l.b16 %v5348
      %v5869 = vunpack.c.l.b16 %v5349
      %v5870 = vunpack.c.l.b16 %v5350
      %v5871 = vunpack.c.l.b16 %v5351
      %v5872 = vunpack.c.l.b16 %v5352
      %v5873 = vunpack.c.l.b16 %v5353
      %v5874 = vunpack.c.l.b16 %v5354
      %v5875 = vunpack.c.l.b16 %v5355
      %v5876 = vunpack.c.l.b16 %v5356
      %v5877 = vunpack.c.l.b16 %v5357
      %v5878 = vunpack.c.l.b16 %v5358
      %v5879 = vunpack.c.l.b16 %v5359
      %v5880 = vunpack.c.l.b16 %v5360
      %v5881 = vunpack.c.l.b16 %v5361
      %v5882 = vunpack.c.l.b16 %v5362
      %v5883 = vunpack.c.l.b16 %v5363
      %v5884 = vunpack.c.l.b16 %v5364
      %v5885 = vunpack.c.l.b16 %v5365
      %v5886 = vunpack.c.l.b16 %v5366
      %v5887 = vunpack.c.l.b16 %v5367
      %v5888 = vunpack.c.l.b16 %v5368
      %v5889 = vunpack.c.l.b16 %v5369
      %v5890 = vunpack.c.l.b16 %v5370
      %v5891 = vunpack.c.l.b16 %v5371
      %v5892 = vunpack.c.l.b16 %v5372
      %v5893 = vunpack.c.l.b16 %v5373
      %v5894 = vunpack.c.l.b16 %v5374
      %v5895 = vunpack.c.l.b16 %v5375
      %v5896 = vunpack.c.l.b16 %v5376
      %v5897 = vunpack.c.l.b16 %v5377
      %v5898 = vunpack.c.l.b16 %v5378
      %v5899 = vunpack.c.l.b16 %v5379
      %v5900 = vunpack.c.l.b16 %v5380
      %v5901 = vunpack.c.l.b16 %v5381
      %v5902 = vunpack.c.l.b16 %v5382
      %v5903 = vunpack.c.l.b16 %v5383
      %v5904 = vunpack.c.l.b16 %v5384
      %v5905 = vunpack.c.l.b16 %v5385
      %v5906 = vunpack.c.l.b16 %v5386
      %v5907 = vunpack.c.l.b16 %v5387
      %v5908 = vunpack.c.l.b16 %v5388
      %v5909 = vunpack.c.l.b16 %v5389
      %v5910 = vpack.c.b16 %v5655, %v5654
      %v5911 = vpack.c.b16 %v5657, %v5656
      %v5912 = vpack.c.b16 %v5659, %v5658
      %v5913 = vpack.c.b16 %v5661, %v5660
      %v5914 = vpack.c.b16 %v5663, %v5662
      %v5915 = vpack.c.b16 %v5665, %v5664
      %v5916 = vpack.c.b16 %v5667, %v5666
      %v5917 = vpack.c.b16 %v5669, %v5668
      %v5918 = vpack.c.b16 %v5671, %v5670
      %v5919 = vpack.c.b16 %v5673, %v5672
      %v5920 = vpack.c.b16 %v5675, %v5674
      %v5921 = vpack.c.b16 %v5677, %v5676
      %v5922 = vpack.c.b16 %v5679, %v5678
      %v5923 = vpack.c.b16 %v5681, %v5680
      %v5924 = vpack.c.b16 %v5683, %v5682
      %v5925 = vpack.c.b16 %v5685, %v5684
      %v5926 = vpack.c.b16 %v5687, %v5686
      %v5927 = vpack.c.b16 %v5689, %v5688
      %v5928 = vpack.c.b16 %v5691, %v5690
      %v5929 = vpack.c.b16 %v5693, %v5692
      %v5930 = vpack.c.b16 %v5695, %v5694
      %v5931 = vpack.c.b16 %v5697, %v5696
      %v5932 = vpack.c.b16 %v5699, %v5698
      %v5933 = vpack.c.b16 %v5701, %v5700
      %v5934 = vpack.c.b16 %v5703, %v5702
      %v5935 = vpack.c.b16 %v5705, %v5704
      %v5936 = vpack.c.b16 %v5707, %v5706
      %v5937 = vpack.c.b16 %v5709, %v5708
      %v5938 = vpack.c.b16 %v5711, %v5710
      %v5939 = vpack.c.b16 %v5713, %v5712
      %v5940 = vpack.c.b16 %v5715, %v5714
      %v5941 = vpack.c.b16 %v5717, %v5716
      %v5942 = vpack.c.b16 %v5719, %v5718
      %v5943 = vpack.c.b16 %v5721, %v5720
      %v5944 = vpack.c.b16 %v5723, %v5722
      %v5945 = vpack.c.b16 %v5725, %v5724
      %v5946 = vpack.c.b16 %v5727, %v5726
      %v5947 = vpack.c.b16 %v5729, %v5728
      %v5948 = vpack.c.b16 %v5731, %v5730
      %v5949 = vpack.c.b16 %v5733, %v5732
      %v5950 = vpack.c.b16 %v5735, %v5734
      %v5951 = vpack.c.b16 %v5737, %v5736
      %v5952 = vpack.c.b16 %v5739, %v5738
      %v5953 = vpack.c.b16 %v5741, %v5740
      %v5954 = vpack.c.b16 %v5743, %v5742
      %v5955 = vpack.c.b16 %v5745, %v5744
      %v5956 = vpack.c.b16 %v5747, %v5746
      %v5957 = vpack.c.b16 %v5749, %v5748
      %v5958 = vpack.c.b16 %v5751, %v5750
      %v5959 = vpack.c.b16 %v5753, %v5752
      %v5960 = vpack.c.b16 %v5755, %v5754
      %v5961 = vpack.c.b16 %v5757, %v5756
      %v5962 = vpack.c.b16 %v5759, %v5758
      %v5963 = vpack.c.b16 %v5761, %v5760
      %v5964 = vpack.c.b16 %v5763, %v5762
      %v5965 = vpack.c.b16 %v5765, %v5764
      %v5966 = vpack.c.b16 %v5767, %v5766
      %v5967 = vpack.c.b16 %v5769, %v5768
      %v5968 = vpack.c.b16 %v5771, %v5770
      %v5969 = vpack.c.b16 %v5773, %v5772
      %v5970 = vpack.c.b16 %v5775, %v5774
      %v5971 = vpack.c.b16 %v5777, %v5776
      %v5972 = vpack.c.b16 %v5779, %v5778
      %v5973 = vpack.c.b16 %v5781, %v5780
      %v5974 = vpack.c.b16 %v5783, %v5782
      %v5975 = vpack.c.b16 %v5785, %v5784
      %v5976 = vpack.c.b16 %v5787, %v5786
      %v5977 = vpack.c.b16 %v5789, %v5788
      %v5978 = vpack.c.b16 %v5791, %v5790
      %v5979 = vpack.c.b16 %v5793, %v5792
      %v5980 = vpack.c.b16 %v5795, %v5794
      %v5981 = vpack.c.b16 %v5797, %v5796
      %v5982 = vpack.c.b16 %v5799, %v5798
      %v5983 = vpack.c.b16 %v5801, %v5800
      %v5984 = vpack.c.b16 %v5803, %v5802
      %v5985 = vpack.c.b16 %v5805, %v5804
      %v5986 = vpack.c.b16 %v5807, %v5806
      %v5987 = vpack.c.b16 %v5809, %v5808
      %v5988 = vpack.c.b16 %v5811, %v5810
      %v5989 = vpack.c.b16 %v5813, %v5812
      %v5990 = vpack.c.b16 %v5815, %v5814
      %v5991 = vpack.c.b16 %v5817, %v5816
      %v5992 = vpack.c.b16 %v5819, %v5818
      %v5993 = vpack.c.b16 %v5821, %v5820
      %v5994 = vpack.c.b16 %v5823, %v5822
      %v5995 = vpack.c.b16 %v5825, %v5824
      %v5996 = vpack.c.b16 %v5827, %v5826
      %v5997 = vpack.c.b16 %v5829, %v5828
      %v5998 = vpack.c.b16 %v5831, %v5830
      %v5999 = vpack.c.b16 %v5833, %v5832
      %v6000 = vpack.c.b16 %v5835, %v5834
      %v6001 = vpack.c.b16 %v5837, %v5836
      %v6002 = vpack.c.b16 %v5839, %v5838
      %v6003 = vpack.c.b16 %v5841, %v5840
      %v6004 = vpack.c.b16 %v5843, %v5842
      %v6005 = vpack.c.b16 %v5845, %v5844
      %v6006 = vpack.c.b16 %v5847, %v5846
      %v6007 = vpack.c.b16 %v5849, %v5848
      %v6008 = vpack.c.b16 %v5851, %v5850
      %v6009 = vpack.c.b16 %v5853, %v5852
      %v6010 = vpack.c.b16 %v5855, %v5854
      %v6011 = vpack.c.b16 %v5857, %v5856
      %v6012 = vpack.c.b16 %v5859, %v5858
      %v6013 = vpack.c.b16 %v5861, %v5860
      %v6014 = vpack.c.b16 %v5863, %v5862
      %v6015 = vpack.c.b16 %v5865, %v5864
      %v6016 = vpack.c.b16 %v5867, %v5866
      %v6017 = vpack.c.b16 %v5869, %v5868
      %v6018 = vpack.c.b16 %v5871, %v5870
      %v6019 = vpack.c.b16 %v5873, %v5872
      %v6020 = vpack.c.b16 %v5875, %v5874
      %v6021 = vpack.c.b16 %v5877, %v5876
      %v6022 = vpack.c.b16 %v5879, %v5878
      %v6023 = vpack.c.b16 %v5881, %v5880
      %v6024 = vpack.c.b16 %v5883, %v5882
      %v6025 = vpack.c.b16 %v5885, %v5884
      %v6026 = vpack.c.b16 %v5887, %v5886
      %v6027 = vpack.c.b16 %v5889, %v5888
      %v6028 = vpack.c.b16 %v5891, %v5890
      %v6029 = vpack.c.b16 %v5893, %v5892
      %v6030 = vpack.c.b16 %v5895, %v5894
      %v6031 = vpack.c.b16 %v5897, %v5896
      %v6032 = vpack.c.b16 %v5899, %v5898
      %v6033 = vpack.c.b16 %v5901, %v5900
      %v6034 = vpack.c.b16 %v5903, %v5902
      %v6035 = vpack.c.b16 %v5905, %v5904
      %v6036 = vpack.c.b16 %v5907, %v5906
      %v6037 = vpack.c.b16 %v5909, %v5908
      %6166 = vmatprep.subr.bf16.mxu0 0
      %6167 = vmatpush1.bf16.msra.mxu0 %v5917
      %6168 = vmatprep.subr.bf16.mxu0 0
      %6169 = vmatpush1.bf16.msra.mxu0 %v5916
      %6170 = vmatprep.subr.bf16.mxu0 0
      %6171 = vmatpush1.bf16.msra.mxu0 %v5915
      %6172 = vmatprep.subr.bf16.mxu0 0
      %6173 = vmatpush1.bf16.msra.mxu0 %v5914
      %6174 = vmatprep.subr.bf16.mxu0 0
      %6175 = vmatpush1.bf16.msra.mxu0 %v5913
      %6176 = vmatprep.subr.bf16.mxu0 0
      %6177 = vmatpush1.bf16.msra.mxu0 %v5912
      %6178 = vmatprep.subr.bf16.mxu0 0
      %6179 = vmatpush1.bf16.msra.mxu0 %v5911
      %6180 = vmatprep.subr.bf16.mxu0 0
      %6181 = vmatpush1.bf16.msra.mxu0 %v5910
      %6182 = vmatprep.subr.bf16.mxu0 0
      %6183 = vmatpush2.bf16.msra.mxu0 %v5925
      %6184 = vmatprep.subr.bf16.mxu0 0
      %6185 = vmatpush2.bf16.msra.mxu0 %v5924
      %6186 = vmatprep.subr.bf16.mxu0 0
      %6187 = vmatpush2.bf16.msra.mxu0 %v5923
      %6188 = vmatprep.subr.bf16.mxu0 0
      %6189 = vmatpush2.bf16.msra.mxu0 %v5922
      %6190 = vmatprep.subr.bf16.mxu0 0
      %6191 = vmatpush2.bf16.msra.mxu0 %v5921
      %6192 = vmatprep.subr.bf16.mxu0 0
      %6193 = vmatpush2.bf16.msra.mxu0 %v5920
      %6194 = vmatprep.subr.bf16.mxu0 0
      %6195 = vmatpush2.bf16.msra.mxu0 %v5919
      %6196 = vmatprep.subr.bf16.mxu0 0
      %6197 = vmatpush2.bf16.msra.mxu0 %v5918
      %6198 = vmatprep.mubr.bf16.mxu0 %v5118
      %6199 = vmatmul.mubr.bf16.gmra.mxu0 %v5117
      %v6200 = vpop.f32.mrf.mxu0
      %v6201 = vadd.f32 %v5396, %v6200
      %v6202 = vpop.f32.mrf.mxu0
      %v6203 = vpop.f32.mrf.mxu0
      %v6204 = vpop.f32.mrf.mxu0
      %6205 = vdwg.mxu0
      %6206 = vmatprep.subr.bf16.mxu0 0
      %6207 = vmatpush1.bf16.msra.mxu0 %v5933
      %6208 = vmatprep.subr.bf16.mxu0 0
      %6209 = vmatpush1.bf16.msra.mxu0 %v5932
      %6210 = vmatprep.subr.bf16.mxu0 0
      %6211 = vmatpush1.bf16.msra.mxu0 %v5931
      %6212 = vmatprep.subr.bf16.mxu0 0
      %6213 = vmatpush1.bf16.msra.mxu0 %v5930
      %6214 = vmatprep.subr.bf16.mxu0 0
      %6215 = vmatpush1.bf16.msra.mxu0 %v5929
      %6216 = vmatprep.subr.bf16.mxu0 0
      %6217 = vmatpush1.bf16.msra.mxu0 %v5928
      %6218 = vmatprep.subr.bf16.mxu0 0
      %6219 = vmatpush1.bf16.msra.mxu0 %v5927
      %6220 = vmatprep.subr.bf16.mxu0 0
      %6221 = vmatpush1.bf16.msra.mxu0 %v5926
      %6222 = vmatprep.subr.bf16.mxu0 0
      %6223 = vmatpush2.bf16.msra.mxu0 %v5941
      %6224 = vmatprep.subr.bf16.mxu0 0
      %6225 = vmatpush2.bf16.msra.mxu0 %v5940
      %6226 = vmatprep.subr.bf16.mxu0 0
      %6227 = vmatpush2.bf16.msra.mxu0 %v5939
      %6228 = vmatprep.subr.bf16.mxu0 0
      %6229 = vmatpush2.bf16.msra.mxu0 %v5938
      %6230 = vmatprep.subr.bf16.mxu0 0
      %6231 = vmatpush2.bf16.msra.mxu0 %v5937
      %6232 = vmatprep.subr.bf16.mxu0 0
      %6233 = vmatpush2.bf16.msra.mxu0 %v5936
      %6234 = vmatprep.subr.bf16.mxu0 0
      %6235 = vmatpush2.bf16.msra.mxu0 %v5935
      %6236 = vmatprep.subr.bf16.mxu0 0
      %6237 = vmatpush2.bf16.msra.mxu0 %v5934
      %6238 = vmatprep.mubr.bf16.mxu0 %v5120
      %6239 = vmatmul.mubr.bf16.gmra.mxu0 %v5119
      %v6240 = vpop.f32.mrf.mxu0
      %v6241 = vadd.f32 %v6201, %v6240
      %v6242 = vpop.f32.mrf.mxu0
      %v6243 = vpop.f32.mrf.mxu0
      %v6244 = vpop.f32.mrf.mxu0
      %6245 = vdwg.mxu0
      %6246 = vmatprep.subr.bf16.mxu0 0
      %6247 = vmatpush1.bf16.msra.mxu0 %v5949
      %6248 = vmatprep.subr.bf16.mxu0 0
      %6249 = vmatpush1.bf16.msra.mxu0 %v5948
      %6250 = vmatprep.subr.bf16.mxu0 0
      %6251 = vmatpush1.bf16.msra.mxu0 %v5947
      %6252 = vmatprep.subr.bf16.mxu0 0
      %6253 = vmatpush1.bf16.msra.mxu0 %v5946
      %6254 = vmatprep.subr.bf16.mxu0 0
      %6255 = vmatpush1.bf16.msra.mxu0 %v5945
      %6256 = vmatprep.subr.bf16.mxu0 0
      %6257 = vmatpush1.bf16.msra.mxu0 %v5944
      %6258 = vmatprep.subr.bf16.mxu0 0
      %6259 = vmatpush1.bf16.msra.mxu0 %v5943
      %6260 = vmatprep.subr.bf16.mxu0 0
      %6261 = vmatpush1.bf16.msra.mxu0 %v5942
      %6262 = vmatprep.subr.bf16.mxu0 0
      %6263 = vmatpush2.bf16.msra.mxu0 %v5957
      %6264 = vmatprep.subr.bf16.mxu0 0
      %6265 = vmatpush2.bf16.msra.mxu0 %v5956
      %6266 = vmatprep.subr.bf16.mxu0 0
      %6267 = vmatpush2.bf16.msra.mxu0 %v5955
      %6268 = vmatprep.subr.bf16.mxu0 0
      %6269 = vmatpush2.bf16.msra.mxu0 %v5954
      %6270 = vmatprep.subr.bf16.mxu0 0
      %6271 = vmatpush2.bf16.msra.mxu0 %v5953
      %6272 = vmatprep.subr.bf16.mxu0 0
      %6273 = vmatpush2.bf16.msra.mxu0 %v5952
      %6274 = vmatprep.subr.bf16.mxu0 0
      %6275 = vmatpush2.bf16.msra.mxu0 %v5951
      %6276 = vmatprep.subr.bf16.mxu0 0
      %6277 = vmatpush2.bf16.msra.mxu0 %v5950
      %6278 = vmatprep.mubr.bf16.mxu0 %v5122
      %6279 = vmatmul.mubr.bf16.gmra.mxu0 %v5121
      %v6280 = vpop.f32.mrf.mxu0
      %v6281 = vadd.f32 %v6241, %v6280
      %v6282 = vpop.f32.mrf.mxu0
      %v6283 = vpop.f32.mrf.mxu0
      %v6284 = vpop.f32.mrf.mxu0
      %6285 = vdwg.mxu0
      %6286 = vmatprep.subr.bf16.mxu0 0
      %6287 = vmatpush1.bf16.msra.mxu0 %v5965
      %6288 = vmatprep.subr.bf16.mxu0 0
      %6289 = vmatpush1.bf16.msra.mxu0 %v5964
      %6290 = vmatprep.subr.bf16.mxu0 0
      %6291 = vmatpush1.bf16.msra.mxu0 %v5963
      %6292 = vmatprep.subr.bf16.mxu0 0
      %6293 = vmatpush1.bf16.msra.mxu0 %v5962
      %6294 = vmatprep.subr.bf16.mxu0 0
      %6295 = vmatpush1.bf16.msra.mxu0 %v5961
      %6296 = vmatprep.subr.bf16.mxu0 0
      %6297 = vmatpush1.bf16.msra.mxu0 %v5960
      %6298 = vmatprep.subr.bf16.mxu0 0
      %6299 = vmatpush1.bf16.msra.mxu0 %v5959
      %6300 = vmatprep.subr.bf16.mxu0 0
      %6301 = vmatpush1.bf16.msra.mxu0 %v5958
      %6302 = vmatprep.subr.bf16.mxu0 0
      %6303 = vmatpush2.bf16.msra.mxu0 %v5973
      %6304 = vmatprep.subr.bf16.mxu0 0
      %6305 = vmatpush2.bf16.msra.mxu0 %v5972
      %6306 = vmatprep.subr.bf16.mxu0 0
      %6307 = vmatpush2.bf16.msra.mxu0 %v5971
      %6308 = vmatprep.subr.bf16.mxu0 0
      %6309 = vmatpush2.bf16.msra.mxu0 %v5970
      %6310 = vmatprep.subr.bf16.mxu0 0
      %6311 = vmatpush2.bf16.msra.mxu0 %v5969
      %6312 = vmatprep.subr.bf16.mxu0 0
      %6313 = vmatpush2.bf16.msra.mxu0 %v5968
      %6314 = vmatprep.subr.bf16.mxu0 0
      %6315 = vmatpush2.bf16.msra.mxu0 %v5967
      %6316 = vmatprep.subr.bf16.mxu0 0
      %6317 = vmatpush2.bf16.msra.mxu0 %v5966
      %6318 = vmatprep.mubr.bf16.mxu0 %v5124
      %6319 = vmatmul.mubr.bf16.gmra.mxu0 %v5123
      %v6320 = vpop.f32.mrf.mxu0
      %v6321 = vadd.f32 %v6281, %v6320
      %v6322 = vpop.f32.mrf.mxu0
      %v6323 = vpop.f32.mrf.mxu0
      %v6324 = vpop.f32.mrf.mxu0
      %6325 = vdwg.mxu0
      %6326 = vmatprep.subr.bf16.mxu0 0
      %6327 = vmatpush1.bf16.msra.mxu0 %v5981
      %6328 = vmatprep.subr.bf16.mxu0 0
      %6329 = vmatpush1.bf16.msra.mxu0 %v5980
      %6330 = vmatprep.subr.bf16.mxu0 0
      %6331 = vmatpush1.bf16.msra.mxu0 %v5979
      %6332 = vmatprep.subr.bf16.mxu0 0
      %6333 = vmatpush1.bf16.msra.mxu0 %v5978
      %6334 = vmatprep.subr.bf16.mxu0 0
      %6335 = vmatpush1.bf16.msra.mxu0 %v5977
      %6336 = vmatprep.subr.bf16.mxu0 0
      %6337 = vmatpush1.bf16.msra.mxu0 %v5976
      %6338 = vmatprep.subr.bf16.mxu0 0
      %6339 = vmatpush1.bf16.msra.mxu0 %v5975
      %6340 = vmatprep.subr.bf16.mxu0 0
      %6341 = vmatpush1.bf16.msra.mxu0 %v5974
      %6342 = vmatprep.subr.bf16.mxu0 0
      %6343 = vmatpush2.bf16.msra.mxu0 %v5989
      %6344 = vmatprep.subr.bf16.mxu0 0
      %6345 = vmatpush2.bf16.msra.mxu0 %v5988
      %6346 = vmatprep.subr.bf16.mxu0 0
      %6347 = vmatpush2.bf16.msra.mxu0 %v5987
      %6348 = vmatprep.subr.bf16.mxu0 0
      %6349 = vmatpush2.bf16.msra.mxu0 %v5986
      %6350 = vmatprep.subr.bf16.mxu0 0
      %6351 = vmatpush2.bf16.msra.mxu0 %v5985
      %6352 = vmatprep.subr.bf16.mxu0 0
      %6353 = vmatpush2.bf16.msra.mxu0 %v5984
      %6354 = vmatprep.subr.bf16.mxu0 0
      %6355 = vmatpush2.bf16.msra.mxu0 %v5983
      %6356 = vmatprep.subr.bf16.mxu0 0
      %6357 = vmatpush2.bf16.msra.mxu0 %v5982
      %6358 = vmatprep.mubr.bf16.mxu0 %v5126
      %6359 = vmatmul.mubr.bf16.gmra.mxu0 %v5125
      %v6360 = vpop.f32.mrf.mxu0
      %v6361 = vadd.f32 %v6321, %v6360
      %v6362 = vpop.f32.mrf.mxu0
      %v6363 = vpop.f32.mrf.mxu0
      %v6364 = vpop.f32.mrf.mxu0
      %6365 = vdwg.mxu0
      %6366 = vmatprep.subr.bf16.mxu0 0
      %6367 = vmatpush1.bf16.msra.mxu0 %v5997
      %6368 = vmatprep.subr.bf16.mxu0 0
      %6369 = vmatpush1.bf16.msra.mxu0 %v5996
      %6370 = vmatprep.subr.bf16.mxu0 0
      %6371 = vmatpush1.bf16.msra.mxu0 %v5995
      %6372 = vmatprep.subr.bf16.mxu0 0
      %6373 = vmatpush1.bf16.msra.mxu0 %v5994
      %6374 = vmatprep.subr.bf16.mxu0 0
      %6375 = vmatpush1.bf16.msra.mxu0 %v5993
      %6376 = vmatprep.subr.bf16.mxu0 0
      %6377 = vmatpush1.bf16.msra.mxu0 %v5992
      %6378 = vmatprep.subr.bf16.mxu0 0
      %6379 = vmatpush1.bf16.msra.mxu0 %v5991
      %6380 = vmatprep.subr.bf16.mxu0 0
      %6381 = vmatpush1.bf16.msra.mxu0 %v5990
      %6382 = vmatprep.subr.bf16.mxu0 0
      %6383 = vmatpush2.bf16.msra.mxu0 %v6005
      %6384 = vmatprep.subr.bf16.mxu0 0
      %6385 = vmatpush2.bf16.msra.mxu0 %v6004
      %6386 = vmatprep.subr.bf16.mxu0 0
      %6387 = vmatpush2.bf16.msra.mxu0 %v6003
      %6388 = vmatprep.subr.bf16.mxu0 0
      %6389 = vmatpush2.bf16.msra.mxu0 %v6002
      %6390 = vmatprep.subr.bf16.mxu0 0
      %6391 = vmatpush2.bf16.msra.mxu0 %v6001
      %6392 = vmatprep.subr.bf16.mxu0 0
      %6393 = vmatpush2.bf16.msra.mxu0 %v6000
      %6394 = vmatprep.subr.bf16.mxu0 0
      %6395 = vmatpush2.bf16.msra.mxu0 %v5999
      %6396 = vmatprep.subr.bf16.mxu0 0
      %6397 = vmatpush2.bf16.msra.mxu0 %v5998
      %6398 = vmatprep.mubr.bf16.mxu0 %v5128
      %6399 = vmatmul.mubr.bf16.gmra.mxu0 %v5127
      %v6400 = vpop.f32.mrf.mxu0
      %v6401 = vadd.f32 %v6361, %v6400
      %v6402 = vpop.f32.mrf.mxu0
      %v6403 = vpop.f32.mrf.mxu0
      %v6404 = vpop.f32.mrf.mxu0
      %6405 = vdwg.mxu0
      %6406 = vmatprep.subr.bf16.mxu0 0
      %6407 = vmatpush1.bf16.msra.mxu0 %v6013
      %6408 = vmatprep.subr.bf16.mxu0 0
      %6409 = vmatpush1.bf16.msra.mxu0 %v6012
      %6410 = vmatprep.subr.bf16.mxu0 0
      %6411 = vmatpush1.bf16.msra.mxu0 %v6011
      %6412 = vmatprep.subr.bf16.mxu0 0
      %6413 = vmatpush1.bf16.msra.mxu0 %v6010
      %6414 = vmatprep.subr.bf16.mxu0 0
      %6415 = vmatpush1.bf16.msra.mxu0 %v6009
      %6416 = vmatprep.subr.bf16.mxu0 0
      %6417 = vmatpush1.bf16.msra.mxu0 %v6008
      %6418 = vmatprep.subr.bf16.mxu0 0
      %6419 = vmatpush1.bf16.msra.mxu0 %v6007
      %6420 = vmatprep.subr.bf16.mxu0 0
      %6421 = vmatpush1.bf16.msra.mxu0 %v6006
      %6422 = vmatprep.subr.bf16.mxu0 0
      %6423 = vmatpush2.bf16.msra.mxu0 %v6021
      %6424 = vmatprep.subr.bf16.mxu0 0
      %6425 = vmatpush2.bf16.msra.mxu0 %v6020
      %6426 = vmatprep.subr.bf16.mxu0 0
      %6427 = vmatpush2.bf16.msra.mxu0 %v6019
      %6428 = vmatprep.subr.bf16.mxu0 0
      %6429 = vmatpush2.bf16.msra.mxu0 %v6018
      %6430 = vmatprep.subr.bf16.mxu0 0
      %6431 = vmatpush2.bf16.msra.mxu0 %v6017
      %6432 = vmatprep.subr.bf16.mxu0 0
      %6433 = vmatpush2.bf16.msra.mxu0 %v6016
      %6434 = vmatprep.subr.bf16.mxu0 0
      %6435 = vmatpush2.bf16.msra.mxu0 %v6015
      %6436 = vmatprep.subr.bf16.mxu0 0
      %6437 = vmatpush2.bf16.msra.mxu0 %v6014
      %6438 = vmatprep.mubr.bf16.mxu0 %v5130
      %6439 = vmatmul.mubr.bf16.gmra.mxu0 %v5129
      %v6440 = vpop.f32.mrf.mxu0
      %v6441 = vadd.f32 %v6401, %v6440
      %v6442 = vpop.f32.mrf.mxu0
      %v6443 = vpop.f32.mrf.mxu0
      %v6444 = vpop.f32.mrf.mxu0
      %6445 = vdwg.mxu0
      %6446 = vmatprep.subr.bf16.mxu0 0
      %6447 = vmatpush1.bf16.msra.mxu0 %v6029
      %6448 = vmatprep.subr.bf16.mxu0 0
      %6449 = vmatpush1.bf16.msra.mxu0 %v6028
      %6450 = vmatprep.subr.bf16.mxu0 0
      %6451 = vmatpush1.bf16.msra.mxu0 %v6027
      %6452 = vmatprep.subr.bf16.mxu0 0
      %6453 = vmatpush1.bf16.msra.mxu0 %v6026
      %6454 = vmatprep.subr.bf16.mxu0 0
      %6455 = vmatpush1.bf16.msra.mxu0 %v6025
      %6456 = vmatprep.subr.bf16.mxu0 0
      %6457 = vmatpush1.bf16.msra.mxu0 %v6024
      %6458 = vmatprep.subr.bf16.mxu0 0
      %6459 = vmatpush1.bf16.msra.mxu0 %v6023
      %6460 = vmatprep.subr.bf16.mxu0 0
      %6461 = vmatpush1.bf16.msra.mxu0 %v6022
      %6462 = vmatprep.subr.bf16.mxu0 0
      %6463 = vmatpush2.bf16.msra.mxu0 %v6037
      %6464 = vmatprep.subr.bf16.mxu0 0
      %6465 = vmatpush2.bf16.msra.mxu0 %v6036
      %6466 = vmatprep.subr.bf16.mxu0 0
      %6467 = vmatpush2.bf16.msra.mxu0 %v6035
      %6468 = vmatprep.subr.bf16.mxu0 0
      %6469 = vmatpush2.bf16.msra.mxu0 %v6034
      %6470 = vmatprep.subr.bf16.mxu0 0
      %6471 = vmatpush2.bf16.msra.mxu0 %v6033
      %6472 = vmatprep.subr.bf16.mxu0 0
      %6473 = vmatpush2.bf16.msra.mxu0 %v6032
      %6474 = vmatprep.subr.bf16.mxu0 0
      %6475 = vmatpush2.bf16.msra.mxu0 %v6031
      %6476 = vmatprep.subr.bf16.mxu0 0
      %6477 = vmatpush2.bf16.msra.mxu0 %v6030
      %6478 = vmatprep.mubr.bf16.mxu0 %v5132
      %6479 = vmatmul.mubr.bf16.gmra.mxu0 %v5131
      %v6480 = vpop.f32.mrf.mxu0
      %v6481 = vadd.f32 %v6441, %v6480
      %v6482 = vpop.f32.mrf.mxu0
      %v6483 = vpop.f32.mrf.mxu0
      %v6484 = vpop.f32.mrf.mxu0
      %6485 = vdwg.mxu0
      %v6486 = vadd.f32 %v4490, %v6481
      %v6487 = vsel %vm732, %v6486, 0.0
      %6488 = vadd.xlane.f32.xlu0 %v6487
      %v6489 = vpop.xlane.xlu0 %6488
      %v6490 = vmul.f32 %v6489, %v1617
      %v6491 = vsub.f32 %v6486, %v6490
      %v6492 = vmul.f32 %v6491, %v6491
      %v6493 = vsel %vm732, %v6492, 0.0
      %6494 = vadd.xlane.f32.xlu0 %v6493
      %v6495 = vpop.xlane.xlu0 %6494
      %v6496 = vmul.f32 %v6495, %v1617
      %v6497 = vadd.f32 %v6496, 1e-05
      %v6498 = vrsqrt.pop %v6497
      %v6499 = vmul.f32 %v6491, %v6498
      %s6500 = scalar_lea.vmem %s10, 5
      %v6501 = vld [vmem:[%s6500] sm:$0x1]
      %v6503 = vlaneseq
      %v6504 = vshrl.u32 %v6503, 7
      %v6505 = vsub.s32 0, %v6504
      %v6506 = vrot.slane %v6501, %v6505
      %v6508 = vmul.f32 %v6499, %v6506
      %s6509 = scalar_lea.vmem %s11, 5
      %v6510 = vld [vmem:[%s6509] sm:$0x1]
      %v6512 = vlaneseq
      %v6513 = vshrl.u32 %v6512, 7
      %v6514 = vsub.s32 0, %v6513
      %v6515 = vrot.slane %v6510, %v6514
      %v6517 = vadd.f32 %v6508, %v6515
      %v6518 = vpack.c.bf16 %v6517, %v6517
      %v6519 = vld [vmem:[%s16] sm:$0xf]
      %v6520 = vld [vmem:[%s16 + $0x4] sm:$0xf]
      %v6521 = vld [vmem:[%s16 + $0x8] sm:$0xf]
      %v6522 = vld [vmem:[%s16 + $0xc] sm:$0xf]
      %v6523 = vld [vmem:[%s17] sm:$0x1]
      %v6525 = vlaneseq
      %v6526 = vshrl.u32 %v6525, 7
      %v6527 = vsub.s32 0, %v6526
      %v6528 = vrot.slane %v6523, %v6527
      %v6534 = vunpack.c.l.b16 %v6519
      %v6535 = vunpack.c.l.b16 %v6520
      %v6536 = vunpack.c.l.b16 %v6521
      %v6537 = vunpack.c.l.b16 %v6522
      %v6538 = vpack.c.b16 %v6535, %v6534
      %v6539 = vpack.c.b16 %v6537, %v6536
      %v6543 = vsel %vm732, %v6518, 0
      %6545 = vmatprep.subr.bf16.mxu0 0
      %6546 = vmatpush1.bf16.msra.mxu0 0
      %6547 = vmatprep.subr.bf16.mxu0 0
      %6548 = vmatpush1.bf16.msra.mxu0 0
      %6549 = vmatprep.subr.bf16.mxu0 0
      %6550 = vmatpush1.bf16.msra.mxu0 0
      %6551 = vmatprep.subr.bf16.mxu0 0
      %6552 = vmatpush1.bf16.msra.mxu0 0
      %6553 = vmatprep.subr.bf16.mxu0 0
      %6554 = vmatpush1.bf16.msra.mxu0 0
      %6555 = vmatprep.subr.bf16.mxu0 0
      %6556 = vmatpush1.bf16.msra.mxu0 0
      %6557 = vmatprep.subr.bf16.mxu0 0
      %6558 = vmatpush1.bf16.msra.mxu0 %v6539
      %6559 = vmatprep.subr.bf16.mxu0 0
      %6560 = vmatpush1.bf16.msra.mxu0 %v6538
      %6561 = vmatprep.subr.bf16.mxu0 0
      %6562 = vmatpush2.bf16.msra.mxu0 0
      %6563 = vmatprep.subr.bf16.mxu0 0
      %6564 = vmatpush2.bf16.msra.mxu0 0
      %6565 = vmatprep.subr.bf16.mxu0 0
      %6566 = vmatpush2.bf16.msra.mxu0 0
      %6567 = vmatprep.subr.bf16.mxu0 0
      %6568 = vmatpush2.bf16.msra.mxu0 0
      %6569 = vmatprep.subr.bf16.mxu0 0
      %6570 = vmatpush2.bf16.msra.mxu0 0
      %6571 = vmatprep.subr.bf16.mxu0 0
      %6572 = vmatpush2.bf16.msra.mxu0 0
      %6573 = vmatprep.subr.bf16.mxu0 0
      %6574 = vmatpush2.bf16.msra.mxu0 0
      %6575 = vmatprep.subr.bf16.mxu0 0
      %6576 = vmatpush2.bf16.msra.mxu0 0
      %6577 = vmatprep.mubr.bf16.mxu0 0
      %6578 = vmatmul.mubr.bf16.gmra.mxu0 %v6543
      %v6579 = vpop.f32.mrf.mxu0
      %v6580 = vadd.f32 %v6528, %v6579
      %v6581 = vpop.f32.mrf.mxu0
      %v6582 = vpop.f32.mrf.mxu0
      %v6583 = vpop.f32.mrf.mxu0
      %6584 = vdwg.mxu0
      %6585 = vmax.xlane.f32.xlu0 %v6580
      %v6586 = vpop.xlane.xlu0 %6585
      %v6587 = vsub.f32 %v6580, %v6586
      %v6588 = vmul.f32 %v6587, 1.442695
      %v6589 = vpow.pop %v6588
      %6590 = vadd.xlane.f32.xlu0 %v6589
      %v6591 = vpop.xlane.xlu0 %6590
      %v6592 = vlog2.pop %v6591
      %v6593 = vmul.f32 %v6592, 0.6931472
      %v6594 = vsub.f32 %v6587, %v6593
      %6595 = vst [vmem:[%s573] sm:$0xff] %v6594
      %p6596 = scmp.lt.s32.totalorder %s29, 1
      %s6597 = scalar_select %p6596, %s29, 1
      %s6598 = smul.addr %s6597, 8
      %s6599 = scalar_lea.vmem %s18, %s6598
      // Predicated region
      $region93: #{transformer_ocr_forward.1} parent=91 // pred_check
        %p6600 = pneg %p430
      $region94: #{transformer_ocr_forward.1} parent=91 // pred_check_branch
        %6602 = sbr.rel (%p6600) target = $region96
      $region95: #{transformer_ocr_forward.1} parent=91 // pred_region
        _
      $region96: #{transformer_ocr_forward.1} parent=91 // pred_fallthru
        _
    $region92: #{transformer_ocr_forward.1} parent=5 // pred_fallthru
      _
    %p6603 = scmp.le.s32.totalorder 2, %s24
    // Predicated region
    $region97: #{transformer_ocr_forward.1} parent=5 // pred_check
      %p6604 = pneg %p6603
    $region98: #{transformer_ocr_forward.1} parent=5 // pred_check_branch
      %6606 = sbr.rel (%p6604) target = $region100
    $region99: #{transformer_ocr_forward.1} parent=5 // pred_region
      %s6607 = ssub.s32 %s24, 2
      // Predicated region
      $region101: #{transformer_ocr_forward.1} parent=99 // pred_check
        %p6608 = pneg %p436
      $region102: #{transformer_ocr_forward.1} parent=99 // pred_check_branch
        %6610 = sbr.rel (%p6608) target = $region104
      $region103: #{transformer_ocr_forward.1} parent=99 // pred_region
        %p6611 = scmp.lt.s32.totalorder %s30, 1
        %s6612 = scalar_select %p6611, %s30, 1
        %s6613 = smul.addr %s6612, 8
        %s6614 = scalar_lea.vmem %s18, %s6613
      $region104: #{transformer_ocr_forward.1} parent=99 // pred_fallthru
        _
    $region100: #{transformer_ocr_forward.1} parent=5 // pred_fallthru
      _
  $region6: #{transformer_ocr_forward.1} parent=0 // loop_footer
    %s28 = sadd.s32 1, %s24
  $region7: #{transformer_ocr_forward.1} parent=0 // loop_footer_branch
    %23 = sbr.rel target = $region3
  $region8: #{transformer_ocr_forward.1} parent=0 // loop_exit
    _

</llo_original>
